<compile_context>
chip_gen: v7x
topology: tpu7x:2x2x1
jax: 0.10.0
libtpu: 0.0.40
codegen_flags: <defaults>
</compile_context>

<pallas_src>
import math
import numpy as np

import jax
import jax.numpy as jnp
from jax.experimental import pallas as pl
from jax.experimental.pallas import tpu as pltpu


MATMUL_DTYPE = jnp.bfloat16   # set to jnp.float32 for exact-f32 projections
RMS_EPS = 1e-5


def _silu(x):
    return x * jax.nn.sigmoid(x)


def _softplus(x):
    # matches torch.nn.functional.softplus(beta=1, threshold=20)
    return jnp.where(x > 20.0, x, jnp.log1p(jnp.exp(jnp.minimum(x, 20.0))))


# ============ fused [RMSNorm -> bidirectional Mamba -> RMSNorm + residual
# ============  -> bilinear upsample] kernel =====================================
def _make_fused_kernel(*, d_model, d_inner, d_state, d_conv, dt_rank,
                       seq_len, n_seq, half, compute_dtype):
    """seq_len = L (Mamba sequence axis == channel axis); n_seq = S packed scan
    sequences, rows laid out time-major (row = t*S + s).  Forward copies live at
    s in [0, batch), feature-flipped backward copies at s in [half, half+batch),
    zero padding elsewhere.  `half` = S//2 is a multiple of 8 so both direction
    blocks are tile-aligned."""
    L, S = seq_len, n_seq
    T = L * S
    R, N = dt_rank, d_state
    f32 = jnp.float32
    cdt = compute_dtype

    def mm(a, b):
        # MXU matmul, (optionally bf16) operands, always f32 accumulation.
        return jnp.dot(a.astype(cdt), b.astype(cdt), preferred_element_type=f32)

    def kernel(tok_ref, nw_ref, wpost_ref, w_in_ref, conv_w_ref, conv_b_ref,
               w_x_ref, w_dt_ref, b_dt_ref, a_t_ref, d_skip_ref,
               wo_f_ref, wo_b_ref, k_up_ref, out_ref,
               decay_sr, inp_sr, st_sr, state_sr):
        tok3 = tok_ref[...]                                   # (L, S, D) raw tokens

        # ---- pre-RMSNorm (backward rows carry the feature-flipped weight) ----
        # TODO(synk): RMSNorm class is not in the source file; assuming the
        # standard x * rsqrt(mean(x^2, -1) + 1e-5) * weight (no mean subtraction).
        ms = jnp.mean(tok3 * tok3, axis=-1, keepdims=True)
        xn = (tok3 * jax.lax.rsqrt(ms + RMS_EPS) * nw_ref[...]).reshape(T, d_model)

        # ---- in_proj: one fused matmul, split x | z at a 128-aligned lane ----
        xz = mm(xn, w_in_ref[...])                            # (T, 2*d_inner)
        x0 = xz[:, :d_inner]
        z = xz[:, d_inner:]

        # ---- causal depthwise conv over time (time steps are S rows apart;
        # S is a multiple of 8, so every shifted slice is a full unmasked tile) --
        xpad = jnp.concatenate(
            [jnp.zeros(((d_conv - 1) * S, d_inner), f32), x0], axis=0)
        xc = jnp.zeros((T, d_inner), f32)
        for k in range(d_conv):                               # static, d_conv = 4
            xc = xc + conv_w_ref[k:k + 1, :] * xpad[k * S:k * S + T, :]
        u = _silu(xc + conv_b_ref[...])                       # (T, d_inner)

        # ---- x_proj (dt | B | C in ONE matmul) -> dt_proj -> softplus ----
        dbc = mm(u, w_x_ref[...])                             # (T, R + 2N)
        delta = _softplus(mm(dbc[:, :R], w_dt_ref[...]) + b_dt_ref[...])
        du = delta * u
        b3 = dbc[:, R:R + N].reshape(L, S, N)
        c3 = dbc[:, R + N:R + 2 * N].reshape(L, S, N)

        # ---- hoisted scan precompute (batched, whole-slab stores): nothing
        # state-independent is left inside the sequential loop ----
        delta4 = delta.reshape(L, S, d_inner)[:, :, None, :]  # (L,S,1,Di)
        du4 = du.reshape(L, S, d_inner)[:, :, None, :]
        a4 = a_t_ref[...][None, None, :, :]                   # (1,1,N,Di)
        decay_sr[...] = jnp.exp(delta4 * a4)                  # exp(delta * A)
        inp_sr[...] = du4 * b3[:, :, :, None]                 # (delta * u) * B

        # ---- selective scan: per-step critical path is one fused multiply-add
        # over full (8,128) vregs; states are stashed for the deferred C-dot ----
        state_sr[...] = jnp.zeros_like(state_sr)

        @pl.loop(0, L)
        def _scan(t):
            st = decay_sr[t] * state_sr[...] + inp_sr[t]
            state_sr[...] = st
            st_sr[t] = st

        # ---- deferred C contraction (one batched reduce), D skip, z gate ----
        y3 = jnp.sum(st_sr[...] * c3[:, :, :, None], axis=2)  # (L, S, Di)
        y = y3.reshape(T, d_inner) + d_skip_ref[...] * u
        y = y * _silu(z)

        # ---- out_proj: forward rows use W_out, backward rows use the column-
        # flipped copy (folds flip(mamba(flip(x)), -1) into the weight) ----
        out_f = mm(y, wo_f_ref[...]).reshape(L, S, d_model)
        out_b = mm(y, wo_b_ref[...]).reshape(L, S, d_model)
        prod = out_f[:, :half, :] * out_b[:, half:, :]        # 8-aligned slices

        # ---- post-RMSNorm + residual (residual = raw forward tokens) ----
        ms2 = jnp.mean(prod * prod, axis=-1, keepdims=True)
        blk = (prod * jax.lax.rsqrt(ms2 + RMS_EPS) * wpost_ref[...]
               + tok3[:, :half, :])                           # (L, half, D)

        # ---- bilinear upsample: one lane-dense matmul against (Rh (x) Rw)^T ----
        out_ref[...] = mm(blk.reshape(L * half, d_model), k_up_ref[...])

    return kernel


# ================================ host-side pieces ================================
def _bilinear_matrix(out_size, in_size):
    """1D weights matching F.interpolate(mode='bilinear', align_corners=False)."""
    scale = in_size / out_size
    o = np.arange(out_size)
    src = np.maximum((o + 0.5) * scale - 0.5, 0.0)
    i0 = np.minimum(np.floor(src).astype(np.int64), in_size - 1)
    i1 = np.minimum(i0 + 1, in_size - 1)
    w1 = (src - i0).astype(np.float32)
    w0 = 1.0 - w1
    mat = np.zeros((out_size, in_size), dtype=np.float32)
    np.add.at(mat, (o, i0), w0)
    np.add.at(mat, (o, i1), w1)
    return mat


def mamba_block_forward(x, p):
    """x: (B, ch_in, H, W) float32, NCHW -- same layout as the PyTorch module."""
    f32 = jnp.float32
    cdt = MATMUL_DTYPE
    b, c, h, w = x.shape
    patch = 8
    ph, pw = h // patch, w // patch
    ntap = patch * patch
    d_model = ph * pw
    dims = p["dims"]
    assert d_model == dims["d_model"], "module requires (H//8)*(W//8) == ps**2"
    d_inner, d_state = dims["d_inner"], dims["d_state"]
    d_conv, dt_rank = dims["d_conv"], dims["dt_rank"]

    L = c                                    # Mamba sequence axis = channel axis
    half = ((b + 7) // 8) * 8                # each direction padded to 8 sublanes
    S = 2 * half                             # packed scan sequences (fwd + bwd)

    # ---- depthwise 8x8/stride-8 patch conv + fwd / feature-flipped-bwd token
    # packing: ~2 MFLOP, left to plain XLA (no separate pallas_call). ----
    xp = (x.reshape(b, c, ph, patch, pw, patch)
            .transpose(0, 1, 3, 5, 2, 4)
            .reshape(b, c, ntap, d_model))
    w2d = p["conv2d_w"].reshape(c, ntap)
    seq = jnp.einsum('bckp,ck->bcp', xp, w2d)          # (B, C, D)
    seq = jnp.transpose(seq, (1, 0, 2))                # (C, B, D), time-major
    zrow = jnp.zeros((c, half - b, d_model), f32)
    tok = jnp.concatenate([seq, zrow, seq[:, :, ::-1], zrow], axis=1)   # (C, S, D)

    # ---- parameter layout prep (matmul weights optionally bf16) ----
    norm_w = p["norm_w"]
    nw = jnp.concatenate([jnp.broadcast_to(norm_w, (half, d_model)),
                          jnp.broadcast_to(norm_w[::-1], (half, d_model))],
                         axis=0)                       # (S, D) pre-norm weights
    w_post = norm_w.reshape(1, d_model)
    w_in_t = p["in_proj_w"].T.astype(cdt)              # (D, 2*Di)
    conv_w = p["conv1d_w"].T                           # (d_conv, Di)
    conv_b = p["conv1d_b"].reshape(1, d_inner)
    w_x_t = p["x_proj_w"].T.astype(cdt)                # (Di, R + 2N)
    w_dt_t = p["dt_proj_w"].T.astype(cdt)              # (R, Di)
    b_dt = p["dt_proj_b"].reshape(1, d_inner)
    a_t = (-jnp.exp(p["A_log"])).T                     # (N, Di), streamed unexpanded
    d_skip = p["D"].reshape(1, d_inner)
    wo_t = p["out_proj_w"].T                           # (Di, D)
    wo_f = wo_t.astype(cdt)
    wo_b = wo_t[:, ::-1].astype(cdt)                   # backward feature flip folded in
    k_up = jnp.asarray(
        np.kron(_bilinear_matrix(h, ph), _bilinear_matrix(w, pw)).T
    ).astype(cdt)                                      # (D, H*W) Kronecker upsample

    kernel = _make_fused_kernel(
        d_model=d_model, d_inner=d_inner, d_state=d_state, d_conv=d_conv,
        dt_rank=dt_rank, seq_len=L, n_seq=S, half=half, compute_dtype=cdt)

    vspec = pl.BlockSpec(memory_space=pltpu.MemorySpace.VMEM)
    out = pl.pallas_call(
        kernel,
        out_shape=jax.ShapeDtypeStruct((L * half, h * w), f32),
        in_specs=[vspec] * 14,
        out_specs=vspec,
        scratch_shapes=[
            pltpu.VMEM((L, S, d_state, d_inner), f32),   # decay_t = exp(delta*A)
            pltpu.VMEM((L, S, d_state, d_inner), f32),   # inp_t   = (delta*u)*B
            pltpu.VMEM((L, S, d_state, d_inner), f32),   # per-step scan states
            pltpu.VMEM((S, d_state, d_inner), f32),      # running scan state
        ],
    )(tok, nw, w_post, w_in_t, conv_w, conv_b, w_x_t, w_dt_t, b_dt,
      a_t, d_skip, wo_f, wo_b, k_up)

    # rows are (channel, padded-batch); keep the valid forward rows only.
    out = out.reshape(L, half, h, w)[:, :b]            # (C, B, H, W)
    return jnp.transpose(out, (1, 0, 2, 3))            # (B, C, H, W)


# ============================== parameter construction ============================
def init_params(key, ch_in, ps, d_state=16, d_conv=4, expand=2,
                dt_min=1e-3, dt_max=1e-1, dt_init_floor=1e-4):
    d_model = ps * ps
    d_inner = int(expand * d_model)
    dt_rank = math.ceil(d_model / 16)
    ks = jax.random.split(key, 8)

    def u(k, shape, scale):
        return jax.random.uniform(k, shape, jnp.float32, -scale, scale)

    p = {}
    p["conv2d_w"] = u(ks[0], (ch_in, 8, 8), 1.0 / 8.0)     # depthwise 8x8 patch conv
    p["norm_w"] = jnp.ones((d_model,), jnp.float32)
    p["in_proj_w"] = u(ks[1], (2 * d_inner, d_model), 1.0 / math.sqrt(d_model))
    p["conv1d_w"] = u(ks[2], (d_inner, d_conv), 1.0 / math.sqrt(d_conv))
    p["conv1d_b"] = u(ks[3], (d_inner,), 1.0 / math.sqrt(d_conv))
    p["x_proj_w"] = u(ks[4], (dt_rank + 2 * d_state, d_inner), 1.0 / math.sqrt(d_inner))
    dt_init_std = dt_rank ** (-0.5)
    p["dt_proj_w"] = u(ks[5], (d_inner, dt_rank), dt_init_std)
    dt = jnp.exp(jax.random.uniform(ks[6], (d_inner,), jnp.float32)
                 * (math.log(dt_max) - math.log(dt_min)) + math.log(dt_min))
    dt = jnp.maximum(dt, dt_init_floor)
    p["dt_proj_b"] = dt + jnp.log(-jnp.expm1(-dt))          # softplus inverse
    p["A_log"] = jnp.log(jnp.broadcast_to(
        jnp.arange(1, d_state + 1, dtype=jnp.float32), (d_inner, d_state)))
    p["D"] = jnp.ones((d_inner,), jnp.float32)
    p["out_proj_w"] = u(ks[7], (d_model, d_inner), 1.0 / math.sqrt(d_inner))
    p["dims"] = dict(d_model=d_model, d_inner=d_inner, d_state=d_state,
                     d_conv=d_conv, dt_rank=dt_rank)
    return p


if __name__ == "__main__":
    ch_in, ps = 4, 8            # d_model = ps**2 = 64, Mamba sequence length = ch_in
    batch = 2
    h = w = 8 * ps              # module requires (H//8)*(W//8) == ps**2

    root = jax.random.PRNGKey(0)
    k_x, k_p = jax.random.split(root)
    x = jax.random.normal(k_x, (batch, ch_in, h, w), jnp.float32)
    params = init_params(k_p, ch_in, ps)

    fwd = jax.jit(lambda v: mamba_block_forward(v, params))
    out = jax.block_until_ready(fwd(x))
    assert out.shape == (batch, ch_in, h, w), out.shape
    assert bool(jnp.all(jnp.isfinite(out)))
    print("KERNEL_OK")
</pallas_src>

<mosaic_0001>
module attributes {stable_mosaic.version = 11 : i64} {
  func.func @kernel(%arg0: memref<4x16x64xf32, #tpu.memory_space<vmem>>, %arg1: memref<16x64xf32, #tpu.memory_space<vmem>>, %arg2: memref<1x64xf32, #tpu.memory_space<vmem>>, %arg3: memref<64x256xbf16, #tpu.memory_space<vmem>>, %arg4: memref<4x128xf32, #tpu.memory_space<vmem>>, %arg5: memref<1x128xf32, #tpu.memory_space<vmem>>, %arg6: memref<128x36xbf16, #tpu.memory_space<vmem>>, %arg7: memref<4x128xbf16, #tpu.memory_space<vmem>>, %arg8: memref<1x128xf32, #tpu.memory_space<vmem>>, %arg9: memref<16x128xf32, #tpu.memory_space<vmem>>, %arg10: memref<1x128xf32, #tpu.memory_space<vmem>>, %arg11: memref<128x64xbf16, #tpu.memory_space<vmem>>, %arg12: memref<128x64xbf16, #tpu.memory_space<vmem>>, %arg13: memref<64x4096xbf16, #tpu.memory_space<vmem>>, %arg14: memref<32x4096xf32, #tpu.memory_space<vmem>>, %arg15: memref<4x16x16x128xf32, #tpu.memory_space<vmem>>, %arg16: memref<4x16x16x128xf32, #tpu.memory_space<vmem>>, %arg17: memref<4x16x16x128xf32, #tpu.memory_space<vmem>>, %arg18: memref<16x16x128xf32, #tpu.memory_space<vmem>>) attributes {dimension_semantics = [], scalar_prefetch = 0 : i64, scratch_operands = 4 : i64, tpu.core_type = #tpu.core_type<tc>} {
    %c0 = arith.constant 0 : index
    %c0_0 = arith.constant 0 : index
    %c0_1 = arith.constant 0 : index
    %0 = vector.load %arg0[%c0, %c0_0, %c0_1] : memref<4x16x64xf32, #tpu.memory_space<vmem>>, vector<4x16x64xf32>
    %1 = arith.mulf %0, %0 : vector<4x16x64xf32>
    %cst = arith.constant dense<0.000000e+00> : vector<4x16xf32>
    %2 = vector.multi_reduction <add>, %1, %cst [2] : vector<4x16x64xf32> to vector<4x16xf32>
    %3 = vector.shape_cast %2 : vector<4x16xf32> to vector<4x16x1xf32>
    %cst_2 = arith.constant 6.400000e+01 : f32
    %4 = vector.broadcast %cst_2 : f32 to vector<4x16x1xf32>
    %5 = arith.divf %3, %4 : vector<4x16x1xf32>
    %cst_3 = arith.constant 9.99999974E-6 : f32
    %6 = vector.broadcast %cst_3 : f32 to vector<4x16x1xf32>
    %7 = arith.addf %5, %6 : vector<4x16x1xf32>
    %8 = math.rsqrt %7 : vector<4x16x1xf32>
    %9 = vector.broadcast %8 : vector<4x16x1xf32> to vector<4x16x64xf32>
    %10 = arith.mulf %0, %9 : vector<4x16x64xf32>
    %c0_4 = arith.constant 0 : index
    %c0_5 = arith.constant 0 : index
    %11 = vector.load %arg1[%c0_4, %c0_5] : memref<16x64xf32, #tpu.memory_space<vmem>>, vector<16x64xf32>
    %12 = vector.shape_cast %11 : vector<16x64xf32> to vector<1x16x64xf32>
    %13 = vector.broadcast %12 : vector<1x16x64xf32> to vector<4x16x64xf32>
    %14 = arith.mulf %10, %13 : vector<4x16x64xf32>
    %15 = vector.shape_cast %14 : vector<4x16x64xf32> to vector<64x64xf32>
    %c0_6 = arith.constant 0 : index
    %c0_7 = arith.constant 0 : index
    %16 = vector.load %arg3[%c0_6, %c0_7] : memref<64x256xbf16, #tpu.memory_space<vmem>>, vector<64x256xbf16>
    %17 = arith.truncf %15 : vector<64x64xf32> to vector<64x64xbf16>
    %cst_8 = arith.constant dense<0.000000e+00> : vector<64x256xf32>
    %18 = tpu.matmul %17, %16, %cst_8 {dimension_numbers = #tpu.dot_dimension_numbers<[1], [0], [0], [1], [0, 0, 1, 1], [], []>} : vector<64x64xbf16>, vector<64x256xbf16>, vector<64x256xf32> -> vector<64x256xf32>
    %19 = vector.extract_strided_slice %18 {offsets = [0, 0], sizes = [64, 128], strides = [1, 1]} : vector<64x256xf32> to vector<64x128xf32>
    %20 = vector.extract_strided_slice %18 {offsets = [0, 128], sizes = [64, 128], strides = [1, 1]} : vector<64x256xf32> to vector<64x128xf32>
    %cst_9 = arith.constant 0.000000e+00 : f32
    %21 = vector.broadcast %cst_9 : f32 to vector<48x128xf32>
    %22 = tpu.concatenate %21, %19 in 0 : vector<48x128xf32>, vector<64x128xf32> -> vector<112x128xf32>
    %cst_10 = arith.constant 0.000000e+00 : f32
    %23 = vector.broadcast %cst_10 : f32 to vector<64x128xf32>
    %c0_11 = arith.constant 0 : index
    %c0_12 = arith.constant 0 : index
    %24 = vector.load %arg4[%c0_11, %c0_12] : memref<4x128xf32, #tpu.memory_space<vmem>>, vector<1x128xf32>
    %25 = vector.extract_strided_slice %22 {offsets = [0, 0], sizes = [64, 128], strides = [1, 1]} : vector<112x128xf32> to vector<64x128xf32>
    %26 = vector.broadcast %24 : vector<1x128xf32> to vector<64x128xf32>
    %27 = arith.mulf %26, %25 : vector<64x128xf32>
    %28 = arith.addf %23, %27 : vector<64x128xf32>
    %c1 = arith.constant 1 : index
    %c0_13 = arith.constant 0 : index
    %29 = vector.load %arg4[%c1, %c0_13] : memref<4x128xf32, #tpu.memory_space<vmem>>, vector<1x128xf32>
    %30 = vector.extract_strided_slice %22 {offsets = [16, 0], sizes = [64, 128], strides = [1, 1]} : vector<112x128xf32> to vector<64x128xf32>
    %31 = vector.broadcast %29 : vector<1x128xf32> to vector<64x128xf32>
    %32 = arith.mulf %31, %30 : vector<64x128xf32>
    %33 = arith.addf %28, %32 : vector<64x128xf32>
    %c2 = arith.constant 2 : index
    %c0_14 = arith.constant 0 : index
    %34 = vector.load %arg4[%c2, %c0_14] : memref<4x128xf32, #tpu.memory_space<vmem>>, vector<1x128xf32>
    %35 = vector.extract_strided_slice %22 {offsets = [32, 0], sizes = [64, 128], strides = [1, 1]} : vector<112x128xf32> to vector<64x128xf32>
    %36 = vector.broadcast %34 : vector<1x128xf32> to vector<64x128xf32>
    %37 = arith.mulf %36, %35 : vector<64x128xf32>
    %38 = arith.addf %33, %37 : vector<64x128xf32>
    %c3 = arith.constant 3 : index
    %c0_15 = arith.constant 0 : index
    %39 = vector.load %arg4[%c3, %c0_15] : memref<4x128xf32, #tpu.memory_space<vmem>>, vector<1x128xf32>
    %40 = vector.extract_strided_slice %22 {offsets = [48, 0], sizes = [64, 128], strides = [1, 1]} : vector<112x128xf32> to vector<64x128xf32>
    %41 = vector.broadcast %39 : vector<1x128xf32> to vector<64x128xf32>
    %42 = arith.mulf %41, %40 : vector<64x128xf32>
    %43 = arith.addf %38, %42 : vector<64x128xf32>
    %c0_16 = arith.constant 0 : index
    %c0_17 = arith.constant 0 : index
    %44 = vector.load %arg5[%c0_16, %c0_17] : memref<1x128xf32, #tpu.memory_space<vmem>>, vector<1x128xf32>
    %45 = vector.broadcast %44 : vector<1x128xf32> to vector<64x128xf32>
    %46 = arith.addf %43, %45 : vector<64x128xf32>
    %47 = arith.negf %46 : vector<64x128xf32>
    %48 = math.exp %47 : vector<64x128xf32>
    %cst_18 = arith.constant 1.000000e+00 : f32
    %49 = vector.broadcast %cst_18 : f32 to vector<64x128xf32>
    %50 = arith.addf %49, %48 : vector<64x128xf32>
    %51 = arith.divf %49, %50 : vector<64x128xf32>
    %52 = arith.mulf %46, %51 : vector<64x128xf32>
    %c0_19 = arith.constant 0 : index
    %c0_20 = arith.constant 0 : index
    %53 = vector.load %arg6[%c0_19, %c0_20] : memref<128x36xbf16, #tpu.memory_space<vmem>>, vector<128x36xbf16>
    %54 = arith.truncf %52 : vector<64x128xf32> to vector<64x128xbf16>
    %cst_21 = arith.constant dense<0.000000e+00> : vector<64x36xf32>
    %55 = tpu.matmul %54, %53, %cst_21 {dimension_numbers = #tpu.dot_dimension_numbers<[1], [0], [0], [1], [0, 0, 1, 1], [], []>} : vector<64x128xbf16>, vector<128x36xbf16>, vector<64x36xf32> -> vector<64x36xf32>
    %56 = vector.extract_strided_slice %55 {offsets = [0, 0], sizes = [64, 4], strides = [1, 1]} : vector<64x36xf32> to vector<64x4xf32>
    %c0_22 = arith.constant 0 : index
    %c0_23 = arith.constant 0 : index
    %57 = vector.load %arg7[%c0_22, %c0_23] : memref<4x128xbf16, #tpu.memory_space<vmem>>, vector<4x128xbf16>
    %58 = arith.truncf %56 : vector<64x4xf32> to vector<64x4xbf16>
    %cst_24 = arith.constant dense<0.000000e+00> : vector<64x128xf32>
    %59 = tpu.matmul %58, %57, %cst_24 {dimension_numbers = #tpu.dot_dimension_numbers<[1], [0], [0], [1], [0, 0, 1, 1], [], []>} : vector<64x4xbf16>, vector<4x128xbf16>, vector<64x128xf32> -> vector<64x128xf32>
    %c0_25 = arith.constant 0 : index
    %c0_26 = arith.constant 0 : index
    %60 = vector.load %arg8[%c0_25, %c0_26] : memref<1x128xf32, #tpu.memory_space<vmem>>, vector<1x128xf32>
    %61 = vector.broadcast %60 : vector<1x128xf32> to vector<64x128xf32>
    %62 = arith.addf %59, %61 : vector<64x128xf32>
    %cst_27 = arith.constant 2.000000e+01 : f32
    %63 = vector.broadcast %cst_27 : f32 to vector<64x128xf32>
    %64 = arith.cmpf ogt, %62, %63 : vector<64x128xf32>
    %cst_28 = arith.constant 2.000000e+01 : f32
    %65 = vector.broadcast %cst_28 : f32 to vector<64x128xf32>
    %66 = arith.minimumf %62, %65 : vector<64x128xf32>
    %67 = math.exp %66 : vector<64x128xf32>
    %68 = math.log1p %67 : vector<64x128xf32>
    %69 = arith.select %64, %62, %68 : vector<64x128xi1>, vector<64x128xf32>
    %70 = arith.mulf %69, %52 : vector<64x128xf32>
    %71 = vector.extract_strided_slice %55 {offsets = [0, 4], sizes = [64, 16], strides = [1, 1]} : vector<64x36xf32> to vector<64x16xf32>
    %72 = vector.shape_cast %71 : vector<64x16xf32> to vector<4x16x16xf32>
    %73 = vector.extract_strided_slice %55 {offsets = [0, 20], sizes = [64, 16], strides = [1, 1]} : vector<64x36xf32> to vector<64x16xf32>
    %74 = vector.shape_cast %73 : vector<64x16xf32> to vector<4x16x16xf32>
    %75 = vector.shape_cast %69 : vector<64x128xf32> to vector<4x16x128xf32>
    %76 = vector.shape_cast %75 : vector<4x16x128xf32> to vector<4x16x1x128xf32>
    %77 = vector.shape_cast %70 : vector<64x128xf32> to vector<4x16x128xf32>
    %78 = vector.shape_cast %77 : vector<4x16x128xf32> to vector<4x16x1x128xf32>
    %c0_29 = arith.constant 0 : index
    %c0_30 = arith.constant 0 : index
    %79 = vector.load %arg9[%c0_29, %c0_30] : memref<16x128xf32, #tpu.memory_space<vmem>>, vector<16x128xf32>
    %80 = vector.shape_cast %79 : vector<16x128xf32> to vector<1x1x16x128xf32>
    %81 = vector.broadcast %76 : vector<4x16x1x128xf32> to vector<4x16x16x128xf32>
    %82 = vector.broadcast %80 : vector<1x1x16x128xf32> to vector<4x16x16x128xf32>
    %83 = arith.mulf %81, %82 : vector<4x16x16x128xf32>
    %84 = math.exp %83 : vector<4x16x16x128xf32>
    %c0_31 = arith.constant 0 : index
    %c0_32 = arith.constant 0 : index
    %c0_33 = arith.constant 0 : index
    %c0_34 = arith.constant 0 : index
    %85 = vector.load %arg15[%c0_31, %c0_32, %c0_33, %c0_34] : memref<4x16x16x128xf32, #tpu.memory_space<vmem>>, vector<4x16x16x128xf32>
    tpu.vector_store %arg15[%c0_31, %c0_32, %c0_33, %c0_34], %84 {strides = array<i32>} : memref<4x16x16x128xf32, #tpu.memory_space<vmem>>, vector<4x16x16x128xf32>,
    %86 = vector.shape_cast %72 : vector<4x16x16xf32> to vector<4x16x16x1xf32>
    %87 = vector.broadcast %78 : vector<4x16x1x128xf32> to vector<4x16x16x128xf32>
    %88 = vector.broadcast %86 : vector<4x16x16x1xf32> to vector<4x16x16x128xf32>
    %89 = arith.mulf %87, %88 : vector<4x16x16x128xf32>
    %c0_35 = arith.constant 0 : index
    %c0_36 = arith.constant 0 : index
    %c0_37 = arith.constant 0 : index
    %c0_38 = arith.constant 0 : index
    %90 = vector.load %arg16[%c0_35, %c0_36, %c0_37, %c0_38] : memref<4x16x16x128xf32, #tpu.memory_space<vmem>>, vector<4x16x16x128xf32>
    tpu.vector_store %arg16[%c0_35, %c0_36, %c0_37, %c0_38], %89 {strides = array<i32>} : memref<4x16x16x128xf32, #tpu.memory_space<vmem>>, vector<4x16x16x128xf32>,
    %cst_39 = arith.constant 0.000000e+00 : f32
    %91 = vector.broadcast %cst_39 : f32 to vector<16x16x128xf32>
    %c0_40 = arith.constant 0 : index
    %c0_41 = arith.constant 0 : index
    %c0_42 = arith.constant 0 : index
    %92 = vector.load %arg18[%c0_40, %c0_41, %c0_42] : memref<16x16x128xf32, #tpu.memory_space<vmem>>, vector<16x16x128xf32>
    tpu.vector_store %arg18[%c0_40, %c0_41, %c0_42], %91 {strides = array<i32>} : memref<16x16x128xf32, #tpu.memory_space<vmem>>, vector<16x16x128xf32>,
    %c0_i32 = arith.constant 0 : i32
    %c4_i32 = arith.constant 4 : i32
    %93 = arith.addi %c0_i32, %c4_i32 : i32
    %c1_i32 = arith.constant 1 : i32
    scf.for %arg19 = %c0_i32 to %93 step %c1_i32  : i32 {
      %c1_i32_68 = arith.constant 1 : i32
      %143 = arith.muli %arg19, %c1_i32_68 : i32
      %c0_i32_69 = arith.constant 0 : i32
      %144 = arith.addi %c0_i32_69, %143 : i32
      %145 = arith.index_cast %144 : i32 to index
      %c0_70 = arith.constant 0 : index
      %c0_71 = arith.constant 0 : index
      %c0_72 = arith.constant 0 : index
      %146 = vector.load %arg15[%145, %c0_70, %c0_71, %c0_72] : memref<4x16x16x128xf32, #tpu.memory_space<vmem>>, vector<1x16x16x128xf32>
      %147 = vector.shape_cast %146 : vector<1x16x16x128xf32> to vector<16x16x128xf32>
      %c0_73 = arith.constant 0 : index
      %c0_74 = arith.constant 0 : index
      %c0_75 = arith.constant 0 : index
      %148 = vector.load %arg18[%c0_73, %c0_74, %c0_75] : memref<16x16x128xf32, #tpu.memory_space<vmem>>, vector<16x16x128xf32>
      %149 = arith.mulf %147, %148 : vector<16x16x128xf32>
      %150 = arith.index_cast %144 : i32 to index
      %c0_76 = arith.constant 0 : index
      %c0_77 = arith.constant 0 : index
      %c0_78 = arith.constant 0 : index
      %151 = vector.load %arg16[%150, %c0_76, %c0_77, %c0_78] : memref<4x16x16x128xf32, #tpu.memory_space<vmem>>, vector<1x16x16x128xf32>
      %152 = vector.shape_cast %151 : vector<1x16x16x128xf32> to vector<16x16x128xf32>
      %153 = arith.addf %149, %152 : vector<16x16x128xf32>
      %c0_79 = arith.constant 0 : index
      %c0_80 = arith.constant 0 : index
      %c0_81 = arith.constant 0 : index
      %154 = vector.load %arg18[%c0_79, %c0_80, %c0_81] : memref<16x16x128xf32, #tpu.memory_space<vmem>>, vector<16x16x128xf32>
      tpu.vector_store %arg18[%c0_79, %c0_80, %c0_81], %153 {strides = array<i32>} : memref<16x16x128xf32, #tpu.memory_space<vmem>>, vector<16x16x128xf32>,
      %155 = arith.index_cast %144 : i32 to index
      %c0_82 = arith.constant 0 : index
      %c0_83 = arith.constant 0 : index
      %c0_84 = arith.constant 0 : index
      %156 = vector.load %arg17[%155, %c0_82, %c0_83, %c0_84] : memref<4x16x16x128xf32, #tpu.memory_space<vmem>>, vector<1x16x16x128xf32>
      %157 = vector.shape_cast %156 : vector<1x16x16x128xf32> to vector<16x16x128xf32>
      %158 = vector.shape_cast %153 : vector<16x16x128xf32> to vector<1x16x16x128xf32>
      tpu.vector_store %arg17[%155, %c0_82, %c0_83, %c0_84], %158 {strides = array<i32>} : memref<4x16x16x128xf32, #tpu.memory_space<vmem>>, vector<1x16x16x128xf32>,
    }
    %c4_i32_43 = arith.constant 4 : i32
    %c0_44 = arith.constant 0 : index
    %c0_45 = arith.constant 0 : index
    %c0_46 = arith.constant 0 : index
    %c0_47 = arith.constant 0 : index
    %94 = vector.load %arg17[%c0_44, %c0_45, %c0_46, %c0_47] : memref<4x16x16x128xf32, #tpu.memory_space<vmem>>, vector<4x16x16x128xf32>
    %95 = vector.shape_cast %74 : vector<4x16x16xf32> to vector<4x16x16x1xf32>
    %96 = vector.broadcast %95 : vector<4x16x16x1xf32> to vector<4x16x16x128xf32>
    %97 = arith.mulf %94, %96 : vector<4x16x16x128xf32>
    %cst_48 = arith.constant dense<0.000000e+00> : vector<4x16x128xf32>
    %98 = vector.multi_reduction <add>, %97, %cst_48 [2] : vector<4x16x16x128xf32> to vector<4x16x128xf32>
    %99 = vector.shape_cast %98 : vector<4x16x128xf32> to vector<64x128xf32>
    %c0_49 = arith.constant 0 : index
    %c0_50 = arith.constant 0 : index
    %100 = vector.load %arg10[%c0_49, %c0_50] : memref<1x128xf32, #tpu.memory_space<vmem>>, vector<1x128xf32>
    %101 = vector.broadcast %100 : vector<1x128xf32> to vector<64x128xf32>
    %102 = arith.mulf %101, %52 : vector<64x128xf32>
    %103 = arith.addf %99, %102 : vector<64x128xf32>
    %104 = arith.negf %20 : vector<64x128xf32>
    %105 = math.exp %104 : vector<64x128xf32>
    %cst_51 = arith.constant 1.000000e+00 : f32
    %106 = vector.broadcast %cst_51 : f32 to vector<64x128xf32>
    %107 = arith.addf %106, %105 : vector<64x128xf32>
    %108 = arith.divf %106, %107 : vector<64x128xf32>
    %109 = arith.mulf %20, %108 : vector<64x128xf32>
    %110 = arith.mulf %103, %109 : vector<64x128xf32>
    %c0_52 = arith.constant 0 : index
    %c0_53 = arith.constant 0 : index
    %111 = vector.load %arg11[%c0_52, %c0_53] : memref<128x64xbf16, #tpu.memory_space<vmem>>, vector<128x64xbf16>
    %112 = arith.truncf %110 : vector<64x128xf32> to vector<64x128xbf16>
    %cst_54 = arith.constant dense<0.000000e+00> : vector<64x64xf32>
    %113 = tpu.matmul %112, %111, %cst_54 {dimension_numbers = #tpu.dot_dimension_numbers<[1], [0], [0], [1], [0, 0, 1, 1], [], []>} : vector<64x128xbf16>, vector<128x64xbf16>, vector<64x64xf32> -> vector<64x64xf32>
    %114 = vector.shape_cast %113 : vector<64x64xf32> to vector<4x16x64xf32>
    %c0_55 = arith.constant 0 : index
    %c0_56 = arith.constant 0 : index
    %115 = vector.load %arg12[%c0_55, %c0_56] : memref<128x64xbf16, #tpu.memory_space<vmem>>, vector<128x64xbf16>
    %116 = arith.truncf %110 : vector<64x128xf32> to vector<64x128xbf16>
    %cst_57 = arith.constant dense<0.000000e+00> : vector<64x64xf32>
    %117 = tpu.matmul %116, %115, %cst_57 {dimension_numbers = #tpu.dot_dimension_numbers<[1], [0], [0], [1], [0, 0, 1, 1], [], []>} : vector<64x128xbf16>, vector<128x64xbf16>, vector<64x64xf32> -> vector<64x64xf32>
    %118 = vector.shape_cast %117 : vector<64x64xf32> to vector<4x16x64xf32>
    %119 = vector.extract_strided_slice %114 {offsets = [0, 0, 0], sizes = [4, 8, 64], strides = [1, 1, 1]} : vector<4x16x64xf32> to vector<4x8x64xf32>
    %120 = vector.extract_strided_slice %118 {offsets = [0, 8, 0], sizes = [4, 8, 64], strides = [1, 1, 1]} : vector<4x16x64xf32> to vector<4x8x64xf32>
    %121 = arith.mulf %119, %120 : vector<4x8x64xf32>
    %122 = arith.mulf %121, %121 : vector<4x8x64xf32>
    %cst_58 = arith.constant dense<0.000000e+00> : vector<4x8xf32>
    %123 = vector.multi_reduction <add>, %122, %cst_58 [2] : vector<4x8x64xf32> to vector<4x8xf32>
    %124 = vector.shape_cast %123 : vector<4x8xf32> to vector<4x8x1xf32>
    %cst_59 = arith.constant 6.400000e+01 : f32
    %125 = vector.broadcast %cst_59 : f32 to vector<4x8x1xf32>
    %126 = arith.divf %124, %125 : vector<4x8x1xf32>
    %cst_60 = arith.constant 9.99999974E-6 : f32
    %127 = vector.broadcast %cst_60 : f32 to vector<4x8x1xf32>
    %128 = arith.addf %126, %127 : vector<4x8x1xf32>
    %129 = math.rsqrt %128 : vector<4x8x1xf32>
    %130 = vector.broadcast %129 : vector<4x8x1xf32> to vector<4x8x64xf32>
    %131 = arith.mulf %121, %130 : vector<4x8x64xf32>
    %c0_61 = arith.constant 0 : index
    %c0_62 = arith.constant 0 : index
    %132 = vector.load %arg2[%c0_61, %c0_62] : memref<1x64xf32, #tpu.memory_space<vmem>>, vector<1x64xf32>
    %133 = vector.shape_cast %132 : vector<1x64xf32> to vector<1x1x64xf32>
    %134 = vector.broadcast %133 : vector<1x1x64xf32> to vector<4x8x64xf32>
    %135 = arith.mulf %131, %134 : vector<4x8x64xf32>
    %136 = vector.extract_strided_slice %0 {offsets = [0, 0, 0], sizes = [4, 8, 64], strides = [1, 1, 1]} : vector<4x16x64xf32> to vector<4x8x64xf32>
    %137 = arith.addf %135, %136 : vector<4x8x64xf32>
    %138 = vector.shape_cast %137 : vector<4x8x64xf32> to vector<32x64xf32>
    %c0_63 = arith.constant 0 : index
    %c0_64 = arith.constant 0 : index
    %139 = vector.load %arg13[%c0_63, %c0_64] : memref<64x4096xbf16, #tpu.memory_space<vmem>>, vector<64x4096xbf16>
    %140 = arith.truncf %138 : vector<32x64xf32> to vector<32x64xbf16>
    %cst_65 = arith.constant dense<0.000000e+00> : vector<32x4096xf32>
    %141 = tpu.matmul %140, %139, %cst_65 {dimension_numbers = #tpu.dot_dimension_numbers<[1], [0], [0], [1], [0, 0, 1, 1], [], []>} : vector<32x64xbf16>, vector<64x4096xbf16>, vector<32x4096xf32> -> vector<32x4096xf32>
    %c0_66 = arith.constant 0 : index
    %c0_67 = arith.constant 0 : index
    %142 = vector.load %arg14[%c0_66, %c0_67] : memref<32x4096xf32, #tpu.memory_space<vmem>>, vector<32x4096xf32>
    tpu.vector_store %arg14[%c0_66, %c0_67], %141 {strides = array<i32>} : memref<32x4096xf32, #tpu.memory_space<vmem>>, vector<32x4096xf32>,
    return
  }
}

</mosaic_0001>

<llo_original>
// kernel: _lambda_.1
$region0: #{_lambda_.1}
  #allocation0 [shape = 'u32[]', space=smem, size = 0x4, offset = 0x4, fixed_abs, tag = 'smem constant byte address 0x4 - core index']
  #allocation1 [shape = 'u32[144,128]{1,0:T(1,128)}', space=vmem, size = 0x12000, scoped, tag = 'internal scratch']
  #allocation2 [shape = 'f32[4,16,16,128]{3,2,1,0:T(8,128)}', space=vmem, size = 0x80000, scoped, tag = 'scratch operand']
  #allocation3 [shape = 'f32[4,16,16,128]{3,2,1,0:T(8,128)}', space=vmem, size = 0x80000, scoped, tag = 'scratch operand']
  #allocation4 [shape = 'f32[4,16,16,128]{3,2,1,0:T(8,128)}', space=vmem, size = 0x80000, scoped, tag = 'scratch operand']
  #allocation5 [shape = 'f32[16,16,128]{2,1,0:T(8,128)}', space=vmem, size = 0x20000, scoped, tag = 'scratch operand']
  %s0 = inlined_call_operand.vmem [shape: f32[4,16,64], index: 0, kind: input, shape index: {}]
  %s1 = inlined_call_operand.vmem [shape: f32[16,64], index: 1, kind: input, shape index: {}]
  %s2 = inlined_call_operand.vmem [shape: f32[1,64], index: 2, kind: input, shape index: {}]
  %s3 = inlined_call_operand.vmem [shape: bf16[64,256], index: 3, kind: input, shape index: {}]
  %s4 = inlined_call_operand.vmem [shape: f32[4,128], index: 4, kind: input, shape index: {}]
  %s5 = inlined_call_operand.vmem [shape: f32[1,128], index: 5, kind: input, shape index: {}]
  %s6 = inlined_call_operand.vmem [shape: bf16[128,36], index: 6, kind: input, shape index: {}]
  %s7 = inlined_call_operand.vmem [shape: bf16[4,128], index: 7, kind: input, shape index: {}]
  %s8 = inlined_call_operand.vmem [shape: f32[1,128], index: 8, kind: input, shape index: {}]
  %s9 = inlined_call_operand.vmem [shape: f32[16,128], index: 9, kind: input, shape index: {}]
  %s10 = inlined_call_operand.vmem [shape: f32[1,128], index: 10, kind: input, shape index: {}]
  %s11 = inlined_call_operand.vmem [shape: bf16[128,64], index: 11, kind: input, shape index: {}]
  %s12 = inlined_call_operand.vmem [shape: bf16[128,64], index: 12, kind: input, shape index: {}]
  %s13 = inlined_call_operand.vmem [shape: bf16[64,4096], index: 13, kind: input, shape index: {}]
  %s14 = inlined_call_operand.vmem [shape: f32[32,4096], index: 14, kind: output, shape index: {}]
  %s15 = sld [smem:[#allocation0]]
  $region73: #{_lambda_.1} parent=0
    _
  %s17 = ssub.s32 1, %s15
  %s18 = scalar_select 0, %s17, %s15
  // Predicated region
  $region2: #{_lambda_.1} parent=0 // pred_check
    _
  $region3: #{_lambda_.1} parent=0 // pred_check_branch
    %20 = sbr.rel (0) target = $region5
  $region4: #{_lambda_.1} parent=0 // pred_region
    _
  $region5: #{_lambda_.1} parent=0 // pred_fallthru
    _
  // Predicated region
  $region6: #{_lambda_.1} parent=0 // pred_check
    _
  $region7: #{_lambda_.1} parent=0 // pred_check_branch
    %22 = sbr.rel (0) target = $region9
  $region8: #{_lambda_.1} parent=0 // pred_region
    _
  $region9: #{_lambda_.1} parent=0 // pred_fallthru
    _
  // Predicated region
  $region10: #{_lambda_.1} parent=0 // pred_check
    _
  $region11: #{_lambda_.1} parent=0 // pred_check_branch
    %24 = sbr.rel (0) target = $region13
  $region12: #{_lambda_.1} parent=0 // pred_region
    _
  $region13: #{_lambda_.1} parent=0 // pred_fallthru
    _
  // Predicated region
  $region14: #{_lambda_.1} parent=0 // pred_check
    _
  $region15: #{_lambda_.1} parent=0 // pred_check_branch
    %26 = sbr.rel (0) target = $region17
  $region16: #{_lambda_.1} parent=0 // pred_region
    _
  $region17: #{_lambda_.1} parent=0 // pred_fallthru
    _
  // Predicated region
  $region18: #{_lambda_.1} parent=0 // pred_check
    _
  $region19: #{_lambda_.1} parent=0 // pred_check_branch
    %28 = sbr.rel (0) target = $region21
  $region20: #{_lambda_.1} parent=0 // pred_region
    _
  $region21: #{_lambda_.1} parent=0 // pred_fallthru
    _
  // Predicated region
  $region22: #{_lambda_.1} parent=0 // pred_check
    _
  $region23: #{_lambda_.1} parent=0 // pred_check_branch
    %30 = sbr.rel (0) target = $region25
  $region24: #{_lambda_.1} parent=0 // pred_region
    _
  $region25: #{_lambda_.1} parent=0 // pred_fallthru
    _
  // Predicated region
  $region26: #{_lambda_.1} parent=0 // pred_check
    _
  $region27: #{_lambda_.1} parent=0 // pred_check_branch
    %32 = sbr.rel (0) target = $region29
  $region28: #{_lambda_.1} parent=0 // pred_region
    _
  $region29: #{_lambda_.1} parent=0 // pred_fallthru
    _
  // Predicated region
  $region30: #{_lambda_.1} parent=0 // pred_check
    _
  $region31: #{_lambda_.1} parent=0 // pred_check_branch
    %34 = sbr.rel (0) target = $region33
  $region32: #{_lambda_.1} parent=0 // pred_region
    _
  $region33: #{_lambda_.1} parent=0 // pred_fallthru
    _
  // Predicated region
  $region34: #{_lambda_.1} parent=0 // pred_check
    _
  $region35: #{_lambda_.1} parent=0 // pred_check_branch
    %36 = sbr.rel (0) target = $region37
  $region36: #{_lambda_.1} parent=0 // pred_region
    _
  $region37: #{_lambda_.1} parent=0 // pred_fallthru
    _
  // Predicated region
  $region38: #{_lambda_.1} parent=0 // pred_check
    _
  $region39: #{_lambda_.1} parent=0 // pred_check_branch
    %38 = sbr.rel (0) target = $region41
  $region40: #{_lambda_.1} parent=0 // pred_region
    _
  $region41: #{_lambda_.1} parent=0 // pred_fallthru
    _
  // Predicated region
  $region42: #{_lambda_.1} parent=0 // pred_check
    _
  $region43: #{_lambda_.1} parent=0 // pred_check_branch
    %40 = sbr.rel (0) target = $region45
  $region44: #{_lambda_.1} parent=0 // pred_region
    _
  $region45: #{_lambda_.1} parent=0 // pred_fallthru
    _
  // Predicated region
  $region46: #{_lambda_.1} parent=0 // pred_check
    _
  $region47: #{_lambda_.1} parent=0 // pred_check_branch
    %42 = sbr.rel (0) target = $region49
  $region48: #{_lambda_.1} parent=0 // pred_region
    _
  $region49: #{_lambda_.1} parent=0 // pred_fallthru
    _
  // Predicated region
  $region50: #{_lambda_.1} parent=0 // pred_check
    _
  $region51: #{_lambda_.1} parent=0 // pred_check_branch
    %44 = sbr.rel (0) target = $region53
  $region52: #{_lambda_.1} parent=0 // pred_region
    _
  $region53: #{_lambda_.1} parent=0 // pred_fallthru
    _
  // Predicated region
  $region54: #{_lambda_.1} parent=0 // pred_check
    _
  $region55: #{_lambda_.1} parent=0 // pred_check_branch
    %46 = sbr.rel (0) target = $region57
  $region56: #{_lambda_.1} parent=0 // pred_region
    _
  $region57: #{_lambda_.1} parent=0 // pred_fallthru
    _
  %v48 = vld [vmem:[%s0] sm:$0xff]
  %v49 = vld [vmem:[%s0 + $0x8] sm:$0xff]
  %v50 = vld [vmem:[%s0 + $0x10] sm:$0xff]
  %v51 = vld [vmem:[%s0 + $0x18] sm:$0xff]
  %v52 = vld [vmem:[%s0 + $0x20] sm:$0xff]
  %v53 = vld [vmem:[%s0 + $0x28] sm:$0xff]
  %v54 = vld [vmem:[%s0 + $0x30] sm:$0xff]
  %v55 = vld [vmem:[%s0 + $0x38] sm:$0xff]
  %v56 = vmul.f32 %v48, %v48
  %v57 = vmul.f32 %v49, %v49
  %v58 = vmul.f32 %v50, %v50
  %v59 = vmul.f32 %v51, %v51
  %v60 = vmul.f32 %v52, %v52
  %v61 = vmul.f32 %v53, %v53
  %v62 = vmul.f32 %v54, %v54
  %v63 = vmul.f32 %v55, %v55
  %vm64 = vcmask 523264
  %v65 = vsel %vm64, %v56, 0.0
  %66 = vadd.xlane.f32.xlu0 %v65
  %v67 = vpop.xlane.xlu0 %66
  %v68 = vsel %vm64, %v57, 0.0
  %69 = vadd.xlane.f32.xlu0 %v68
  %v70 = vpop.xlane.xlu0 %69
  %v71 = vsel %vm64, %v58, 0.0
  %72 = vadd.xlane.f32.xlu0 %v71
  %v73 = vpop.xlane.xlu0 %72
  %v74 = vsel %vm64, %v59, 0.0
  %75 = vadd.xlane.f32.xlu0 %v74
  %v76 = vpop.xlane.xlu0 %75
  %v77 = vsel %vm64, %v60, 0.0
  %78 = vadd.xlane.f32.xlu0 %v77
  %v79 = vpop.xlane.xlu0 %78
  %v80 = vsel %vm64, %v61, 0.0
  %81 = vadd.xlane.f32.xlu0 %v80
  %v82 = vpop.xlane.xlu0 %81
  %v83 = vsel %vm64, %v62, 0.0
  %84 = vadd.xlane.f32.xlu0 %v83
  %v85 = vpop.xlane.xlu0 %84
  %v86 = vsel %vm64, %v63, 0.0
  %87 = vadd.xlane.f32.xlu0 %v86
  %v88 = vpop.xlane.xlu0 %87
  %v89 = vrcp.pop 64.0
  %v90 = vmul.f32 %v67, %v89
  %v91 = vmul.f32 %v70, %v89
  %v92 = vmul.f32 %v73, %v89
  %v93 = vmul.f32 %v76, %v89
  %v94 = vmul.f32 %v79, %v89
  %v95 = vmul.f32 %v82, %v89
  %v96 = vmul.f32 %v85, %v89
  %v97 = vmul.f32 %v88, %v89
  %v98 = vadd.f32 %v90, 1e-05
  %v99 = vadd.f32 %v91, 1e-05
  %v100 = vadd.f32 %v92, 1e-05
  %v101 = vadd.f32 %v93, 1e-05
  %v102 = vadd.f32 %v94, 1e-05
  %v103 = vadd.f32 %v95, 1e-05
  %v104 = vadd.f32 %v96, 1e-05
  %v105 = vadd.f32 %v97, 1e-05
  %v106 = vrsqrt.pop %v98
  %v107 = vrsqrt.pop %v99
  %v108 = vrsqrt.pop %v100
  %v109 = vrsqrt.pop %v101
  %v110 = vrsqrt.pop %v102
  %v111 = vrsqrt.pop %v103
  %v112 = vrsqrt.pop %v104
  %v113 = vrsqrt.pop %v105
  %v114 = vmul.f32 %v48, %v106
  %v115 = vmul.f32 %v49, %v107
  %v116 = vmul.f32 %v50, %v108
  %v117 = vmul.f32 %v51, %v109
  %v118 = vmul.f32 %v52, %v110
  %v119 = vmul.f32 %v53, %v111
  %v120 = vmul.f32 %v54, %v112
  %v121 = vmul.f32 %v55, %v113
  %v122 = vld [vmem:[%s1] sm:$0xff]
  %v123 = vld [vmem:[%s1 + $0x8] sm:$0xff]
  %v124 = vmul.f32 %v114, %v122
  %v125 = vmul.f32 %v115, %v123
  %v126 = vmul.f32 %v116, %v122
  %v127 = vmul.f32 %v117, %v123
  %v128 = vmul.f32 %v118, %v122
  %v129 = vmul.f32 %v119, %v123
  %v130 = vmul.f32 %v120, %v122
  %v131 = vmul.f32 %v121, %v123
  %v132 = vld [vmem:[%s3] sm:$0xff]
  %v133 = vld [vmem:[%s3 + $0x8] sm:$0xff]
  %v134 = vld [vmem:[%s3 + $0x10] sm:$0xff]
  %v135 = vld [vmem:[%s3 + $0x18] sm:$0xff]
  %v136 = vld [vmem:[%s3 + $0x20] sm:$0xff]
  %v137 = vld [vmem:[%s3 + $0x28] sm:$0xff]
  %v138 = vld [vmem:[%s3 + $0x30] sm:$0xff]
  %v139 = vld [vmem:[%s3 + $0x38] sm:$0xff]
  %v140 = vpack.c.bf16 %v125, %v124
  %v141 = vpack.c.bf16 %v127, %v126
  %v142 = vpack.c.bf16 %v129, %v128
  %v143 = vpack.c.bf16 %v131, %v130
  %v152 = vunpack.c.l.b16 %v132
  %v153 = vunpack.c.h.b16 %v132
  %v154 = vunpack.c.l.b16 %v133
  %v155 = vunpack.c.h.b16 %v133
  %v156 = vunpack.c.l.b16 %v134
  %v157 = vunpack.c.h.b16 %v134
  %v158 = vunpack.c.l.b16 %v135
  %v159 = vunpack.c.h.b16 %v135
  %v160 = vunpack.c.l.b16 %v136
  %v161 = vunpack.c.h.b16 %v136
  %v162 = vunpack.c.l.b16 %v137
  %v163 = vunpack.c.h.b16 %v137
  %v164 = vunpack.c.l.b16 %v138
  %v165 = vunpack.c.h.b16 %v138
  %v166 = vunpack.c.l.b16 %v139
  %v167 = vunpack.c.h.b16 %v139
  %v168 = vpack.c.b16 %v154, %v152
  %v169 = vpack.c.b16 %v155, %v153
  %v170 = vpack.c.b16 %v158, %v156
  %v171 = vpack.c.b16 %v159, %v157
  %v172 = vpack.c.b16 %v162, %v160
  %v173 = vpack.c.b16 %v163, %v161
  %v174 = vpack.c.b16 %v166, %v164
  %v175 = vpack.c.b16 %v167, %v165
  %v185 = vsel %vm64, %v140, 0
  %v188 = vsel %vm64, %v141, 0
  %v191 = vsel %vm64, %v142, 0
  %v194 = vsel %vm64, %v143, 0
  %196 = vmatprep.subr.bf16.mxu0 %v169
  %197 = vmatpush1.bf16.msra.mxu0 %v168
  %198 = vmatprep.subr.bf16.mxu0 %v171
  %199 = vmatpush1.bf16.msra.mxu0 %v170
  %200 = vmatprep.subr.bf16.mxu0 %v173
  %201 = vmatpush1.bf16.msra.mxu0 %v172
  %202 = vmatprep.subr.bf16.mxu0 %v175
  %203 = vmatpush1.bf16.msra.mxu0 %v174
  %204 = vmatprep.subr.bf16.mxu0 0
  %205 = vmatpush1.bf16.msra.mxu0 0
  %206 = vmatprep.subr.bf16.mxu0 0
  %207 = vmatpush1.bf16.msra.mxu0 0
  %208 = vmatprep.subr.bf16.mxu0 0
  %209 = vmatpush1.bf16.msra.mxu0 0
  %210 = vmatprep.subr.bf16.mxu0 0
  %211 = vmatpush1.bf16.msra.mxu0 0
  %212 = vmatprep.subr.bf16.mxu0 0
  %213 = vmatpush1.bf16.msra.mxu0 0
  %214 = vmatprep.subr.bf16.mxu0 0
  %215 = vmatpush1.bf16.msra.mxu0 0
  %216 = vmatprep.subr.bf16.mxu0 0
  %217 = vmatpush1.bf16.msra.mxu0 0
  %218 = vmatprep.subr.bf16.mxu0 0
  %219 = vmatpush1.bf16.msra.mxu0 0
  %220 = vmatprep.subr.bf16.mxu0 0
  %221 = vmatpush1.bf16.msra.mxu0 0
  %222 = vmatprep.subr.bf16.mxu0 0
  %223 = vmatpush1.bf16.msra.mxu0 0
  %224 = vmatprep.subr.bf16.mxu0 0
  %225 = vmatpush1.bf16.msra.mxu0 0
  %226 = vmatprep.subr.bf16.mxu0 0
  %227 = vmatpush1.bf16.msra.mxu0 0
  %228 = vmatprep.mubr.bf16.mxu0 0
  %229 = vmatmul.mubr.bf16.gmra.mrb[0].mxu0 %v185
  %v230 = vpop.f32.mrb[0].mxu0
  %v231 = vadd.f32 0.0, %v230
  %v232 = vpop.f32.mrb[0].mxu0
  %v233 = vadd.f32 0.0, %v232
  %v234 = vpop.f32.mrb[0].mxu0
  %v235 = vadd.f32 0.0, %v234
  %v236 = vpop.f32.mrb[0].mxu0
  %v237 = vadd.f32 0.0, %v236
  %238 = vmatprep.mubr.bf16.mxu0 0
  %239 = vmatmul.mubr.bf16.gmra.mrb[0].mxu0 %v188
  %v240 = vpop.f32.mrb[0].mxu0
  %v241 = vadd.f32 0.0, %v240
  %v242 = vpop.f32.mrb[0].mxu0
  %v243 = vadd.f32 0.0, %v242
  %v244 = vpop.f32.mrb[0].mxu0
  %v245 = vadd.f32 0.0, %v244
  %v246 = vpop.f32.mrb[0].mxu0
  %v247 = vadd.f32 0.0, %v246
  %248 = vmatprep.mubr.bf16.mxu0 0
  %249 = vmatmul.mubr.bf16.gmra.mrb[0].mxu0 %v191
  %v250 = vpop.f32.mrb[0].mxu0
  %v251 = vadd.f32 0.0, %v250
  %v252 = vpop.f32.mrb[0].mxu0
  %v253 = vadd.f32 0.0, %v252
  %v254 = vpop.f32.mrb[0].mxu0
  %v255 = vadd.f32 0.0, %v254
  %v256 = vpop.f32.mrb[0].mxu0
  %v257 = vadd.f32 0.0, %v256
  %258 = vmatprep.mubr.bf16.mxu0 0
  %259 = vmatmul.mubr.bf16.gmra.mrb[0].mxu0 %v194
  %v260 = vpop.f32.mrb[0].mxu0
  %v261 = vadd.f32 0.0, %v260
  %v262 = vpop.f32.mrb[0].mxu0
  %v263 = vadd.f32 0.0, %v262
  %v264 = vpop.f32.mrb[0].mxu0
  %v265 = vadd.f32 0.0, %v264
  %v266 = vpop.f32.mrb[0].mxu0
  %v267 = vadd.f32 0.0, %v266
  %268 = vdwg.mxu0
  %v269 = vld [vmem:[%s4] sm:$0x1]
  %v270 = vlaneseq
  %v271 = vshrl.u32 %v270, 7
  %v272 = vsub.s32 0, %v271
  %v273 = vrot.slane %v269, %v272
  %v274 = vmul.f32 %v273, 0.0
  %v275 = vmul.f32 %v273, %v231
  %v276 = vmul.f32 %v273, %v235
  %v277 = vadd.f32 %v274, 0.0
  %v278 = vadd.f32 %v275, 0.0
  %v279 = vadd.f32 %v276, 0.0
  %v280 = vld [vmem:[%s4 + $0x1] sm:$0x1]
  %v281 = vlaneseq
  %v282 = vshrl.u32 %v281, 7
  %v283 = vsub.s32 0, %v282
  %v284 = vrot.slane %v280, %v283
  %v285 = vmul.f32 %v284, 0.0
  %v286 = vmul.f32 %v284, %v231
  %v287 = vmul.f32 %v284, %v235
  %v288 = vmul.f32 %v284, %v241
  %v289 = vmul.f32 %v284, %v245
  %v290 = vadd.f32 %v277, %v285
  %v291 = vadd.f32 %v277, %v286
  %v292 = vadd.f32 %v277, %v287
  %v293 = vadd.f32 %v278, %v288
  %v294 = vadd.f32 %v279, %v289
  %v295 = vld [vmem:[%s4 + $0x2] sm:$0x1]
  %v296 = vlaneseq
  %v297 = vshrl.u32 %v296, 7
  %v298 = vsub.s32 0, %v297
  %v299 = vrot.slane %v295, %v298
  %v300 = vmul.f32 %v299, 0.0
  %v301 = vmul.f32 %v299, %v231
  %v302 = vmul.f32 %v299, %v235
  %v303 = vmul.f32 %v299, %v241
  %v304 = vmul.f32 %v299, %v245
  %v305 = vmul.f32 %v299, %v251
  %v306 = vmul.f32 %v299, %v255
  %v307 = vadd.f32 %v290, %v300
  %v308 = vadd.f32 %v290, %v301
  %v309 = vadd.f32 %v290, %v302
  %v310 = vadd.f32 %v291, %v303
  %v311 = vadd.f32 %v292, %v304
  %v312 = vadd.f32 %v293, %v305
  %v313 = vadd.f32 %v294, %v306
  %v314 = vld [vmem:[%s4 + $0x3] sm:$0x1]
  %v315 = vlaneseq
  %v316 = vshrl.u32 %v315, 7
  %v317 = vsub.s32 0, %v316
  %v318 = vrot.slane %v314, %v317
  %v319 = vmul.f32 %v318, %v231
  %v320 = vmul.f32 %v318, %v235
  %v321 = vmul.f32 %v318, %v241
  %v322 = vmul.f32 %v318, %v245
  %v323 = vmul.f32 %v318, %v251
  %v324 = vmul.f32 %v318, %v255
  %v325 = vmul.f32 %v318, %v261
  %v326 = vmul.f32 %v318, %v265
  %v327 = vadd.f32 %v307, %v319
  %v328 = vadd.f32 %v307, %v320
  %v329 = vadd.f32 %v308, %v321
  %v330 = vadd.f32 %v309, %v322
  %v331 = vadd.f32 %v310, %v323
  %v332 = vadd.f32 %v311, %v324
  %v333 = vadd.f32 %v312, %v325
  %v334 = vadd.f32 %v313, %v326
  %v335 = vld [vmem:[%s5] sm:$0x1]
  %v337 = vlaneseq
  %v338 = vshrl.u32 %v337, 7
  %v339 = vsub.s32 0, %v338
  %v340 = vrot.slane %v335, %v339
  %v342 = vadd.f32 %v327, %v340
  %v343 = vadd.f32 %v328, %v340
  %v344 = vadd.f32 %v329, %v340
  %v345 = vadd.f32 %v330, %v340
  %v346 = vadd.f32 %v331, %v340
  %v347 = vadd.f32 %v332, %v340
  %v348 = vadd.f32 %v333, %v340
  %v349 = vadd.f32 %v334, %v340
  %v350 = vxor.u32 %v342, 2147483648
  %v351 = vxor.u32 %v343, 2147483648
  %v352 = vxor.u32 %v344, 2147483648
  %v353 = vxor.u32 %v345, 2147483648
  %v354 = vxor.u32 %v346, 2147483648
  %v355 = vxor.u32 %v347, 2147483648
  %v356 = vxor.u32 %v348, 2147483648
  %v357 = vxor.u32 %v349, 2147483648
  %v358 = vmul.f32 %v350, 1.442695
  %v359 = vpow.pop %v358
  %v360 = vmul.f32 %v351, 1.442695
  %v361 = vpow.pop %v360
  %v362 = vmul.f32 %v352, 1.442695
  %v363 = vpow.pop %v362
  %v364 = vmul.f32 %v353, 1.442695
  %v365 = vpow.pop %v364
  %v366 = vmul.f32 %v354, 1.442695
  %v367 = vpow.pop %v366
  %v368 = vmul.f32 %v355, 1.442695
  %v369 = vpow.pop %v368
  %v370 = vmul.f32 %v356, 1.442695
  %v371 = vpow.pop %v370
  %v372 = vmul.f32 %v357, 1.442695
  %v373 = vpow.pop %v372
  %v374 = vadd.f32 %v359, 1.0
  %v375 = vadd.f32 %v361, 1.0
  %v376 = vadd.f32 %v363, 1.0
  %v377 = vadd.f32 %v365, 1.0
  %v378 = vadd.f32 %v367, 1.0
  %v379 = vadd.f32 %v369, 1.0
  %v380 = vadd.f32 %v371, 1.0
  %v381 = vadd.f32 %v373, 1.0
  %v382 = vrcp.pop %v374
  %v383 = vmul.f32 1.0, %v382
  %v384 = vrcp.pop %v375
  %v385 = vmul.f32 1.0, %v384
  %v386 = vrcp.pop %v376
  %v387 = vmul.f32 1.0, %v386
  %v388 = vrcp.pop %v377
  %v389 = vmul.f32 1.0, %v388
  %v390 = vrcp.pop %v378
  %v391 = vmul.f32 1.0, %v390
  %v392 = vrcp.pop %v379
  %v393 = vmul.f32 1.0, %v392
  %v394 = vrcp.pop %v380
  %v395 = vmul.f32 1.0, %v394
  %v396 = vrcp.pop %v381
  %v397 = vmul.f32 1.0, %v396
  %v398 = vmul.f32 %v342, %v383
  %v399 = vmul.f32 %v343, %v385
  %v400 = vmul.f32 %v344, %v387
  %v401 = vmul.f32 %v345, %v389
  %v402 = vmul.f32 %v346, %v391
  %v403 = vmul.f32 %v347, %v393
  %v404 = vmul.f32 %v348, %v395
  %v405 = vmul.f32 %v349, %v397
  %v406 = vld [vmem:[%s6] sm:$0xf]
  %v407 = vld [vmem:[%s6 + $0x4] sm:$0xf]
  %v408 = vld [vmem:[%s6 + $0x8] sm:$0xf]
  %v409 = vld [vmem:[%s6 + $0xc] sm:$0xf]
  %v410 = vld [vmem:[%s6 + $0x10] sm:$0xf]
  %v411 = vld [vmem:[%s6 + $0x14] sm:$0xf]
  %v412 = vld [vmem:[%s6 + $0x18] sm:$0xf]
  %v413 = vld [vmem:[%s6 + $0x1c] sm:$0xf]
  %v414 = vld [vmem:[%s6 + $0x20] sm:$0xf]
  %v415 = vld [vmem:[%s6 + $0x24] sm:$0xf]
  %v416 = vld [vmem:[%s6 + $0x28] sm:$0xf]
  %v417 = vld [vmem:[%s6 + $0x2c] sm:$0xf]
  %v418 = vld [vmem:[%s6 + $0x30] sm:$0xf]
  %v419 = vld [vmem:[%s6 + $0x34] sm:$0xf]
  %v420 = vld [vmem:[%s6 + $0x38] sm:$0xf]
  %v421 = vld [vmem:[%s6 + $0x3c] sm:$0xf]
  %v422 = vpack.c.bf16 %v399, %v398
  %v423 = vpack.c.bf16 %v401, %v400
  %v424 = vpack.c.bf16 %v403, %v402
  %v425 = vpack.c.bf16 %v405, %v404
  %v442 = vunpack.c.l.b16 %v406
  %v443 = vunpack.c.l.b16 %v407
  %v444 = vunpack.c.l.b16 %v408
  %v445 = vunpack.c.l.b16 %v409
  %v446 = vunpack.c.l.b16 %v410
  %v447 = vunpack.c.l.b16 %v411
  %v448 = vunpack.c.l.b16 %v412
  %v449 = vunpack.c.l.b16 %v413
  %v450 = vunpack.c.l.b16 %v414
  %v451 = vunpack.c.l.b16 %v415
  %v452 = vunpack.c.l.b16 %v416
  %v453 = vunpack.c.l.b16 %v417
  %v454 = vunpack.c.l.b16 %v418
  %v455 = vunpack.c.l.b16 %v419
  %v456 = vunpack.c.l.b16 %v420
  %v457 = vunpack.c.l.b16 %v421
  %v458 = vpack.c.b16 %v443, %v442
  %v459 = vpack.c.b16 %v445, %v444
  %v460 = vpack.c.b16 %v447, %v446
  %v461 = vpack.c.b16 %v449, %v448
  %v462 = vpack.c.b16 %v451, %v450
  %v463 = vpack.c.b16 %v453, %v452
  %v464 = vpack.c.b16 %v455, %v454
  %v465 = vpack.c.b16 %v457, %v456
  %474 = vmatprep.subr.bf16.mxu0 0
  %475 = vmatpush1.bf16.msra.mxu0 %v458
  %476 = vmatprep.subr.bf16.mxu0 0
  %477 = vmatpush1.bf16.msra.mxu0 %v459
  %478 = vmatprep.subr.bf16.mxu0 0
  %479 = vmatpush1.bf16.msra.mxu0 %v460
  %480 = vmatprep.subr.bf16.mxu0 0
  %481 = vmatpush1.bf16.msra.mxu0 %v461
  %482 = vmatprep.subr.bf16.mxu0 0
  %483 = vmatpush1.bf16.msra.mxu0 %v462
  %484 = vmatprep.subr.bf16.mxu0 0
  %485 = vmatpush1.bf16.msra.mxu0 %v463
  %486 = vmatprep.subr.bf16.mxu0 0
  %487 = vmatpush1.bf16.msra.mxu0 %v464
  %488 = vmatprep.subr.bf16.mxu0 0
  %489 = vmatpush1.bf16.msra.mxu0 %v465
  %490 = vmatprep.subr.bf16.mxu0 0
  %491 = vmatpush1.bf16.msra.mxu0 0
  %492 = vmatprep.subr.bf16.mxu0 0
  %493 = vmatpush1.bf16.msra.mxu0 0
  %494 = vmatprep.subr.bf16.mxu0 0
  %495 = vmatpush1.bf16.msra.mxu0 0
  %496 = vmatprep.subr.bf16.mxu0 0
  %497 = vmatpush1.bf16.msra.mxu0 0
  %498 = vmatprep.subr.bf16.mxu0 0
  %499 = vmatpush1.bf16.msra.mxu0 0
  %500 = vmatprep.subr.bf16.mxu0 0
  %501 = vmatpush1.bf16.msra.mxu0 0
  %502 = vmatprep.subr.bf16.mxu0 0
  %503 = vmatpush1.bf16.msra.mxu0 0
  %504 = vmatprep.subr.bf16.mxu0 0
  %505 = vmatpush1.bf16.msra.mxu0 0
  %506 = vmatprep.mubr.bf16.mxu0 0
  %507 = vmatmul.mubr.bf16.gmra.mrb[0].mxu0 %v422
  %v508 = vpop.f32.mrb[0].mxu0
  %v509 = vadd.f32 0.0, %v508
  %v510 = vpop.f32.mrb[0].mxu0
  %v511 = vpop.f32.mrb[0].mxu0
  %v512 = vadd.f32 0.0, %v511
  %v513 = vpop.f32.mrb[0].mxu0
  %514 = vmatprep.mubr.bf16.mxu0 0
  %515 = vmatmul.mubr.bf16.gmra.mrb[0].mxu0 %v423
  %v516 = vpop.f32.mrb[0].mxu0
  %v517 = vadd.f32 0.0, %v516
  %v518 = vpop.f32.mrb[0].mxu0
  %v519 = vpop.f32.mrb[0].mxu0
  %v520 = vadd.f32 0.0, %v519
  %v521 = vpop.f32.mrb[0].mxu0
  %522 = vmatprep.mubr.bf16.mxu0 0
  %523 = vmatmul.mubr.bf16.gmra.mrb[0].mxu0 %v424
  %v524 = vpop.f32.mrb[0].mxu0
  %v525 = vadd.f32 0.0, %v524
  %v526 = vpop.f32.mrb[0].mxu0
  %v527 = vpop.f32.mrb[0].mxu0
  %v528 = vadd.f32 0.0, %v527
  %v529 = vpop.f32.mrb[0].mxu0
  %530 = vmatprep.mubr.bf16.mxu0 0
  %531 = vmatmul.mubr.bf16.gmra.mrb[0].mxu0 %v425
  %v532 = vpop.f32.mrb[0].mxu0
  %v533 = vadd.f32 0.0, %v532
  %v534 = vpop.f32.mrb[0].mxu0
  %v535 = vpop.f32.mrb[0].mxu0
  %v536 = vadd.f32 0.0, %v535
  %v537 = vpop.f32.mrb[0].mxu0
  %538 = vdwg.mxu0
  %v539 = vld [vmem:[%s7] sm:$0x3]
  %v540 = vpack.c.bf16 %v512, %v509
  %v541 = vpack.c.bf16 %v520, %v517
  %v542 = vpack.c.bf16 %v528, %v525
  %v543 = vpack.c.bf16 %v536, %v533
  %v544 = vld [vmem:[%s8] sm:$0x1]
  %v546 = vlaneseq
  %v547 = vshrl.u32 %v546, 7
  %v548 = vsub.s32 0, %v547
  %v549 = vrot.slane %v544, %v548
  %vm551 = vcmask 31744
  %v553 = vsel %vm551, %v540, 0
  %v556 = vsel %vm551, %v541, 0
  %v559 = vsel %vm551, %v542, 0
  %v562 = vsel %vm551, %v543, 0
  %vm564 = vcmask 1041408
  %v566 = vsel %vm564, %v539, 0
  %568 = vmatprep.subr.bf16.mxu0 0
  %569 = vmatpush1.bf16.msra.mxu0 %v566
  %570 = vmatprep.subr.bf16.mxu0 0
  %571 = vmatpush1.bf16.msra.mxu0 0
  %572 = vmatprep.subr.bf16.mxu0 0
  %573 = vmatpush1.bf16.msra.mxu0 0
  %574 = vmatprep.subr.bf16.mxu0 0
  %575 = vmatpush1.bf16.msra.mxu0 0
  %576 = vmatprep.subr.bf16.mxu0 0
  %577 = vmatpush1.bf16.msra.mxu0 0
  %578 = vmatprep.subr.bf16.mxu0 0
  %579 = vmatpush1.bf16.msra.mxu0 0
  %580 = vmatprep.subr.bf16.mxu0 0
  %581 = vmatpush1.bf16.msra.mxu0 0
  %582 = vmatprep.subr.bf16.mxu0 0
  %583 = vmatpush1.bf16.msra.mxu0 0
  %584 = vmatprep.subr.bf16.mxu0 0
  %585 = vmatpush1.bf16.msra.mxu0 0
  %586 = vmatprep.subr.bf16.mxu0 0
  %587 = vmatpush1.bf16.msra.mxu0 0
  %588 = vmatprep.subr.bf16.mxu0 0
  %589 = vmatpush1.bf16.msra.mxu0 0
  %590 = vmatprep.subr.bf16.mxu0 0
  %591 = vmatpush1.bf16.msra.mxu0 0
  %592 = vmatprep.subr.bf16.mxu0 0
  %593 = vmatpush1.bf16.msra.mxu0 0
  %594 = vmatprep.subr.bf16.mxu0 0
  %595 = vmatpush1.bf16.msra.mxu0 0
  %596 = vmatprep.subr.bf16.mxu0 0
  %597 = vmatpush1.bf16.msra.mxu0 0
  %598 = vmatprep.subr.bf16.mxu0 0
  %599 = vmatpush1.bf16.msra.mxu0 0
  %600 = vmatprep.mubr.bf16.mxu0 0
  %601 = vmatmul.mubr.bf16.gmra.mrb[0].mxu0 %v553
  %v602 = vpop.f32.mrb[0].mxu0
  %v603 = vadd.f32 %v549, %v602
  %v604 = vpop.f32.mrb[0].mxu0
  %v605 = vpop.f32.mrb[0].mxu0
  %v606 = vadd.f32 %v549, %v605
  %v607 = vpop.f32.mrb[0].mxu0
  %608 = vmatprep.mubr.bf16.mxu0 0
  %609 = vmatmul.mubr.bf16.gmra.mrb[0].mxu0 %v556
  %v610 = vpop.f32.mrb[0].mxu0
  %v611 = vadd.f32 %v549, %v610
  %v612 = vpop.f32.mrb[0].mxu0
  %v613 = vpop.f32.mrb[0].mxu0
  %v614 = vadd.f32 %v549, %v613
  %v615 = vpop.f32.mrb[0].mxu0
  %616 = vmatprep.mubr.bf16.mxu0 0
  %617 = vmatmul.mubr.bf16.gmra.mrb[0].mxu0 %v559
  %v618 = vpop.f32.mrb[0].mxu0
  %v619 = vadd.f32 %v549, %v618
  %v620 = vpop.f32.mrb[0].mxu0
  %v621 = vpop.f32.mrb[0].mxu0
  %v622 = vadd.f32 %v549, %v621
  %v623 = vpop.f32.mrb[0].mxu0
  %624 = vmatprep.mubr.bf16.mxu0 0
  %625 = vmatmul.mubr.bf16.gmra.mrb[0].mxu0 %v562
  %v626 = vpop.f32.mrb[0].mxu0
  %v627 = vadd.f32 %v549, %v626
  %v628 = vpop.f32.mrb[0].mxu0
  %v629 = vpop.f32.mrb[0].mxu0
  %v630 = vadd.f32 %v549, %v629
  %v631 = vpop.f32.mrb[0].mxu0
  %632 = vdwg.mxu0
  %vm633 = vcmp.gt.f32.partialorder %v603, 20.0
  %vm634 = vcmp.gt.f32.partialorder %v606, 20.0
  %vm635 = vcmp.gt.f32.partialorder %v611, 20.0
  %vm636 = vcmp.gt.f32.partialorder %v614, 20.0
  %vm637 = vcmp.gt.f32.partialorder %v619, 20.0
  %vm638 = vcmp.gt.f32.partialorder %v622, 20.0
  %vm639 = vcmp.gt.f32.partialorder %v627, 20.0
  %vm640 = vcmp.gt.f32.partialorder %v630, 20.0
  %v641 = vmin.f32 %v603, 20.0
  %v642 = vmin.f32 %v606, 20.0
  %v643 = vmin.f32 %v611, 20.0
  %v644 = vmin.f32 %v614, 20.0
  %v645 = vmin.f32 %v619, 20.0
  %v646 = vmin.f32 %v622, 20.0
  %v647 = vmin.f32 %v627, 20.0
  %v648 = vmin.f32 %v630, 20.0
  %v649 = vmul.f32 %v641, 1.442695
  %v650 = vpow.pop %v649
  %v651 = vmul.f32 %v642, 1.442695
  %v652 = vpow.pop %v651
  %v653 = vmul.f32 %v643, 1.442695
  %v654 = vpow.pop %v653
  %v655 = vmul.f32 %v644, 1.442695
  %v656 = vpow.pop %v655
  %v657 = vmul.f32 %v645, 1.442695
  %v658 = vpow.pop %v657
  %v659 = vmul.f32 %v646, 1.442695
  %v660 = vpow.pop %v659
  %v661 = vmul.f32 %v647, 1.442695
  %v662 = vpow.pop %v661
  %v663 = vmul.f32 %v648, 1.442695
  %v664 = vpow.pop %v663
  %v665 = vadd.f32 %v650, 1.0
  %v666 = vlog2.pop %v665
  %v667 = vmul.f32 %v666, 0.6931472
  %v668 = vmul.f32 -0.5, %v650
  %v669 = vadd.f32 %v668, 1.0
  %v670 = vmul.f32 %v669, %v650
  %v671 = vand.u32 2147483647, %v650
  %vm672 = vcmp.lt.f32.partialorder %v671, 0.0004427343
  %v673 = vsel %vm672, %v670, %v667
  %v674 = vadd.f32 %v652, 1.0
  %v675 = vlog2.pop %v674
  %v676 = vmul.f32 %v675, 0.6931472
  %v677 = vmul.f32 -0.5, %v652
  %v678 = vadd.f32 %v677, 1.0
  %v679 = vmul.f32 %v678, %v652
  %v680 = vand.u32 2147483647, %v652
  %vm681 = vcmp.lt.f32.partialorder %v680, 0.0004427343
  %v682 = vsel %vm681, %v679, %v676
  %v683 = vadd.f32 %v654, 1.0
  %v684 = vlog2.pop %v683
  %v685 = vmul.f32 %v684, 0.6931472
  %v686 = vmul.f32 -0.5, %v654
  %v687 = vadd.f32 %v686, 1.0
  %v688 = vmul.f32 %v687, %v654
  %v689 = vand.u32 2147483647, %v654
  %vm690 = vcmp.lt.f32.partialorder %v689, 0.0004427343
  %v691 = vsel %vm690, %v688, %v685
  %v692 = vadd.f32 %v656, 1.0
  %v693 = vlog2.pop %v692
  %v694 = vmul.f32 %v693, 0.6931472
  %v695 = vmul.f32 -0.5, %v656
  %v696 = vadd.f32 %v695, 1.0
  %v697 = vmul.f32 %v696, %v656
  %v698 = vand.u32 2147483647, %v656
  %vm699 = vcmp.lt.f32.partialorder %v698, 0.0004427343
  %v700 = vsel %vm699, %v697, %v694
  %v701 = vadd.f32 %v658, 1.0
  %v702 = vlog2.pop %v701
  %v703 = vmul.f32 %v702, 0.6931472
  %v704 = vmul.f32 -0.5, %v658
  %v705 = vadd.f32 %v704, 1.0
  %v706 = vmul.f32 %v705, %v658
  %v707 = vand.u32 2147483647, %v658
  %vm708 = vcmp.lt.f32.partialorder %v707, 0.0004427343
  %v709 = vsel %vm708, %v706, %v703
  %v710 = vadd.f32 %v660, 1.0
  %v711 = vlog2.pop %v710
  %v712 = vmul.f32 %v711, 0.6931472
  %v713 = vmul.f32 -0.5, %v660
  %v714 = vadd.f32 %v713, 1.0
  %v715 = vmul.f32 %v714, %v660
  %v716 = vand.u32 2147483647, %v660
  %vm717 = vcmp.lt.f32.partialorder %v716, 0.0004427343
  %v718 = vsel %vm717, %v715, %v712
  %v719 = vadd.f32 %v662, 1.0
  %v720 = vlog2.pop %v719
  %v721 = vmul.f32 %v720, 0.6931472
  %v722 = vmul.f32 -0.5, %v662
  %v723 = vadd.f32 %v722, 1.0
  %v724 = vmul.f32 %v723, %v662
  %v725 = vand.u32 2147483647, %v662
  %vm726 = vcmp.lt.f32.partialorder %v725, 0.0004427343
  %v727 = vsel %vm726, %v724, %v721
  %v728 = vadd.f32 %v664, 1.0
  %v729 = vlog2.pop %v728
  %v730 = vmul.f32 %v729, 0.6931472
  %v731 = vmul.f32 -0.5, %v664
  %v732 = vadd.f32 %v731, 1.0
  %v733 = vmul.f32 %v732, %v664
  %v734 = vand.u32 2147483647, %v664
  %vm735 = vcmp.lt.f32.partialorder %v734, 0.0004427343
  %v736 = vsel %vm735, %v733, %v730
  %v737 = vsel %vm633, %v603, %v673
  %v738 = vsel %vm634, %v606, %v682
  %v739 = vsel %vm635, %v611, %v691
  %v740 = vsel %vm636, %v614, %v700
  %v741 = vsel %vm637, %v619, %v709
  %v742 = vsel %vm638, %v622, %v718
  %v743 = vsel %vm639, %v627, %v727
  %v744 = vsel %vm640, %v630, %v736
  %v745 = vmul.f32 %v737, %v398
  %v746 = vmul.f32 %v738, %v399
  %v747 = vmul.f32 %v739, %v400
  %v748 = vmul.f32 %v740, %v401
  %v749 = vmul.f32 %v741, %v402
  %v750 = vmul.f32 %v742, %v403
  %v751 = vmul.f32 %v743, %v404
  %v752 = vmul.f32 %v744, %v405
  %v761 = vcombine.high %v737, %v737
  %v763 = vunpack.c.l.s4 1966171168
  %v764 = vunpack.c.0.s8 %v763
  %v765 = vlaneseq
  %v766 = vshrl.u32 %v765, 7
  %v767 = vsub.s32 %v764, %v766
  %v768 = vrot.slane %v737, %v767
  %v770 = vunpack.c.l.s4 1966171168
  %v771 = vunpack.c.0.s8 %v770
  %v772 = vlaneseq
  %v773 = vshrl.u32 %v772, 7
  %v774 = vsub.s32 %v771, %v773
  %v775 = vrot.slane %v761, %v774
  %v776 = vcombine.high %v768, %v768
  %v777 = vcombine.high %v775, %v775
  %v779 = vunpack.c.l.s4 1966171168
  %v780 = vunpack.c.0.s8 %v779
  %v781 = vlaneseq
  %v782 = vshrl.u32 %v781, 7
  %v783 = vsub.s32 %v780, %v782
  %v784 = vrot.slane %v768, %v783
  %v786 = vunpack.c.l.s4 1966171168
  %v787 = vunpack.c.0.s8 %v786
  %v788 = vlaneseq
  %v789 = vshrl.u32 %v788, 7
  %v790 = vsub.s32 %v787, %v789
  %v791 = vrot.slane %v775, %v790
  %v793 = vunpack.c.l.s4 1966171168
  %v794 = vunpack.c.0.s8 %v793
  %v795 = vlaneseq
  %v796 = vshrl.u32 %v795, 7
  %v797 = vsub.s32 %v794, %v796
  %v798 = vrot.slane %v776, %v797
  %v800 = vunpack.c.l.s4 1966171168
  %v801 = vunpack.c.0.s8 %v800
  %v802 = vlaneseq
  %v803 = vshrl.u32 %v802, 7
  %v804 = vsub.s32 %v801, %v803
  %v805 = vrot.slane %v777, %v804
  %v806 = vcombine.high %v784, %v784
  %v807 = vcombine.high %v791, %v791
  %v808 = vcombine.high %v798, %v798
  %v809 = vcombine.high %v805, %v805
  %v810 = vcombine.high %v738, %v738
  %v812 = vunpack.c.l.s4 1966171168
  %v813 = vunpack.c.0.s8 %v812
  %v814 = vlaneseq
  %v815 = vshrl.u32 %v814, 7
  %v816 = vsub.s32 %v813, %v815
  %v817 = vrot.slane %v738, %v816
  %v819 = vunpack.c.l.s4 1966171168
  %v820 = vunpack.c.0.s8 %v819
  %v821 = vlaneseq
  %v822 = vshrl.u32 %v821, 7
  %v823 = vsub.s32 %v820, %v822
  %v824 = vrot.slane %v810, %v823
  %v825 = vcombine.high %v817, %v817
  %v826 = vcombine.high %v824, %v824
  %v828 = vunpack.c.l.s4 1966171168
  %v829 = vunpack.c.0.s8 %v828
  %v830 = vlaneseq
  %v831 = vshrl.u32 %v830, 7
  %v832 = vsub.s32 %v829, %v831
  %v833 = vrot.slane %v817, %v832
  %v835 = vunpack.c.l.s4 1966171168
  %v836 = vunpack.c.0.s8 %v835
  %v837 = vlaneseq
  %v838 = vshrl.u32 %v837, 7
  %v839 = vsub.s32 %v836, %v838
  %v840 = vrot.slane %v824, %v839
  %v842 = vunpack.c.l.s4 1966171168
  %v843 = vunpack.c.0.s8 %v842
  %v844 = vlaneseq
  %v845 = vshrl.u32 %v844, 7
  %v846 = vsub.s32 %v843, %v845
  %v847 = vrot.slane %v825, %v846
  %v849 = vunpack.c.l.s4 1966171168
  %v850 = vunpack.c.0.s8 %v849
  %v851 = vlaneseq
  %v852 = vshrl.u32 %v851, 7
  %v853 = vsub.s32 %v850, %v852
  %v854 = vrot.slane %v826, %v853
  %v855 = vcombine.high %v833, %v833
  %v856 = vcombine.high %v840, %v840
  %v857 = vcombine.high %v847, %v847
  %v858 = vcombine.high %v854, %v854
  %v859 = vcombine.high %v739, %v739
  %v861 = vunpack.c.l.s4 1966171168
  %v862 = vunpack.c.0.s8 %v861
  %v863 = vlaneseq
  %v864 = vshrl.u32 %v863, 7
  %v865 = vsub.s32 %v862, %v864
  %v866 = vrot.slane %v739, %v865
  %v868 = vunpack.c.l.s4 1966171168
  %v869 = vunpack.c.0.s8 %v868
  %v870 = vlaneseq
  %v871 = vshrl.u32 %v870, 7
  %v872 = vsub.s32 %v869, %v871
  %v873 = vrot.slane %v859, %v872
  %v874 = vcombine.high %v866, %v866
  %v875 = vcombine.high %v873, %v873
  %v877 = vunpack.c.l.s4 1966171168
  %v878 = vunpack.c.0.s8 %v877
  %v879 = vlaneseq
  %v880 = vshrl.u32 %v879, 7
  %v881 = vsub.s32 %v878, %v880
  %v882 = vrot.slane %v866, %v881
  %v884 = vunpack.c.l.s4 1966171168
  %v885 = vunpack.c.0.s8 %v884
  %v886 = vlaneseq
  %v887 = vshrl.u32 %v886, 7
  %v888 = vsub.s32 %v885, %v887
  %v889 = vrot.slane %v873, %v888
  %v891 = vunpack.c.l.s4 1966171168
  %v892 = vunpack.c.0.s8 %v891
  %v893 = vlaneseq
  %v894 = vshrl.u32 %v893, 7
  %v895 = vsub.s32 %v892, %v894
  %v896 = vrot.slane %v874, %v895
  %v898 = vunpack.c.l.s4 1966171168
  %v899 = vunpack.c.0.s8 %v898
  %v900 = vlaneseq
  %v901 = vshrl.u32 %v900, 7
  %v902 = vsub.s32 %v899, %v901
  %v903 = vrot.slane %v875, %v902
  %v904 = vcombine.high %v882, %v882
  %v905 = vcombine.high %v889, %v889
  %v906 = vcombine.high %v896, %v896
  %v907 = vcombine.high %v903, %v903
  %v908 = vcombine.high %v740, %v740
  %v910 = vunpack.c.l.s4 1966171168
  %v911 = vunpack.c.0.s8 %v910
  %v912 = vlaneseq
  %v913 = vshrl.u32 %v912, 7
  %v914 = vsub.s32 %v911, %v913
  %v915 = vrot.slane %v740, %v914
  %v917 = vunpack.c.l.s4 1966171168
  %v918 = vunpack.c.0.s8 %v917
  %v919 = vlaneseq
  %v920 = vshrl.u32 %v919, 7
  %v921 = vsub.s32 %v918, %v920
  %v922 = vrot.slane %v908, %v921
  %v923 = vcombine.high %v915, %v915
  %v924 = vcombine.high %v922, %v922
  %v926 = vunpack.c.l.s4 1966171168
  %v927 = vunpack.c.0.s8 %v926
  %v928 = vlaneseq
  %v929 = vshrl.u32 %v928, 7
  %v930 = vsub.s32 %v927, %v929
  %v931 = vrot.slane %v915, %v930
  %v933 = vunpack.c.l.s4 1966171168
  %v934 = vunpack.c.0.s8 %v933
  %v935 = vlaneseq
  %v936 = vshrl.u32 %v935, 7
  %v937 = vsub.s32 %v934, %v936
  %v938 = vrot.slane %v922, %v937
  %v940 = vunpack.c.l.s4 1966171168
  %v941 = vunpack.c.0.s8 %v940
  %v942 = vlaneseq
  %v943 = vshrl.u32 %v942, 7
  %v944 = vsub.s32 %v941, %v943
  %v945 = vrot.slane %v923, %v944
  %v947 = vunpack.c.l.s4 1966171168
  %v948 = vunpack.c.0.s8 %v947
  %v949 = vlaneseq
  %v950 = vshrl.u32 %v949, 7
  %v951 = vsub.s32 %v948, %v950
  %v952 = vrot.slane %v924, %v951
  %v953 = vcombine.high %v931, %v931
  %v954 = vcombine.high %v938, %v938
  %v955 = vcombine.high %v945, %v945
  %v956 = vcombine.high %v952, %v952
  %v957 = vcombine.high %v741, %v741
  %v959 = vunpack.c.l.s4 1966171168
  %v960 = vunpack.c.0.s8 %v959
  %v961 = vlaneseq
  %v962 = vshrl.u32 %v961, 7
  %v963 = vsub.s32 %v960, %v962
  %v964 = vrot.slane %v741, %v963
  %v966 = vunpack.c.l.s4 1966171168
  %v967 = vunpack.c.0.s8 %v966
  %v968 = vlaneseq
  %v969 = vshrl.u32 %v968, 7
  %v970 = vsub.s32 %v967, %v969
  %v971 = vrot.slane %v957, %v970
  %v972 = vcombine.high %v964, %v964
  %v973 = vcombine.high %v971, %v971
  %v975 = vunpack.c.l.s4 1966171168
  %v976 = vunpack.c.0.s8 %v975
  %v977 = vlaneseq
  %v978 = vshrl.u32 %v977, 7
  %v979 = vsub.s32 %v976, %v978
  %v980 = vrot.slane %v964, %v979
  %v982 = vunpack.c.l.s4 1966171168
  %v983 = vunpack.c.0.s8 %v982
  %v984 = vlaneseq
  %v985 = vshrl.u32 %v984, 7
  %v986 = vsub.s32 %v983, %v985
  %v987 = vrot.slane %v971, %v986
  %v989 = vunpack.c.l.s4 1966171168
  %v990 = vunpack.c.0.s8 %v989
  %v991 = vlaneseq
  %v992 = vshrl.u32 %v991, 7
  %v993 = vsub.s32 %v990, %v992
  %v994 = vrot.slane %v972, %v993
  %v996 = vunpack.c.l.s4 1966171168
  %v997 = vunpack.c.0.s8 %v996
  %v998 = vlaneseq
  %v999 = vshrl.u32 %v998, 7
  %v1000 = vsub.s32 %v997, %v999
  %v1001 = vrot.slane %v973, %v1000
  %v1002 = vcombine.high %v980, %v980
  %v1003 = vcombine.high %v987, %v987
  %v1004 = vcombine.high %v994, %v994
  %v1005 = vcombine.high %v1001, %v1001
  %v1006 = vcombine.high %v742, %v742
  %v1008 = vunpack.c.l.s4 1966171168
  %v1009 = vunpack.c.0.s8 %v1008
  %v1010 = vlaneseq
  %v1011 = vshrl.u32 %v1010, 7
  %v1012 = vsub.s32 %v1009, %v1011
  %v1013 = vrot.slane %v742, %v1012
  %v1015 = vunpack.c.l.s4 1966171168
  %v1016 = vunpack.c.0.s8 %v1015
  %v1017 = vlaneseq
  %v1018 = vshrl.u32 %v1017, 7
  %v1019 = vsub.s32 %v1016, %v1018
  %v1020 = vrot.slane %v1006, %v1019
  %v1021 = vcombine.high %v1013, %v1013
  %v1022 = vcombine.high %v1020, %v1020
  %v1024 = vunpack.c.l.s4 1966171168
  %v1025 = vunpack.c.0.s8 %v1024
  %v1026 = vlaneseq
  %v1027 = vshrl.u32 %v1026, 7
  %v1028 = vsub.s32 %v1025, %v1027
  %v1029 = vrot.slane %v1013, %v1028
  %v1031 = vunpack.c.l.s4 1966171168
  %v1032 = vunpack.c.0.s8 %v1031
  %v1033 = vlaneseq
  %v1034 = vshrl.u32 %v1033, 7
  %v1035 = vsub.s32 %v1032, %v1034
  %v1036 = vrot.slane %v1020, %v1035
  %v1038 = vunpack.c.l.s4 1966171168
  %v1039 = vunpack.c.0.s8 %v1038
  %v1040 = vlaneseq
  %v1041 = vshrl.u32 %v1040, 7
  %v1042 = vsub.s32 %v1039, %v1041
  %v1043 = vrot.slane %v1021, %v1042
  %v1045 = vunpack.c.l.s4 1966171168
  %v1046 = vunpack.c.0.s8 %v1045
  %v1047 = vlaneseq
  %v1048 = vshrl.u32 %v1047, 7
  %v1049 = vsub.s32 %v1046, %v1048
  %v1050 = vrot.slane %v1022, %v1049
  %v1051 = vcombine.high %v1029, %v1029
  %v1052 = vcombine.high %v1036, %v1036
  %v1053 = vcombine.high %v1043, %v1043
  %v1054 = vcombine.high %v1050, %v1050
  %v1055 = vcombine.high %v743, %v743
  %v1057 = vunpack.c.l.s4 1966171168
  %v1058 = vunpack.c.0.s8 %v1057
  %v1059 = vlaneseq
  %v1060 = vshrl.u32 %v1059, 7
  %v1061 = vsub.s32 %v1058, %v1060
  %v1062 = vrot.slane %v743, %v1061
  %v1064 = vunpack.c.l.s4 1966171168
  %v1065 = vunpack.c.0.s8 %v1064
  %v1066 = vlaneseq
  %v1067 = vshrl.u32 %v1066, 7
  %v1068 = vsub.s32 %v1065, %v1067
  %v1069 = vrot.slane %v1055, %v1068
  %v1070 = vcombine.high %v1062, %v1062
  %v1071 = vcombine.high %v1069, %v1069
  %v1073 = vunpack.c.l.s4 1966171168
  %v1074 = vunpack.c.0.s8 %v1073
  %v1075 = vlaneseq
  %v1076 = vshrl.u32 %v1075, 7
  %v1077 = vsub.s32 %v1074, %v1076
  %v1078 = vrot.slane %v1062, %v1077
  %v1080 = vunpack.c.l.s4 1966171168
  %v1081 = vunpack.c.0.s8 %v1080
  %v1082 = vlaneseq
  %v1083 = vshrl.u32 %v1082, 7
  %v1084 = vsub.s32 %v1081, %v1083
  %v1085 = vrot.slane %v1069, %v1084
  %v1087 = vunpack.c.l.s4 1966171168
  %v1088 = vunpack.c.0.s8 %v1087
  %v1089 = vlaneseq
  %v1090 = vshrl.u32 %v1089, 7
  %v1091 = vsub.s32 %v1088, %v1090
  %v1092 = vrot.slane %v1070, %v1091
  %v1094 = vunpack.c.l.s4 1966171168
  %v1095 = vunpack.c.0.s8 %v1094
  %v1096 = vlaneseq
  %v1097 = vshrl.u32 %v1096, 7
  %v1098 = vsub.s32 %v1095, %v1097
  %v1099 = vrot.slane %v1071, %v1098
  %v1100 = vcombine.high %v1078, %v1078
  %v1101 = vcombine.high %v1085, %v1085
  %v1102 = vcombine.high %v1092, %v1092
  %v1103 = vcombine.high %v1099, %v1099
  %v1104 = vcombine.high %v744, %v744
  %v1106 = vunpack.c.l.s4 1966171168
  %v1107 = vunpack.c.0.s8 %v1106
  %v1108 = vlaneseq
  %v1109 = vshrl.u32 %v1108, 7
  %v1110 = vsub.s32 %v1107, %v1109
  %v1111 = vrot.slane %v744, %v1110
  %v1113 = vunpack.c.l.s4 1966171168
  %v1114 = vunpack.c.0.s8 %v1113
  %v1115 = vlaneseq
  %v1116 = vshrl.u32 %v1115, 7
  %v1117 = vsub.s32 %v1114, %v1116
  %v1118 = vrot.slane %v1104, %v1117
  %v1119 = vcombine.high %v1111, %v1111
  %v1120 = vcombine.high %v1118, %v1118
  %v1122 = vunpack.c.l.s4 1966171168
  %v1123 = vunpack.c.0.s8 %v1122
  %v1124 = vlaneseq
  %v1125 = vshrl.u32 %v1124, 7
  %v1126 = vsub.s32 %v1123, %v1125
  %v1127 = vrot.slane %v1111, %v1126
  %v1129 = vunpack.c.l.s4 1966171168
  %v1130 = vunpack.c.0.s8 %v1129
  %v1131 = vlaneseq
  %v1132 = vshrl.u32 %v1131, 7
  %v1133 = vsub.s32 %v1130, %v1132
  %v1134 = vrot.slane %v1118, %v1133
  %v1136 = vunpack.c.l.s4 1966171168
  %v1137 = vunpack.c.0.s8 %v1136
  %v1138 = vlaneseq
  %v1139 = vshrl.u32 %v1138, 7
  %v1140 = vsub.s32 %v1137, %v1139
  %v1141 = vrot.slane %v1119, %v1140
  %v1143 = vunpack.c.l.s4 1966171168
  %v1144 = vunpack.c.0.s8 %v1143
  %v1145 = vlaneseq
  %v1146 = vshrl.u32 %v1145, 7
  %v1147 = vsub.s32 %v1144, %v1146
  %v1148 = vrot.slane %v1120, %v1147
  %v1149 = vcombine.high %v1127, %v1127
  %v1150 = vcombine.high %v1134, %v1134
  %v1151 = vcombine.high %v1141, %v1141
  %v1152 = vcombine.high %v1148, %v1148
  %v1161 = vcombine.high %v745, %v745
  %v1163 = vunpack.c.l.s4 1966171168
  %v1164 = vunpack.c.0.s8 %v1163
  %v1165 = vlaneseq
  %v1166 = vshrl.u32 %v1165, 7
  %v1167 = vsub.s32 %v1164, %v1166
  %v1168 = vrot.slane %v745, %v1167
  %v1170 = vunpack.c.l.s4 1966171168
  %v1171 = vunpack.c.0.s8 %v1170
  %v1172 = vlaneseq
  %v1173 = vshrl.u32 %v1172, 7
  %v1174 = vsub.s32 %v1171, %v1173
  %v1175 = vrot.slane %v1161, %v1174
  %v1176 = vcombine.high %v1168, %v1168
  %v1177 = vcombine.high %v1175, %v1175
  %v1179 = vunpack.c.l.s4 1966171168
  %v1180 = vunpack.c.0.s8 %v1179
  %v1181 = vlaneseq
  %v1182 = vshrl.u32 %v1181, 7
  %v1183 = vsub.s32 %v1180, %v1182
  %v1184 = vrot.slane %v1168, %v1183
  %v1186 = vunpack.c.l.s4 1966171168
  %v1187 = vunpack.c.0.s8 %v1186
  %v1188 = vlaneseq
  %v1189 = vshrl.u32 %v1188, 7
  %v1190 = vsub.s32 %v1187, %v1189
  %v1191 = vrot.slane %v1175, %v1190
  %v1193 = vunpack.c.l.s4 1966171168
  %v1194 = vunpack.c.0.s8 %v1193
  %v1195 = vlaneseq
  %v1196 = vshrl.u32 %v1195, 7
  %v1197 = vsub.s32 %v1194, %v1196
  %v1198 = vrot.slane %v1176, %v1197
  %v1200 = vunpack.c.l.s4 1966171168
  %v1201 = vunpack.c.0.s8 %v1200
  %v1202 = vlaneseq
  %v1203 = vshrl.u32 %v1202, 7
  %v1204 = vsub.s32 %v1201, %v1203
  %v1205 = vrot.slane %v1177, %v1204
  %v1206 = vcombine.high %v1184, %v1184
  %v1207 = vcombine.high %v1191, %v1191
  %v1208 = vcombine.high %v1198, %v1198
  %v1209 = vcombine.high %v1205, %v1205
  %v1210 = vcombine.high %v746, %v746
  %v1212 = vunpack.c.l.s4 1966171168
  %v1213 = vunpack.c.0.s8 %v1212
  %v1214 = vlaneseq
  %v1215 = vshrl.u32 %v1214, 7
  %v1216 = vsub.s32 %v1213, %v1215
  %v1217 = vrot.slane %v746, %v1216
  %v1219 = vunpack.c.l.s4 1966171168
  %v1220 = vunpack.c.0.s8 %v1219
  %v1221 = vlaneseq
  %v1222 = vshrl.u32 %v1221, 7
  %v1223 = vsub.s32 %v1220, %v1222
  %v1224 = vrot.slane %v1210, %v1223
  %v1225 = vcombine.high %v1217, %v1217
  %v1226 = vcombine.high %v1224, %v1224
  %v1228 = vunpack.c.l.s4 1966171168
  %v1229 = vunpack.c.0.s8 %v1228
  %v1230 = vlaneseq
  %v1231 = vshrl.u32 %v1230, 7
  %v1232 = vsub.s32 %v1229, %v1231
  %v1233 = vrot.slane %v1217, %v1232
  %v1235 = vunpack.c.l.s4 1966171168
  %v1236 = vunpack.c.0.s8 %v1235
  %v1237 = vlaneseq
  %v1238 = vshrl.u32 %v1237, 7
  %v1239 = vsub.s32 %v1236, %v1238
  %v1240 = vrot.slane %v1224, %v1239
  %v1242 = vunpack.c.l.s4 1966171168
  %v1243 = vunpack.c.0.s8 %v1242
  %v1244 = vlaneseq
  %v1245 = vshrl.u32 %v1244, 7
  %v1246 = vsub.s32 %v1243, %v1245
  %v1247 = vrot.slane %v1225, %v1246
  %v1249 = vunpack.c.l.s4 1966171168
  %v1250 = vunpack.c.0.s8 %v1249
  %v1251 = vlaneseq
  %v1252 = vshrl.u32 %v1251, 7
  %v1253 = vsub.s32 %v1250, %v1252
  %v1254 = vrot.slane %v1226, %v1253
  %v1255 = vcombine.high %v1233, %v1233
  %v1256 = vcombine.high %v1240, %v1240
  %v1257 = vcombine.high %v1247, %v1247
  %v1258 = vcombine.high %v1254, %v1254
  %v1259 = vcombine.high %v747, %v747
  %v1261 = vunpack.c.l.s4 1966171168
  %v1262 = vunpack.c.0.s8 %v1261
  %v1263 = vlaneseq
  %v1264 = vshrl.u32 %v1263, 7
  %v1265 = vsub.s32 %v1262, %v1264
  %v1266 = vrot.slane %v747, %v1265
  %v1268 = vunpack.c.l.s4 1966171168
  %v1269 = vunpack.c.0.s8 %v1268
  %v1270 = vlaneseq
  %v1271 = vshrl.u32 %v1270, 7
  %v1272 = vsub.s32 %v1269, %v1271
  %v1273 = vrot.slane %v1259, %v1272
  %v1274 = vcombine.high %v1266, %v1266
  %v1275 = vcombine.high %v1273, %v1273
  %v1277 = vunpack.c.l.s4 1966171168
  %v1278 = vunpack.c.0.s8 %v1277
  %v1279 = vlaneseq
  %v1280 = vshrl.u32 %v1279, 7
  %v1281 = vsub.s32 %v1278, %v1280
  %v1282 = vrot.slane %v1266, %v1281
  %v1284 = vunpack.c.l.s4 1966171168
  %v1285 = vunpack.c.0.s8 %v1284
  %v1286 = vlaneseq
  %v1287 = vshrl.u32 %v1286, 7
  %v1288 = vsub.s32 %v1285, %v1287
  %v1289 = vrot.slane %v1273, %v1288
  %v1291 = vunpack.c.l.s4 1966171168
  %v1292 = vunpack.c.0.s8 %v1291
  %v1293 = vlaneseq
  %v1294 = vshrl.u32 %v1293, 7
  %v1295 = vsub.s32 %v1292, %v1294
  %v1296 = vrot.slane %v1274, %v1295
  %v1298 = vunpack.c.l.s4 1966171168
  %v1299 = vunpack.c.0.s8 %v1298
  %v1300 = vlaneseq
  %v1301 = vshrl.u32 %v1300, 7
  %v1302 = vsub.s32 %v1299, %v1301
  %v1303 = vrot.slane %v1275, %v1302
  %v1304 = vcombine.high %v1282, %v1282
  %v1305 = vcombine.high %v1289, %v1289
  %v1306 = vcombine.high %v1296, %v1296
  %v1307 = vcombine.high %v1303, %v1303
  %v1308 = vcombine.high %v748, %v748
  %v1310 = vunpack.c.l.s4 1966171168
  %v1311 = vunpack.c.0.s8 %v1310
  %v1312 = vlaneseq
  %v1313 = vshrl.u32 %v1312, 7
  %v1314 = vsub.s32 %v1311, %v1313
  %v1315 = vrot.slane %v748, %v1314
  %v1317 = vunpack.c.l.s4 1966171168
  %v1318 = vunpack.c.0.s8 %v1317
  %v1319 = vlaneseq
  %v1320 = vshrl.u32 %v1319, 7
  %v1321 = vsub.s32 %v1318, %v1320
  %v1322 = vrot.slane %v1308, %v1321
  %v1323 = vcombine.high %v1315, %v1315
  %v1324 = vcombine.high %v1322, %v1322
  %v1326 = vunpack.c.l.s4 1966171168
  %v1327 = vunpack.c.0.s8 %v1326
  %v1328 = vlaneseq
  %v1329 = vshrl.u32 %v1328, 7
  %v1330 = vsub.s32 %v1327, %v1329
  %v1331 = vrot.slane %v1315, %v1330
  %v1333 = vunpack.c.l.s4 1966171168
  %v1334 = vunpack.c.0.s8 %v1333
  %v1335 = vlaneseq
  %v1336 = vshrl.u32 %v1335, 7
  %v1337 = vsub.s32 %v1334, %v1336
  %v1338 = vrot.slane %v1322, %v1337
  %v1340 = vunpack.c.l.s4 1966171168
  %v1341 = vunpack.c.0.s8 %v1340
  %v1342 = vlaneseq
  %v1343 = vshrl.u32 %v1342, 7
  %v1344 = vsub.s32 %v1341, %v1343
  %v1345 = vrot.slane %v1323, %v1344
  %v1347 = vunpack.c.l.s4 1966171168
  %v1348 = vunpack.c.0.s8 %v1347
  %v1349 = vlaneseq
  %v1350 = vshrl.u32 %v1349, 7
  %v1351 = vsub.s32 %v1348, %v1350
  %v1352 = vrot.slane %v1324, %v1351
  %v1353 = vcombine.high %v1331, %v1331
  %v1354 = vcombine.high %v1338, %v1338
  %v1355 = vcombine.high %v1345, %v1345
  %v1356 = vcombine.high %v1352, %v1352
  %v1357 = vcombine.high %v749, %v749
  %v1359 = vunpack.c.l.s4 1966171168
  %v1360 = vunpack.c.0.s8 %v1359
  %v1361 = vlaneseq
  %v1362 = vshrl.u32 %v1361, 7
  %v1363 = vsub.s32 %v1360, %v1362
  %v1364 = vrot.slane %v749, %v1363
  %v1366 = vunpack.c.l.s4 1966171168
  %v1367 = vunpack.c.0.s8 %v1366
  %v1368 = vlaneseq
  %v1369 = vshrl.u32 %v1368, 7
  %v1370 = vsub.s32 %v1367, %v1369
  %v1371 = vrot.slane %v1357, %v1370
  %v1372 = vcombine.high %v1364, %v1364
  %v1373 = vcombine.high %v1371, %v1371
  %v1375 = vunpack.c.l.s4 1966171168
  %v1376 = vunpack.c.0.s8 %v1375
  %v1377 = vlaneseq
  %v1378 = vshrl.u32 %v1377, 7
  %v1379 = vsub.s32 %v1376, %v1378
  %v1380 = vrot.slane %v1364, %v1379
  %v1382 = vunpack.c.l.s4 1966171168
  %v1383 = vunpack.c.0.s8 %v1382
  %v1384 = vlaneseq
  %v1385 = vshrl.u32 %v1384, 7
  %v1386 = vsub.s32 %v1383, %v1385
  %v1387 = vrot.slane %v1371, %v1386
  %v1389 = vunpack.c.l.s4 1966171168
  %v1390 = vunpack.c.0.s8 %v1389
  %v1391 = vlaneseq
  %v1392 = vshrl.u32 %v1391, 7
  %v1393 = vsub.s32 %v1390, %v1392
  %v1394 = vrot.slane %v1372, %v1393
  %v1396 = vunpack.c.l.s4 1966171168
  %v1397 = vunpack.c.0.s8 %v1396
  %v1398 = vlaneseq
  %v1399 = vshrl.u32 %v1398, 7
  %v1400 = vsub.s32 %v1397, %v1399
  %v1401 = vrot.slane %v1373, %v1400
  %v1402 = vcombine.high %v1380, %v1380
  %v1403 = vcombine.high %v1387, %v1387
  %v1404 = vcombine.high %v1394, %v1394
  %v1405 = vcombine.high %v1401, %v1401
  %v1406 = vcombine.high %v750, %v750
  %v1408 = vunpack.c.l.s4 1966171168
  %v1409 = vunpack.c.0.s8 %v1408
  %v1410 = vlaneseq
  %v1411 = vshrl.u32 %v1410, 7
  %v1412 = vsub.s32 %v1409, %v1411
  %v1413 = vrot.slane %v750, %v1412
  %v1415 = vunpack.c.l.s4 1966171168
  %v1416 = vunpack.c.0.s8 %v1415
  %v1417 = vlaneseq
  %v1418 = vshrl.u32 %v1417, 7
  %v1419 = vsub.s32 %v1416, %v1418
  %v1420 = vrot.slane %v1406, %v1419
  %v1421 = vcombine.high %v1413, %v1413
  %v1422 = vcombine.high %v1420, %v1420
  %v1424 = vunpack.c.l.s4 1966171168
  %v1425 = vunpack.c.0.s8 %v1424
  %v1426 = vlaneseq
  %v1427 = vshrl.u32 %v1426, 7
  %v1428 = vsub.s32 %v1425, %v1427
  %v1429 = vrot.slane %v1413, %v1428
  %v1431 = vunpack.c.l.s4 1966171168
  %v1432 = vunpack.c.0.s8 %v1431
  %v1433 = vlaneseq
  %v1434 = vshrl.u32 %v1433, 7
  %v1435 = vsub.s32 %v1432, %v1434
  %v1436 = vrot.slane %v1420, %v1435
  %v1438 = vunpack.c.l.s4 1966171168
  %v1439 = vunpack.c.0.s8 %v1438
  %v1440 = vlaneseq
  %v1441 = vshrl.u32 %v1440, 7
  %v1442 = vsub.s32 %v1439, %v1441
  %v1443 = vrot.slane %v1421, %v1442
  %v1445 = vunpack.c.l.s4 1966171168
  %v1446 = vunpack.c.0.s8 %v1445
  %v1447 = vlaneseq
  %v1448 = vshrl.u32 %v1447, 7
  %v1449 = vsub.s32 %v1446, %v1448
  %v1450 = vrot.slane %v1422, %v1449
  %v1451 = vcombine.high %v1429, %v1429
  %v1452 = vcombine.high %v1436, %v1436
  %v1453 = vcombine.high %v1443, %v1443
  %v1454 = vcombine.high %v1450, %v1450
  %v1455 = vcombine.high %v751, %v751
  %v1457 = vunpack.c.l.s4 1966171168
  %v1458 = vunpack.c.0.s8 %v1457
  %v1459 = vlaneseq
  %v1460 = vshrl.u32 %v1459, 7
  %v1461 = vsub.s32 %v1458, %v1460
  %v1462 = vrot.slane %v751, %v1461
  %v1464 = vunpack.c.l.s4 1966171168
  %v1465 = vunpack.c.0.s8 %v1464
  %v1466 = vlaneseq
  %v1467 = vshrl.u32 %v1466, 7
  %v1468 = vsub.s32 %v1465, %v1467
  %v1469 = vrot.slane %v1455, %v1468
  %v1470 = vcombine.high %v1462, %v1462
  %v1471 = vcombine.high %v1469, %v1469
  %v1473 = vunpack.c.l.s4 1966171168
  %v1474 = vunpack.c.0.s8 %v1473
  %v1475 = vlaneseq
  %v1476 = vshrl.u32 %v1475, 7
  %v1477 = vsub.s32 %v1474, %v1476
  %v1478 = vrot.slane %v1462, %v1477
  %v1480 = vunpack.c.l.s4 1966171168
  %v1481 = vunpack.c.0.s8 %v1480
  %v1482 = vlaneseq
  %v1483 = vshrl.u32 %v1482, 7
  %v1484 = vsub.s32 %v1481, %v1483
  %v1485 = vrot.slane %v1469, %v1484
  %v1487 = vunpack.c.l.s4 1966171168
  %v1488 = vunpack.c.0.s8 %v1487
  %v1489 = vlaneseq
  %v1490 = vshrl.u32 %v1489, 7
  %v1491 = vsub.s32 %v1488, %v1490
  %v1492 = vrot.slane %v1470, %v1491
  %v1494 = vunpack.c.l.s4 1966171168
  %v1495 = vunpack.c.0.s8 %v1494
  %v1496 = vlaneseq
  %v1497 = vshrl.u32 %v1496, 7
  %v1498 = vsub.s32 %v1495, %v1497
  %v1499 = vrot.slane %v1471, %v1498
  %v1500 = vcombine.high %v1478, %v1478
  %v1501 = vcombine.high %v1485, %v1485
  %v1502 = vcombine.high %v1492, %v1492
  %v1503 = vcombine.high %v1499, %v1499
  %v1504 = vcombine.high %v752, %v752
  %v1506 = vunpack.c.l.s4 1966171168
  %v1507 = vunpack.c.0.s8 %v1506
  %v1508 = vlaneseq
  %v1509 = vshrl.u32 %v1508, 7
  %v1510 = vsub.s32 %v1507, %v1509
  %v1511 = vrot.slane %v752, %v1510
  %v1513 = vunpack.c.l.s4 1966171168
  %v1514 = vunpack.c.0.s8 %v1513
  %v1515 = vlaneseq
  %v1516 = vshrl.u32 %v1515, 7
  %v1517 = vsub.s32 %v1514, %v1516
  %v1518 = vrot.slane %v1504, %v1517
  %v1519 = vcombine.high %v1511, %v1511
  %v1520 = vcombine.high %v1518, %v1518
  %v1522 = vunpack.c.l.s4 1966171168
  %v1523 = vunpack.c.0.s8 %v1522
  %v1524 = vlaneseq
  %v1525 = vshrl.u32 %v1524, 7
  %v1526 = vsub.s32 %v1523, %v1525
  %v1527 = vrot.slane %v1511, %v1526
  %v1529 = vunpack.c.l.s4 1966171168
  %v1530 = vunpack.c.0.s8 %v1529
  %v1531 = vlaneseq
  %v1532 = vshrl.u32 %v1531, 7
  %v1533 = vsub.s32 %v1530, %v1532
  %v1534 = vrot.slane %v1518, %v1533
  %v1536 = vunpack.c.l.s4 1966171168
  %v1537 = vunpack.c.0.s8 %v1536
  %v1538 = vlaneseq
  %v1539 = vshrl.u32 %v1538, 7
  %v1540 = vsub.s32 %v1537, %v1539
  %v1541 = vrot.slane %v1519, %v1540
  %v1543 = vunpack.c.l.s4 1966171168
  %v1544 = vunpack.c.0.s8 %v1543
  %v1545 = vlaneseq
  %v1546 = vshrl.u32 %v1545, 7
  %v1547 = vsub.s32 %v1544, %v1546
  %v1548 = vrot.slane %v1520, %v1547
  %v1549 = vcombine.high %v1527, %v1527
  %v1550 = vcombine.high %v1534, %v1534
  %v1551 = vcombine.high %v1541, %v1541
  %v1552 = vcombine.high %v1548, %v1548
  %v1553 = vld [vmem:[%s9] sm:$0xff]
  %v1554 = vld [vmem:[%s9 + $0x8] sm:$0xff]
  %v1555 = vlaneseq
  %v1556 = vshrl.u32 %v1555, 7
  %v1557 = vsub.s32 0, %v1556
  %v1558 = vrot.slane %v784, %v1557
  %v1559 = vlaneseq
  %v1560 = vshrl.u32 %v1559, 7
  %v1561 = vsub.s32 0, %v1560
  %v1562 = vrot.slane %v798, %v1561
  %v1563 = vlaneseq
  %v1564 = vshrl.u32 %v1563, 7
  %v1565 = vsub.s32 0, %v1564
  %v1566 = vrot.slane %v806, %v1565
  %v1567 = vlaneseq
  %v1568 = vshrl.u32 %v1567, 7
  %v1569 = vsub.s32 0, %v1568
  %v1570 = vrot.slane %v808, %v1569
  %v1571 = vlaneseq
  %v1572 = vshrl.u32 %v1571, 7
  %v1573 = vsub.s32 0, %v1572
  %v1574 = vrot.slane %v791, %v1573
  %v1575 = vlaneseq
  %v1576 = vshrl.u32 %v1575, 7
  %v1577 = vsub.s32 0, %v1576
  %v1578 = vrot.slane %v805, %v1577
  %v1579 = vlaneseq
  %v1580 = vshrl.u32 %v1579, 7
  %v1581 = vsub.s32 0, %v1580
  %v1582 = vrot.slane %v807, %v1581
  %v1583 = vlaneseq
  %v1584 = vshrl.u32 %v1583, 7
  %v1585 = vsub.s32 0, %v1584
  %v1586 = vrot.slane %v809, %v1585
  %v1587 = vlaneseq
  %v1588 = vshrl.u32 %v1587, 7
  %v1589 = vsub.s32 0, %v1588
  %v1590 = vrot.slane %v833, %v1589
  %v1591 = vlaneseq
  %v1592 = vshrl.u32 %v1591, 7
  %v1593 = vsub.s32 0, %v1592
  %v1594 = vrot.slane %v847, %v1593
  %v1595 = vlaneseq
  %v1596 = vshrl.u32 %v1595, 7
  %v1597 = vsub.s32 0, %v1596
  %v1598 = vrot.slane %v855, %v1597
  %v1599 = vlaneseq
  %v1600 = vshrl.u32 %v1599, 7
  %v1601 = vsub.s32 0, %v1600
  %v1602 = vrot.slane %v857, %v1601
  %v1603 = vlaneseq
  %v1604 = vshrl.u32 %v1603, 7
  %v1605 = vsub.s32 0, %v1604
  %v1606 = vrot.slane %v840, %v1605
  %v1607 = vlaneseq
  %v1608 = vshrl.u32 %v1607, 7
  %v1609 = vsub.s32 0, %v1608
  %v1610 = vrot.slane %v854, %v1609
  %v1611 = vlaneseq
  %v1612 = vshrl.u32 %v1611, 7
  %v1613 = vsub.s32 0, %v1612
  %v1614 = vrot.slane %v856, %v1613
  %v1615 = vlaneseq
  %v1616 = vshrl.u32 %v1615, 7
  %v1617 = vsub.s32 0, %v1616
  %v1618 = vrot.slane %v858, %v1617
  %v1619 = vlaneseq
  %v1620 = vshrl.u32 %v1619, 7
  %v1621 = vsub.s32 0, %v1620
  %v1622 = vrot.slane %v882, %v1621
  %v1623 = vlaneseq
  %v1624 = vshrl.u32 %v1623, 7
  %v1625 = vsub.s32 0, %v1624
  %v1626 = vrot.slane %v896, %v1625
  %v1627 = vlaneseq
  %v1628 = vshrl.u32 %v1627, 7
  %v1629 = vsub.s32 0, %v1628
  %v1630 = vrot.slane %v904, %v1629
  %v1631 = vlaneseq
  %v1632 = vshrl.u32 %v1631, 7
  %v1633 = vsub.s32 0, %v1632
  %v1634 = vrot.slane %v906, %v1633
  %v1635 = vlaneseq
  %v1636 = vshrl.u32 %v1635, 7
  %v1637 = vsub.s32 0, %v1636
  %v1638 = vrot.slane %v889, %v1637
  %v1639 = vlaneseq
  %v1640 = vshrl.u32 %v1639, 7
  %v1641 = vsub.s32 0, %v1640
  %v1642 = vrot.slane %v903, %v1641
  %v1643 = vlaneseq
  %v1644 = vshrl.u32 %v1643, 7
  %v1645 = vsub.s32 0, %v1644
  %v1646 = vrot.slane %v905, %v1645
  %v1647 = vlaneseq
  %v1648 = vshrl.u32 %v1647, 7
  %v1649 = vsub.s32 0, %v1648
  %v1650 = vrot.slane %v907, %v1649
  %v1651 = vlaneseq
  %v1652 = vshrl.u32 %v1651, 7
  %v1653 = vsub.s32 0, %v1652
  %v1654 = vrot.slane %v931, %v1653
  %v1655 = vlaneseq
  %v1656 = vshrl.u32 %v1655, 7
  %v1657 = vsub.s32 0, %v1656
  %v1658 = vrot.slane %v945, %v1657
  %v1659 = vlaneseq
  %v1660 = vshrl.u32 %v1659, 7
  %v1661 = vsub.s32 0, %v1660
  %v1662 = vrot.slane %v953, %v1661
  %v1663 = vlaneseq
  %v1664 = vshrl.u32 %v1663, 7
  %v1665 = vsub.s32 0, %v1664
  %v1666 = vrot.slane %v955, %v1665
  %v1667 = vlaneseq
  %v1668 = vshrl.u32 %v1667, 7
  %v1669 = vsub.s32 0, %v1668
  %v1670 = vrot.slane %v938, %v1669
  %v1671 = vlaneseq
  %v1672 = vshrl.u32 %v1671, 7
  %v1673 = vsub.s32 0, %v1672
  %v1674 = vrot.slane %v952, %v1673
  %v1675 = vlaneseq
  %v1676 = vshrl.u32 %v1675, 7
  %v1677 = vsub.s32 0, %v1676
  %v1678 = vrot.slane %v954, %v1677
  %v1679 = vlaneseq
  %v1680 = vshrl.u32 %v1679, 7
  %v1681 = vsub.s32 0, %v1680
  %v1682 = vrot.slane %v956, %v1681
  %v1683 = vlaneseq
  %v1684 = vshrl.u32 %v1683, 7
  %v1685 = vsub.s32 0, %v1684
  %v1686 = vrot.slane %v980, %v1685
  %v1687 = vlaneseq
  %v1688 = vshrl.u32 %v1687, 7
  %v1689 = vsub.s32 0, %v1688
  %v1690 = vrot.slane %v994, %v1689
  %v1691 = vlaneseq
  %v1692 = vshrl.u32 %v1691, 7
  %v1693 = vsub.s32 0, %v1692
  %v1694 = vrot.slane %v1002, %v1693
  %v1695 = vlaneseq
  %v1696 = vshrl.u32 %v1695, 7
  %v1697 = vsub.s32 0, %v1696
  %v1698 = vrot.slane %v1004, %v1697
  %v1699 = vlaneseq
  %v1700 = vshrl.u32 %v1699, 7
  %v1701 = vsub.s32 0, %v1700
  %v1702 = vrot.slane %v987, %v1701
  %v1703 = vlaneseq
  %v1704 = vshrl.u32 %v1703, 7
  %v1705 = vsub.s32 0, %v1704
  %v1706 = vrot.slane %v1001, %v1705
  %v1707 = vlaneseq
  %v1708 = vshrl.u32 %v1707, 7
  %v1709 = vsub.s32 0, %v1708
  %v1710 = vrot.slane %v1003, %v1709
  %v1711 = vlaneseq
  %v1712 = vshrl.u32 %v1711, 7
  %v1713 = vsub.s32 0, %v1712
  %v1714 = vrot.slane %v1005, %v1713
  %v1715 = vlaneseq
  %v1716 = vshrl.u32 %v1715, 7
  %v1717 = vsub.s32 0, %v1716
  %v1718 = vrot.slane %v1029, %v1717
  %v1719 = vlaneseq
  %v1720 = vshrl.u32 %v1719, 7
  %v1721 = vsub.s32 0, %v1720
  %v1722 = vrot.slane %v1043, %v1721
  %v1723 = vlaneseq
  %v1724 = vshrl.u32 %v1723, 7
  %v1725 = vsub.s32 0, %v1724
  %v1726 = vrot.slane %v1051, %v1725
  %v1727 = vlaneseq
  %v1728 = vshrl.u32 %v1727, 7
  %v1729 = vsub.s32 0, %v1728
  %v1730 = vrot.slane %v1053, %v1729
  %v1731 = vlaneseq
  %v1732 = vshrl.u32 %v1731, 7
  %v1733 = vsub.s32 0, %v1732
  %v1734 = vrot.slane %v1036, %v1733
  %v1735 = vlaneseq
  %v1736 = vshrl.u32 %v1735, 7
  %v1737 = vsub.s32 0, %v1736
  %v1738 = vrot.slane %v1050, %v1737
  %v1739 = vlaneseq
  %v1740 = vshrl.u32 %v1739, 7
  %v1741 = vsub.s32 0, %v1740
  %v1742 = vrot.slane %v1052, %v1741
  %v1743 = vlaneseq
  %v1744 = vshrl.u32 %v1743, 7
  %v1745 = vsub.s32 0, %v1744
  %v1746 = vrot.slane %v1054, %v1745
  %v1747 = vlaneseq
  %v1748 = vshrl.u32 %v1747, 7
  %v1749 = vsub.s32 0, %v1748
  %v1750 = vrot.slane %v1078, %v1749
  %v1751 = vlaneseq
  %v1752 = vshrl.u32 %v1751, 7
  %v1753 = vsub.s32 0, %v1752
  %v1754 = vrot.slane %v1092, %v1753
  %v1755 = vlaneseq
  %v1756 = vshrl.u32 %v1755, 7
  %v1757 = vsub.s32 0, %v1756
  %v1758 = vrot.slane %v1100, %v1757
  %v1759 = vlaneseq
  %v1760 = vshrl.u32 %v1759, 7
  %v1761 = vsub.s32 0, %v1760
  %v1762 = vrot.slane %v1102, %v1761
  %v1763 = vlaneseq
  %v1764 = vshrl.u32 %v1763, 7
  %v1765 = vsub.s32 0, %v1764
  %v1766 = vrot.slane %v1085, %v1765
  %v1767 = vlaneseq
  %v1768 = vshrl.u32 %v1767, 7
  %v1769 = vsub.s32 0, %v1768
  %v1770 = vrot.slane %v1099, %v1769
  %v1771 = vlaneseq
  %v1772 = vshrl.u32 %v1771, 7
  %v1773 = vsub.s32 0, %v1772
  %v1774 = vrot.slane %v1101, %v1773
  %v1775 = vlaneseq
  %v1776 = vshrl.u32 %v1775, 7
  %v1777 = vsub.s32 0, %v1776
  %v1778 = vrot.slane %v1103, %v1777
  %v1779 = vlaneseq
  %v1780 = vshrl.u32 %v1779, 7
  %v1781 = vsub.s32 0, %v1780
  %v1782 = vrot.slane %v1127, %v1781
  %v1783 = vlaneseq
  %v1784 = vshrl.u32 %v1783, 7
  %v1785 = vsub.s32 0, %v1784
  %v1786 = vrot.slane %v1141, %v1785
  %v1787 = vlaneseq
  %v1788 = vshrl.u32 %v1787, 7
  %v1789 = vsub.s32 0, %v1788
  %v1790 = vrot.slane %v1149, %v1789
  %v1791 = vlaneseq
  %v1792 = vshrl.u32 %v1791, 7
  %v1793 = vsub.s32 0, %v1792
  %v1794 = vrot.slane %v1151, %v1793
  %v1795 = vlaneseq
  %v1796 = vshrl.u32 %v1795, 7
  %v1797 = vsub.s32 0, %v1796
  %v1798 = vrot.slane %v1134, %v1797
  %v1799 = vlaneseq
  %v1800 = vshrl.u32 %v1799, 7
  %v1801 = vsub.s32 0, %v1800
  %v1802 = vrot.slane %v1148, %v1801
  %v1803 = vlaneseq
  %v1804 = vshrl.u32 %v1803, 7
  %v1805 = vsub.s32 0, %v1804
  %v1806 = vrot.slane %v1150, %v1805
  %v1807 = vlaneseq
  %v1808 = vshrl.u32 %v1807, 7
  %v1809 = vsub.s32 0, %v1808
  %v1810 = vrot.slane %v1152, %v1809
  %v1875 = vmul.f32 %v1558, %v1553
  %v1876 = vmul.f32 %v1558, %v1554
  %v1877 = vmul.f32 %v1562, %v1553
  %v1878 = vmul.f32 %v1562, %v1554
  %v1879 = vmul.f32 %v1566, %v1553
  %v1880 = vmul.f32 %v1566, %v1554
  %v1881 = vmul.f32 %v1570, %v1553
  %v1882 = vmul.f32 %v1570, %v1554
  %v1883 = vmul.f32 %v1574, %v1553
  %v1884 = vmul.f32 %v1574, %v1554
  %v1885 = vmul.f32 %v1578, %v1553
  %v1886 = vmul.f32 %v1578, %v1554
  %v1887 = vmul.f32 %v1582, %v1553
  %v1888 = vmul.f32 %v1582, %v1554
  %v1889 = vmul.f32 %v1586, %v1553
  %v1890 = vmul.f32 %v1586, %v1554
  %v1891 = vmul.f32 %v1590, %v1553
  %v1892 = vmul.f32 %v1590, %v1554
  %v1893 = vmul.f32 %v1594, %v1553
  %v1894 = vmul.f32 %v1594, %v1554
  %v1895 = vmul.f32 %v1598, %v1553
  %v1896 = vmul.f32 %v1598, %v1554
  %v1897 = vmul.f32 %v1602, %v1553
  %v1898 = vmul.f32 %v1602, %v1554
  %v1899 = vmul.f32 %v1606, %v1553
  %v1900 = vmul.f32 %v1606, %v1554
  %v1901 = vmul.f32 %v1610, %v1553
  %v1902 = vmul.f32 %v1610, %v1554
  %v1903 = vmul.f32 %v1614, %v1553
  %v1904 = vmul.f32 %v1614, %v1554
  %v1905 = vmul.f32 %v1618, %v1553
  %v1906 = vmul.f32 %v1618, %v1554
  %v1907 = vmul.f32 %v1622, %v1553
  %v1908 = vmul.f32 %v1622, %v1554
  %v1909 = vmul.f32 %v1626, %v1553
  %v1910 = vmul.f32 %v1626, %v1554
  %v1911 = vmul.f32 %v1630, %v1553
  %v1912 = vmul.f32 %v1630, %v1554
  %v1913 = vmul.f32 %v1634, %v1553
  %v1914 = vmul.f32 %v1634, %v1554
  %v1915 = vmul.f32 %v1638, %v1553
  %v1916 = vmul.f32 %v1638, %v1554
  %v1917 = vmul.f32 %v1642, %v1553
  %v1918 = vmul.f32 %v1642, %v1554
  %v1919 = vmul.f32 %v1646, %v1553
  %v1920 = vmul.f32 %v1646, %v1554
  %v1921 = vmul.f32 %v1650, %v1553
  %v1922 = vmul.f32 %v1650, %v1554
  %v1923 = vmul.f32 %v1654, %v1553
  %v1924 = vmul.f32 %v1654, %v1554
  %v1925 = vmul.f32 %v1658, %v1553
  %v1926 = vmul.f32 %v1658, %v1554
  %v1927 = vmul.f32 %v1662, %v1553
  %v1928 = vmul.f32 %v1662, %v1554
  %v1929 = vmul.f32 %v1666, %v1553
  %v1930 = vmul.f32 %v1666, %v1554
  %v1931 = vmul.f32 %v1670, %v1553
  %v1932 = vmul.f32 %v1670, %v1554
  %v1933 = vmul.f32 %v1674, %v1553
  %v1934 = vmul.f32 %v1674, %v1554
  %v1935 = vmul.f32 %v1678, %v1553
  %v1936 = vmul.f32 %v1678, %v1554
  %v1937 = vmul.f32 %v1682, %v1553
  %v1938 = vmul.f32 %v1682, %v1554
  %v1939 = vmul.f32 %v1686, %v1553
  %v1940 = vmul.f32 %v1686, %v1554
  %v1941 = vmul.f32 %v1690, %v1553
  %v1942 = vmul.f32 %v1690, %v1554
  %v1943 = vmul.f32 %v1694, %v1553
  %v1944 = vmul.f32 %v1694, %v1554
  %v1945 = vmul.f32 %v1698, %v1553
  %v1946 = vmul.f32 %v1698, %v1554
  %v1947 = vmul.f32 %v1702, %v1553
  %v1948 = vmul.f32 %v1702, %v1554
  %v1949 = vmul.f32 %v1706, %v1553
  %v1950 = vmul.f32 %v1706, %v1554
  %v1951 = vmul.f32 %v1710, %v1553
  %v1952 = vmul.f32 %v1710, %v1554
  %v1953 = vmul.f32 %v1714, %v1553
  %v1954 = vmul.f32 %v1714, %v1554
  %v1955 = vmul.f32 %v1718, %v1553
  %v1956 = vmul.f32 %v1718, %v1554
  %v1957 = vmul.f32 %v1722, %v1553
  %v1958 = vmul.f32 %v1722, %v1554
  %v1959 = vmul.f32 %v1726, %v1553
  %v1960 = vmul.f32 %v1726, %v1554
  %v1961 = vmul.f32 %v1730, %v1553
  %v1962 = vmul.f32 %v1730, %v1554
  %v1963 = vmul.f32 %v1734, %v1553
  %v1964 = vmul.f32 %v1734, %v1554
  %v1965 = vmul.f32 %v1738, %v1553
  %v1966 = vmul.f32 %v1738, %v1554
  %v1967 = vmul.f32 %v1742, %v1553
  %v1968 = vmul.f32 %v1742, %v1554
  %v1969 = vmul.f32 %v1746, %v1553
  %v1970 = vmul.f32 %v1746, %v1554
  %v1971 = vmul.f32 %v1750, %v1553
  %v1972 = vmul.f32 %v1750, %v1554
  %v1973 = vmul.f32 %v1754, %v1553
  %v1974 = vmul.f32 %v1754, %v1554
  %v1975 = vmul.f32 %v1758, %v1553
  %v1976 = vmul.f32 %v1758, %v1554
  %v1977 = vmul.f32 %v1762, %v1553
  %v1978 = vmul.f32 %v1762, %v1554
  %v1979 = vmul.f32 %v1766, %v1553
  %v1980 = vmul.f32 %v1766, %v1554
  %v1981 = vmul.f32 %v1770, %v1553
  %v1982 = vmul.f32 %v1770, %v1554
  %v1983 = vmul.f32 %v1774, %v1553
  %v1984 = vmul.f32 %v1774, %v1554
  %v1985 = vmul.f32 %v1778, %v1553
  %v1986 = vmul.f32 %v1778, %v1554
  %v1987 = vmul.f32 %v1782, %v1553
  %v1988 = vmul.f32 %v1782, %v1554
  %v1989 = vmul.f32 %v1786, %v1553
  %v1990 = vmul.f32 %v1786, %v1554
  %v1991 = vmul.f32 %v1790, %v1553
  %v1992 = vmul.f32 %v1790, %v1554
  %v1993 = vmul.f32 %v1794, %v1553
  %v1994 = vmul.f32 %v1794, %v1554
  %v1995 = vmul.f32 %v1798, %v1553
  %v1996 = vmul.f32 %v1798, %v1554
  %v1997 = vmul.f32 %v1802, %v1553
  %v1998 = vmul.f32 %v1802, %v1554
  %v1999 = vmul.f32 %v1806, %v1553
  %v2000 = vmul.f32 %v1806, %v1554
  %v2001 = vmul.f32 %v1810, %v1553
  %v2002 = vmul.f32 %v1810, %v1554
  %v2003 = vmul.f32 %v1875, 1.442695
  %v2004 = vpow.pop %v2003
  %v2005 = vmul.f32 %v1876, 1.442695
  %v2006 = vpow.pop %v2005
  %v2007 = vmul.f32 %v1877, 1.442695
  %v2008 = vpow.pop %v2007
  %v2009 = vmul.f32 %v1878, 1.442695
  %v2010 = vpow.pop %v2009
  %v2011 = vmul.f32 %v1879, 1.442695
  %v2012 = vpow.pop %v2011
  %v2013 = vmul.f32 %v1880, 1.442695
  %v2014 = vpow.pop %v2013
  %v2015 = vmul.f32 %v1881, 1.442695
  %v2016 = vpow.pop %v2015
  %v2017 = vmul.f32 %v1882, 1.442695
  %v2018 = vpow.pop %v2017
  %v2019 = vmul.f32 %v1883, 1.442695
  %v2020 = vpow.pop %v2019
  %v2021 = vmul.f32 %v1884, 1.442695
  %v2022 = vpow.pop %v2021
  %v2023 = vmul.f32 %v1885, 1.442695
  %v2024 = vpow.pop %v2023
  %v2025 = vmul.f32 %v1886, 1.442695
  %v2026 = vpow.pop %v2025
  %v2027 = vmul.f32 %v1887, 1.442695
  %v2028 = vpow.pop %v2027
  %v2029 = vmul.f32 %v1888, 1.442695
  %v2030 = vpow.pop %v2029
  %v2031 = vmul.f32 %v1889, 1.442695
  %v2032 = vpow.pop %v2031
  %v2033 = vmul.f32 %v1890, 1.442695
  %v2034 = vpow.pop %v2033
  %v2035 = vmul.f32 %v1891, 1.442695
  %v2036 = vpow.pop %v2035
  %v2037 = vmul.f32 %v1892, 1.442695
  %v2038 = vpow.pop %v2037
  %v2039 = vmul.f32 %v1893, 1.442695
  %v2040 = vpow.pop %v2039
  %v2041 = vmul.f32 %v1894, 1.442695
  %v2042 = vpow.pop %v2041
  %v2043 = vmul.f32 %v1895, 1.442695
  %v2044 = vpow.pop %v2043
  %v2045 = vmul.f32 %v1896, 1.442695
  %v2046 = vpow.pop %v2045
  %v2047 = vmul.f32 %v1897, 1.442695
  %v2048 = vpow.pop %v2047
  %v2049 = vmul.f32 %v1898, 1.442695
  %v2050 = vpow.pop %v2049
  %v2051 = vmul.f32 %v1899, 1.442695
  %v2052 = vpow.pop %v2051
  %v2053 = vmul.f32 %v1900, 1.442695
  %v2054 = vpow.pop %v2053
  %v2055 = vmul.f32 %v1901, 1.442695
  %v2056 = vpow.pop %v2055
  %v2057 = vmul.f32 %v1902, 1.442695
  %v2058 = vpow.pop %v2057
  %v2059 = vmul.f32 %v1903, 1.442695
  %v2060 = vpow.pop %v2059
  %v2061 = vmul.f32 %v1904, 1.442695
  %v2062 = vpow.pop %v2061
  %v2063 = vmul.f32 %v1905, 1.442695
  %v2064 = vpow.pop %v2063
  %v2065 = vmul.f32 %v1906, 1.442695
  %v2066 = vpow.pop %v2065
  %v2067 = vmul.f32 %v1907, 1.442695
  %v2068 = vpow.pop %v2067
  %v2069 = vmul.f32 %v1908, 1.442695
  %v2070 = vpow.pop %v2069
  %v2071 = vmul.f32 %v1909, 1.442695
  %v2072 = vpow.pop %v2071
  %v2073 = vmul.f32 %v1910, 1.442695
  %v2074 = vpow.pop %v2073
  %v2075 = vmul.f32 %v1911, 1.442695
  %v2076 = vpow.pop %v2075
  %v2077 = vmul.f32 %v1912, 1.442695
  %v2078 = vpow.pop %v2077
  %v2079 = vmul.f32 %v1913, 1.442695
  %v2080 = vpow.pop %v2079
  %v2081 = vmul.f32 %v1914, 1.442695
  %v2082 = vpow.pop %v2081
  %v2083 = vmul.f32 %v1915, 1.442695
  %v2084 = vpow.pop %v2083
  %v2085 = vmul.f32 %v1916, 1.442695
  %v2086 = vpow.pop %v2085
  %v2087 = vmul.f32 %v1917, 1.442695
  %v2088 = vpow.pop %v2087
  %v2089 = vmul.f32 %v1918, 1.442695
  %v2090 = vpow.pop %v2089
  %v2091 = vmul.f32 %v1919, 1.442695
  %v2092 = vpow.pop %v2091
  %v2093 = vmul.f32 %v1920, 1.442695
  %v2094 = vpow.pop %v2093
  %v2095 = vmul.f32 %v1921, 1.442695
  %v2096 = vpow.pop %v2095
  %v2097 = vmul.f32 %v1922, 1.442695
  %v2098 = vpow.pop %v2097
  %v2099 = vmul.f32 %v1923, 1.442695
  %v2100 = vpow.pop %v2099
  %v2101 = vmul.f32 %v1924, 1.442695
  %v2102 = vpow.pop %v2101
  %v2103 = vmul.f32 %v1925, 1.442695
  %v2104 = vpow.pop %v2103
  %v2105 = vmul.f32 %v1926, 1.442695
  %v2106 = vpow.pop %v2105
  %v2107 = vmul.f32 %v1927, 1.442695
  %v2108 = vpow.pop %v2107
  %v2109 = vmul.f32 %v1928, 1.442695
  %v2110 = vpow.pop %v2109
  %v2111 = vmul.f32 %v1929, 1.442695
  %v2112 = vpow.pop %v2111
  %v2113 = vmul.f32 %v1930, 1.442695
  %v2114 = vpow.pop %v2113
  %v2115 = vmul.f32 %v1931, 1.442695
  %v2116 = vpow.pop %v2115
  %v2117 = vmul.f32 %v1932, 1.442695
  %v2118 = vpow.pop %v2117
  %v2119 = vmul.f32 %v1933, 1.442695
  %v2120 = vpow.pop %v2119
  %v2121 = vmul.f32 %v1934, 1.442695
  %v2122 = vpow.pop %v2121
  %v2123 = vmul.f32 %v1935, 1.442695
  %v2124 = vpow.pop %v2123
  %v2125 = vmul.f32 %v1936, 1.442695
  %v2126 = vpow.pop %v2125
  %v2127 = vmul.f32 %v1937, 1.442695
  %v2128 = vpow.pop %v2127
  %v2129 = vmul.f32 %v1938, 1.442695
  %v2130 = vpow.pop %v2129
  %v2131 = vmul.f32 %v1939, 1.442695
  %v2132 = vpow.pop %v2131
  %v2133 = vmul.f32 %v1940, 1.442695
  %v2134 = vpow.pop %v2133
  %v2135 = vmul.f32 %v1941, 1.442695
  %v2136 = vpow.pop %v2135
  %v2137 = vmul.f32 %v1942, 1.442695
  %v2138 = vpow.pop %v2137
  %v2139 = vmul.f32 %v1943, 1.442695
  %v2140 = vpow.pop %v2139
  %v2141 = vmul.f32 %v1944, 1.442695
  %v2142 = vpow.pop %v2141
  %v2143 = vmul.f32 %v1945, 1.442695
  %v2144 = vpow.pop %v2143
  %v2145 = vmul.f32 %v1946, 1.442695
  %v2146 = vpow.pop %v2145
  %v2147 = vmul.f32 %v1947, 1.442695
  %v2148 = vpow.pop %v2147
  %v2149 = vmul.f32 %v1948, 1.442695
  %v2150 = vpow.pop %v2149
  %v2151 = vmul.f32 %v1949, 1.442695
  %v2152 = vpow.pop %v2151
  %v2153 = vmul.f32 %v1950, 1.442695
  %v2154 = vpow.pop %v2153
  %v2155 = vmul.f32 %v1951, 1.442695
  %v2156 = vpow.pop %v2155
  %v2157 = vmul.f32 %v1952, 1.442695
  %v2158 = vpow.pop %v2157
  %v2159 = vmul.f32 %v1953, 1.442695
  %v2160 = vpow.pop %v2159
  %v2161 = vmul.f32 %v1954, 1.442695
  %v2162 = vpow.pop %v2161
  %v2163 = vmul.f32 %v1955, 1.442695
  %v2164 = vpow.pop %v2163
  %v2165 = vmul.f32 %v1956, 1.442695
  %v2166 = vpow.pop %v2165
  %v2167 = vmul.f32 %v1957, 1.442695
  %v2168 = vpow.pop %v2167
  %v2169 = vmul.f32 %v1958, 1.442695
  %v2170 = vpow.pop %v2169
  %v2171 = vmul.f32 %v1959, 1.442695
  %v2172 = vpow.pop %v2171
  %v2173 = vmul.f32 %v1960, 1.442695
  %v2174 = vpow.pop %v2173
  %v2175 = vmul.f32 %v1961, 1.442695
  %v2176 = vpow.pop %v2175
  %v2177 = vmul.f32 %v1962, 1.442695
  %v2178 = vpow.pop %v2177
  %v2179 = vmul.f32 %v1963, 1.442695
  %v2180 = vpow.pop %v2179
  %v2181 = vmul.f32 %v1964, 1.442695
  %v2182 = vpow.pop %v2181
  %v2183 = vmul.f32 %v1965, 1.442695
  %v2184 = vpow.pop %v2183
  %v2185 = vmul.f32 %v1966, 1.442695
  %v2186 = vpow.pop %v2185
  %v2187 = vmul.f32 %v1967, 1.442695
  %v2188 = vpow.pop %v2187
  %v2189 = vmul.f32 %v1968, 1.442695
  %v2190 = vpow.pop %v2189
  %v2191 = vmul.f32 %v1969, 1.442695
  %v2192 = vpow.pop %v2191
  %v2193 = vmul.f32 %v1970, 1.442695
  %v2194 = vpow.pop %v2193
  %v2195 = vmul.f32 %v1971, 1.442695
  %v2196 = vpow.pop %v2195
  %v2197 = vmul.f32 %v1972, 1.442695
  %v2198 = vpow.pop %v2197
  %v2199 = vmul.f32 %v1973, 1.442695
  %v2200 = vpow.pop %v2199
  %v2201 = vmul.f32 %v1974, 1.442695
  %v2202 = vpow.pop %v2201
  %v2203 = vmul.f32 %v1975, 1.442695
  %v2204 = vpow.pop %v2203
  %v2205 = vmul.f32 %v1976, 1.442695
  %v2206 = vpow.pop %v2205
  %v2207 = vmul.f32 %v1977, 1.442695
  %v2208 = vpow.pop %v2207
  %v2209 = vmul.f32 %v1978, 1.442695
  %v2210 = vpow.pop %v2209
  %v2211 = vmul.f32 %v1979, 1.442695
  %v2212 = vpow.pop %v2211
  %v2213 = vmul.f32 %v1980, 1.442695
  %v2214 = vpow.pop %v2213
  %v2215 = vmul.f32 %v1981, 1.442695
  %v2216 = vpow.pop %v2215
  %v2217 = vmul.f32 %v1982, 1.442695
  %v2218 = vpow.pop %v2217
  %v2219 = vmul.f32 %v1983, 1.442695
  %v2220 = vpow.pop %v2219
  %v2221 = vmul.f32 %v1984, 1.442695
  %v2222 = vpow.pop %v2221
  %v2223 = vmul.f32 %v1985, 1.442695
  %v2224 = vpow.pop %v2223
  %v2225 = vmul.f32 %v1986, 1.442695
  %v2226 = vpow.pop %v2225
  %v2227 = vmul.f32 %v1987, 1.442695
  %v2228 = vpow.pop %v2227
  %v2229 = vmul.f32 %v1988, 1.442695
  %v2230 = vpow.pop %v2229
  %v2231 = vmul.f32 %v1989, 1.442695
  %v2232 = vpow.pop %v2231
  %v2233 = vmul.f32 %v1990, 1.442695
  %v2234 = vpow.pop %v2233
  %v2235 = vmul.f32 %v1991, 1.442695
  %v2236 = vpow.pop %v2235
  %v2237 = vmul.f32 %v1992, 1.442695
  %v2238 = vpow.pop %v2237
  %v2239 = vmul.f32 %v1993, 1.442695
  %v2240 = vpow.pop %v2239
  %v2241 = vmul.f32 %v1994, 1.442695
  %v2242 = vpow.pop %v2241
  %v2243 = vmul.f32 %v1995, 1.442695
  %v2244 = vpow.pop %v2243
  %v2245 = vmul.f32 %v1996, 1.442695
  %v2246 = vpow.pop %v2245
  %v2247 = vmul.f32 %v1997, 1.442695
  %v2248 = vpow.pop %v2247
  %v2249 = vmul.f32 %v1998, 1.442695
  %v2250 = vpow.pop %v2249
  %v2251 = vmul.f32 %v1999, 1.442695
  %v2252 = vpow.pop %v2251
  %v2253 = vmul.f32 %v2000, 1.442695
  %v2254 = vpow.pop %v2253
  %v2255 = vmul.f32 %v2001, 1.442695
  %v2256 = vpow.pop %v2255
  %v2257 = vmul.f32 %v2002, 1.442695
  %v2258 = vpow.pop %v2257
  %2259 = vst [vmem:[#allocation2] sm:$0xff] %v2004
  %2260 = vst [vmem:[#allocation2 + $0x8] sm:$0xff] %v2006
  %2261 = vst [vmem:[#allocation2 + $0x10] sm:$0xff] %v2008
  %2262 = vst [vmem:[#allocation2 + $0x18] sm:$0xff] %v2010
  %2263 = vst [vmem:[#allocation2 + $0x20] sm:$0xff] %v2012
  %2264 = vst [vmem:[#allocation2 + $0x28] sm:$0xff] %v2014
  %2265 = vst [vmem:[#allocation2 + $0x30] sm:$0xff] %v2016
  %2266 = vst [vmem:[#allocation2 + $0x38] sm:$0xff] %v2018
  %2267 = vst [vmem:[#allocation2 + $0x40] sm:$0xff] %v2020
  %2268 = vst [vmem:[#allocation2 + $0x48] sm:$0xff] %v2022
  %2269 = vst [vmem:[#allocation2 + $0x50] sm:$0xff] %v2024
  %2270 = vst [vmem:[#allocation2 + $0x58] sm:$0xff] %v2026
  %2271 = vst [vmem:[#allocation2 + $0x60] sm:$0xff] %v2028
  %2272 = vst [vmem:[#allocation2 + $0x68] sm:$0xff] %v2030
  %2273 = vst [vmem:[#allocation2 + $0x70] sm:$0xff] %v2032
  %2274 = vst [vmem:[#allocation2 + $0x78] sm:$0xff] %v2034
  %2275 = vst [vmem:[#allocation2 + $0x80] sm:$0xff] %v2036
  %2276 = vst [vmem:[#allocation2 + $0x88] sm:$0xff] %v2038
  %2277 = vst [vmem:[#allocation2 + $0x90] sm:$0xff] %v2040
  %2278 = vst [vmem:[#allocation2 + $0x98] sm:$0xff] %v2042
  %2279 = vst [vmem:[#allocation2 + $0xa0] sm:$0xff] %v2044
  %2280 = vst [vmem:[#allocation2 + $0xa8] sm:$0xff] %v2046
  %2281 = vst [vmem:[#allocation2 + $0xb0] sm:$0xff] %v2048
  %2282 = vst [vmem:[#allocation2 + $0xb8] sm:$0xff] %v2050
  %2283 = vst [vmem:[#allocation2 + $0xc0] sm:$0xff] %v2052
  %2284 = vst [vmem:[#allocation2 + $0xc8] sm:$0xff] %v2054
  %2285 = vst [vmem:[#allocation2 + $0xd0] sm:$0xff] %v2056
  %2286 = vst [vmem:[#allocation2 + $0xd8] sm:$0xff] %v2058
  %2287 = vst [vmem:[#allocation2 + $0xe0] sm:$0xff] %v2060
  %2288 = vst [vmem:[#allocation2 + $0xe8] sm:$0xff] %v2062
  %2289 = vst [vmem:[#allocation2 + $0xf0] sm:$0xff] %v2064
  %2290 = vst [vmem:[#allocation2 + $0xf8] sm:$0xff] %v2066
  %2291 = vst [vmem:[#allocation2 + $0x100] sm:$0xff] %v2068
  %2292 = vst [vmem:[#allocation2 + $0x108] sm:$0xff] %v2070
  %2293 = vst [vmem:[#allocation2 + $0x110] sm:$0xff] %v2072
  %2294 = vst [vmem:[#allocation2 + $0x118] sm:$0xff] %v2074
  %2295 = vst [vmem:[#allocation2 + $0x120] sm:$0xff] %v2076
  %2296 = vst [vmem:[#allocation2 + $0x128] sm:$0xff] %v2078
  %2297 = vst [vmem:[#allocation2 + $0x130] sm:$0xff] %v2080
  %2298 = vst [vmem:[#allocation2 + $0x138] sm:$0xff] %v2082
  %2299 = vst [vmem:[#allocation2 + $0x140] sm:$0xff] %v2084
  %2300 = vst [vmem:[#allocation2 + $0x148] sm:$0xff] %v2086
  %2301 = vst [vmem:[#allocation2 + $0x150] sm:$0xff] %v2088
  %2302 = vst [vmem:[#allocation2 + $0x158] sm:$0xff] %v2090
  %2303 = vst [vmem:[#allocation2 + $0x160] sm:$0xff] %v2092
  %2304 = vst [vmem:[#allocation2 + $0x168] sm:$0xff] %v2094
  %2305 = vst [vmem:[#allocation2 + $0x170] sm:$0xff] %v2096
  %2306 = vst [vmem:[#allocation2 + $0x178] sm:$0xff] %v2098
  %2307 = vst [vmem:[#allocation2 + $0x180] sm:$0xff] %v2100
  %2308 = vst [vmem:[#allocation2 + $0x188] sm:$0xff] %v2102
  %2309 = vst [vmem:[#allocation2 + $0x190] sm:$0xff] %v2104
  %2310 = vst [vmem:[#allocation2 + $0x198] sm:$0xff] %v2106
  %2311 = vst [vmem:[#allocation2 + $0x1a0] sm:$0xff] %v2108
  %2312 = vst [vmem:[#allocation2 + $0x1a8] sm:$0xff] %v2110
  %2313 = vst [vmem:[#allocation2 + $0x1b0] sm:$0xff] %v2112
  %2314 = vst [vmem:[#allocation2 + $0x1b8] sm:$0xff] %v2114
  %2315 = vst [vmem:[#allocation2 + $0x1c0] sm:$0xff] %v2116
  %2316 = vst [vmem:[#allocation2 + $0x1c8] sm:$0xff] %v2118
  %2317 = vst [vmem:[#allocation2 + $0x1d0] sm:$0xff] %v2120
  %2318 = vst [vmem:[#allocation2 + $0x1d8] sm:$0xff] %v2122
  %2319 = vst [vmem:[#allocation2 + $0x1e0] sm:$0xff] %v2124
  %2320 = vst [vmem:[#allocation2 + $0x1e8] sm:$0xff] %v2126
  %2321 = vst [vmem:[#allocation2 + $0x1f0] sm:$0xff] %v2128
  %2322 = vst [vmem:[#allocation2 + $0x1f8] sm:$0xff] %v2130
  %2323 = vst [vmem:[#allocation2 + $0x200] sm:$0xff] %v2132
  %2324 = vst [vmem:[#allocation2 + $0x208] sm:$0xff] %v2134
  %2325 = vst [vmem:[#allocation2 + $0x210] sm:$0xff] %v2136
  %2326 = vst [vmem:[#allocation2 + $0x218] sm:$0xff] %v2138
  %2327 = vst [vmem:[#allocation2 + $0x220] sm:$0xff] %v2140
  %2328 = vst [vmem:[#allocation2 + $0x228] sm:$0xff] %v2142
  %2329 = vst [vmem:[#allocation2 + $0x230] sm:$0xff] %v2144
  %2330 = vst [vmem:[#allocation2 + $0x238] sm:$0xff] %v2146
  %2331 = vst [vmem:[#allocation2 + $0x240] sm:$0xff] %v2148
  %2332 = vst [vmem:[#allocation2 + $0x248] sm:$0xff] %v2150
  %2333 = vst [vmem:[#allocation2 + $0x250] sm:$0xff] %v2152
  %2334 = vst [vmem:[#allocation2 + $0x258] sm:$0xff] %v2154
  %2335 = vst [vmem:[#allocation2 + $0x260] sm:$0xff] %v2156
  %2336 = vst [vmem:[#allocation2 + $0x268] sm:$0xff] %v2158
  %2337 = vst [vmem:[#allocation2 + $0x270] sm:$0xff] %v2160
  %2338 = vst [vmem:[#allocation2 + $0x278] sm:$0xff] %v2162
  %2339 = vst [vmem:[#allocation2 + $0x280] sm:$0xff] %v2164
  %2340 = vst [vmem:[#allocation2 + $0x288] sm:$0xff] %v2166
  %2341 = vst [vmem:[#allocation2 + $0x290] sm:$0xff] %v2168
  %2342 = vst [vmem:[#allocation2 + $0x298] sm:$0xff] %v2170
  %2343 = vst [vmem:[#allocation2 + $0x2a0] sm:$0xff] %v2172
  %2344 = vst [vmem:[#allocation2 + $0x2a8] sm:$0xff] %v2174
  %2345 = vst [vmem:[#allocation2 + $0x2b0] sm:$0xff] %v2176
  %2346 = vst [vmem:[#allocation2 + $0x2b8] sm:$0xff] %v2178
  %2347 = vst [vmem:[#allocation2 + $0x2c0] sm:$0xff] %v2180
  %2348 = vst [vmem:[#allocation2 + $0x2c8] sm:$0xff] %v2182
  %2349 = vst [vmem:[#allocation2 + $0x2d0] sm:$0xff] %v2184
  %2350 = vst [vmem:[#allocation2 + $0x2d8] sm:$0xff] %v2186
  %2351 = vst [vmem:[#allocation2 + $0x2e0] sm:$0xff] %v2188
  %2352 = vst [vmem:[#allocation2 + $0x2e8] sm:$0xff] %v2190
  %2353 = vst [vmem:[#allocation2 + $0x2f0] sm:$0xff] %v2192
  %2354 = vst [vmem:[#allocation2 + $0x2f8] sm:$0xff] %v2194
  %2355 = vst [vmem:[#allocation2 + $0x300] sm:$0xff] %v2196
  %2356 = vst [vmem:[#allocation2 + $0x308] sm:$0xff] %v2198
  %2357 = vst [vmem:[#allocation2 + $0x310] sm:$0xff] %v2200
  %2358 = vst [vmem:[#allocation2 + $0x318] sm:$0xff] %v2202
  %2359 = vst [vmem:[#allocation2 + $0x320] sm:$0xff] %v2204
  %2360 = vst [vmem:[#allocation2 + $0x328] sm:$0xff] %v2206
  %2361 = vst [vmem:[#allocation2 + $0x330] sm:$0xff] %v2208
  %2362 = vst [vmem:[#allocation2 + $0x338] sm:$0xff] %v2210
  %2363 = vst [vmem:[#allocation2 + $0x340] sm:$0xff] %v2212
  %2364 = vst [vmem:[#allocation2 + $0x348] sm:$0xff] %v2214
  %2365 = vst [vmem:[#allocation2 + $0x350] sm:$0xff] %v2216
  %2366 = vst [vmem:[#allocation2 + $0x358] sm:$0xff] %v2218
  %2367 = vst [vmem:[#allocation2 + $0x360] sm:$0xff] %v2220
  %2368 = vst [vmem:[#allocation2 + $0x368] sm:$0xff] %v2222
  %2369 = vst [vmem:[#allocation2 + $0x370] sm:$0xff] %v2224
  %2370 = vst [vmem:[#allocation2 + $0x378] sm:$0xff] %v2226
  %2371 = vst [vmem:[#allocation2 + $0x380] sm:$0xff] %v2228
  %2372 = vst [vmem:[#allocation2 + $0x388] sm:$0xff] %v2230
  %2373 = vst [vmem:[#allocation2 + $0x390] sm:$0xff] %v2232
  %2374 = vst [vmem:[#allocation2 + $0x398] sm:$0xff] %v2234
  %2375 = vst [vmem:[#allocation2 + $0x3a0] sm:$0xff] %v2236
  %2376 = vst [vmem:[#allocation2 + $0x3a8] sm:$0xff] %v2238
  %2377 = vst [vmem:[#allocation2 + $0x3b0] sm:$0xff] %v2240
  %2378 = vst [vmem:[#allocation2 + $0x3b8] sm:$0xff] %v2242
  %2379 = vst [vmem:[#allocation2 + $0x3c0] sm:$0xff] %v2244
  %2380 = vst [vmem:[#allocation2 + $0x3c8] sm:$0xff] %v2246
  %2381 = vst [vmem:[#allocation2 + $0x3d0] sm:$0xff] %v2248
  %2382 = vst [vmem:[#allocation2 + $0x3d8] sm:$0xff] %v2250
  %2383 = vst [vmem:[#allocation2 + $0x3e0] sm:$0xff] %v2252
  %2384 = vst [vmem:[#allocation2 + $0x3e8] sm:$0xff] %v2254
  %2385 = vst [vmem:[#allocation2 + $0x3f0] sm:$0xff] %v2256
  %2386 = vst [vmem:[#allocation2 + $0x3f8] sm:$0xff] %v2258
  %v2387 = vlaneseq
  %v2388 = vshrl.u32 %v2387, 7
  %v2389 = vsub.s32 0, %v2388
  %v2390 = vrot.slane %v509, %v2389
  %s2392 = sor.u32 256, 4
  %2393 = vbcast.lane.b32.xlu0 %v2390, %s2392
  %v2394 = vpop.permute.xlu0 %2393
  %s2396 = sor.u32 256, 12
  %2397 = vbcast.lane.b32.xlu0 %v2390, %s2396
  %v2398 = vpop.permute.xlu0 %2397
  %v2399 = vlaneseq
  %v2400 = vshrl.u32 %v2399, 7
  %v2401 = vsub.s32 1, %v2400
  %v2402 = vrot.slane %v509, %v2401
  %s2404 = sor.u32 256, 4
  %2405 = vbcast.lane.b32.xlu0 %v2402, %s2404
  %v2406 = vpop.permute.xlu0 %2405
  %s2408 = sor.u32 256, 12
  %2409 = vbcast.lane.b32.xlu0 %v2402, %s2408
  %v2410 = vpop.permute.xlu0 %2409
  %v2411 = vlaneseq
  %v2412 = vshrl.u32 %v2411, 7
  %v2413 = vsub.s32 2, %v2412
  %v2414 = vrot.slane %v509, %v2413
  %s2416 = sor.u32 256, 4
  %2417 = vbcast.lane.b32.xlu0 %v2414, %s2416
  %v2418 = vpop.permute.xlu0 %2417
  %s2420 = sor.u32 256, 12
  %2421 = vbcast.lane.b32.xlu0 %v2414, %s2420
  %v2422 = vpop.permute.xlu0 %2421
  %v2423 = vlaneseq
  %v2424 = vshrl.u32 %v2423, 7
  %v2425 = vsub.s32 3, %v2424
  %v2426 = vrot.slane %v509, %v2425
  %s2428 = sor.u32 256, 4
  %2429 = vbcast.lane.b32.xlu0 %v2426, %s2428
  %v2430 = vpop.permute.xlu0 %2429
  %s2432 = sor.u32 256, 12
  %2433 = vbcast.lane.b32.xlu0 %v2426, %s2432
  %v2434 = vpop.permute.xlu0 %2433
  %v2435 = vlaneseq
  %v2436 = vshrl.u32 %v2435, 7
  %v2437 = vsub.s32 4, %v2436
  %v2438 = vrot.slane %v509, %v2437
  %s2440 = sor.u32 256, 4
  %2441 = vbcast.lane.b32.xlu0 %v2438, %s2440
  %v2442 = vpop.permute.xlu0 %2441
  %s2444 = sor.u32 256, 12
  %2445 = vbcast.lane.b32.xlu0 %v2438, %s2444
  %v2446 = vpop.permute.xlu0 %2445
  %v2447 = vlaneseq
  %v2448 = vshrl.u32 %v2447, 7
  %v2449 = vsub.s32 5, %v2448
  %v2450 = vrot.slane %v509, %v2449
  %s2452 = sor.u32 256, 4
  %2453 = vbcast.lane.b32.xlu0 %v2450, %s2452
  %v2454 = vpop.permute.xlu0 %2453
  %s2456 = sor.u32 256, 12
  %2457 = vbcast.lane.b32.xlu0 %v2450, %s2456
  %v2458 = vpop.permute.xlu0 %2457
  %v2459 = vlaneseq
  %v2460 = vshrl.u32 %v2459, 7
  %v2461 = vsub.s32 6, %v2460
  %v2462 = vrot.slane %v509, %v2461
  %s2464 = sor.u32 256, 4
  %2465 = vbcast.lane.b32.xlu0 %v2462, %s2464
  %v2466 = vpop.permute.xlu0 %2465
  %s2468 = sor.u32 256, 12
  %2469 = vbcast.lane.b32.xlu0 %v2462, %s2468
  %v2470 = vpop.permute.xlu0 %2469
  %v2471 = vlaneseq
  %v2472 = vshrl.u32 %v2471, 7
  %v2473 = vsub.s32 7, %v2472
  %v2474 = vrot.slane %v509, %v2473
  %s2476 = sor.u32 256, 4
  %2477 = vbcast.lane.b32.xlu0 %v2474, %s2476
  %v2478 = vpop.permute.xlu0 %2477
  %s2480 = sor.u32 256, 12
  %2481 = vbcast.lane.b32.xlu0 %v2474, %s2480
  %v2482 = vpop.permute.xlu0 %2481
  %v2483 = vlaneseq
  %v2484 = vshrl.u32 %v2483, 7
  %v2485 = vsub.s32 0, %v2484
  %v2486 = vrot.slane %v512, %v2485
  %s2488 = sor.u32 256, 4
  %2489 = vbcast.lane.b32.xlu0 %v2486, %s2488
  %v2490 = vpop.permute.xlu0 %2489
  %s2492 = sor.u32 256, 12
  %2493 = vbcast.lane.b32.xlu0 %v2486, %s2492
  %v2494 = vpop.permute.xlu0 %2493
  %v2495 = vlaneseq
  %v2496 = vshrl.u32 %v2495, 7
  %v2497 = vsub.s32 1, %v2496
  %v2498 = vrot.slane %v512, %v2497
  %s2500 = sor.u32 256, 4
  %2501 = vbcast.lane.b32.xlu0 %v2498, %s2500
  %v2502 = vpop.permute.xlu0 %2501
  %s2504 = sor.u32 256, 12
  %2505 = vbcast.lane.b32.xlu0 %v2498, %s2504
  %v2506 = vpop.permute.xlu0 %2505
  %v2507 = vlaneseq
  %v2508 = vshrl.u32 %v2507, 7
  %v2509 = vsub.s32 2, %v2508
  %v2510 = vrot.slane %v512, %v2509
  %s2512 = sor.u32 256, 4
  %2513 = vbcast.lane.b32.xlu0 %v2510, %s2512
  %v2514 = vpop.permute.xlu0 %2513
  %s2516 = sor.u32 256, 12
  %2517 = vbcast.lane.b32.xlu0 %v2510, %s2516
  %v2518 = vpop.permute.xlu0 %2517
  %v2519 = vlaneseq
  %v2520 = vshrl.u32 %v2519, 7
  %v2521 = vsub.s32 3, %v2520
  %v2522 = vrot.slane %v512, %v2521
  %s2524 = sor.u32 256, 4
  %2525 = vbcast.lane.b32.xlu0 %v2522, %s2524
  %v2526 = vpop.permute.xlu0 %2525
  %s2528 = sor.u32 256, 12
  %2529 = vbcast.lane.b32.xlu0 %v2522, %s2528
  %v2530 = vpop.permute.xlu0 %2529
  %v2531 = vlaneseq
  %v2532 = vshrl.u32 %v2531, 7
  %v2533 = vsub.s32 4, %v2532
  %v2534 = vrot.slane %v512, %v2533
  %s2536 = sor.u32 256, 4
  %2537 = vbcast.lane.b32.xlu0 %v2534, %s2536
  %v2538 = vpop.permute.xlu0 %2537
  %s2540 = sor.u32 256, 12
  %2541 = vbcast.lane.b32.xlu0 %v2534, %s2540
  %v2542 = vpop.permute.xlu0 %2541
  %v2543 = vlaneseq
  %v2544 = vshrl.u32 %v2543, 7
  %v2545 = vsub.s32 5, %v2544
  %v2546 = vrot.slane %v512, %v2545
  %s2548 = sor.u32 256, 4
  %2549 = vbcast.lane.b32.xlu0 %v2546, %s2548
  %v2550 = vpop.permute.xlu0 %2549
  %s2552 = sor.u32 256, 12
  %2553 = vbcast.lane.b32.xlu0 %v2546, %s2552
  %v2554 = vpop.permute.xlu0 %2553
  %v2555 = vlaneseq
  %v2556 = vshrl.u32 %v2555, 7
  %v2557 = vsub.s32 6, %v2556
  %v2558 = vrot.slane %v512, %v2557
  %s2560 = sor.u32 256, 4
  %2561 = vbcast.lane.b32.xlu0 %v2558, %s2560
  %v2562 = vpop.permute.xlu0 %2561
  %s2564 = sor.u32 256, 12
  %2565 = vbcast.lane.b32.xlu0 %v2558, %s2564
  %v2566 = vpop.permute.xlu0 %2565
  %v2567 = vlaneseq
  %v2568 = vshrl.u32 %v2567, 7
  %v2569 = vsub.s32 7, %v2568
  %v2570 = vrot.slane %v512, %v2569
  %s2572 = sor.u32 256, 4
  %2573 = vbcast.lane.b32.xlu0 %v2570, %s2572
  %v2574 = vpop.permute.xlu0 %2573
  %s2576 = sor.u32 256, 12
  %2577 = vbcast.lane.b32.xlu0 %v2570, %s2576
  %v2578 = vpop.permute.xlu0 %2577
  %v2579 = vlaneseq
  %v2580 = vshrl.u32 %v2579, 7
  %v2581 = vsub.s32 0, %v2580
  %v2582 = vrot.slane %v517, %v2581
  %s2584 = sor.u32 256, 4
  %2585 = vbcast.lane.b32.xlu0 %v2582, %s2584
  %v2586 = vpop.permute.xlu0 %2585
  %s2588 = sor.u32 256, 12
  %2589 = vbcast.lane.b32.xlu0 %v2582, %s2588
  %v2590 = vpop.permute.xlu0 %2589
  %v2591 = vlaneseq
  %v2592 = vshrl.u32 %v2591, 7
  %v2593 = vsub.s32 1, %v2592
  %v2594 = vrot.slane %v517, %v2593
  %s2596 = sor.u32 256, 4
  %2597 = vbcast.lane.b32.xlu0 %v2594, %s2596
  %v2598 = vpop.permute.xlu0 %2597
  %s2600 = sor.u32 256, 12
  %2601 = vbcast.lane.b32.xlu0 %v2594, %s2600
  %v2602 = vpop.permute.xlu0 %2601
  %v2603 = vlaneseq
  %v2604 = vshrl.u32 %v2603, 7
  %v2605 = vsub.s32 2, %v2604
  %v2606 = vrot.slane %v517, %v2605
  %s2608 = sor.u32 256, 4
  %2609 = vbcast.lane.b32.xlu0 %v2606, %s2608
  %v2610 = vpop.permute.xlu0 %2609
  %s2612 = sor.u32 256, 12
  %2613 = vbcast.lane.b32.xlu0 %v2606, %s2612
  %v2614 = vpop.permute.xlu0 %2613
  %v2615 = vlaneseq
  %v2616 = vshrl.u32 %v2615, 7
  %v2617 = vsub.s32 3, %v2616
  %v2618 = vrot.slane %v517, %v2617
  %s2620 = sor.u32 256, 4
  %2621 = vbcast.lane.b32.xlu0 %v2618, %s2620
  %v2622 = vpop.permute.xlu0 %2621
  %s2624 = sor.u32 256, 12
  %2625 = vbcast.lane.b32.xlu0 %v2618, %s2624
  %v2626 = vpop.permute.xlu0 %2625
  %v2627 = vlaneseq
  %v2628 = vshrl.u32 %v2627, 7
  %v2629 = vsub.s32 4, %v2628
  %v2630 = vrot.slane %v517, %v2629
  %s2632 = sor.u32 256, 4
  %2633 = vbcast.lane.b32.xlu0 %v2630, %s2632
  %v2634 = vpop.permute.xlu0 %2633
  %s2636 = sor.u32 256, 12
  %2637 = vbcast.lane.b32.xlu0 %v2630, %s2636
  %v2638 = vpop.permute.xlu0 %2637
  %v2639 = vlaneseq
  %v2640 = vshrl.u32 %v2639, 7
  %v2641 = vsub.s32 5, %v2640
  %v2642 = vrot.slane %v517, %v2641
  %s2644 = sor.u32 256, 4
  %2645 = vbcast.lane.b32.xlu0 %v2642, %s2644
  %v2646 = vpop.permute.xlu0 %2645
  %s2648 = sor.u32 256, 12
  %2649 = vbcast.lane.b32.xlu0 %v2642, %s2648
  %v2650 = vpop.permute.xlu0 %2649
  %v2651 = vlaneseq
  %v2652 = vshrl.u32 %v2651, 7
  %v2653 = vsub.s32 6, %v2652
  %v2654 = vrot.slane %v517, %v2653
  %s2656 = sor.u32 256, 4
  %2657 = vbcast.lane.b32.xlu0 %v2654, %s2656
  %v2658 = vpop.permute.xlu0 %2657
  %s2660 = sor.u32 256, 12
  %2661 = vbcast.lane.b32.xlu0 %v2654, %s2660
  %v2662 = vpop.permute.xlu0 %2661
  %v2663 = vlaneseq
  %v2664 = vshrl.u32 %v2663, 7
  %v2665 = vsub.s32 7, %v2664
  %v2666 = vrot.slane %v517, %v2665
  %s2668 = sor.u32 256, 4
  %2669 = vbcast.lane.b32.xlu0 %v2666, %s2668
  %v2670 = vpop.permute.xlu0 %2669
  %s2672 = sor.u32 256, 12
  %2673 = vbcast.lane.b32.xlu0 %v2666, %s2672
  %v2674 = vpop.permute.xlu0 %2673
  %v2675 = vlaneseq
  %v2676 = vshrl.u32 %v2675, 7
  %v2677 = vsub.s32 0, %v2676
  %v2678 = vrot.slane %v520, %v2677
  %s2680 = sor.u32 256, 4
  %2681 = vbcast.lane.b32.xlu0 %v2678, %s2680
  %v2682 = vpop.permute.xlu0 %2681
  %s2684 = sor.u32 256, 12
  %2685 = vbcast.lane.b32.xlu0 %v2678, %s2684
  %v2686 = vpop.permute.xlu0 %2685
  %v2687 = vlaneseq
  %v2688 = vshrl.u32 %v2687, 7
  %v2689 = vsub.s32 1, %v2688
  %v2690 = vrot.slane %v520, %v2689
  %s2692 = sor.u32 256, 4
  %2693 = vbcast.lane.b32.xlu0 %v2690, %s2692
  %v2694 = vpop.permute.xlu0 %2693
  %s2696 = sor.u32 256, 12
  %2697 = vbcast.lane.b32.xlu0 %v2690, %s2696
  %v2698 = vpop.permute.xlu0 %2697
  %v2699 = vlaneseq
  %v2700 = vshrl.u32 %v2699, 7
  %v2701 = vsub.s32 2, %v2700
  %v2702 = vrot.slane %v520, %v2701
  %s2704 = sor.u32 256, 4
  %2705 = vbcast.lane.b32.xlu0 %v2702, %s2704
  %v2706 = vpop.permute.xlu0 %2705
  %s2708 = sor.u32 256, 12
  %2709 = vbcast.lane.b32.xlu0 %v2702, %s2708
  %v2710 = vpop.permute.xlu0 %2709
  %v2711 = vlaneseq
  %v2712 = vshrl.u32 %v2711, 7
  %v2713 = vsub.s32 3, %v2712
  %v2714 = vrot.slane %v520, %v2713
  %s2716 = sor.u32 256, 4
  %2717 = vbcast.lane.b32.xlu0 %v2714, %s2716
  %v2718 = vpop.permute.xlu0 %2717
  %s2720 = sor.u32 256, 12
  %2721 = vbcast.lane.b32.xlu0 %v2714, %s2720
  %v2722 = vpop.permute.xlu0 %2721
  %v2723 = vlaneseq
  %v2724 = vshrl.u32 %v2723, 7
  %v2725 = vsub.s32 4, %v2724
  %v2726 = vrot.slane %v520, %v2725
  %s2728 = sor.u32 256, 4
  %2729 = vbcast.lane.b32.xlu0 %v2726, %s2728
  %v2730 = vpop.permute.xlu0 %2729
  %s2732 = sor.u32 256, 12
  %2733 = vbcast.lane.b32.xlu0 %v2726, %s2732
  %v2734 = vpop.permute.xlu0 %2733
  %v2735 = vlaneseq
  %v2736 = vshrl.u32 %v2735, 7
  %v2737 = vsub.s32 5, %v2736
  %v2738 = vrot.slane %v520, %v2737
  %s2740 = sor.u32 256, 4
  %2741 = vbcast.lane.b32.xlu0 %v2738, %s2740
  %v2742 = vpop.permute.xlu0 %2741
  %s2744 = sor.u32 256, 12
  %2745 = vbcast.lane.b32.xlu0 %v2738, %s2744
  %v2746 = vpop.permute.xlu0 %2745
  %v2747 = vlaneseq
  %v2748 = vshrl.u32 %v2747, 7
  %v2749 = vsub.s32 6, %v2748
  %v2750 = vrot.slane %v520, %v2749
  %s2752 = sor.u32 256, 4
  %2753 = vbcast.lane.b32.xlu0 %v2750, %s2752
  %v2754 = vpop.permute.xlu0 %2753
  %s2756 = sor.u32 256, 12
  %2757 = vbcast.lane.b32.xlu0 %v2750, %s2756
  %v2758 = vpop.permute.xlu0 %2757
  %v2759 = vlaneseq
  %v2760 = vshrl.u32 %v2759, 7
  %v2761 = vsub.s32 7, %v2760
  %v2762 = vrot.slane %v520, %v2761
  %s2764 = sor.u32 256, 4
  %2765 = vbcast.lane.b32.xlu0 %v2762, %s2764
  %v2766 = vpop.permute.xlu0 %2765
  %s2768 = sor.u32 256, 12
  %2769 = vbcast.lane.b32.xlu0 %v2762, %s2768
  %v2770 = vpop.permute.xlu0 %2769
  %v2771 = vlaneseq
  %v2772 = vshrl.u32 %v2771, 7
  %v2773 = vsub.s32 0, %v2772
  %v2774 = vrot.slane %v525, %v2773
  %s2776 = sor.u32 256, 4
  %2777 = vbcast.lane.b32.xlu0 %v2774, %s2776
  %v2778 = vpop.permute.xlu0 %2777
  %s2780 = sor.u32 256, 12
  %2781 = vbcast.lane.b32.xlu0 %v2774, %s2780
  %v2782 = vpop.permute.xlu0 %2781
  %v2783 = vlaneseq
  %v2784 = vshrl.u32 %v2783, 7
  %v2785 = vsub.s32 1, %v2784
  %v2786 = vrot.slane %v525, %v2785
  %s2788 = sor.u32 256, 4
  %2789 = vbcast.lane.b32.xlu0 %v2786, %s2788
  %v2790 = vpop.permute.xlu0 %2789
  %s2792 = sor.u32 256, 12
  %2793 = vbcast.lane.b32.xlu0 %v2786, %s2792
  %v2794 = vpop.permute.xlu0 %2793
  %v2795 = vlaneseq
  %v2796 = vshrl.u32 %v2795, 7
  %v2797 = vsub.s32 2, %v2796
  %v2798 = vrot.slane %v525, %v2797
  %s2800 = sor.u32 256, 4
  %2801 = vbcast.lane.b32.xlu0 %v2798, %s2800
  %v2802 = vpop.permute.xlu0 %2801
  %s2804 = sor.u32 256, 12
  %2805 = vbcast.lane.b32.xlu0 %v2798, %s2804
  %v2806 = vpop.permute.xlu0 %2805
  %v2807 = vlaneseq
  %v2808 = vshrl.u32 %v2807, 7
  %v2809 = vsub.s32 3, %v2808
  %v2810 = vrot.slane %v525, %v2809
  %s2812 = sor.u32 256, 4
  %2813 = vbcast.lane.b32.xlu0 %v2810, %s2812
  %v2814 = vpop.permute.xlu0 %2813
  %s2816 = sor.u32 256, 12
  %2817 = vbcast.lane.b32.xlu0 %v2810, %s2816
  %v2818 = vpop.permute.xlu0 %2817
  %v2819 = vlaneseq
  %v2820 = vshrl.u32 %v2819, 7
  %v2821 = vsub.s32 4, %v2820
  %v2822 = vrot.slane %v525, %v2821
  %s2824 = sor.u32 256, 4
  %2825 = vbcast.lane.b32.xlu0 %v2822, %s2824
  %v2826 = vpop.permute.xlu0 %2825
  %s2828 = sor.u32 256, 12
  %2829 = vbcast.lane.b32.xlu0 %v2822, %s2828
  %v2830 = vpop.permute.xlu0 %2829
  %v2831 = vlaneseq
  %v2832 = vshrl.u32 %v2831, 7
  %v2833 = vsub.s32 5, %v2832
  %v2834 = vrot.slane %v525, %v2833
  %s2836 = sor.u32 256, 4
  %2837 = vbcast.lane.b32.xlu0 %v2834, %s2836
  %v2838 = vpop.permute.xlu0 %2837
  %s2840 = sor.u32 256, 12
  %2841 = vbcast.lane.b32.xlu0 %v2834, %s2840
  %v2842 = vpop.permute.xlu0 %2841
  %v2843 = vlaneseq
  %v2844 = vshrl.u32 %v2843, 7
  %v2845 = vsub.s32 6, %v2844
  %v2846 = vrot.slane %v525, %v2845
  %s2848 = sor.u32 256, 4
  %2849 = vbcast.lane.b32.xlu0 %v2846, %s2848
  %v2850 = vpop.permute.xlu0 %2849
  %s2852 = sor.u32 256, 12
  %2853 = vbcast.lane.b32.xlu0 %v2846, %s2852
  %v2854 = vpop.permute.xlu0 %2853
  %v2855 = vlaneseq
  %v2856 = vshrl.u32 %v2855, 7
  %v2857 = vsub.s32 7, %v2856
  %v2858 = vrot.slane %v525, %v2857
  %s2860 = sor.u32 256, 4
  %2861 = vbcast.lane.b32.xlu0 %v2858, %s2860
  %v2862 = vpop.permute.xlu0 %2861
  %s2864 = sor.u32 256, 12
  %2865 = vbcast.lane.b32.xlu0 %v2858, %s2864
  %v2866 = vpop.permute.xlu0 %2865
  %v2867 = vlaneseq
  %v2868 = vshrl.u32 %v2867, 7
  %v2869 = vsub.s32 0, %v2868
  %v2870 = vrot.slane %v528, %v2869
  %s2872 = sor.u32 256, 4
  %2873 = vbcast.lane.b32.xlu0 %v2870, %s2872
  %v2874 = vpop.permute.xlu0 %2873
  %s2876 = sor.u32 256, 12
  %2877 = vbcast.lane.b32.xlu0 %v2870, %s2876
  %v2878 = vpop.permute.xlu0 %2877
  %v2879 = vlaneseq
  %v2880 = vshrl.u32 %v2879, 7
  %v2881 = vsub.s32 1, %v2880
  %v2882 = vrot.slane %v528, %v2881
  %s2884 = sor.u32 256, 4
  %2885 = vbcast.lane.b32.xlu0 %v2882, %s2884
  %v2886 = vpop.permute.xlu0 %2885
  %s2888 = sor.u32 256, 12
  %2889 = vbcast.lane.b32.xlu0 %v2882, %s2888
  %v2890 = vpop.permute.xlu0 %2889
  %v2891 = vlaneseq
  %v2892 = vshrl.u32 %v2891, 7
  %v2893 = vsub.s32 2, %v2892
  %v2894 = vrot.slane %v528, %v2893
  %s2896 = sor.u32 256, 4
  %2897 = vbcast.lane.b32.xlu0 %v2894, %s2896
  %v2898 = vpop.permute.xlu0 %2897
  %s2900 = sor.u32 256, 12
  %2901 = vbcast.lane.b32.xlu0 %v2894, %s2900
  %v2902 = vpop.permute.xlu0 %2901
  %v2903 = vlaneseq
  %v2904 = vshrl.u32 %v2903, 7
  %v2905 = vsub.s32 3, %v2904
  %v2906 = vrot.slane %v528, %v2905
  %s2908 = sor.u32 256, 4
  %2909 = vbcast.lane.b32.xlu0 %v2906, %s2908
  %v2910 = vpop.permute.xlu0 %2909
  %s2912 = sor.u32 256, 12
  %2913 = vbcast.lane.b32.xlu0 %v2906, %s2912
  %v2914 = vpop.permute.xlu0 %2913
  %v2915 = vlaneseq
  %v2916 = vshrl.u32 %v2915, 7
  %v2917 = vsub.s32 4, %v2916
  %v2918 = vrot.slane %v528, %v2917
  %s2920 = sor.u32 256, 4
  %2921 = vbcast.lane.b32.xlu0 %v2918, %s2920
  %v2922 = vpop.permute.xlu0 %2921
  %s2924 = sor.u32 256, 12
  %2925 = vbcast.lane.b32.xlu0 %v2918, %s2924
  %v2926 = vpop.permute.xlu0 %2925
  %v2927 = vlaneseq
  %v2928 = vshrl.u32 %v2927, 7
  %v2929 = vsub.s32 5, %v2928
  %v2930 = vrot.slane %v528, %v2929
  %s2932 = sor.u32 256, 4
  %2933 = vbcast.lane.b32.xlu0 %v2930, %s2932
  %v2934 = vpop.permute.xlu0 %2933
  %s2936 = sor.u32 256, 12
  %2937 = vbcast.lane.b32.xlu0 %v2930, %s2936
  %v2938 = vpop.permute.xlu0 %2937
  %v2939 = vlaneseq
  %v2940 = vshrl.u32 %v2939, 7
  %v2941 = vsub.s32 6, %v2940
  %v2942 = vrot.slane %v528, %v2941
  %s2944 = sor.u32 256, 4
  %2945 = vbcast.lane.b32.xlu0 %v2942, %s2944
  %v2946 = vpop.permute.xlu0 %2945
  %s2948 = sor.u32 256, 12
  %2949 = vbcast.lane.b32.xlu0 %v2942, %s2948
  %v2950 = vpop.permute.xlu0 %2949
  %v2951 = vlaneseq
  %v2952 = vshrl.u32 %v2951, 7
  %v2953 = vsub.s32 7, %v2952
  %v2954 = vrot.slane %v528, %v2953
  %s2956 = sor.u32 256, 4
  %2957 = vbcast.lane.b32.xlu0 %v2954, %s2956
  %v2958 = vpop.permute.xlu0 %2957
  %s2960 = sor.u32 256, 12
  %2961 = vbcast.lane.b32.xlu0 %v2954, %s2960
  %v2962 = vpop.permute.xlu0 %2961
  %v2963 = vlaneseq
  %v2964 = vshrl.u32 %v2963, 7
  %v2965 = vsub.s32 0, %v2964
  %v2966 = vrot.slane %v533, %v2965
  %s2968 = sor.u32 256, 4
  %2969 = vbcast.lane.b32.xlu0 %v2966, %s2968
  %v2970 = vpop.permute.xlu0 %2969
  %s2972 = sor.u32 256, 12
  %2973 = vbcast.lane.b32.xlu0 %v2966, %s2972
  %v2974 = vpop.permute.xlu0 %2973
  %v2975 = vlaneseq
  %v2976 = vshrl.u32 %v2975, 7
  %v2977 = vsub.s32 1, %v2976
  %v2978 = vrot.slane %v533, %v2977
  %s2980 = sor.u32 256, 4
  %2981 = vbcast.lane.b32.xlu0 %v2978, %s2980
  %v2982 = vpop.permute.xlu0 %2981
  %s2984 = sor.u32 256, 12
  %2985 = vbcast.lane.b32.xlu0 %v2978, %s2984
  %v2986 = vpop.permute.xlu0 %2985
  %v2987 = vlaneseq
  %v2988 = vshrl.u32 %v2987, 7
  %v2989 = vsub.s32 2, %v2988
  %v2990 = vrot.slane %v533, %v2989
  %s2992 = sor.u32 256, 4
  %2993 = vbcast.lane.b32.xlu0 %v2990, %s2992
  %v2994 = vpop.permute.xlu0 %2993
  %s2996 = sor.u32 256, 12
  %2997 = vbcast.lane.b32.xlu0 %v2990, %s2996
  %v2998 = vpop.permute.xlu0 %2997
  %v2999 = vlaneseq
  %v3000 = vshrl.u32 %v2999, 7
  %v3001 = vsub.s32 3, %v3000
  %v3002 = vrot.slane %v533, %v3001
  %s3004 = sor.u32 256, 4
  %3005 = vbcast.lane.b32.xlu0 %v3002, %s3004
  %v3006 = vpop.permute.xlu0 %3005
  %s3008 = sor.u32 256, 12
  %3009 = vbcast.lane.b32.xlu0 %v3002, %s3008
  %v3010 = vpop.permute.xlu0 %3009
  %v3011 = vlaneseq
  %v3012 = vshrl.u32 %v3011, 7
  %v3013 = vsub.s32 4, %v3012
  %v3014 = vrot.slane %v533, %v3013
  %s3016 = sor.u32 256, 4
  %3017 = vbcast.lane.b32.xlu0 %v3014, %s3016
  %v3018 = vpop.permute.xlu0 %3017
  %s3020 = sor.u32 256, 12
  %3021 = vbcast.lane.b32.xlu0 %v3014, %s3020
  %v3022 = vpop.permute.xlu0 %3021
  %v3023 = vlaneseq
  %v3024 = vshrl.u32 %v3023, 7
  %v3025 = vsub.s32 5, %v3024
  %v3026 = vrot.slane %v533, %v3025
  %s3028 = sor.u32 256, 4
  %3029 = vbcast.lane.b32.xlu0 %v3026, %s3028
  %v3030 = vpop.permute.xlu0 %3029
  %s3032 = sor.u32 256, 12
  %3033 = vbcast.lane.b32.xlu0 %v3026, %s3032
  %v3034 = vpop.permute.xlu0 %3033
  %v3035 = vlaneseq
  %v3036 = vshrl.u32 %v3035, 7
  %v3037 = vsub.s32 6, %v3036
  %v3038 = vrot.slane %v533, %v3037
  %s3040 = sor.u32 256, 4
  %3041 = vbcast.lane.b32.xlu0 %v3038, %s3040
  %v3042 = vpop.permute.xlu0 %3041
  %s3044 = sor.u32 256, 12
  %3045 = vbcast.lane.b32.xlu0 %v3038, %s3044
  %v3046 = vpop.permute.xlu0 %3045
  %v3047 = vlaneseq
  %v3048 = vshrl.u32 %v3047, 7
  %v3049 = vsub.s32 7, %v3048
  %v3050 = vrot.slane %v533, %v3049
  %s3052 = sor.u32 256, 4
  %3053 = vbcast.lane.b32.xlu0 %v3050, %s3052
  %v3054 = vpop.permute.xlu0 %3053
  %s3056 = sor.u32 256, 12
  %3057 = vbcast.lane.b32.xlu0 %v3050, %s3056
  %v3058 = vpop.permute.xlu0 %3057
  %v3059 = vlaneseq
  %v3060 = vshrl.u32 %v3059, 7
  %v3061 = vsub.s32 0, %v3060
  %v3062 = vrot.slane %v536, %v3061
  %s3064 = sor.u32 256, 4
  %3065 = vbcast.lane.b32.xlu0 %v3062, %s3064
  %v3066 = vpop.permute.xlu0 %3065
  %s3068 = sor.u32 256, 12
  %3069 = vbcast.lane.b32.xlu0 %v3062, %s3068
  %v3070 = vpop.permute.xlu0 %3069
  %v3071 = vlaneseq
  %v3072 = vshrl.u32 %v3071, 7
  %v3073 = vsub.s32 1, %v3072
  %v3074 = vrot.slane %v536, %v3073
  %s3076 = sor.u32 256, 4
  %3077 = vbcast.lane.b32.xlu0 %v3074, %s3076
  %v3078 = vpop.permute.xlu0 %3077
  %s3080 = sor.u32 256, 12
  %3081 = vbcast.lane.b32.xlu0 %v3074, %s3080
  %v3082 = vpop.permute.xlu0 %3081
  %v3083 = vlaneseq
  %v3084 = vshrl.u32 %v3083, 7
  %v3085 = vsub.s32 2, %v3084
  %v3086 = vrot.slane %v536, %v3085
  %s3088 = sor.u32 256, 4
  %3089 = vbcast.lane.b32.xlu0 %v3086, %s3088
  %v3090 = vpop.permute.xlu0 %3089
  %s3092 = sor.u32 256, 12
  %3093 = vbcast.lane.b32.xlu0 %v3086, %s3092
  %v3094 = vpop.permute.xlu0 %3093
  %v3095 = vlaneseq
  %v3096 = vshrl.u32 %v3095, 7
  %v3097 = vsub.s32 3, %v3096
  %v3098 = vrot.slane %v536, %v3097
  %s3100 = sor.u32 256, 4
  %3101 = vbcast.lane.b32.xlu0 %v3098, %s3100
  %v3102 = vpop.permute.xlu0 %3101
  %s3104 = sor.u32 256, 12
  %3105 = vbcast.lane.b32.xlu0 %v3098, %s3104
  %v3106 = vpop.permute.xlu0 %3105
  %v3107 = vlaneseq
  %v3108 = vshrl.u32 %v3107, 7
  %v3109 = vsub.s32 4, %v3108
  %v3110 = vrot.slane %v536, %v3109
  %s3112 = sor.u32 256, 4
  %3113 = vbcast.lane.b32.xlu0 %v3110, %s3112
  %v3114 = vpop.permute.xlu0 %3113
  %s3116 = sor.u32 256, 12
  %3117 = vbcast.lane.b32.xlu0 %v3110, %s3116
  %v3118 = vpop.permute.xlu0 %3117
  %v3119 = vlaneseq
  %v3120 = vshrl.u32 %v3119, 7
  %v3121 = vsub.s32 5, %v3120
  %v3122 = vrot.slane %v536, %v3121
  %s3124 = sor.u32 256, 4
  %3125 = vbcast.lane.b32.xlu0 %v3122, %s3124
  %v3126 = vpop.permute.xlu0 %3125
  %s3128 = sor.u32 256, 12
  %3129 = vbcast.lane.b32.xlu0 %v3122, %s3128
  %v3130 = vpop.permute.xlu0 %3129
  %v3131 = vlaneseq
  %v3132 = vshrl.u32 %v3131, 7
  %v3133 = vsub.s32 6, %v3132
  %v3134 = vrot.slane %v536, %v3133
  %s3136 = sor.u32 256, 4
  %3137 = vbcast.lane.b32.xlu0 %v3134, %s3136
  %v3138 = vpop.permute.xlu0 %3137
  %s3140 = sor.u32 256, 12
  %3141 = vbcast.lane.b32.xlu0 %v3134, %s3140
  %v3142 = vpop.permute.xlu0 %3141
  %v3143 = vlaneseq
  %v3144 = vshrl.u32 %v3143, 7
  %v3145 = vsub.s32 7, %v3144
  %v3146 = vrot.slane %v536, %v3145
  %s3148 = sor.u32 256, 4
  %3149 = vbcast.lane.b32.xlu0 %v3146, %s3148
  %v3150 = vpop.permute.xlu0 %3149
  %s3152 = sor.u32 256, 12
  %3153 = vbcast.lane.b32.xlu0 %v3146, %s3152
  %v3154 = vpop.permute.xlu0 %3153
  %v3155 = vlaneseq
  %v3156 = vshrl.u32 %v3155, 7
  %v3157 = vsub.s32 0, %v3156
  %v3158 = vrot.slane %v1184, %v3157
  %v3159 = vlaneseq
  %v3160 = vshrl.u32 %v3159, 7
  %v3161 = vsub.s32 0, %v3160
  %v3162 = vrot.slane %v1198, %v3161
  %v3163 = vlaneseq
  %v3164 = vshrl.u32 %v3163, 7
  %v3165 = vsub.s32 0, %v3164
  %v3166 = vrot.slane %v1206, %v3165
  %v3167 = vlaneseq
  %v3168 = vshrl.u32 %v3167, 7
  %v3169 = vsub.s32 0, %v3168
  %v3170 = vrot.slane %v1208, %v3169
  %v3171 = vlaneseq
  %v3172 = vshrl.u32 %v3171, 7
  %v3173 = vsub.s32 0, %v3172
  %v3174 = vrot.slane %v1191, %v3173
  %v3175 = vlaneseq
  %v3176 = vshrl.u32 %v3175, 7
  %v3177 = vsub.s32 0, %v3176
  %v3178 = vrot.slane %v1205, %v3177
  %v3179 = vlaneseq
  %v3180 = vshrl.u32 %v3179, 7
  %v3181 = vsub.s32 0, %v3180
  %v3182 = vrot.slane %v1207, %v3181
  %v3183 = vlaneseq
  %v3184 = vshrl.u32 %v3183, 7
  %v3185 = vsub.s32 0, %v3184
  %v3186 = vrot.slane %v1209, %v3185
  %v3187 = vlaneseq
  %v3188 = vshrl.u32 %v3187, 7
  %v3189 = vsub.s32 0, %v3188
  %v3190 = vrot.slane %v1233, %v3189
  %v3191 = vlaneseq
  %v3192 = vshrl.u32 %v3191, 7
  %v3193 = vsub.s32 0, %v3192
  %v3194 = vrot.slane %v1247, %v3193
  %v3195 = vlaneseq
  %v3196 = vshrl.u32 %v3195, 7
  %v3197 = vsub.s32 0, %v3196
  %v3198 = vrot.slane %v1255, %v3197
  %v3199 = vlaneseq
  %v3200 = vshrl.u32 %v3199, 7
  %v3201 = vsub.s32 0, %v3200
  %v3202 = vrot.slane %v1257, %v3201
  %v3203 = vlaneseq
  %v3204 = vshrl.u32 %v3203, 7
  %v3205 = vsub.s32 0, %v3204
  %v3206 = vrot.slane %v1240, %v3205
  %v3207 = vlaneseq
  %v3208 = vshrl.u32 %v3207, 7
  %v3209 = vsub.s32 0, %v3208
  %v3210 = vrot.slane %v1254, %v3209
  %v3211 = vlaneseq
  %v3212 = vshrl.u32 %v3211, 7
  %v3213 = vsub.s32 0, %v3212
  %v3214 = vrot.slane %v1256, %v3213
  %v3215 = vlaneseq
  %v3216 = vshrl.u32 %v3215, 7
  %v3217 = vsub.s32 0, %v3216
  %v3218 = vrot.slane %v1258, %v3217
  %v3219 = vlaneseq
  %v3220 = vshrl.u32 %v3219, 7
  %v3221 = vsub.s32 0, %v3220
  %v3222 = vrot.slane %v1282, %v3221
  %v3223 = vlaneseq
  %v3224 = vshrl.u32 %v3223, 7
  %v3225 = vsub.s32 0, %v3224
  %v3226 = vrot.slane %v1296, %v3225
  %v3227 = vlaneseq
  %v3228 = vshrl.u32 %v3227, 7
  %v3229 = vsub.s32 0, %v3228
  %v3230 = vrot.slane %v1304, %v3229
  %v3231 = vlaneseq
  %v3232 = vshrl.u32 %v3231, 7
  %v3233 = vsub.s32 0, %v3232
  %v3234 = vrot.slane %v1306, %v3233
  %v3235 = vlaneseq
  %v3236 = vshrl.u32 %v3235, 7
  %v3237 = vsub.s32 0, %v3236
  %v3238 = vrot.slane %v1289, %v3237
  %v3239 = vlaneseq
  %v3240 = vshrl.u32 %v3239, 7
  %v3241 = vsub.s32 0, %v3240
  %v3242 = vrot.slane %v1303, %v3241
  %v3243 = vlaneseq
  %v3244 = vshrl.u32 %v3243, 7
  %v3245 = vsub.s32 0, %v3244
  %v3246 = vrot.slane %v1305, %v3245
  %v3247 = vlaneseq
  %v3248 = vshrl.u32 %v3247, 7
  %v3249 = vsub.s32 0, %v3248
  %v3250 = vrot.slane %v1307, %v3249
  %v3251 = vlaneseq
  %v3252 = vshrl.u32 %v3251, 7
  %v3253 = vsub.s32 0, %v3252
  %v3254 = vrot.slane %v1331, %v3253
  %v3255 = vlaneseq
  %v3256 = vshrl.u32 %v3255, 7
  %v3257 = vsub.s32 0, %v3256
  %v3258 = vrot.slane %v1345, %v3257
  %v3259 = vlaneseq
  %v3260 = vshrl.u32 %v3259, 7
  %v3261 = vsub.s32 0, %v3260
  %v3262 = vrot.slane %v1353, %v3261
  %v3263 = vlaneseq
  %v3264 = vshrl.u32 %v3263, 7
  %v3265 = vsub.s32 0, %v3264
  %v3266 = vrot.slane %v1355, %v3265
  %v3267 = vlaneseq
  %v3268 = vshrl.u32 %v3267, 7
  %v3269 = vsub.s32 0, %v3268
  %v3270 = vrot.slane %v1338, %v3269
  %v3271 = vlaneseq
  %v3272 = vshrl.u32 %v3271, 7
  %v3273 = vsub.s32 0, %v3272
  %v3274 = vrot.slane %v1352, %v3273
  %v3275 = vlaneseq
  %v3276 = vshrl.u32 %v3275, 7
  %v3277 = vsub.s32 0, %v3276
  %v3278 = vrot.slane %v1354, %v3277
  %v3279 = vlaneseq
  %v3280 = vshrl.u32 %v3279, 7
  %v3281 = vsub.s32 0, %v3280
  %v3282 = vrot.slane %v1356, %v3281
  %v3283 = vlaneseq
  %v3284 = vshrl.u32 %v3283, 7
  %v3285 = vsub.s32 0, %v3284
  %v3286 = vrot.slane %v1380, %v3285
  %v3287 = vlaneseq
  %v3288 = vshrl.u32 %v3287, 7
  %v3289 = vsub.s32 0, %v3288
  %v3290 = vrot.slane %v1394, %v3289
  %v3291 = vlaneseq
  %v3292 = vshrl.u32 %v3291, 7
  %v3293 = vsub.s32 0, %v3292
  %v3294 = vrot.slane %v1402, %v3293
  %v3295 = vlaneseq
  %v3296 = vshrl.u32 %v3295, 7
  %v3297 = vsub.s32 0, %v3296
  %v3298 = vrot.slane %v1404, %v3297
  %v3299 = vlaneseq
  %v3300 = vshrl.u32 %v3299, 7
  %v3301 = vsub.s32 0, %v3300
  %v3302 = vrot.slane %v1387, %v3301
  %v3303 = vlaneseq
  %v3304 = vshrl.u32 %v3303, 7
  %v3305 = vsub.s32 0, %v3304
  %v3306 = vrot.slane %v1401, %v3305
  %v3307 = vlaneseq
  %v3308 = vshrl.u32 %v3307, 7
  %v3309 = vsub.s32 0, %v3308
  %v3310 = vrot.slane %v1403, %v3309
  %v3311 = vlaneseq
  %v3312 = vshrl.u32 %v3311, 7
  %v3313 = vsub.s32 0, %v3312
  %v3314 = vrot.slane %v1405, %v3313
  %v3315 = vlaneseq
  %v3316 = vshrl.u32 %v3315, 7
  %v3317 = vsub.s32 0, %v3316
  %v3318 = vrot.slane %v1429, %v3317
  %v3319 = vlaneseq
  %v3320 = vshrl.u32 %v3319, 7
  %v3321 = vsub.s32 0, %v3320
  %v3322 = vrot.slane %v1443, %v3321
  %v3323 = vlaneseq
  %v3324 = vshrl.u32 %v3323, 7
  %v3325 = vsub.s32 0, %v3324
  %v3326 = vrot.slane %v1451, %v3325
  %v3327 = vlaneseq
  %v3328 = vshrl.u32 %v3327, 7
  %v3329 = vsub.s32 0, %v3328
  %v3330 = vrot.slane %v1453, %v3329
  %v3331 = vlaneseq
  %v3332 = vshrl.u32 %v3331, 7
  %v3333 = vsub.s32 0, %v3332
  %v3334 = vrot.slane %v1436, %v3333
  %v3335 = vlaneseq
  %v3336 = vshrl.u32 %v3335, 7
  %v3337 = vsub.s32 0, %v3336
  %v3338 = vrot.slane %v1450, %v3337
  %v3339 = vlaneseq
  %v3340 = vshrl.u32 %v3339, 7
  %v3341 = vsub.s32 0, %v3340
  %v3342 = vrot.slane %v1452, %v3341
  %v3343 = vlaneseq
  %v3344 = vshrl.u32 %v3343, 7
  %v3345 = vsub.s32 0, %v3344
  %v3346 = vrot.slane %v1454, %v3345
  %v3347 = vlaneseq
  %v3348 = vshrl.u32 %v3347, 7
  %v3349 = vsub.s32 0, %v3348
  %v3350 = vrot.slane %v1478, %v3349
  %v3351 = vlaneseq
  %v3352 = vshrl.u32 %v3351, 7
  %v3353 = vsub.s32 0, %v3352
  %v3354 = vrot.slane %v1492, %v3353
  %v3355 = vlaneseq
  %v3356 = vshrl.u32 %v3355, 7
  %v3357 = vsub.s32 0, %v3356
  %v3358 = vrot.slane %v1500, %v3357
  %v3359 = vlaneseq
  %v3360 = vshrl.u32 %v3359, 7
  %v3361 = vsub.s32 0, %v3360
  %v3362 = vrot.slane %v1502, %v3361
  %v3363 = vlaneseq
  %v3364 = vshrl.u32 %v3363, 7
  %v3365 = vsub.s32 0, %v3364
  %v3366 = vrot.slane %v1485, %v3365
  %v3367 = vlaneseq
  %v3368 = vshrl.u32 %v3367, 7
  %v3369 = vsub.s32 0, %v3368
  %v3370 = vrot.slane %v1499, %v3369
  %v3371 = vlaneseq
  %v3372 = vshrl.u32 %v3371, 7
  %v3373 = vsub.s32 0, %v3372
  %v3374 = vrot.slane %v1501, %v3373
  %v3375 = vlaneseq
  %v3376 = vshrl.u32 %v3375, 7
  %v3377 = vsub.s32 0, %v3376
  %v3378 = vrot.slane %v1503, %v3377
  %v3379 = vlaneseq
  %v3380 = vshrl.u32 %v3379, 7
  %v3381 = vsub.s32 0, %v3380
  %v3382 = vrot.slane %v1527, %v3381
  %v3383 = vlaneseq
  %v3384 = vshrl.u32 %v3383, 7
  %v3385 = vsub.s32 0, %v3384
  %v3386 = vrot.slane %v1541, %v3385
  %v3387 = vlaneseq
  %v3388 = vshrl.u32 %v3387, 7
  %v3389 = vsub.s32 0, %v3388
  %v3390 = vrot.slane %v1549, %v3389
  %v3391 = vlaneseq
  %v3392 = vshrl.u32 %v3391, 7
  %v3393 = vsub.s32 0, %v3392
  %v3394 = vrot.slane %v1551, %v3393
  %v3395 = vlaneseq
  %v3396 = vshrl.u32 %v3395, 7
  %v3397 = vsub.s32 0, %v3396
  %v3398 = vrot.slane %v1534, %v3397
  %v3399 = vlaneseq
  %v3400 = vshrl.u32 %v3399, 7
  %v3401 = vsub.s32 0, %v3400
  %v3402 = vrot.slane %v1548, %v3401
  %v3403 = vlaneseq
  %v3404 = vshrl.u32 %v3403, 7
  %v3405 = vsub.s32 0, %v3404
  %v3406 = vrot.slane %v1550, %v3405
  %v3407 = vlaneseq
  %v3408 = vshrl.u32 %v3407, 7
  %v3409 = vsub.s32 0, %v3408
  %v3410 = vrot.slane %v1552, %v3409
  %v3475 = vmul.f32 %v3158, %v2394
  %v3476 = vmul.f32 %v3158, %v2398
  %v3477 = vmul.f32 %v3162, %v2406
  %v3478 = vmul.f32 %v3162, %v2410
  %v3479 = vmul.f32 %v3166, %v2418
  %v3480 = vmul.f32 %v3166, %v2422
  %v3481 = vmul.f32 %v3170, %v2430
  %v3482 = vmul.f32 %v3170, %v2434
  %v3483 = vmul.f32 %v3174, %v2442
  %v3484 = vmul.f32 %v3174, %v2446
  %v3485 = vmul.f32 %v3178, %v2454
  %v3486 = vmul.f32 %v3178, %v2458
  %v3487 = vmul.f32 %v3182, %v2466
  %v3488 = vmul.f32 %v3182, %v2470
  %v3489 = vmul.f32 %v3186, %v2478
  %v3490 = vmul.f32 %v3186, %v2482
  %v3491 = vmul.f32 %v3190, %v2490
  %v3492 = vmul.f32 %v3190, %v2494
  %v3493 = vmul.f32 %v3194, %v2502
  %v3494 = vmul.f32 %v3194, %v2506
  %v3495 = vmul.f32 %v3198, %v2514
  %v3496 = vmul.f32 %v3198, %v2518
  %v3497 = vmul.f32 %v3202, %v2526
  %v3498 = vmul.f32 %v3202, %v2530
  %v3499 = vmul.f32 %v3206, %v2538
  %v3500 = vmul.f32 %v3206, %v2542
  %v3501 = vmul.f32 %v3210, %v2550
  %v3502 = vmul.f32 %v3210, %v2554
  %v3503 = vmul.f32 %v3214, %v2562
  %v3504 = vmul.f32 %v3214, %v2566
  %v3505 = vmul.f32 %v3218, %v2574
  %v3506 = vmul.f32 %v3218, %v2578
  %v3507 = vmul.f32 %v3222, %v2586
  %v3508 = vmul.f32 %v3222, %v2590
  %v3509 = vmul.f32 %v3226, %v2598
  %v3510 = vmul.f32 %v3226, %v2602
  %v3511 = vmul.f32 %v3230, %v2610
  %v3512 = vmul.f32 %v3230, %v2614
  %v3513 = vmul.f32 %v3234, %v2622
  %v3514 = vmul.f32 %v3234, %v2626
  %v3515 = vmul.f32 %v3238, %v2634
  %v3516 = vmul.f32 %v3238, %v2638
  %v3517 = vmul.f32 %v3242, %v2646
  %v3518 = vmul.f32 %v3242, %v2650
  %v3519 = vmul.f32 %v3246, %v2658
  %v3520 = vmul.f32 %v3246, %v2662
  %v3521 = vmul.f32 %v3250, %v2670
  %v3522 = vmul.f32 %v3250, %v2674
  %v3523 = vmul.f32 %v3254, %v2682
  %v3524 = vmul.f32 %v3254, %v2686
  %v3525 = vmul.f32 %v3258, %v2694
  %v3526 = vmul.f32 %v3258, %v2698
  %v3527 = vmul.f32 %v3262, %v2706
  %v3528 = vmul.f32 %v3262, %v2710
  %v3529 = vmul.f32 %v3266, %v2718
  %v3530 = vmul.f32 %v3266, %v2722
  %v3531 = vmul.f32 %v3270, %v2730
  %v3532 = vmul.f32 %v3270, %v2734
  %v3533 = vmul.f32 %v3274, %v2742
  %v3534 = vmul.f32 %v3274, %v2746
  %v3535 = vmul.f32 %v3278, %v2754
  %v3536 = vmul.f32 %v3278, %v2758
  %v3537 = vmul.f32 %v3282, %v2766
  %v3538 = vmul.f32 %v3282, %v2770
  %v3539 = vmul.f32 %v3286, %v2778
  %v3540 = vmul.f32 %v3286, %v2782
  %v3541 = vmul.f32 %v3290, %v2790
  %v3542 = vmul.f32 %v3290, %v2794
  %v3543 = vmul.f32 %v3294, %v2802
  %v3544 = vmul.f32 %v3294, %v2806
  %v3545 = vmul.f32 %v3298, %v2814
  %v3546 = vmul.f32 %v3298, %v2818
  %v3547 = vmul.f32 %v3302, %v2826
  %v3548 = vmul.f32 %v3302, %v2830
  %v3549 = vmul.f32 %v3306, %v2838
  %v3550 = vmul.f32 %v3306, %v2842
  %v3551 = vmul.f32 %v3310, %v2850
  %v3552 = vmul.f32 %v3310, %v2854
  %v3553 = vmul.f32 %v3314, %v2862
  %v3554 = vmul.f32 %v3314, %v2866
  %v3555 = vmul.f32 %v3318, %v2874
  %v3556 = vmul.f32 %v3318, %v2878
  %v3557 = vmul.f32 %v3322, %v2886
  %v3558 = vmul.f32 %v3322, %v2890
  %v3559 = vmul.f32 %v3326, %v2898
  %v3560 = vmul.f32 %v3326, %v2902
  %v3561 = vmul.f32 %v3330, %v2910
  %v3562 = vmul.f32 %v3330, %v2914
  %v3563 = vmul.f32 %v3334, %v2922
  %v3564 = vmul.f32 %v3334, %v2926
  %v3565 = vmul.f32 %v3338, %v2934
  %v3566 = vmul.f32 %v3338, %v2938
  %v3567 = vmul.f32 %v3342, %v2946
  %v3568 = vmul.f32 %v3342, %v2950
  %v3569 = vmul.f32 %v3346, %v2958
  %v3570 = vmul.f32 %v3346, %v2962
  %v3571 = vmul.f32 %v3350, %v2970
  %v3572 = vmul.f32 %v3350, %v2974
  %v3573 = vmul.f32 %v3354, %v2982
  %v3574 = vmul.f32 %v3354, %v2986
  %v3575 = vmul.f32 %v3358, %v2994
  %v3576 = vmul.f32 %v3358, %v2998
  %v3577 = vmul.f32 %v3362, %v3006
  %v3578 = vmul.f32 %v3362, %v3010
  %v3579 = vmul.f32 %v3366, %v3018
  %v3580 = vmul.f32 %v3366, %v3022
  %v3581 = vmul.f32 %v3370, %v3030
  %v3582 = vmul.f32 %v3370, %v3034
  %v3583 = vmul.f32 %v3374, %v3042
  %v3584 = vmul.f32 %v3374, %v3046
  %v3585 = vmul.f32 %v3378, %v3054
  %v3586 = vmul.f32 %v3378, %v3058
  %v3587 = vmul.f32 %v3382, %v3066
  %v3588 = vmul.f32 %v3382, %v3070
  %v3589 = vmul.f32 %v3386, %v3078
  %v3590 = vmul.f32 %v3386, %v3082
  %v3591 = vmul.f32 %v3390, %v3090
  %v3592 = vmul.f32 %v3390, %v3094
  %v3593 = vmul.f32 %v3394, %v3102
  %v3594 = vmul.f32 %v3394, %v3106
  %v3595 = vmul.f32 %v3398, %v3114
  %v3596 = vmul.f32 %v3398, %v3118
  %v3597 = vmul.f32 %v3402, %v3126
  %v3598 = vmul.f32 %v3402, %v3130
  %v3599 = vmul.f32 %v3406, %v3138
  %v3600 = vmul.f32 %v3406, %v3142
  %v3601 = vmul.f32 %v3410, %v3150
  %v3602 = vmul.f32 %v3410, %v3154
  %3603 = vst [vmem:[#allocation3] sm:$0xff] %v3475
  %3604 = vst [vmem:[#allocation3 + $0x8] sm:$0xff] %v3476
  %3605 = vst [vmem:[#allocation3 + $0x10] sm:$0xff] %v3477
  %3606 = vst [vmem:[#allocation3 + $0x18] sm:$0xff] %v3478
  %3607 = vst [vmem:[#allocation3 + $0x20] sm:$0xff] %v3479
  %3608 = vst [vmem:[#allocation3 + $0x28] sm:$0xff] %v3480
  %3609 = vst [vmem:[#allocation3 + $0x30] sm:$0xff] %v3481
  %3610 = vst [vmem:[#allocation3 + $0x38] sm:$0xff] %v3482
  %3611 = vst [vmem:[#allocation3 + $0x40] sm:$0xff] %v3483
  %3612 = vst [vmem:[#allocation3 + $0x48] sm:$0xff] %v3484
  %3613 = vst [vmem:[#allocation3 + $0x50] sm:$0xff] %v3485
  %3614 = vst [vmem:[#allocation3 + $0x58] sm:$0xff] %v3486
  %3615 = vst [vmem:[#allocation3 + $0x60] sm:$0xff] %v3487
  %3616 = vst [vmem:[#allocation3 + $0x68] sm:$0xff] %v3488
  %3617 = vst [vmem:[#allocation3 + $0x70] sm:$0xff] %v3489
  %3618 = vst [vmem:[#allocation3 + $0x78] sm:$0xff] %v3490
  %3619 = vst [vmem:[#allocation3 + $0x80] sm:$0xff] %v3491
  %3620 = vst [vmem:[#allocation3 + $0x88] sm:$0xff] %v3492
  %3621 = vst [vmem:[#allocation3 + $0x90] sm:$0xff] %v3493
  %3622 = vst [vmem:[#allocation3 + $0x98] sm:$0xff] %v3494
  %3623 = vst [vmem:[#allocation3 + $0xa0] sm:$0xff] %v3495
  %3624 = vst [vmem:[#allocation3 + $0xa8] sm:$0xff] %v3496
  %3625 = vst [vmem:[#allocation3 + $0xb0] sm:$0xff] %v3497
  %3626 = vst [vmem:[#allocation3 + $0xb8] sm:$0xff] %v3498
  %3627 = vst [vmem:[#allocation3 + $0xc0] sm:$0xff] %v3499
  %3628 = vst [vmem:[#allocation3 + $0xc8] sm:$0xff] %v3500
  %3629 = vst [vmem:[#allocation3 + $0xd0] sm:$0xff] %v3501
  %3630 = vst [vmem:[#allocation3 + $0xd8] sm:$0xff] %v3502
  %3631 = vst [vmem:[#allocation3 + $0xe0] sm:$0xff] %v3503
  %3632 = vst [vmem:[#allocation3 + $0xe8] sm:$0xff] %v3504
  %3633 = vst [vmem:[#allocation3 + $0xf0] sm:$0xff] %v3505
  %3634 = vst [vmem:[#allocation3 + $0xf8] sm:$0xff] %v3506
  %3635 = vst [vmem:[#allocation3 + $0x100] sm:$0xff] %v3507
  %3636 = vst [vmem:[#allocation3 + $0x108] sm:$0xff] %v3508
  %3637 = vst [vmem:[#allocation3 + $0x110] sm:$0xff] %v3509
  %3638 = vst [vmem:[#allocation3 + $0x118] sm:$0xff] %v3510
  %3639 = vst [vmem:[#allocation3 + $0x120] sm:$0xff] %v3511
  %3640 = vst [vmem:[#allocation3 + $0x128] sm:$0xff] %v3512
  %3641 = vst [vmem:[#allocation3 + $0x130] sm:$0xff] %v3513
  %3642 = vst [vmem:[#allocation3 + $0x138] sm:$0xff] %v3514
  %3643 = vst [vmem:[#allocation3 + $0x140] sm:$0xff] %v3515
  %3644 = vst [vmem:[#allocation3 + $0x148] sm:$0xff] %v3516
  %3645 = vst [vmem:[#allocation3 + $0x150] sm:$0xff] %v3517
  %3646 = vst [vmem:[#allocation3 + $0x158] sm:$0xff] %v3518
  %3647 = vst [vmem:[#allocation3 + $0x160] sm:$0xff] %v3519
  %3648 = vst [vmem:[#allocation3 + $0x168] sm:$0xff] %v3520
  %3649 = vst [vmem:[#allocation3 + $0x170] sm:$0xff] %v3521
  %3650 = vst [vmem:[#allocation3 + $0x178] sm:$0xff] %v3522
  %3651 = vst [vmem:[#allocation3 + $0x180] sm:$0xff] %v3523
  %3652 = vst [vmem:[#allocation3 + $0x188] sm:$0xff] %v3524
  %3653 = vst [vmem:[#allocation3 + $0x190] sm:$0xff] %v3525
  %3654 = vst [vmem:[#allocation3 + $0x198] sm:$0xff] %v3526
  %3655 = vst [vmem:[#allocation3 + $0x1a0] sm:$0xff] %v3527
  %3656 = vst [vmem:[#allocation3 + $0x1a8] sm:$0xff] %v3528
  %3657 = vst [vmem:[#allocation3 + $0x1b0] sm:$0xff] %v3529
  %3658 = vst [vmem:[#allocation3 + $0x1b8] sm:$0xff] %v3530
  %3659 = vst [vmem:[#allocation3 + $0x1c0] sm:$0xff] %v3531
  %3660 = vst [vmem:[#allocation3 + $0x1c8] sm:$0xff] %v3532
  %3661 = vst [vmem:[#allocation3 + $0x1d0] sm:$0xff] %v3533
  %3662 = vst [vmem:[#allocation3 + $0x1d8] sm:$0xff] %v3534
  %3663 = vst [vmem:[#allocation3 + $0x1e0] sm:$0xff] %v3535
  %3664 = vst [vmem:[#allocation3 + $0x1e8] sm:$0xff] %v3536
  %3665 = vst [vmem:[#allocation3 + $0x1f0] sm:$0xff] %v3537
  %3666 = vst [vmem:[#allocation3 + $0x1f8] sm:$0xff] %v3538
  %3667 = vst [vmem:[#allocation3 + $0x200] sm:$0xff] %v3539
  %3668 = vst [vmem:[#allocation3 + $0x208] sm:$0xff] %v3540
  %3669 = vst [vmem:[#allocation3 + $0x210] sm:$0xff] %v3541
  %3670 = vst [vmem:[#allocation3 + $0x218] sm:$0xff] %v3542
  %3671 = vst [vmem:[#allocation3 + $0x220] sm:$0xff] %v3543
  %3672 = vst [vmem:[#allocation3 + $0x228] sm:$0xff] %v3544
  %3673 = vst [vmem:[#allocation3 + $0x230] sm:$0xff] %v3545
  %3674 = vst [vmem:[#allocation3 + $0x238] sm:$0xff] %v3546
  %3675 = vst [vmem:[#allocation3 + $0x240] sm:$0xff] %v3547
  %3676 = vst [vmem:[#allocation3 + $0x248] sm:$0xff] %v3548
  %3677 = vst [vmem:[#allocation3 + $0x250] sm:$0xff] %v3549
  %3678 = vst [vmem:[#allocation3 + $0x258] sm:$0xff] %v3550
  %3679 = vst [vmem:[#allocation3 + $0x260] sm:$0xff] %v3551
  %3680 = vst [vmem:[#allocation3 + $0x268] sm:$0xff] %v3552
  %3681 = vst [vmem:[#allocation3 + $0x270] sm:$0xff] %v3553
  %3682 = vst [vmem:[#allocation3 + $0x278] sm:$0xff] %v3554
  %3683 = vst [vmem:[#allocation3 + $0x280] sm:$0xff] %v3555
  %3684 = vst [vmem:[#allocation3 + $0x288] sm:$0xff] %v3556
  %3685 = vst [vmem:[#allocation3 + $0x290] sm:$0xff] %v3557
  %3686 = vst [vmem:[#allocation3 + $0x298] sm:$0xff] %v3558
  %3687 = vst [vmem:[#allocation3 + $0x2a0] sm:$0xff] %v3559
  %3688 = vst [vmem:[#allocation3 + $0x2a8] sm:$0xff] %v3560
  %3689 = vst [vmem:[#allocation3 + $0x2b0] sm:$0xff] %v3561
  %3690 = vst [vmem:[#allocation3 + $0x2b8] sm:$0xff] %v3562
  %3691 = vst [vmem:[#allocation3 + $0x2c0] sm:$0xff] %v3563
  %3692 = vst [vmem:[#allocation3 + $0x2c8] sm:$0xff] %v3564
  %3693 = vst [vmem:[#allocation3 + $0x2d0] sm:$0xff] %v3565
  %3694 = vst [vmem:[#allocation3 + $0x2d8] sm:$0xff] %v3566
  %3695 = vst [vmem:[#allocation3 + $0x2e0] sm:$0xff] %v3567
  %3696 = vst [vmem:[#allocation3 + $0x2e8] sm:$0xff] %v3568
  %3697 = vst [vmem:[#allocation3 + $0x2f0] sm:$0xff] %v3569
  %3698 = vst [vmem:[#allocation3 + $0x2f8] sm:$0xff] %v3570
  %3699 = vst [vmem:[#allocation3 + $0x300] sm:$0xff] %v3571
  %3700 = vst [vmem:[#allocation3 + $0x308] sm:$0xff] %v3572
  %3701 = vst [vmem:[#allocation3 + $0x310] sm:$0xff] %v3573
  %3702 = vst [vmem:[#allocation3 + $0x318] sm:$0xff] %v3574
  %3703 = vst [vmem:[#allocation3 + $0x320] sm:$0xff] %v3575
  %3704 = vst [vmem:[#allocation3 + $0x328] sm:$0xff] %v3576
  %3705 = vst [vmem:[#allocation3 + $0x330] sm:$0xff] %v3577
  %3706 = vst [vmem:[#allocation3 + $0x338] sm:$0xff] %v3578
  %3707 = vst [vmem:[#allocation3 + $0x340] sm:$0xff] %v3579
  %3708 = vst [vmem:[#allocation3 + $0x348] sm:$0xff] %v3580
  %3709 = vst [vmem:[#allocation3 + $0x350] sm:$0xff] %v3581
  %3710 = vst [vmem:[#allocation3 + $0x358] sm:$0xff] %v3582
  %3711 = vst [vmem:[#allocation3 + $0x360] sm:$0xff] %v3583
  %3712 = vst [vmem:[#allocation3 + $0x368] sm:$0xff] %v3584
  %3713 = vst [vmem:[#allocation3 + $0x370] sm:$0xff] %v3585
  %3714 = vst [vmem:[#allocation3 + $0x378] sm:$0xff] %v3586
  %3715 = vst [vmem:[#allocation3 + $0x380] sm:$0xff] %v3587
  %3716 = vst [vmem:[#allocation3 + $0x388] sm:$0xff] %v3588
  %3717 = vst [vmem:[#allocation3 + $0x390] sm:$0xff] %v3589
  %3718 = vst [vmem:[#allocation3 + $0x398] sm:$0xff] %v3590
  %3719 = vst [vmem:[#allocation3 + $0x3a0] sm:$0xff] %v3591
  %3720 = vst [vmem:[#allocation3 + $0x3a8] sm:$0xff] %v3592
  %3721 = vst [vmem:[#allocation3 + $0x3b0] sm:$0xff] %v3593
  %3722 = vst [vmem:[#allocation3 + $0x3b8] sm:$0xff] %v3594
  %3723 = vst [vmem:[#allocation3 + $0x3c0] sm:$0xff] %v3595
  %3724 = vst [vmem:[#allocation3 + $0x3c8] sm:$0xff] %v3596
  %3725 = vst [vmem:[#allocation3 + $0x3d0] sm:$0xff] %v3597
  %3726 = vst [vmem:[#allocation3 + $0x3d8] sm:$0xff] %v3598
  %3727 = vst [vmem:[#allocation3 + $0x3e0] sm:$0xff] %v3599
  %3728 = vst [vmem:[#allocation3 + $0x3e8] sm:$0xff] %v3600
  %3729 = vst [vmem:[#allocation3 + $0x3f0] sm:$0xff] %v3601
  %3730 = vst [vmem:[#allocation3 + $0x3f8] sm:$0xff] %v3602
  %3731 = vst [vmem:[#allocation5] sm:$0xff] 0.0
  %3732 = vst [vmem:[#allocation5 + $0x8] sm:$0xff] 0.0
  %3733 = vst [vmem:[#allocation5 + $0x10] sm:$0xff] 0.0
  %3734 = vst [vmem:[#allocation5 + $0x18] sm:$0xff] 0.0
  %3735 = vst [vmem:[#allocation5 + $0x20] sm:$0xff] 0.0
  %3736 = vst [vmem:[#allocation5 + $0x28] sm:$0xff] 0.0
  %3737 = vst [vmem:[#allocation5 + $0x30] sm:$0xff] 0.0
  %3738 = vst [vmem:[#allocation5 + $0x38] sm:$0xff] 0.0
  %3739 = vst [vmem:[#allocation5 + $0x40] sm:$0xff] 0.0
  %3740 = vst [vmem:[#allocation5 + $0x48] sm:$0xff] 0.0
  %3741 = vst [vmem:[#allocation5 + $0x50] sm:$0xff] 0.0
  %3742 = vst [vmem:[#allocation5 + $0x58] sm:$0xff] 0.0
  %3743 = vst [vmem:[#allocation5 + $0x60] sm:$0xff] 0.0
  %3744 = vst [vmem:[#allocation5 + $0x68] sm:$0xff] 0.0
  %3745 = vst [vmem:[#allocation5 + $0x70] sm:$0xff] 0.0
  %3746 = vst [vmem:[#allocation5 + $0x78] sm:$0xff] 0.0
  %3747 = vst [vmem:[#allocation5 + $0x80] sm:$0xff] 0.0
  %3748 = vst [vmem:[#allocation5 + $0x88] sm:$0xff] 0.0
  %3749 = vst [vmem:[#allocation5 + $0x90] sm:$0xff] 0.0
  %3750 = vst [vmem:[#allocation5 + $0x98] sm:$0xff] 0.0
  %3751 = vst [vmem:[#allocation5 + $0xa0] sm:$0xff] 0.0
  %3752 = vst [vmem:[#allocation5 + $0xa8] sm:$0xff] 0.0
  %3753 = vst [vmem:[#allocation5 + $0xb0] sm:$0xff] 0.0
  %3754 = vst [vmem:[#allocation5 + $0xb8] sm:$0xff] 0.0
  %3755 = vst [vmem:[#allocation5 + $0xc0] sm:$0xff] 0.0
  %3756 = vst [vmem:[#allocation5 + $0xc8] sm:$0xff] 0.0
  %3757 = vst [vmem:[#allocation5 + $0xd0] sm:$0xff] 0.0
  %3758 = vst [vmem:[#allocation5 + $0xd8] sm:$0xff] 0.0
  %3759 = vst [vmem:[#allocation5 + $0xe0] sm:$0xff] 0.0
  %3760 = vst [vmem:[#allocation5 + $0xe8] sm:$0xff] 0.0
  %3761 = vst [vmem:[#allocation5 + $0xf0] sm:$0xff] 0.0
  %3762 = vst [vmem:[#allocation5 + $0xf8] sm:$0xff] 0.0
  loop: start=0, step=1, limit=4
  $region58: #{_lambda_.1} parent=0 // loop_pre_header
    _
  $region59: #{_lambda_.1} parent=0 // loop_header
    %s3764 = sphi 0, %s3768
    %p3765 = scmp.ge.s32.totalorder %s3764, 4
  $region60: #{_lambda_.1} parent=0 // loop_header_branch
    %3767 = sbr.rel (%p3765) target = $region64
  $region61: #{_lambda_.1} parent=0 // loop_body
    %s3769 = smul.u32 %s3764, 256
    %s3770 = scalar_lea.vmem [#allocation2], %s3769
    %v3771 = vld [vmem:[%s3770] sm:$0xff]
    %v3772 = vld [vmem:[%s3770 + $0x8] sm:$0xff]
    %v3773 = vld [vmem:[%s3770 + $0x10] sm:$0xff]
    %v3774 = vld [vmem:[%s3770 + $0x18] sm:$0xff]
    %v3775 = vld [vmem:[%s3770 + $0x20] sm:$0xff]
    %v3776 = vld [vmem:[%s3770 + $0x28] sm:$0xff]
    %v3777 = vld [vmem:[%s3770 + $0x30] sm:$0xff]
    %v3778 = vld [vmem:[%s3770 + $0x38] sm:$0xff]
    %v3779 = vld [vmem:[%s3770 + $0x40] sm:$0xff]
    %v3780 = vld [vmem:[%s3770 + $0x48] sm:$0xff]
    %v3781 = vld [vmem:[%s3770 + $0x50] sm:$0xff]
    %v3782 = vld [vmem:[%s3770 + $0x58] sm:$0xff]
    %v3783 = vld [vmem:[%s3770 + $0x60] sm:$0xff]
    %v3784 = vld [vmem:[%s3770 + $0x68] sm:$0xff]
    %v3785 = vld [vmem:[%s3770 + $0x70] sm:$0xff]
    %v3786 = vld [vmem:[%s3770 + $0x78] sm:$0xff]
    %v3787 = vld [vmem:[%s3770 + $0x80] sm:$0xff]
    %v3788 = vld [vmem:[%s3770 + $0x88] sm:$0xff]
    %v3789 = vld [vmem:[%s3770 + $0x90] sm:$0xff]
    %v3790 = vld [vmem:[%s3770 + $0x98] sm:$0xff]
    %v3791 = vld [vmem:[%s3770 + $0xa0] sm:$0xff]
    %v3792 = vld [vmem:[%s3770 + $0xa8] sm:$0xff]
    %v3793 = vld [vmem:[%s3770 + $0xb0] sm:$0xff]
    %v3794 = vld [vmem:[%s3770 + $0xb8] sm:$0xff]
    %v3795 = vld [vmem:[%s3770 + $0xc0] sm:$0xff]
    %v3796 = vld [vmem:[%s3770 + $0xc8] sm:$0xff]
    %v3797 = vld [vmem:[%s3770 + $0xd0] sm:$0xff]
    %v3798 = vld [vmem:[%s3770 + $0xd8] sm:$0xff]
    %v3799 = vld [vmem:[%s3770 + $0xe0] sm:$0xff]
    %v3800 = vld [vmem:[%s3770 + $0xe8] sm:$0xff]
    %v3801 = vld [vmem:[%s3770 + $0xf0] sm:$0xff]
    %v3802 = vld [vmem:[%s3770 + $0xf8] sm:$0xff]
    %v3803 = vld [vmem:[#allocation5] sm:$0xff]
    %v3804 = vld [vmem:[#allocation5 + $0x8] sm:$0xff]
    %v3805 = vld [vmem:[#allocation5 + $0x10] sm:$0xff]
    %v3806 = vld [vmem:[#allocation5 + $0x18] sm:$0xff]
    %v3807 = vld [vmem:[#allocation5 + $0x20] sm:$0xff]
    %v3808 = vld [vmem:[#allocation5 + $0x28] sm:$0xff]
    %v3809 = vld [vmem:[#allocation5 + $0x30] sm:$0xff]
    %v3810 = vld [vmem:[#allocation5 + $0x38] sm:$0xff]
    %v3811 = vld [vmem:[#allocation5 + $0x40] sm:$0xff]
    %v3812 = vld [vmem:[#allocation5 + $0x48] sm:$0xff]
    %v3813 = vld [vmem:[#allocation5 + $0x50] sm:$0xff]
    %v3814 = vld [vmem:[#allocation5 + $0x58] sm:$0xff]
    %v3815 = vld [vmem:[#allocation5 + $0x60] sm:$0xff]
    %v3816 = vld [vmem:[#allocation5 + $0x68] sm:$0xff]
    %v3817 = vld [vmem:[#allocation5 + $0x70] sm:$0xff]
    %v3818 = vld [vmem:[#allocation5 + $0x78] sm:$0xff]
    %v3819 = vld [vmem:[#allocation5 + $0x80] sm:$0xff]
    %v3820 = vld [vmem:[#allocation5 + $0x88] sm:$0xff]
    %v3821 = vld [vmem:[#allocation5 + $0x90] sm:$0xff]
    %v3822 = vld [vmem:[#allocation5 + $0x98] sm:$0xff]
    %v3823 = vld [vmem:[#allocation5 + $0xa0] sm:$0xff]
    %v3824 = vld [vmem:[#allocation5 + $0xa8] sm:$0xff]
    %v3825 = vld [vmem:[#allocation5 + $0xb0] sm:$0xff]
    %v3826 = vld [vmem:[#allocation5 + $0xb8] sm:$0xff]
    %v3827 = vld [vmem:[#allocation5 + $0xc0] sm:$0xff]
    %v3828 = vld [vmem:[#allocation5 + $0xc8] sm:$0xff]
    %v3829 = vld [vmem:[#allocation5 + $0xd0] sm:$0xff]
    %v3830 = vld [vmem:[#allocation5 + $0xd8] sm:$0xff]
    %v3831 = vld [vmem:[#allocation5 + $0xe0] sm:$0xff]
    %v3832 = vld [vmem:[#allocation5 + $0xe8] sm:$0xff]
    %v3833 = vld [vmem:[#allocation5 + $0xf0] sm:$0xff]
    %v3834 = vld [vmem:[#allocation5 + $0xf8] sm:$0xff]
    %v3835 = vmul.f32 %v3771, %v3803
    %v3836 = vmul.f32 %v3772, %v3804
    %v3837 = vmul.f32 %v3773, %v3805
    %v3838 = vmul.f32 %v3774, %v3806
    %v3839 = vmul.f32 %v3775, %v3807
    %v3840 = vmul.f32 %v3776, %v3808
    %v3841 = vmul.f32 %v3777, %v3809
    %v3842 = vmul.f32 %v3778, %v3810
    %v3843 = vmul.f32 %v3779, %v3811
    %v3844 = vmul.f32 %v3780, %v3812
    %v3845 = vmul.f32 %v3781, %v3813
    %v3846 = vmul.f32 %v3782, %v3814
    %v3847 = vmul.f32 %v3783, %v3815
    %v3848 = vmul.f32 %v3784, %v3816
    %v3849 = vmul.f32 %v3785, %v3817
    %v3850 = vmul.f32 %v3786, %v3818
    %v3851 = vmul.f32 %v3787, %v3819
    %v3852 = vmul.f32 %v3788, %v3820
    %v3853 = vmul.f32 %v3789, %v3821
    %v3854 = vmul.f32 %v3790, %v3822
    %v3855 = vmul.f32 %v3791, %v3823
    %v3856 = vmul.f32 %v3792, %v3824
    %v3857 = vmul.f32 %v3793, %v3825
    %v3858 = vmul.f32 %v3794, %v3826
    %v3859 = vmul.f32 %v3795, %v3827
    %v3860 = vmul.f32 %v3796, %v3828
    %v3861 = vmul.f32 %v3797, %v3829
    %v3862 = vmul.f32 %v3798, %v3830
    %v3863 = vmul.f32 %v3799, %v3831
    %v3864 = vmul.f32 %v3800, %v3832
    %v3865 = vmul.f32 %v3801, %v3833
    %v3866 = vmul.f32 %v3802, %v3834
    %s3867 = scalar_lea.vmem [#allocation3], %s3769
    %v3868 = vld [vmem:[%s3867] sm:$0xff]
    %v3869 = vld [vmem:[%s3867 + $0x8] sm:$0xff]
    %v3870 = vld [vmem:[%s3867 + $0x10] sm:$0xff]
    %v3871 = vld [vmem:[%s3867 + $0x18] sm:$0xff]
    %v3872 = vld [vmem:[%s3867 + $0x20] sm:$0xff]
    %v3873 = vld [vmem:[%s3867 + $0x28] sm:$0xff]
    %v3874 = vld [vmem:[%s3867 + $0x30] sm:$0xff]
    %v3875 = vld [vmem:[%s3867 + $0x38] sm:$0xff]
    %v3876 = vld [vmem:[%s3867 + $0x40] sm:$0xff]
    %v3877 = vld [vmem:[%s3867 + $0x48] sm:$0xff]
    %v3878 = vld [vmem:[%s3867 + $0x50] sm:$0xff]
    %v3879 = vld [vmem:[%s3867 + $0x58] sm:$0xff]
    %v3880 = vld [vmem:[%s3867 + $0x60] sm:$0xff]
    %v3881 = vld [vmem:[%s3867 + $0x68] sm:$0xff]
    %v3882 = vld [vmem:[%s3867 + $0x70] sm:$0xff]
    %v3883 = vld [vmem:[%s3867 + $0x78] sm:$0xff]
    %v3884 = vld [vmem:[%s3867 + $0x80] sm:$0xff]
    %v3885 = vld [vmem:[%s3867 + $0x88] sm:$0xff]
    %v3886 = vld [vmem:[%s3867 + $0x90] sm:$0xff]
    %v3887 = vld [vmem:[%s3867 + $0x98] sm:$0xff]
    %v3888 = vld [vmem:[%s3867 + $0xa0] sm:$0xff]
    %v3889 = vld [vmem:[%s3867 + $0xa8] sm:$0xff]
    %v3890 = vld [vmem:[%s3867 + $0xb0] sm:$0xff]
    %v3891 = vld [vmem:[%s3867 + $0xb8] sm:$0xff]
    %v3892 = vld [vmem:[%s3867 + $0xc0] sm:$0xff]
    %v3893 = vld [vmem:[%s3867 + $0xc8] sm:$0xff]
    %v3894 = vld [vmem:[%s3867 + $0xd0] sm:$0xff]
    %v3895 = vld [vmem:[%s3867 + $0xd8] sm:$0xff]
    %v3896 = vld [vmem:[%s3867 + $0xe0] sm:$0xff]
    %v3897 = vld [vmem:[%s3867 + $0xe8] sm:$0xff]
    %v3898 = vld [vmem:[%s3867 + $0xf0] sm:$0xff]
    %v3899 = vld [vmem:[%s3867 + $0xf8] sm:$0xff]
    %v3900 = vadd.f32 %v3835, %v3868
    %v3901 = vadd.f32 %v3836, %v3869
    %v3902 = vadd.f32 %v3837, %v3870
    %v3903 = vadd.f32 %v3838, %v3871
    %v3904 = vadd.f32 %v3839, %v3872
    %v3905 = vadd.f32 %v3840, %v3873
    %v3906 = vadd.f32 %v3841, %v3874
    %v3907 = vadd.f32 %v3842, %v3875
    %v3908 = vadd.f32 %v3843, %v3876
    %v3909 = vadd.f32 %v3844, %v3877
    %v3910 = vadd.f32 %v3845, %v3878
    %v3911 = vadd.f32 %v3846, %v3879
    %v3912 = vadd.f32 %v3847, %v3880
    %v3913 = vadd.f32 %v3848, %v3881
    %v3914 = vadd.f32 %v3849, %v3882
    %v3915 = vadd.f32 %v3850, %v3883
    %v3916 = vadd.f32 %v3851, %v3884
    %v3917 = vadd.f32 %v3852, %v3885
    %v3918 = vadd.f32 %v3853, %v3886
    %v3919 = vadd.f32 %v3854, %v3887
    %v3920 = vadd.f32 %v3855, %v3888
    %v3921 = vadd.f32 %v3856, %v3889
    %v3922 = vadd.f32 %v3857, %v3890
    %v3923 = vadd.f32 %v3858, %v3891
    %v3924 = vadd.f32 %v3859, %v3892
    %v3925 = vadd.f32 %v3860, %v3893
    %v3926 = vadd.f32 %v3861, %v3894
    %v3927 = vadd.f32 %v3862, %v3895
    %v3928 = vadd.f32 %v3863, %v3896
    %v3929 = vadd.f32 %v3864, %v3897
    %v3930 = vadd.f32 %v3865, %v3898
    %v3931 = vadd.f32 %v3866, %v3899
    %3932 = vst [vmem:[#allocation5] sm:$0xff] %v3900
    %3933 = vst [vmem:[#allocation5 + $0x8] sm:$0xff] %v3901
    %3934 = vst [vmem:[#allocation5 + $0x10] sm:$0xff] %v3902
    %3935 = vst [vmem:[#allocation5 + $0x18] sm:$0xff] %v3903
    %3936 = vst [vmem:[#allocation5 + $0x20] sm:$0xff] %v3904
    %3937 = vst [vmem:[#allocation5 + $0x28] sm:$0xff] %v3905
    %3938 = vst [vmem:[#allocation5 + $0x30] sm:$0xff] %v3906
    %3939 = vst [vmem:[#allocation5 + $0x38] sm:$0xff] %v3907
    %3940 = vst [vmem:[#allocation5 + $0x40] sm:$0xff] %v3908
    %3941 = vst [vmem:[#allocation5 + $0x48] sm:$0xff] %v3909
    %3942 = vst [vmem:[#allocation5 + $0x50] sm:$0xff] %v3910
    %3943 = vst [vmem:[#allocation5 + $0x58] sm:$0xff] %v3911
    %3944 = vst [vmem:[#allocation5 + $0x60] sm:$0xff] %v3912
    %3945 = vst [vmem:[#allocation5 + $0x68] sm:$0xff] %v3913
    %3946 = vst [vmem:[#allocation5 + $0x70] sm:$0xff] %v3914
    %3947 = vst [vmem:[#allocation5 + $0x78] sm:$0xff] %v3915
    %3948 = vst [vmem:[#allocation5 + $0x80] sm:$0xff] %v3916
    %3949 = vst [vmem:[#allocation5 + $0x88] sm:$0xff] %v3917
    %3950 = vst [vmem:[#allocation5 + $0x90] sm:$0xff] %v3918
    %3951 = vst [vmem:[#allocation5 + $0x98] sm:$0xff] %v3919
    %3952 = vst [vmem:[#allocation5 + $0xa0] sm:$0xff] %v3920
    %3953 = vst [vmem:[#allocation5 + $0xa8] sm:$0xff] %v3921
    %3954 = vst [vmem:[#allocation5 + $0xb0] sm:$0xff] %v3922
    %3955 = vst [vmem:[#allocation5 + $0xb8] sm:$0xff] %v3923
    %3956 = vst [vmem:[#allocation5 + $0xc0] sm:$0xff] %v3924
    %3957 = vst [vmem:[#allocation5 + $0xc8] sm:$0xff] %v3925
    %3958 = vst [vmem:[#allocation5 + $0xd0] sm:$0xff] %v3926
    %3959 = vst [vmem:[#allocation5 + $0xd8] sm:$0xff] %v3927
    %3960 = vst [vmem:[#allocation5 + $0xe0] sm:$0xff] %v3928
    %3961 = vst [vmem:[#allocation5 + $0xe8] sm:$0xff] %v3929
    %3962 = vst [vmem:[#allocation5 + $0xf0] sm:$0xff] %v3930
    %3963 = vst [vmem:[#allocation5 + $0xf8] sm:$0xff] %v3931
    %s3964 = scalar_lea.vmem [#allocation4], %s3769
    %3965 = vst [vmem:[%s3964] sm:$0xff] %v3900
    %3966 = vst [vmem:[%s3964 + $0x8] sm:$0xff] %v3901
    %3967 = vst [vmem:[%s3964 + $0x10] sm:$0xff] %v3902
    %3968 = vst [vmem:[%s3964 + $0x18] sm:$0xff] %v3903
    %3969 = vst [vmem:[%s3964 + $0x20] sm:$0xff] %v3904
    %3970 = vst [vmem:[%s3964 + $0x28] sm:$0xff] %v3905
    %3971 = vst [vmem:[%s3964 + $0x30] sm:$0xff] %v3906
    %3972 = vst [vmem:[%s3964 + $0x38] sm:$0xff] %v3907
    %3973 = vst [vmem:[%s3964 + $0x40] sm:$0xff] %v3908
    %3974 = vst [vmem:[%s3964 + $0x48] sm:$0xff] %v3909
    %3975 = vst [vmem:[%s3964 + $0x50] sm:$0xff] %v3910
    %3976 = vst [vmem:[%s3964 + $0x58] sm:$0xff] %v3911
    %3977 = vst [vmem:[%s3964 + $0x60] sm:$0xff] %v3912
    %3978 = vst [vmem:[%s3964 + $0x68] sm:$0xff] %v3913
    %3979 = vst [vmem:[%s3964 + $0x70] sm:$0xff] %v3914
    %3980 = vst [vmem:[%s3964 + $0x78] sm:$0xff] %v3915
    %3981 = vst [vmem:[%s3964 + $0x80] sm:$0xff] %v3916
    %3982 = vst [vmem:[%s3964 + $0x88] sm:$0xff] %v3917
    %3983 = vst [vmem:[%s3964 + $0x90] sm:$0xff] %v3918
    %3984 = vst [vmem:[%s3964 + $0x98] sm:$0xff] %v3919
    %3985 = vst [vmem:[%s3964 + $0xa0] sm:$0xff] %v3920
    %3986 = vst [vmem:[%s3964 + $0xa8] sm:$0xff] %v3921
    %3987 = vst [vmem:[%s3964 + $0xb0] sm:$0xff] %v3922
    %3988 = vst [vmem:[%s3964 + $0xb8] sm:$0xff] %v3923
    %3989 = vst [vmem:[%s3964 + $0xc0] sm:$0xff] %v3924
    %3990 = vst [vmem:[%s3964 + $0xc8] sm:$0xff] %v3925
    %3991 = vst [vmem:[%s3964 + $0xd0] sm:$0xff] %v3926
    %3992 = vst [vmem:[%s3964 + $0xd8] sm:$0xff] %v3927
    %3993 = vst [vmem:[%s3964 + $0xe0] sm:$0xff] %v3928
    %3994 = vst [vmem:[%s3964 + $0xe8] sm:$0xff] %v3929
    %3995 = vst [vmem:[%s3964 + $0xf0] sm:$0xff] %v3930
    %3996 = vst [vmem:[%s3964 + $0xf8] sm:$0xff] %v3931
  $region62: #{_lambda_.1} parent=0 // loop_footer
    %s3768 = sadd.s32 1, %s3764
  $region63: #{_lambda_.1} parent=0 // loop_footer_branch
    %3763 = sbr.rel target = $region59
  $region64: #{_lambda_.1} parent=0 // loop_exit
    _
  %v3997 = vld [vmem:[#allocation4] sm:$0xff]
  %v3998 = vld [vmem:[#allocation4 + $0x8] sm:$0xff]
  %v3999 = vld [vmem:[#allocation4 + $0x10] sm:$0xff]
  %v4000 = vld [vmem:[#allocation4 + $0x18] sm:$0xff]
  %v4001 = vld [vmem:[#allocation4 + $0x20] sm:$0xff]
  %v4002 = vld [vmem:[#allocation4 + $0x28] sm:$0xff]
  %v4003 = vld [vmem:[#allocation4 + $0x30] sm:$0xff]
  %v4004 = vld [vmem:[#allocation4 + $0x38] sm:$0xff]
  %v4005 = vld [vmem:[#allocation4 + $0x40] sm:$0xff]
  %v4006 = vld [vmem:[#allocation4 + $0x48] sm:$0xff]
  %v4007 = vld [vmem:[#allocation4 + $0x50] sm:$0xff]
  %v4008 = vld [vmem:[#allocation4 + $0x58] sm:$0xff]
  %v4009 = vld [vmem:[#allocation4 + $0x60] sm:$0xff]
  %v4010 = vld [vmem:[#allocation4 + $0x68] sm:$0xff]
  %v4011 = vld [vmem:[#allocation4 + $0x70] sm:$0xff]
  %v4012 = vld [vmem:[#allocation4 + $0x78] sm:$0xff]
  %v4013 = vld [vmem:[#allocation4 + $0x80] sm:$0xff]
  %v4014 = vld [vmem:[#allocation4 + $0x88] sm:$0xff]
  %v4015 = vld [vmem:[#allocation4 + $0x90] sm:$0xff]
  %v4016 = vld [vmem:[#allocation4 + $0x98] sm:$0xff]
  %v4017 = vld [vmem:[#allocation4 + $0xa0] sm:$0xff]
  %v4018 = vld [vmem:[#allocation4 + $0xa8] sm:$0xff]
  %v4019 = vld [vmem:[#allocation4 + $0xb0] sm:$0xff]
  %v4020 = vld [vmem:[#allocation4 + $0xb8] sm:$0xff]
  %v4021 = vld [vmem:[#allocation4 + $0xc0] sm:$0xff]
  %v4022 = vld [vmem:[#allocation4 + $0xc8] sm:$0xff]
  %v4023 = vld [vmem:[#allocation4 + $0xd0] sm:$0xff]
  %v4024 = vld [vmem:[#allocation4 + $0xd8] sm:$0xff]
  %v4025 = vld [vmem:[#allocation4 + $0xe0] sm:$0xff]
  %v4026 = vld [vmem:[#allocation4 + $0xe8] sm:$0xff]
  %v4027 = vld [vmem:[#allocation4 + $0xf0] sm:$0xff]
  %v4028 = vld [vmem:[#allocation4 + $0xf8] sm:$0xff]
  %v4029 = vld [vmem:[#allocation4 + $0x100] sm:$0xff]
  %v4030 = vld [vmem:[#allocation4 + $0x108] sm:$0xff]
  %v4031 = vld [vmem:[#allocation4 + $0x110] sm:$0xff]
  %v4032 = vld [vmem:[#allocation4 + $0x118] sm:$0xff]
  %v4033 = vld [vmem:[#allocation4 + $0x120] sm:$0xff]
  %v4034 = vld [vmem:[#allocation4 + $0x128] sm:$0xff]
  %v4035 = vld [vmem:[#allocation4 + $0x130] sm:$0xff]
  %v4036 = vld [vmem:[#allocation4 + $0x138] sm:$0xff]
  %v4037 = vld [vmem:[#allocation4 + $0x140] sm:$0xff]
  %v4038 = vld [vmem:[#allocation4 + $0x148] sm:$0xff]
  %v4039 = vld [vmem:[#allocation4 + $0x150] sm:$0xff]
  %v4040 = vld [vmem:[#allocation4 + $0x158] sm:$0xff]
  %v4041 = vld [vmem:[#allocation4 + $0x160] sm:$0xff]
  %v4042 = vld [vmem:[#allocation4 + $0x168] sm:$0xff]
  %v4043 = vld [vmem:[#allocation4 + $0x170] sm:$0xff]
  %v4044 = vld [vmem:[#allocation4 + $0x178] sm:$0xff]
  %v4045 = vld [vmem:[#allocation4 + $0x180] sm:$0xff]
  %v4046 = vld [vmem:[#allocation4 + $0x188] sm:$0xff]
  %v4047 = vld [vmem:[#allocation4 + $0x190] sm:$0xff]
  %v4048 = vld [vmem:[#allocation4 + $0x198] sm:$0xff]
  %v4049 = vld [vmem:[#allocation4 + $0x1a0] sm:$0xff]
  %v4050 = vld [vmem:[#allocation4 + $0x1a8] sm:$0xff]
  %v4051 = vld [vmem:[#allocation4 + $0x1b0] sm:$0xff]
  %v4052 = vld [vmem:[#allocation4 + $0x1b8] sm:$0xff]
  %v4053 = vld [vmem:[#allocation4 + $0x1c0] sm:$0xff]
  %v4054 = vld [vmem:[#allocation4 + $0x1c8] sm:$0xff]
  %v4055 = vld [vmem:[#allocation4 + $0x1d0] sm:$0xff]
  %v4056 = vld [vmem:[#allocation4 + $0x1d8] sm:$0xff]
  %v4057 = vld [vmem:[#allocation4 + $0x1e0] sm:$0xff]
  %v4058 = vld [vmem:[#allocation4 + $0x1e8] sm:$0xff]
  %v4059 = vld [vmem:[#allocation4 + $0x1f0] sm:$0xff]
  %v4060 = vld [vmem:[#allocation4 + $0x1f8] sm:$0xff]
  %v4061 = vld [vmem:[#allocation4 + $0x200] sm:$0xff]
  %v4062 = vld [vmem:[#allocation4 + $0x208] sm:$0xff]
  %v4063 = vld [vmem:[#allocation4 + $0x210] sm:$0xff]
  %v4064 = vld [vmem:[#allocation4 + $0x218] sm:$0xff]
  %v4065 = vld [vmem:[#allocation4 + $0x220] sm:$0xff]
  %v4066 = vld [vmem:[#allocation4 + $0x228] sm:$0xff]
  %v4067 = vld [vmem:[#allocation4 + $0x230] sm:$0xff]
  %v4068 = vld [vmem:[#allocation4 + $0x238] sm:$0xff]
  %v4069 = vld [vmem:[#allocation4 + $0x240] sm:$0xff]
  %v4070 = vld [vmem:[#allocation4 + $0x248] sm:$0xff]
  %v4071 = vld [vmem:[#allocation4 + $0x250] sm:$0xff]
  %v4072 = vld [vmem:[#allocation4 + $0x258] sm:$0xff]
  %v4073 = vld [vmem:[#allocation4 + $0x260] sm:$0xff]
  %v4074 = vld [vmem:[#allocation4 + $0x268] sm:$0xff]
  %v4075 = vld [vmem:[#allocation4 + $0x270] sm:$0xff]
  %v4076 = vld [vmem:[#allocation4 + $0x278] sm:$0xff]
  %v4077 = vld [vmem:[#allocation4 + $0x280] sm:$0xff]
  %v4078 = vld [vmem:[#allocation4 + $0x288] sm:$0xff]
  %v4079 = vld [vmem:[#allocation4 + $0x290] sm:$0xff]
  %v4080 = vld [vmem:[#allocation4 + $0x298] sm:$0xff]
  %v4081 = vld [vmem:[#allocation4 + $0x2a0] sm:$0xff]
  %v4082 = vld [vmem:[#allocation4 + $0x2a8] sm:$0xff]
  %v4083 = vld [vmem:[#allocation4 + $0x2b0] sm:$0xff]
  %v4084 = vld [vmem:[#allocation4 + $0x2b8] sm:$0xff]
  %v4085 = vld [vmem:[#allocation4 + $0x2c0] sm:$0xff]
  %v4086 = vld [vmem:[#allocation4 + $0x2c8] sm:$0xff]
  %v4087 = vld [vmem:[#allocation4 + $0x2d0] sm:$0xff]
  %v4088 = vld [vmem:[#allocation4 + $0x2d8] sm:$0xff]
  %v4089 = vld [vmem:[#allocation4 + $0x2e0] sm:$0xff]
  %v4090 = vld [vmem:[#allocation4 + $0x2e8] sm:$0xff]
  %v4091 = vld [vmem:[#allocation4 + $0x2f0] sm:$0xff]
  %v4092 = vld [vmem:[#allocation4 + $0x2f8] sm:$0xff]
  %v4093 = vld [vmem:[#allocation4 + $0x300] sm:$0xff]
  %v4094 = vld [vmem:[#allocation4 + $0x308] sm:$0xff]
  %v4095 = vld [vmem:[#allocation4 + $0x310] sm:$0xff]
  %v4096 = vld [vmem:[#allocation4 + $0x318] sm:$0xff]
  %v4097 = vld [vmem:[#allocation4 + $0x320] sm:$0xff]
  %v4098 = vld [vmem:[#allocation4 + $0x328] sm:$0xff]
  %v4099 = vld [vmem:[#allocation4 + $0x330] sm:$0xff]
  %v4100 = vld [vmem:[#allocation4 + $0x338] sm:$0xff]
  %v4101 = vld [vmem:[#allocation4 + $0x340] sm:$0xff]
  %v4102 = vld [vmem:[#allocation4 + $0x348] sm:$0xff]
  %v4103 = vld [vmem:[#allocation4 + $0x350] sm:$0xff]
  %v4104 = vld [vmem:[#allocation4 + $0x358] sm:$0xff]
  %v4105 = vld [vmem:[#allocation4 + $0x360] sm:$0xff]
  %v4106 = vld [vmem:[#allocation4 + $0x368] sm:$0xff]
  %v4107 = vld [vmem:[#allocation4 + $0x370] sm:$0xff]
  %v4108 = vld [vmem:[#allocation4 + $0x378] sm:$0xff]
  %v4109 = vld [vmem:[#allocation4 + $0x380] sm:$0xff]
  %v4110 = vld [vmem:[#allocation4 + $0x388] sm:$0xff]
  %v4111 = vld [vmem:[#allocation4 + $0x390] sm:$0xff]
  %v4112 = vld [vmem:[#allocation4 + $0x398] sm:$0xff]
  %v4113 = vld [vmem:[#allocation4 + $0x3a0] sm:$0xff]
  %v4114 = vld [vmem:[#allocation4 + $0x3a8] sm:$0xff]
  %v4115 = vld [vmem:[#allocation4 + $0x3b0] sm:$0xff]
  %v4116 = vld [vmem:[#allocation4 + $0x3b8] sm:$0xff]
  %v4117 = vld [vmem:[#allocation4 + $0x3c0] sm:$0xff]
  %v4118 = vld [vmem:[#allocation4 + $0x3c8] sm:$0xff]
  %v4119 = vld [vmem:[#allocation4 + $0x3d0] sm:$0xff]
  %v4120 = vld [vmem:[#allocation4 + $0x3d8] sm:$0xff]
  %v4121 = vld [vmem:[#allocation4 + $0x3e0] sm:$0xff]
  %v4122 = vld [vmem:[#allocation4 + $0x3e8] sm:$0xff]
  %v4123 = vld [vmem:[#allocation4 + $0x3f0] sm:$0xff]
  %v4124 = vld [vmem:[#allocation4 + $0x3f8] sm:$0xff]
  %s4126 = sor.u32 256, 20
  %4127 = vbcast.lane.b32.xlu0 %v2390, %s4126
  %v4128 = vpop.permute.xlu0 %4127
  %s4130 = sor.u32 256, 28
  %4131 = vbcast.lane.b32.xlu0 %v2390, %s4130
  %v4132 = vpop.permute.xlu0 %4131
  %s4134 = sor.u32 256, 20
  %4135 = vbcast.lane.b32.xlu0 %v2402, %s4134
  %v4136 = vpop.permute.xlu0 %4135
  %s4138 = sor.u32 256, 28
  %4139 = vbcast.lane.b32.xlu0 %v2402, %s4138
  %v4140 = vpop.permute.xlu0 %4139
  %s4142 = sor.u32 256, 20
  %4143 = vbcast.lane.b32.xlu0 %v2414, %s4142
  %v4144 = vpop.permute.xlu0 %4143
  %s4146 = sor.u32 256, 28
  %4147 = vbcast.lane.b32.xlu0 %v2414, %s4146
  %v4148 = vpop.permute.xlu0 %4147
  %s4150 = sor.u32 256, 20
  %4151 = vbcast.lane.b32.xlu0 %v2426, %s4150
  %v4152 = vpop.permute.xlu0 %4151
  %s4154 = sor.u32 256, 28
  %4155 = vbcast.lane.b32.xlu0 %v2426, %s4154
  %v4156 = vpop.permute.xlu0 %4155
  %s4158 = sor.u32 256, 20
  %4159 = vbcast.lane.b32.xlu0 %v2438, %s4158
  %v4160 = vpop.permute.xlu0 %4159
  %s4162 = sor.u32 256, 28
  %4163 = vbcast.lane.b32.xlu0 %v2438, %s4162
  %v4164 = vpop.permute.xlu0 %4163
  %s4166 = sor.u32 256, 20
  %4167 = vbcast.lane.b32.xlu0 %v2450, %s4166
  %v4168 = vpop.permute.xlu0 %4167
  %s4170 = sor.u32 256, 28
  %4171 = vbcast.lane.b32.xlu0 %v2450, %s4170
  %v4172 = vpop.permute.xlu0 %4171
  %s4174 = sor.u32 256, 20
  %4175 = vbcast.lane.b32.xlu0 %v2462, %s4174
  %v4176 = vpop.permute.xlu0 %4175
  %s4178 = sor.u32 256, 28
  %4179 = vbcast.lane.b32.xlu0 %v2462, %s4178
  %v4180 = vpop.permute.xlu0 %4179
  %s4182 = sor.u32 256, 20
  %4183 = vbcast.lane.b32.xlu0 %v2474, %s4182
  %v4184 = vpop.permute.xlu0 %4183
  %s4186 = sor.u32 256, 28
  %4187 = vbcast.lane.b32.xlu0 %v2474, %s4186
  %v4188 = vpop.permute.xlu0 %4187
  %s4190 = sor.u32 256, 20
  %4191 = vbcast.lane.b32.xlu0 %v2486, %s4190
  %v4192 = vpop.permute.xlu0 %4191
  %s4194 = sor.u32 256, 28
  %4195 = vbcast.lane.b32.xlu0 %v2486, %s4194
  %v4196 = vpop.permute.xlu0 %4195
  %s4198 = sor.u32 256, 20
  %4199 = vbcast.lane.b32.xlu0 %v2498, %s4198
  %v4200 = vpop.permute.xlu0 %4199
  %s4202 = sor.u32 256, 28
  %4203 = vbcast.lane.b32.xlu0 %v2498, %s4202
  %v4204 = vpop.permute.xlu0 %4203
  %s4206 = sor.u32 256, 20
  %4207 = vbcast.lane.b32.xlu0 %v2510, %s4206
  %v4208 = vpop.permute.xlu0 %4207
  %s4210 = sor.u32 256, 28
  %4211 = vbcast.lane.b32.xlu0 %v2510, %s4210
  %v4212 = vpop.permute.xlu0 %4211
  %s4214 = sor.u32 256, 20
  %4215 = vbcast.lane.b32.xlu0 %v2522, %s4214
  %v4216 = vpop.permute.xlu0 %4215
  %s4218 = sor.u32 256, 28
  %4219 = vbcast.lane.b32.xlu0 %v2522, %s4218
  %v4220 = vpop.permute.xlu0 %4219
  %s4222 = sor.u32 256, 20
  %4223 = vbcast.lane.b32.xlu0 %v2534, %s4222
  %v4224 = vpop.permute.xlu0 %4223
  %s4226 = sor.u32 256, 28
  %4227 = vbcast.lane.b32.xlu0 %v2534, %s4226
  %v4228 = vpop.permute.xlu0 %4227
  %s4230 = sor.u32 256, 20
  %4231 = vbcast.lane.b32.xlu0 %v2546, %s4230
  %v4232 = vpop.permute.xlu0 %4231
  %s4234 = sor.u32 256, 28
  %4235 = vbcast.lane.b32.xlu0 %v2546, %s4234
  %v4236 = vpop.permute.xlu0 %4235
  %s4238 = sor.u32 256, 20
  %4239 = vbcast.lane.b32.xlu0 %v2558, %s4238
  %v4240 = vpop.permute.xlu0 %4239
  %s4242 = sor.u32 256, 28
  %4243 = vbcast.lane.b32.xlu0 %v2558, %s4242
  %v4244 = vpop.permute.xlu0 %4243
  %s4246 = sor.u32 256, 20
  %4247 = vbcast.lane.b32.xlu0 %v2570, %s4246
  %v4248 = vpop.permute.xlu0 %4247
  %s4250 = sor.u32 256, 28
  %4251 = vbcast.lane.b32.xlu0 %v2570, %s4250
  %v4252 = vpop.permute.xlu0 %4251
  %s4254 = sor.u32 256, 20
  %4255 = vbcast.lane.b32.xlu0 %v2582, %s4254
  %v4256 = vpop.permute.xlu0 %4255
  %s4258 = sor.u32 256, 28
  %4259 = vbcast.lane.b32.xlu0 %v2582, %s4258
  %v4260 = vpop.permute.xlu0 %4259
  %s4262 = sor.u32 256, 20
  %4263 = vbcast.lane.b32.xlu0 %v2594, %s4262
  %v4264 = vpop.permute.xlu0 %4263
  %s4266 = sor.u32 256, 28
  %4267 = vbcast.lane.b32.xlu0 %v2594, %s4266
  %v4268 = vpop.permute.xlu0 %4267
  %s4270 = sor.u32 256, 20
  %4271 = vbcast.lane.b32.xlu0 %v2606, %s4270
  %v4272 = vpop.permute.xlu0 %4271
  %s4274 = sor.u32 256, 28
  %4275 = vbcast.lane.b32.xlu0 %v2606, %s4274
  %v4276 = vpop.permute.xlu0 %4275
  %s4278 = sor.u32 256, 20
  %4279 = vbcast.lane.b32.xlu0 %v2618, %s4278
  %v4280 = vpop.permute.xlu0 %4279
  %s4282 = sor.u32 256, 28
  %4283 = vbcast.lane.b32.xlu0 %v2618, %s4282
  %v4284 = vpop.permute.xlu0 %4283
  %s4286 = sor.u32 256, 20
  %4287 = vbcast.lane.b32.xlu0 %v2630, %s4286
  %v4288 = vpop.permute.xlu0 %4287
  %s4290 = sor.u32 256, 28
  %4291 = vbcast.lane.b32.xlu0 %v2630, %s4290
  %v4292 = vpop.permute.xlu0 %4291
  %s4294 = sor.u32 256, 20
  %4295 = vbcast.lane.b32.xlu0 %v2642, %s4294
  %v4296 = vpop.permute.xlu0 %4295
  %s4298 = sor.u32 256, 28
  %4299 = vbcast.lane.b32.xlu0 %v2642, %s4298
  %v4300 = vpop.permute.xlu0 %4299
  %s4302 = sor.u32 256, 20
  %4303 = vbcast.lane.b32.xlu0 %v2654, %s4302
  %v4304 = vpop.permute.xlu0 %4303
  %s4306 = sor.u32 256, 28
  %4307 = vbcast.lane.b32.xlu0 %v2654, %s4306
  %v4308 = vpop.permute.xlu0 %4307
  %s4310 = sor.u32 256, 20
  %4311 = vbcast.lane.b32.xlu0 %v2666, %s4310
  %v4312 = vpop.permute.xlu0 %4311
  %s4314 = sor.u32 256, 28
  %4315 = vbcast.lane.b32.xlu0 %v2666, %s4314
  %v4316 = vpop.permute.xlu0 %4315
  %s4318 = sor.u32 256, 20
  %4319 = vbcast.lane.b32.xlu0 %v2678, %s4318
  %v4320 = vpop.permute.xlu0 %4319
  %s4322 = sor.u32 256, 28
  %4323 = vbcast.lane.b32.xlu0 %v2678, %s4322
  %v4324 = vpop.permute.xlu0 %4323
  %s4326 = sor.u32 256, 20
  %4327 = vbcast.lane.b32.xlu0 %v2690, %s4326
  %v4328 = vpop.permute.xlu0 %4327
  %s4330 = sor.u32 256, 28
  %4331 = vbcast.lane.b32.xlu0 %v2690, %s4330
  %v4332 = vpop.permute.xlu0 %4331
  %s4334 = sor.u32 256, 20
  %4335 = vbcast.lane.b32.xlu0 %v2702, %s4334
  %v4336 = vpop.permute.xlu0 %4335
  %s4338 = sor.u32 256, 28
  %4339 = vbcast.lane.b32.xlu0 %v2702, %s4338
  %v4340 = vpop.permute.xlu0 %4339
  %s4342 = sor.u32 256, 20
  %4343 = vbcast.lane.b32.xlu0 %v2714, %s4342
  %v4344 = vpop.permute.xlu0 %4343
  %s4346 = sor.u32 256, 28
  %4347 = vbcast.lane.b32.xlu0 %v2714, %s4346
  %v4348 = vpop.permute.xlu0 %4347
  %s4350 = sor.u32 256, 20
  %4351 = vbcast.lane.b32.xlu0 %v2726, %s4350
  %v4352 = vpop.permute.xlu0 %4351
  %s4354 = sor.u32 256, 28
  %4355 = vbcast.lane.b32.xlu0 %v2726, %s4354
  %v4356 = vpop.permute.xlu0 %4355
  %s4358 = sor.u32 256, 20
  %4359 = vbcast.lane.b32.xlu0 %v2738, %s4358
  %v4360 = vpop.permute.xlu0 %4359
  %s4362 = sor.u32 256, 28
  %4363 = vbcast.lane.b32.xlu0 %v2738, %s4362
  %v4364 = vpop.permute.xlu0 %4363
  %s4366 = sor.u32 256, 20
  %4367 = vbcast.lane.b32.xlu0 %v2750, %s4366
  %v4368 = vpop.permute.xlu0 %4367
  %s4370 = sor.u32 256, 28
  %4371 = vbcast.lane.b32.xlu0 %v2750, %s4370
  %v4372 = vpop.permute.xlu0 %4371
  %s4374 = sor.u32 256, 20
  %4375 = vbcast.lane.b32.xlu0 %v2762, %s4374
  %v4376 = vpop.permute.xlu0 %4375
  %s4378 = sor.u32 256, 28
  %4379 = vbcast.lane.b32.xlu0 %v2762, %s4378
  %v4380 = vpop.permute.xlu0 %4379
  %s4382 = sor.u32 256, 20
  %4383 = vbcast.lane.b32.xlu0 %v2774, %s4382
  %v4384 = vpop.permute.xlu0 %4383
  %s4386 = sor.u32 256, 28
  %4387 = vbcast.lane.b32.xlu0 %v2774, %s4386
  %v4388 = vpop.permute.xlu0 %4387
  %s4390 = sor.u32 256, 20
  %4391 = vbcast.lane.b32.xlu0 %v2786, %s4390
  %v4392 = vpop.permute.xlu0 %4391
  %s4394 = sor.u32 256, 28
  %4395 = vbcast.lane.b32.xlu0 %v2786, %s4394
  %v4396 = vpop.permute.xlu0 %4395
  %s4398 = sor.u32 256, 20
  %4399 = vbcast.lane.b32.xlu0 %v2798, %s4398
  %v4400 = vpop.permute.xlu0 %4399
  %s4402 = sor.u32 256, 28
  %4403 = vbcast.lane.b32.xlu0 %v2798, %s4402
  %v4404 = vpop.permute.xlu0 %4403
  %s4406 = sor.u32 256, 20
  %4407 = vbcast.lane.b32.xlu0 %v2810, %s4406
  %v4408 = vpop.permute.xlu0 %4407
  %s4410 = sor.u32 256, 28
  %4411 = vbcast.lane.b32.xlu0 %v2810, %s4410
  %v4412 = vpop.permute.xlu0 %4411
  %s4414 = sor.u32 256, 20
  %4415 = vbcast.lane.b32.xlu0 %v2822, %s4414
  %v4416 = vpop.permute.xlu0 %4415
  %s4418 = sor.u32 256, 28
  %4419 = vbcast.lane.b32.xlu0 %v2822, %s4418
  %v4420 = vpop.permute.xlu0 %4419
  %s4422 = sor.u32 256, 20
  %4423 = vbcast.lane.b32.xlu0 %v2834, %s4422
  %v4424 = vpop.permute.xlu0 %4423
  %s4426 = sor.u32 256, 28
  %4427 = vbcast.lane.b32.xlu0 %v2834, %s4426
  %v4428 = vpop.permute.xlu0 %4427
  %s4430 = sor.u32 256, 20
  %4431 = vbcast.lane.b32.xlu0 %v2846, %s4430
  %v4432 = vpop.permute.xlu0 %4431
  %s4434 = sor.u32 256, 28
  %4435 = vbcast.lane.b32.xlu0 %v2846, %s4434
  %v4436 = vpop.permute.xlu0 %4435
  %s4438 = sor.u32 256, 20
  %4439 = vbcast.lane.b32.xlu0 %v2858, %s4438
  %v4440 = vpop.permute.xlu0 %4439
  %s4442 = sor.u32 256, 28
  %4443 = vbcast.lane.b32.xlu0 %v2858, %s4442
  %v4444 = vpop.permute.xlu0 %4443
  %s4446 = sor.u32 256, 20
  %4447 = vbcast.lane.b32.xlu0 %v2870, %s4446
  %v4448 = vpop.permute.xlu0 %4447
  %s4450 = sor.u32 256, 28
  %4451 = vbcast.lane.b32.xlu0 %v2870, %s4450
  %v4452 = vpop.permute.xlu0 %4451
  %s4454 = sor.u32 256, 20
  %4455 = vbcast.lane.b32.xlu0 %v2882, %s4454
  %v4456 = vpop.permute.xlu0 %4455
  %s4458 = sor.u32 256, 28
  %4459 = vbcast.lane.b32.xlu0 %v2882, %s4458
  %v4460 = vpop.permute.xlu0 %4459
  %s4462 = sor.u32 256, 20
  %4463 = vbcast.lane.b32.xlu0 %v2894, %s4462
  %v4464 = vpop.permute.xlu0 %4463
  %s4466 = sor.u32 256, 28
  %4467 = vbcast.lane.b32.xlu0 %v2894, %s4466
  %v4468 = vpop.permute.xlu0 %4467
  %s4470 = sor.u32 256, 20
  %4471 = vbcast.lane.b32.xlu0 %v2906, %s4470
  %v4472 = vpop.permute.xlu0 %4471
  %s4474 = sor.u32 256, 28
  %4475 = vbcast.lane.b32.xlu0 %v2906, %s4474
  %v4476 = vpop.permute.xlu0 %4475
  %s4478 = sor.u32 256, 20
  %4479 = vbcast.lane.b32.xlu0 %v2918, %s4478
  %v4480 = vpop.permute.xlu0 %4479
  %s4482 = sor.u32 256, 28
  %4483 = vbcast.lane.b32.xlu0 %v2918, %s4482
  %v4484 = vpop.permute.xlu0 %4483
  %s4486 = sor.u32 256, 20
  %4487 = vbcast.lane.b32.xlu0 %v2930, %s4486
  %v4488 = vpop.permute.xlu0 %4487
  %s4490 = sor.u32 256, 28
  %4491 = vbcast.lane.b32.xlu0 %v2930, %s4490
  %v4492 = vpop.permute.xlu0 %4491
  %s4494 = sor.u32 256, 20
  %4495 = vbcast.lane.b32.xlu0 %v2942, %s4494
  %v4496 = vpop.permute.xlu0 %4495
  %s4498 = sor.u32 256, 28
  %4499 = vbcast.lane.b32.xlu0 %v2942, %s4498
  %v4500 = vpop.permute.xlu0 %4499
  %s4502 = sor.u32 256, 20
  %4503 = vbcast.lane.b32.xlu0 %v2954, %s4502
  %v4504 = vpop.permute.xlu0 %4503
  %s4506 = sor.u32 256, 28
  %4507 = vbcast.lane.b32.xlu0 %v2954, %s4506
  %v4508 = vpop.permute.xlu0 %4507
  %s4510 = sor.u32 256, 20
  %4511 = vbcast.lane.b32.xlu0 %v2966, %s4510
  %v4512 = vpop.permute.xlu0 %4511
  %s4514 = sor.u32 256, 28
  %4515 = vbcast.lane.b32.xlu0 %v2966, %s4514
  %v4516 = vpop.permute.xlu0 %4515
  %s4518 = sor.u32 256, 20
  %4519 = vbcast.lane.b32.xlu0 %v2978, %s4518
  %v4520 = vpop.permute.xlu0 %4519
  %s4522 = sor.u32 256, 28
  %4523 = vbcast.lane.b32.xlu0 %v2978, %s4522
  %v4524 = vpop.permute.xlu0 %4523
  %s4526 = sor.u32 256, 20
  %4527 = vbcast.lane.b32.xlu0 %v2990, %s4526
  %v4528 = vpop.permute.xlu0 %4527
  %s4530 = sor.u32 256, 28
  %4531 = vbcast.lane.b32.xlu0 %v2990, %s4530
  %v4532 = vpop.permute.xlu0 %4531
  %s4534 = sor.u32 256, 20
  %4535 = vbcast.lane.b32.xlu0 %v3002, %s4534
  %v4536 = vpop.permute.xlu0 %4535
  %s4538 = sor.u32 256, 28
  %4539 = vbcast.lane.b32.xlu0 %v3002, %s4538
  %v4540 = vpop.permute.xlu0 %4539
  %s4542 = sor.u32 256, 20
  %4543 = vbcast.lane.b32.xlu0 %v3014, %s4542
  %v4544 = vpop.permute.xlu0 %4543
  %s4546 = sor.u32 256, 28
  %4547 = vbcast.lane.b32.xlu0 %v3014, %s4546
  %v4548 = vpop.permute.xlu0 %4547
  %s4550 = sor.u32 256, 20
  %4551 = vbcast.lane.b32.xlu0 %v3026, %s4550
  %v4552 = vpop.permute.xlu0 %4551
  %s4554 = sor.u32 256, 28
  %4555 = vbcast.lane.b32.xlu0 %v3026, %s4554
  %v4556 = vpop.permute.xlu0 %4555
  %s4558 = sor.u32 256, 20
  %4559 = vbcast.lane.b32.xlu0 %v3038, %s4558
  %v4560 = vpop.permute.xlu0 %4559
  %s4562 = sor.u32 256, 28
  %4563 = vbcast.lane.b32.xlu0 %v3038, %s4562
  %v4564 = vpop.permute.xlu0 %4563
  %s4566 = sor.u32 256, 20
  %4567 = vbcast.lane.b32.xlu0 %v3050, %s4566
  %v4568 = vpop.permute.xlu0 %4567
  %s4570 = sor.u32 256, 28
  %4571 = vbcast.lane.b32.xlu0 %v3050, %s4570
  %v4572 = vpop.permute.xlu0 %4571
  %s4574 = sor.u32 256, 20
  %4575 = vbcast.lane.b32.xlu0 %v3062, %s4574
  %v4576 = vpop.permute.xlu0 %4575
  %s4578 = sor.u32 256, 28
  %4579 = vbcast.lane.b32.xlu0 %v3062, %s4578
  %v4580 = vpop.permute.xlu0 %4579
  %s4582 = sor.u32 256, 20
  %4583 = vbcast.lane.b32.xlu0 %v3074, %s4582
  %v4584 = vpop.permute.xlu0 %4583
  %s4586 = sor.u32 256, 28
  %4587 = vbcast.lane.b32.xlu0 %v3074, %s4586
  %v4588 = vpop.permute.xlu0 %4587
  %s4590 = sor.u32 256, 20
  %4591 = vbcast.lane.b32.xlu0 %v3086, %s4590
  %v4592 = vpop.permute.xlu0 %4591
  %s4594 = sor.u32 256, 28
  %4595 = vbcast.lane.b32.xlu0 %v3086, %s4594
  %v4596 = vpop.permute.xlu0 %4595
  %s4598 = sor.u32 256, 20
  %4599 = vbcast.lane.b32.xlu0 %v3098, %s4598
  %v4600 = vpop.permute.xlu0 %4599
  %s4602 = sor.u32 256, 28
  %4603 = vbcast.lane.b32.xlu0 %v3098, %s4602
  %v4604 = vpop.permute.xlu0 %4603
  %s4606 = sor.u32 256, 20
  %4607 = vbcast.lane.b32.xlu0 %v3110, %s4606
  %v4608 = vpop.permute.xlu0 %4607
  %s4610 = sor.u32 256, 28
  %4611 = vbcast.lane.b32.xlu0 %v3110, %s4610
  %v4612 = vpop.permute.xlu0 %4611
  %s4614 = sor.u32 256, 20
  %4615 = vbcast.lane.b32.xlu0 %v3122, %s4614
  %v4616 = vpop.permute.xlu0 %4615
  %s4618 = sor.u32 256, 28
  %4619 = vbcast.lane.b32.xlu0 %v3122, %s4618
  %v4620 = vpop.permute.xlu0 %4619
  %s4622 = sor.u32 256, 20
  %4623 = vbcast.lane.b32.xlu0 %v3134, %s4622
  %v4624 = vpop.permute.xlu0 %4623
  %s4626 = sor.u32 256, 28
  %4627 = vbcast.lane.b32.xlu0 %v3134, %s4626
  %v4628 = vpop.permute.xlu0 %4627
  %s4630 = sor.u32 256, 20
  %4631 = vbcast.lane.b32.xlu0 %v3146, %s4630
  %v4632 = vpop.permute.xlu0 %4631
  %s4634 = sor.u32 256, 28
  %4635 = vbcast.lane.b32.xlu0 %v3146, %s4634
  %v4636 = vpop.permute.xlu0 %4635
  %v4637 = vmul.f32 %v3997, %v4128
  %v4638 = vmul.f32 %v3998, %v4132
  %v4639 = vmul.f32 %v3999, %v4136
  %v4640 = vmul.f32 %v4000, %v4140
  %v4641 = vmul.f32 %v4001, %v4144
  %v4642 = vmul.f32 %v4002, %v4148
  %v4643 = vmul.f32 %v4003, %v4152
  %v4644 = vmul.f32 %v4004, %v4156
  %v4645 = vmul.f32 %v4005, %v4160
  %v4646 = vmul.f32 %v4006, %v4164
  %v4647 = vmul.f32 %v4007, %v4168
  %v4648 = vmul.f32 %v4008, %v4172
  %v4649 = vmul.f32 %v4009, %v4176
  %v4650 = vmul.f32 %v4010, %v4180
  %v4651 = vmul.f32 %v4011, %v4184
  %v4652 = vmul.f32 %v4012, %v4188
  %v4653 = vmul.f32 %v4013, %v4192
  %v4654 = vmul.f32 %v4014, %v4196
  %v4655 = vmul.f32 %v4015, %v4200
  %v4656 = vmul.f32 %v4016, %v4204
  %v4657 = vmul.f32 %v4017, %v4208
  %v4658 = vmul.f32 %v4018, %v4212
  %v4659 = vmul.f32 %v4019, %v4216
  %v4660 = vmul.f32 %v4020, %v4220
  %v4661 = vmul.f32 %v4021, %v4224
  %v4662 = vmul.f32 %v4022, %v4228
  %v4663 = vmul.f32 %v4023, %v4232
  %v4664 = vmul.f32 %v4024, %v4236
  %v4665 = vmul.f32 %v4025, %v4240
  %v4666 = vmul.f32 %v4026, %v4244
  %v4667 = vmul.f32 %v4027, %v4248
  %v4668 = vmul.f32 %v4028, %v4252
  %v4669 = vmul.f32 %v4029, %v4256
  %v4670 = vmul.f32 %v4030, %v4260
  %v4671 = vmul.f32 %v4031, %v4264
  %v4672 = vmul.f32 %v4032, %v4268
  %v4673 = vmul.f32 %v4033, %v4272
  %v4674 = vmul.f32 %v4034, %v4276
  %v4675 = vmul.f32 %v4035, %v4280
  %v4676 = vmul.f32 %v4036, %v4284
  %v4677 = vmul.f32 %v4037, %v4288
  %v4678 = vmul.f32 %v4038, %v4292
  %v4679 = vmul.f32 %v4039, %v4296
  %v4680 = vmul.f32 %v4040, %v4300
  %v4681 = vmul.f32 %v4041, %v4304
  %v4682 = vmul.f32 %v4042, %v4308
  %v4683 = vmul.f32 %v4043, %v4312
  %v4684 = vmul.f32 %v4044, %v4316
  %v4685 = vmul.f32 %v4045, %v4320
  %v4686 = vmul.f32 %v4046, %v4324
  %v4687 = vmul.f32 %v4047, %v4328
  %v4688 = vmul.f32 %v4048, %v4332
  %v4689 = vmul.f32 %v4049, %v4336
  %v4690 = vmul.f32 %v4050, %v4340
  %v4691 = vmul.f32 %v4051, %v4344
  %v4692 = vmul.f32 %v4052, %v4348
  %v4693 = vmul.f32 %v4053, %v4352
  %v4694 = vmul.f32 %v4054, %v4356
  %v4695 = vmul.f32 %v4055, %v4360
  %v4696 = vmul.f32 %v4056, %v4364
  %v4697 = vmul.f32 %v4057, %v4368
  %v4698 = vmul.f32 %v4058, %v4372
  %v4699 = vmul.f32 %v4059, %v4376
  %v4700 = vmul.f32 %v4060, %v4380
  %v4701 = vmul.f32 %v4061, %v4384
  %v4702 = vmul.f32 %v4062, %v4388
  %v4703 = vmul.f32 %v4063, %v4392
  %v4704 = vmul.f32 %v4064, %v4396
  %v4705 = vmul.f32 %v4065, %v4400
  %v4706 = vmul.f32 %v4066, %v4404
  %v4707 = vmul.f32 %v4067, %v4408
  %v4708 = vmul.f32 %v4068, %v4412
  %v4709 = vmul.f32 %v4069, %v4416
  %v4710 = vmul.f32 %v4070, %v4420
  %v4711 = vmul.f32 %v4071, %v4424
  %v4712 = vmul.f32 %v4072, %v4428
  %v4713 = vmul.f32 %v4073, %v4432
  %v4714 = vmul.f32 %v4074, %v4436
  %v4715 = vmul.f32 %v4075, %v4440
  %v4716 = vmul.f32 %v4076, %v4444
  %v4717 = vmul.f32 %v4077, %v4448
  %v4718 = vmul.f32 %v4078, %v4452
  %v4719 = vmul.f32 %v4079, %v4456
  %v4720 = vmul.f32 %v4080, %v4460
  %v4721 = vmul.f32 %v4081, %v4464
  %v4722 = vmul.f32 %v4082, %v4468
  %v4723 = vmul.f32 %v4083, %v4472
  %v4724 = vmul.f32 %v4084, %v4476
  %v4725 = vmul.f32 %v4085, %v4480
  %v4726 = vmul.f32 %v4086, %v4484
  %v4727 = vmul.f32 %v4087, %v4488
  %v4728 = vmul.f32 %v4088, %v4492
  %v4729 = vmul.f32 %v4089, %v4496
  %v4730 = vmul.f32 %v4090, %v4500
  %v4731 = vmul.f32 %v4091, %v4504
  %v4732 = vmul.f32 %v4092, %v4508
  %v4733 = vmul.f32 %v4093, %v4512
  %v4734 = vmul.f32 %v4094, %v4516
  %v4735 = vmul.f32 %v4095, %v4520
  %v4736 = vmul.f32 %v4096, %v4524
  %v4737 = vmul.f32 %v4097, %v4528
  %v4738 = vmul.f32 %v4098, %v4532
  %v4739 = vmul.f32 %v4099, %v4536
  %v4740 = vmul.f32 %v4100, %v4540
  %v4741 = vmul.f32 %v4101, %v4544
  %v4742 = vmul.f32 %v4102, %v4548
  %v4743 = vmul.f32 %v4103, %v4552
  %v4744 = vmul.f32 %v4104, %v4556
  %v4745 = vmul.f32 %v4105, %v4560
  %v4746 = vmul.f32 %v4106, %v4564
  %v4747 = vmul.f32 %v4107, %v4568
  %v4748 = vmul.f32 %v4108, %v4572
  %v4749 = vmul.f32 %v4109, %v4576
  %v4750 = vmul.f32 %v4110, %v4580
  %v4751 = vmul.f32 %v4111, %v4584
  %v4752 = vmul.f32 %v4112, %v4588
  %v4753 = vmul.f32 %v4113, %v4592
  %v4754 = vmul.f32 %v4114, %v4596
  %v4755 = vmul.f32 %v4115, %v4600
  %v4756 = vmul.f32 %v4116, %v4604
  %v4757 = vmul.f32 %v4117, %v4608
  %v4758 = vmul.f32 %v4118, %v4612
  %v4759 = vmul.f32 %v4119, %v4616
  %v4760 = vmul.f32 %v4120, %v4620
  %v4761 = vmul.f32 %v4121, %v4624
  %v4762 = vmul.f32 %v4122, %v4628
  %v4763 = vmul.f32 %v4123, %v4632
  %v4764 = vmul.f32 %v4124, %v4636
  %v4765 = vadd.f32 %v4637, %v4638
  %v4766 = vrot.slane %v4765, 4
  %v4767 = vadd.f32 %v4765, %v4766
  %v4768 = vrot.slane %v4767, 2
  %v4769 = vadd.f32 %v4767, %v4768
  %v4770 = vrot.slane %v4769, 1
  %v4771 = vadd.f32 %v4769, %v4770
  %v4772 = vadd.f32 %v4639, %v4640
  %v4773 = vrot.slane %v4772, 4
  %v4774 = vadd.f32 %v4772, %v4773
  %v4775 = vrot.slane %v4774, 2
  %v4776 = vadd.f32 %v4774, %v4775
  %v4777 = vrot.slane %v4776, 1
  %v4778 = vadd.f32 %v4776, %v4777
  %v4779 = vadd.f32 %v4641, %v4642
  %v4780 = vrot.slane %v4779, 4
  %v4781 = vadd.f32 %v4779, %v4780
  %v4782 = vrot.slane %v4781, 2
  %v4783 = vadd.f32 %v4781, %v4782
  %v4784 = vrot.slane %v4783, 1
  %v4785 = vadd.f32 %v4783, %v4784
  %v4786 = vadd.f32 %v4643, %v4644
  %v4787 = vrot.slane %v4786, 4
  %v4788 = vadd.f32 %v4786, %v4787
  %v4789 = vrot.slane %v4788, 2
  %v4790 = vadd.f32 %v4788, %v4789
  %v4791 = vrot.slane %v4790, 1
  %v4792 = vadd.f32 %v4790, %v4791
  %v4793 = vadd.f32 %v4645, %v4646
  %v4794 = vrot.slane %v4793, 4
  %v4795 = vadd.f32 %v4793, %v4794
  %v4796 = vrot.slane %v4795, 2
  %v4797 = vadd.f32 %v4795, %v4796
  %v4798 = vrot.slane %v4797, 1
  %v4799 = vadd.f32 %v4797, %v4798
  %v4800 = vadd.f32 %v4647, %v4648
  %v4801 = vrot.slane %v4800, 4
  %v4802 = vadd.f32 %v4800, %v4801
  %v4803 = vrot.slane %v4802, 2
  %v4804 = vadd.f32 %v4802, %v4803
  %v4805 = vrot.slane %v4804, 1
  %v4806 = vadd.f32 %v4804, %v4805
  %v4807 = vadd.f32 %v4649, %v4650
  %v4808 = vrot.slane %v4807, 4
  %v4809 = vadd.f32 %v4807, %v4808
  %v4810 = vrot.slane %v4809, 2
  %v4811 = vadd.f32 %v4809, %v4810
  %v4812 = vrot.slane %v4811, 1
  %v4813 = vadd.f32 %v4811, %v4812
  %v4814 = vadd.f32 %v4651, %v4652
  %v4815 = vrot.slane %v4814, 4
  %v4816 = vadd.f32 %v4814, %v4815
  %v4817 = vrot.slane %v4816, 2
  %v4818 = vadd.f32 %v4816, %v4817
  %v4819 = vrot.slane %v4818, 1
  %v4820 = vadd.f32 %v4818, %v4819
  %v4821 = vadd.f32 %v4653, %v4654
  %v4822 = vrot.slane %v4821, 4
  %v4823 = vadd.f32 %v4821, %v4822
  %v4824 = vrot.slane %v4823, 2
  %v4825 = vadd.f32 %v4823, %v4824
  %v4826 = vrot.slane %v4825, 1
  %v4827 = vadd.f32 %v4825, %v4826
  %v4828 = vadd.f32 %v4655, %v4656
  %v4829 = vrot.slane %v4828, 4
  %v4830 = vadd.f32 %v4828, %v4829
  %v4831 = vrot.slane %v4830, 2
  %v4832 = vadd.f32 %v4830, %v4831
  %v4833 = vrot.slane %v4832, 1
  %v4834 = vadd.f32 %v4832, %v4833
  %v4835 = vadd.f32 %v4657, %v4658
  %v4836 = vrot.slane %v4835, 4
  %v4837 = vadd.f32 %v4835, %v4836
  %v4838 = vrot.slane %v4837, 2
  %v4839 = vadd.f32 %v4837, %v4838
  %v4840 = vrot.slane %v4839, 1
  %v4841 = vadd.f32 %v4839, %v4840
  %v4842 = vadd.f32 %v4659, %v4660
  %v4843 = vrot.slane %v4842, 4
  %v4844 = vadd.f32 %v4842, %v4843
  %v4845 = vrot.slane %v4844, 2
  %v4846 = vadd.f32 %v4844, %v4845
  %v4847 = vrot.slane %v4846, 1
  %v4848 = vadd.f32 %v4846, %v4847
  %v4849 = vadd.f32 %v4661, %v4662
  %v4850 = vrot.slane %v4849, 4
  %v4851 = vadd.f32 %v4849, %v4850
  %v4852 = vrot.slane %v4851, 2
  %v4853 = vadd.f32 %v4851, %v4852
  %v4854 = vrot.slane %v4853, 1
  %v4855 = vadd.f32 %v4853, %v4854
  %v4856 = vadd.f32 %v4663, %v4664
  %v4857 = vrot.slane %v4856, 4
  %v4858 = vadd.f32 %v4856, %v4857
  %v4859 = vrot.slane %v4858, 2
  %v4860 = vadd.f32 %v4858, %v4859
  %v4861 = vrot.slane %v4860, 1
  %v4862 = vadd.f32 %v4860, %v4861
  %v4863 = vadd.f32 %v4665, %v4666
  %v4864 = vrot.slane %v4863, 4
  %v4865 = vadd.f32 %v4863, %v4864
  %v4866 = vrot.slane %v4865, 2
  %v4867 = vadd.f32 %v4865, %v4866
  %v4868 = vrot.slane %v4867, 1
  %v4869 = vadd.f32 %v4867, %v4868
  %v4870 = vadd.f32 %v4667, %v4668
  %v4871 = vrot.slane %v4870, 4
  %v4872 = vadd.f32 %v4870, %v4871
  %v4873 = vrot.slane %v4872, 2
  %v4874 = vadd.f32 %v4872, %v4873
  %v4875 = vrot.slane %v4874, 1
  %v4876 = vadd.f32 %v4874, %v4875
  %v4877 = vadd.f32 %v4669, %v4670
  %v4878 = vrot.slane %v4877, 4
  %v4879 = vadd.f32 %v4877, %v4878
  %v4880 = vrot.slane %v4879, 2
  %v4881 = vadd.f32 %v4879, %v4880
  %v4882 = vrot.slane %v4881, 1
  %v4883 = vadd.f32 %v4881, %v4882
  %v4884 = vadd.f32 %v4671, %v4672
  %v4885 = vrot.slane %v4884, 4
  %v4886 = vadd.f32 %v4884, %v4885
  %v4887 = vrot.slane %v4886, 2
  %v4888 = vadd.f32 %v4886, %v4887
  %v4889 = vrot.slane %v4888, 1
  %v4890 = vadd.f32 %v4888, %v4889
  %v4891 = vadd.f32 %v4673, %v4674
  %v4892 = vrot.slane %v4891, 4
  %v4893 = vadd.f32 %v4891, %v4892
  %v4894 = vrot.slane %v4893, 2
  %v4895 = vadd.f32 %v4893, %v4894
  %v4896 = vrot.slane %v4895, 1
  %v4897 = vadd.f32 %v4895, %v4896
  %v4898 = vadd.f32 %v4675, %v4676
  %v4899 = vrot.slane %v4898, 4
  %v4900 = vadd.f32 %v4898, %v4899
  %v4901 = vrot.slane %v4900, 2
  %v4902 = vadd.f32 %v4900, %v4901
  %v4903 = vrot.slane %v4902, 1
  %v4904 = vadd.f32 %v4902, %v4903
  %v4905 = vadd.f32 %v4677, %v4678
  %v4906 = vrot.slane %v4905, 4
  %v4907 = vadd.f32 %v4905, %v4906
  %v4908 = vrot.slane %v4907, 2
  %v4909 = vadd.f32 %v4907, %v4908
  %v4910 = vrot.slane %v4909, 1
  %v4911 = vadd.f32 %v4909, %v4910
  %v4912 = vadd.f32 %v4679, %v4680
  %v4913 = vrot.slane %v4912, 4
  %v4914 = vadd.f32 %v4912, %v4913
  %v4915 = vrot.slane %v4914, 2
  %v4916 = vadd.f32 %v4914, %v4915
  %v4917 = vrot.slane %v4916, 1
  %v4918 = vadd.f32 %v4916, %v4917
  %v4919 = vadd.f32 %v4681, %v4682
  %v4920 = vrot.slane %v4919, 4
  %v4921 = vadd.f32 %v4919, %v4920
  %v4922 = vrot.slane %v4921, 2
  %v4923 = vadd.f32 %v4921, %v4922
  %v4924 = vrot.slane %v4923, 1
  %v4925 = vadd.f32 %v4923, %v4924
  %v4926 = vadd.f32 %v4683, %v4684
  %v4927 = vrot.slane %v4926, 4
  %v4928 = vadd.f32 %v4926, %v4927
  %v4929 = vrot.slane %v4928, 2
  %v4930 = vadd.f32 %v4928, %v4929
  %v4931 = vrot.slane %v4930, 1
  %v4932 = vadd.f32 %v4930, %v4931
  %v4933 = vadd.f32 %v4685, %v4686
  %v4934 = vrot.slane %v4933, 4
  %v4935 = vadd.f32 %v4933, %v4934
  %v4936 = vrot.slane %v4935, 2
  %v4937 = vadd.f32 %v4935, %v4936
  %v4938 = vrot.slane %v4937, 1
  %v4939 = vadd.f32 %v4937, %v4938
  %v4940 = vadd.f32 %v4687, %v4688
  %v4941 = vrot.slane %v4940, 4
  %v4942 = vadd.f32 %v4940, %v4941
  %v4943 = vrot.slane %v4942, 2
  %v4944 = vadd.f32 %v4942, %v4943
  %v4945 = vrot.slane %v4944, 1
  %v4946 = vadd.f32 %v4944, %v4945
  %v4947 = vadd.f32 %v4689, %v4690
  %v4948 = vrot.slane %v4947, 4
  %v4949 = vadd.f32 %v4947, %v4948
  %v4950 = vrot.slane %v4949, 2
  %v4951 = vadd.f32 %v4949, %v4950
  %v4952 = vrot.slane %v4951, 1
  %v4953 = vadd.f32 %v4951, %v4952
  %v4954 = vadd.f32 %v4691, %v4692
  %v4955 = vrot.slane %v4954, 4
  %v4956 = vadd.f32 %v4954, %v4955
  %v4957 = vrot.slane %v4956, 2
  %v4958 = vadd.f32 %v4956, %v4957
  %v4959 = vrot.slane %v4958, 1
  %v4960 = vadd.f32 %v4958, %v4959
  %v4961 = vadd.f32 %v4693, %v4694
  %v4962 = vrot.slane %v4961, 4
  %v4963 = vadd.f32 %v4961, %v4962
  %v4964 = vrot.slane %v4963, 2
  %v4965 = vadd.f32 %v4963, %v4964
  %v4966 = vrot.slane %v4965, 1
  %v4967 = vadd.f32 %v4965, %v4966
  %v4968 = vadd.f32 %v4695, %v4696
  %v4969 = vrot.slane %v4968, 4
  %v4970 = vadd.f32 %v4968, %v4969
  %v4971 = vrot.slane %v4970, 2
  %v4972 = vadd.f32 %v4970, %v4971
  %v4973 = vrot.slane %v4972, 1
  %v4974 = vadd.f32 %v4972, %v4973
  %v4975 = vadd.f32 %v4697, %v4698
  %v4976 = vrot.slane %v4975, 4
  %v4977 = vadd.f32 %v4975, %v4976
  %v4978 = vrot.slane %v4977, 2
  %v4979 = vadd.f32 %v4977, %v4978
  %v4980 = vrot.slane %v4979, 1
  %v4981 = vadd.f32 %v4979, %v4980
  %v4982 = vadd.f32 %v4699, %v4700
  %v4983 = vrot.slane %v4982, 4
  %v4984 = vadd.f32 %v4982, %v4983
  %v4985 = vrot.slane %v4984, 2
  %v4986 = vadd.f32 %v4984, %v4985
  %v4987 = vrot.slane %v4986, 1
  %v4988 = vadd.f32 %v4986, %v4987
  %v4989 = vadd.f32 %v4701, %v4702
  %v4990 = vrot.slane %v4989, 4
  %v4991 = vadd.f32 %v4989, %v4990
  %v4992 = vrot.slane %v4991, 2
  %v4993 = vadd.f32 %v4991, %v4992
  %v4994 = vrot.slane %v4993, 1
  %v4995 = vadd.f32 %v4993, %v4994
  %v4996 = vadd.f32 %v4703, %v4704
  %v4997 = vrot.slane %v4996, 4
  %v4998 = vadd.f32 %v4996, %v4997
  %v4999 = vrot.slane %v4998, 2
  %v5000 = vadd.f32 %v4998, %v4999
  %v5001 = vrot.slane %v5000, 1
  %v5002 = vadd.f32 %v5000, %v5001
  %v5003 = vadd.f32 %v4705, %v4706
  %v5004 = vrot.slane %v5003, 4
  %v5005 = vadd.f32 %v5003, %v5004
  %v5006 = vrot.slane %v5005, 2
  %v5007 = vadd.f32 %v5005, %v5006
  %v5008 = vrot.slane %v5007, 1
  %v5009 = vadd.f32 %v5007, %v5008
  %v5010 = vadd.f32 %v4707, %v4708
  %v5011 = vrot.slane %v5010, 4
  %v5012 = vadd.f32 %v5010, %v5011
  %v5013 = vrot.slane %v5012, 2
  %v5014 = vadd.f32 %v5012, %v5013
  %v5015 = vrot.slane %v5014, 1
  %v5016 = vadd.f32 %v5014, %v5015
  %v5017 = vadd.f32 %v4709, %v4710
  %v5018 = vrot.slane %v5017, 4
  %v5019 = vadd.f32 %v5017, %v5018
  %v5020 = vrot.slane %v5019, 2
  %v5021 = vadd.f32 %v5019, %v5020
  %v5022 = vrot.slane %v5021, 1
  %v5023 = vadd.f32 %v5021, %v5022
  %v5024 = vadd.f32 %v4711, %v4712
  %v5025 = vrot.slane %v5024, 4
  %v5026 = vadd.f32 %v5024, %v5025
  %v5027 = vrot.slane %v5026, 2
  %v5028 = vadd.f32 %v5026, %v5027
  %v5029 = vrot.slane %v5028, 1
  %v5030 = vadd.f32 %v5028, %v5029
  %v5031 = vadd.f32 %v4713, %v4714
  %v5032 = vrot.slane %v5031, 4
  %v5033 = vadd.f32 %v5031, %v5032
  %v5034 = vrot.slane %v5033, 2
  %v5035 = vadd.f32 %v5033, %v5034
  %v5036 = vrot.slane %v5035, 1
  %v5037 = vadd.f32 %v5035, %v5036
  %v5038 = vadd.f32 %v4715, %v4716
  %v5039 = vrot.slane %v5038, 4
  %v5040 = vadd.f32 %v5038, %v5039
  %v5041 = vrot.slane %v5040, 2
  %v5042 = vadd.f32 %v5040, %v5041
  %v5043 = vrot.slane %v5042, 1
  %v5044 = vadd.f32 %v5042, %v5043
  %v5045 = vadd.f32 %v4717, %v4718
  %v5046 = vrot.slane %v5045, 4
  %v5047 = vadd.f32 %v5045, %v5046
  %v5048 = vrot.slane %v5047, 2
  %v5049 = vadd.f32 %v5047, %v5048
  %v5050 = vrot.slane %v5049, 1
  %v5051 = vadd.f32 %v5049, %v5050
  %v5052 = vadd.f32 %v4719, %v4720
  %v5053 = vrot.slane %v5052, 4
  %v5054 = vadd.f32 %v5052, %v5053
  %v5055 = vrot.slane %v5054, 2
  %v5056 = vadd.f32 %v5054, %v5055
  %v5057 = vrot.slane %v5056, 1
  %v5058 = vadd.f32 %v5056, %v5057
  %v5059 = vadd.f32 %v4721, %v4722
  %v5060 = vrot.slane %v5059, 4
  %v5061 = vadd.f32 %v5059, %v5060
  %v5062 = vrot.slane %v5061, 2
  %v5063 = vadd.f32 %v5061, %v5062
  %v5064 = vrot.slane %v5063, 1
  %v5065 = vadd.f32 %v5063, %v5064
  %v5066 = vadd.f32 %v4723, %v4724
  %v5067 = vrot.slane %v5066, 4
  %v5068 = vadd.f32 %v5066, %v5067
  %v5069 = vrot.slane %v5068, 2
  %v5070 = vadd.f32 %v5068, %v5069
  %v5071 = vrot.slane %v5070, 1
  %v5072 = vadd.f32 %v5070, %v5071
  %v5073 = vadd.f32 %v4725, %v4726
  %v5074 = vrot.slane %v5073, 4
  %v5075 = vadd.f32 %v5073, %v5074
  %v5076 = vrot.slane %v5075, 2
  %v5077 = vadd.f32 %v5075, %v5076
  %v5078 = vrot.slane %v5077, 1
  %v5079 = vadd.f32 %v5077, %v5078
  %v5080 = vadd.f32 %v4727, %v4728
  %v5081 = vrot.slane %v5080, 4
  %v5082 = vadd.f32 %v5080, %v5081
  %v5083 = vrot.slane %v5082, 2
  %v5084 = vadd.f32 %v5082, %v5083
  %v5085 = vrot.slane %v5084, 1
  %v5086 = vadd.f32 %v5084, %v5085
  %v5087 = vadd.f32 %v4729, %v4730
  %v5088 = vrot.slane %v5087, 4
  %v5089 = vadd.f32 %v5087, %v5088
  %v5090 = vrot.slane %v5089, 2
  %v5091 = vadd.f32 %v5089, %v5090
  %v5092 = vrot.slane %v5091, 1
  %v5093 = vadd.f32 %v5091, %v5092
  %v5094 = vadd.f32 %v4731, %v4732
  %v5095 = vrot.slane %v5094, 4
  %v5096 = vadd.f32 %v5094, %v5095
  %v5097 = vrot.slane %v5096, 2
  %v5098 = vadd.f32 %v5096, %v5097
  %v5099 = vrot.slane %v5098, 1
  %v5100 = vadd.f32 %v5098, %v5099
  %v5101 = vadd.f32 %v4733, %v4734
  %v5102 = vrot.slane %v5101, 4
  %v5103 = vadd.f32 %v5101, %v5102
  %v5104 = vrot.slane %v5103, 2
  %v5105 = vadd.f32 %v5103, %v5104
  %v5106 = vrot.slane %v5105, 1
  %v5107 = vadd.f32 %v5105, %v5106
  %v5108 = vadd.f32 %v4735, %v4736
  %v5109 = vrot.slane %v5108, 4
  %v5110 = vadd.f32 %v5108, %v5109
  %v5111 = vrot.slane %v5110, 2
  %v5112 = vadd.f32 %v5110, %v5111
  %v5113 = vrot.slane %v5112, 1
  %v5114 = vadd.f32 %v5112, %v5113
  %v5115 = vadd.f32 %v4737, %v4738
  %v5116 = vrot.slane %v5115, 4
  %v5117 = vadd.f32 %v5115, %v5116
  %v5118 = vrot.slane %v5117, 2
  %v5119 = vadd.f32 %v5117, %v5118
  %v5120 = vrot.slane %v5119, 1
  %v5121 = vadd.f32 %v5119, %v5120
  %v5122 = vadd.f32 %v4739, %v4740
  %v5123 = vrot.slane %v5122, 4
  %v5124 = vadd.f32 %v5122, %v5123
  %v5125 = vrot.slane %v5124, 2
  %v5126 = vadd.f32 %v5124, %v5125
  %v5127 = vrot.slane %v5126, 1
  %v5128 = vadd.f32 %v5126, %v5127
  %v5129 = vadd.f32 %v4741, %v4742
  %v5130 = vrot.slane %v5129, 4
  %v5131 = vadd.f32 %v5129, %v5130
  %v5132 = vrot.slane %v5131, 2
  %v5133 = vadd.f32 %v5131, %v5132
  %v5134 = vrot.slane %v5133, 1
  %v5135 = vadd.f32 %v5133, %v5134
  %v5136 = vadd.f32 %v4743, %v4744
  %v5137 = vrot.slane %v5136, 4
  %v5138 = vadd.f32 %v5136, %v5137
  %v5139 = vrot.slane %v5138, 2
  %v5140 = vadd.f32 %v5138, %v5139
  %v5141 = vrot.slane %v5140, 1
  %v5142 = vadd.f32 %v5140, %v5141
  %v5143 = vadd.f32 %v4745, %v4746
  %v5144 = vrot.slane %v5143, 4
  %v5145 = vadd.f32 %v5143, %v5144
  %v5146 = vrot.slane %v5145, 2
  %v5147 = vadd.f32 %v5145, %v5146
  %v5148 = vrot.slane %v5147, 1
  %v5149 = vadd.f32 %v5147, %v5148
  %v5150 = vadd.f32 %v4747, %v4748
  %v5151 = vrot.slane %v5150, 4
  %v5152 = vadd.f32 %v5150, %v5151
  %v5153 = vrot.slane %v5152, 2
  %v5154 = vadd.f32 %v5152, %v5153
  %v5155 = vrot.slane %v5154, 1
  %v5156 = vadd.f32 %v5154, %v5155
  %v5157 = vadd.f32 %v4749, %v4750
  %v5158 = vrot.slane %v5157, 4
  %v5159 = vadd.f32 %v5157, %v5158
  %v5160 = vrot.slane %v5159, 2
  %v5161 = vadd.f32 %v5159, %v5160
  %v5162 = vrot.slane %v5161, 1
  %v5163 = vadd.f32 %v5161, %v5162
  %v5164 = vadd.f32 %v4751, %v4752
  %v5165 = vrot.slane %v5164, 4
  %v5166 = vadd.f32 %v5164, %v5165
  %v5167 = vrot.slane %v5166, 2
  %v5168 = vadd.f32 %v5166, %v5167
  %v5169 = vrot.slane %v5168, 1
  %v5170 = vadd.f32 %v5168, %v5169
  %v5171 = vadd.f32 %v4753, %v4754
  %v5172 = vrot.slane %v5171, 4
  %v5173 = vadd.f32 %v5171, %v5172
  %v5174 = vrot.slane %v5173, 2
  %v5175 = vadd.f32 %v5173, %v5174
  %v5176 = vrot.slane %v5175, 1
  %v5177 = vadd.f32 %v5175, %v5176
  %v5178 = vadd.f32 %v4755, %v4756
  %v5179 = vrot.slane %v5178, 4
  %v5180 = vadd.f32 %v5178, %v5179
  %v5181 = vrot.slane %v5180, 2
  %v5182 = vadd.f32 %v5180, %v5181
  %v5183 = vrot.slane %v5182, 1
  %v5184 = vadd.f32 %v5182, %v5183
  %v5185 = vadd.f32 %v4757, %v4758
  %v5186 = vrot.slane %v5185, 4
  %v5187 = vadd.f32 %v5185, %v5186
  %v5188 = vrot.slane %v5187, 2
  %v5189 = vadd.f32 %v5187, %v5188
  %v5190 = vrot.slane %v5189, 1
  %v5191 = vadd.f32 %v5189, %v5190
  %v5192 = vadd.f32 %v4759, %v4760
  %v5193 = vrot.slane %v5192, 4
  %v5194 = vadd.f32 %v5192, %v5193
  %v5195 = vrot.slane %v5194, 2
  %v5196 = vadd.f32 %v5194, %v5195
  %v5197 = vrot.slane %v5196, 1
  %v5198 = vadd.f32 %v5196, %v5197
  %v5199 = vadd.f32 %v4761, %v4762
  %v5200 = vrot.slane %v5199, 4
  %v5201 = vadd.f32 %v5199, %v5200
  %v5202 = vrot.slane %v5201, 2
  %v5203 = vadd.f32 %v5201, %v5202
  %v5204 = vrot.slane %v5203, 1
  %v5205 = vadd.f32 %v5203, %v5204
  %v5206 = vadd.f32 %v4763, %v4764
  %v5207 = vrot.slane %v5206, 4
  %v5208 = vadd.f32 %v5206, %v5207
  %v5209 = vrot.slane %v5208, 2
  %v5210 = vadd.f32 %v5208, %v5209
  %v5211 = vrot.slane %v5210, 1
  %v5212 = vadd.f32 %v5210, %v5211
  %v5213 = vld [vmem:[%s10] sm:$0x1]
  %v5215 = vlaneseq
  %v5216 = vshrl.u32 %v5215, 7
  %v5217 = vsub.s32 0, %v5216
  %v5218 = vrot.slane %v5213, %v5217
  %v5220 = vmul.f32 %v5218, %v398
  %v5221 = vmul.f32 %v5218, %v399
  %v5222 = vmul.f32 %v5218, %v400
  %v5223 = vmul.f32 %v5218, %v401
  %v5224 = vmul.f32 %v5218, %v402
  %v5225 = vmul.f32 %v5218, %v403
  %v5226 = vmul.f32 %v5218, %v404
  %v5227 = vmul.f32 %v5218, %v405
  %v5236 = vrot.slane %v5220, 1
  %v5237 = vrot.slane %v5220, 2
  %v5238 = vrot.slane %v5220, 3
  %v5239 = vrot.slane %v5220, 4
  %v5240 = vrot.slane %v5220, 5
  %v5241 = vrot.slane %v5220, 6
  %v5242 = vrot.slane %v5220, 7
  %v5243 = vrot.slane %v5221, 1
  %v5244 = vrot.slane %v5221, 2
  %v5245 = vrot.slane %v5221, 3
  %v5246 = vrot.slane %v5221, 4
  %v5247 = vrot.slane %v5221, 5
  %v5248 = vrot.slane %v5221, 6
  %v5249 = vrot.slane %v5221, 7
  %v5250 = vrot.slane %v5222, 1
  %v5251 = vrot.slane %v5222, 2
  %v5252 = vrot.slane %v5222, 3
  %v5253 = vrot.slane %v5222, 4
  %v5254 = vrot.slane %v5222, 5
  %v5255 = vrot.slane %v5222, 6
  %v5256 = vrot.slane %v5222, 7
  %v5257 = vrot.slane %v5223, 1
  %v5258 = vrot.slane %v5223, 2
  %v5259 = vrot.slane %v5223, 3
  %v5260 = vrot.slane %v5223, 4
  %v5261 = vrot.slane %v5223, 5
  %v5262 = vrot.slane %v5223, 6
  %v5263 = vrot.slane %v5223, 7
  %v5264 = vrot.slane %v5224, 1
  %v5265 = vrot.slane %v5224, 2
  %v5266 = vrot.slane %v5224, 3
  %v5267 = vrot.slane %v5224, 4
  %v5268 = vrot.slane %v5224, 5
  %v5269 = vrot.slane %v5224, 6
  %v5270 = vrot.slane %v5224, 7
  %v5271 = vrot.slane %v5225, 1
  %v5272 = vrot.slane %v5225, 2
  %v5273 = vrot.slane %v5225, 3
  %v5274 = vrot.slane %v5225, 4
  %v5275 = vrot.slane %v5225, 5
  %v5276 = vrot.slane %v5225, 6
  %v5277 = vrot.slane %v5225, 7
  %v5278 = vrot.slane %v5226, 1
  %v5279 = vrot.slane %v5226, 2
  %v5280 = vrot.slane %v5226, 3
  %v5281 = vrot.slane %v5226, 4
  %v5282 = vrot.slane %v5226, 5
  %v5283 = vrot.slane %v5226, 6
  %v5284 = vrot.slane %v5226, 7
  %v5285 = vrot.slane %v5227, 1
  %v5286 = vrot.slane %v5227, 2
  %v5287 = vrot.slane %v5227, 3
  %v5288 = vrot.slane %v5227, 4
  %v5289 = vrot.slane %v5227, 5
  %v5290 = vrot.slane %v5227, 6
  %v5291 = vrot.slane %v5227, 7
  %v5356 = vadd.f32 %v4771, %v5220
  %v5357 = vadd.f32 %v4778, %v5236
  %v5358 = vadd.f32 %v4785, %v5237
  %v5359 = vadd.f32 %v4792, %v5238
  %v5360 = vadd.f32 %v4799, %v5239
  %v5361 = vadd.f32 %v4806, %v5240
  %v5362 = vadd.f32 %v4813, %v5241
  %v5363 = vadd.f32 %v4820, %v5242
  %v5364 = vadd.f32 %v4827, %v5221
  %v5365 = vadd.f32 %v4834, %v5243
  %v5366 = vadd.f32 %v4841, %v5244
  %v5367 = vadd.f32 %v4848, %v5245
  %v5368 = vadd.f32 %v4855, %v5246
  %v5369 = vadd.f32 %v4862, %v5247
  %v5370 = vadd.f32 %v4869, %v5248
  %v5371 = vadd.f32 %v4876, %v5249
  %v5372 = vadd.f32 %v4883, %v5222
  %v5373 = vadd.f32 %v4890, %v5250
  %v5374 = vadd.f32 %v4897, %v5251
  %v5375 = vadd.f32 %v4904, %v5252
  %v5376 = vadd.f32 %v4911, %v5253
  %v5377 = vadd.f32 %v4918, %v5254
  %v5378 = vadd.f32 %v4925, %v5255
  %v5379 = vadd.f32 %v4932, %v5256
  %v5380 = vadd.f32 %v4939, %v5223
  %v5381 = vadd.f32 %v4946, %v5257
  %v5382 = vadd.f32 %v4953, %v5258
  %v5383 = vadd.f32 %v4960, %v5259
  %v5384 = vadd.f32 %v4967, %v5260
  %v5385 = vadd.f32 %v4974, %v5261
  %v5386 = vadd.f32 %v4981, %v5262
  %v5387 = vadd.f32 %v4988, %v5263
  %v5388 = vadd.f32 %v4995, %v5224
  %v5389 = vadd.f32 %v5002, %v5264
  %v5390 = vadd.f32 %v5009, %v5265
  %v5391 = vadd.f32 %v5016, %v5266
  %v5392 = vadd.f32 %v5023, %v5267
  %v5393 = vadd.f32 %v5030, %v5268
  %v5394 = vadd.f32 %v5037, %v5269
  %v5395 = vadd.f32 %v5044, %v5270
  %v5396 = vadd.f32 %v5051, %v5225
  %v5397 = vadd.f32 %v5058, %v5271
  %v5398 = vadd.f32 %v5065, %v5272
  %v5399 = vadd.f32 %v5072, %v5273
  %v5400 = vadd.f32 %v5079, %v5274
  %v5401 = vadd.f32 %v5086, %v5275
  %v5402 = vadd.f32 %v5093, %v5276
  %v5403 = vadd.f32 %v5100, %v5277
  %v5404 = vadd.f32 %v5107, %v5226
  %v5405 = vadd.f32 %v5114, %v5278
  %v5406 = vadd.f32 %v5121, %v5279
  %v5407 = vadd.f32 %v5128, %v5280
  %v5408 = vadd.f32 %v5135, %v5281
  %v5409 = vadd.f32 %v5142, %v5282
  %v5410 = vadd.f32 %v5149, %v5283
  %v5411 = vadd.f32 %v5156, %v5284
  %v5412 = vadd.f32 %v5163, %v5227
  %v5413 = vadd.f32 %v5170, %v5285
  %v5414 = vadd.f32 %v5177, %v5286
  %v5415 = vadd.f32 %v5184, %v5287
  %v5416 = vadd.f32 %v5191, %v5288
  %v5417 = vadd.f32 %v5198, %v5289
  %v5418 = vadd.f32 %v5205, %v5290
  %v5419 = vadd.f32 %v5212, %v5291
  %v5420 = vxor.u32 %v233, 2147483648
  %v5421 = vxor.u32 %v237, 2147483648
  %v5422 = vxor.u32 %v243, 2147483648
  %v5423 = vxor.u32 %v247, 2147483648
  %v5424 = vxor.u32 %v253, 2147483648
  %v5425 = vxor.u32 %v257, 2147483648
  %v5426 = vxor.u32 %v263, 2147483648
  %v5427 = vxor.u32 %v267, 2147483648
  %v5428 = vmul.f32 %v5420, 1.442695
  %v5429 = vpow.pop %v5428
  %v5430 = vmul.f32 %v5421, 1.442695
  %v5431 = vpow.pop %v5430
  %v5432 = vmul.f32 %v5422, 1.442695
  %v5433 = vpow.pop %v5432
  %v5434 = vmul.f32 %v5423, 1.442695
  %v5435 = vpow.pop %v5434
  %v5436 = vmul.f32 %v5424, 1.442695
  %v5437 = vpow.pop %v5436
  %v5438 = vmul.f32 %v5425, 1.442695
  %v5439 = vpow.pop %v5438
  %v5440 = vmul.f32 %v5426, 1.442695
  %v5441 = vpow.pop %v5440
  %v5442 = vmul.f32 %v5427, 1.442695
  %v5443 = vpow.pop %v5442
  %v5444 = vadd.f32 %v5429, 1.0
  %v5445 = vadd.f32 %v5431, 1.0
  %v5446 = vadd.f32 %v5433, 1.0
  %v5447 = vadd.f32 %v5435, 1.0
  %v5448 = vadd.f32 %v5437, 1.0
  %v5449 = vadd.f32 %v5439, 1.0
  %v5450 = vadd.f32 %v5441, 1.0
  %v5451 = vadd.f32 %v5443, 1.0
  %v5452 = vrcp.pop %v5444
  %v5453 = vmul.f32 1.0, %v5452
  %v5454 = vrcp.pop %v5445
  %v5455 = vmul.f32 1.0, %v5454
  %v5456 = vrcp.pop %v5446
  %v5457 = vmul.f32 1.0, %v5456
  %v5458 = vrcp.pop %v5447
  %v5459 = vmul.f32 1.0, %v5458
  %v5460 = vrcp.pop %v5448
  %v5461 = vmul.f32 1.0, %v5460
  %v5462 = vrcp.pop %v5449
  %v5463 = vmul.f32 1.0, %v5462
  %v5464 = vrcp.pop %v5450
  %v5465 = vmul.f32 1.0, %v5464
  %v5466 = vrcp.pop %v5451
  %v5467 = vmul.f32 1.0, %v5466
  %v5468 = vmul.f32 %v233, %v5453
  %v5469 = vmul.f32 %v237, %v5455
  %v5470 = vmul.f32 %v243, %v5457
  %v5471 = vmul.f32 %v247, %v5459
  %v5472 = vmul.f32 %v253, %v5461
  %v5473 = vmul.f32 %v257, %v5463
  %v5474 = vmul.f32 %v263, %v5465
  %v5475 = vmul.f32 %v267, %v5467
  %v5484 = vrot.slane %v5468, 1
  %v5485 = vrot.slane %v5468, 2
  %v5486 = vrot.slane %v5468, 3
  %v5487 = vrot.slane %v5468, 4
  %v5488 = vrot.slane %v5468, 5
  %v5489 = vrot.slane %v5468, 6
  %v5490 = vrot.slane %v5468, 7
  %v5491 = vrot.slane %v5469, 1
  %v5492 = vrot.slane %v5469, 2
  %v5493 = vrot.slane %v5469, 3
  %v5494 = vrot.slane %v5469, 4
  %v5495 = vrot.slane %v5469, 5
  %v5496 = vrot.slane %v5469, 6
  %v5497 = vrot.slane %v5469, 7
  %v5498 = vrot.slane %v5470, 1
  %v5499 = vrot.slane %v5470, 2
  %v5500 = vrot.slane %v5470, 3
  %v5501 = vrot.slane %v5470, 4
  %v5502 = vrot.slane %v5470, 5
  %v5503 = vrot.slane %v5470, 6
  %v5504 = vrot.slane %v5470, 7
  %v5505 = vrot.slane %v5471, 1
  %v5506 = vrot.slane %v5471, 2
  %v5507 = vrot.slane %v5471, 3
  %v5508 = vrot.slane %v5471, 4
  %v5509 = vrot.slane %v5471, 5
  %v5510 = vrot.slane %v5471, 6
  %v5511 = vrot.slane %v5471, 7
  %v5512 = vrot.slane %v5472, 1
  %v5513 = vrot.slane %v5472, 2
  %v5514 = vrot.slane %v5472, 3
  %v5515 = vrot.slane %v5472, 4
  %v5516 = vrot.slane %v5472, 5
  %v5517 = vrot.slane %v5472, 6
  %v5518 = vrot.slane %v5472, 7
  %v5519 = vrot.slane %v5473, 1
  %v5520 = vrot.slane %v5473, 2
  %v5521 = vrot.slane %v5473, 3
  %v5522 = vrot.slane %v5473, 4
  %v5523 = vrot.slane %v5473, 5
  %v5524 = vrot.slane %v5473, 6
  %v5525 = vrot.slane %v5473, 7
  %v5526 = vrot.slane %v5474, 1
  %v5527 = vrot.slane %v5474, 2
  %v5528 = vrot.slane %v5474, 3
  %v5529 = vrot.slane %v5474, 4
  %v5530 = vrot.slane %v5474, 5
  %v5531 = vrot.slane %v5474, 6
  %v5532 = vrot.slane %v5474, 7
  %v5533 = vrot.slane %v5475, 1
  %v5534 = vrot.slane %v5475, 2
  %v5535 = vrot.slane %v5475, 3
  %v5536 = vrot.slane %v5475, 4
  %v5537 = vrot.slane %v5475, 5
  %v5538 = vrot.slane %v5475, 6
  %v5539 = vrot.slane %v5475, 7
  %v5604 = vmul.f32 %v5356, %v5468
  %v5605 = vmul.f32 %v5357, %v5484
  %v5606 = vmul.f32 %v5358, %v5485
  %v5607 = vmul.f32 %v5359, %v5486
  %v5608 = vmul.f32 %v5360, %v5487
  %v5609 = vmul.f32 %v5361, %v5488
  %v5610 = vmul.f32 %v5362, %v5489
  %v5611 = vmul.f32 %v5363, %v5490
  %v5612 = vmul.f32 %v5364, %v5469
  %v5613 = vmul.f32 %v5365, %v5491
  %v5614 = vmul.f32 %v5366, %v5492
  %v5615 = vmul.f32 %v5367, %v5493
  %v5616 = vmul.f32 %v5368, %v5494
  %v5617 = vmul.f32 %v5369, %v5495
  %v5618 = vmul.f32 %v5370, %v5496
  %v5619 = vmul.f32 %v5371, %v5497
  %v5620 = vmul.f32 %v5372, %v5470
  %v5621 = vmul.f32 %v5373, %v5498
  %v5622 = vmul.f32 %v5374, %v5499
  %v5623 = vmul.f32 %v5375, %v5500
  %v5624 = vmul.f32 %v5376, %v5501
  %v5625 = vmul.f32 %v5377, %v5502
  %v5626 = vmul.f32 %v5378, %v5503
  %v5627 = vmul.f32 %v5379, %v5504
  %v5628 = vmul.f32 %v5380, %v5471
  %v5629 = vmul.f32 %v5381, %v5505
  %v5630 = vmul.f32 %v5382, %v5506
  %v5631 = vmul.f32 %v5383, %v5507
  %v5632 = vmul.f32 %v5384, %v5508
  %v5633 = vmul.f32 %v5385, %v5509
  %v5634 = vmul.f32 %v5386, %v5510
  %v5635 = vmul.f32 %v5387, %v5511
  %v5636 = vmul.f32 %v5388, %v5472
  %v5637 = vmul.f32 %v5389, %v5512
  %v5638 = vmul.f32 %v5390, %v5513
  %v5639 = vmul.f32 %v5391, %v5514
  %v5640 = vmul.f32 %v5392, %v5515
  %v5641 = vmul.f32 %v5393, %v5516
  %v5642 = vmul.f32 %v5394, %v5517
  %v5643 = vmul.f32 %v5395, %v5518
  %v5644 = vmul.f32 %v5396, %v5473
  %v5645 = vmul.f32 %v5397, %v5519
  %v5646 = vmul.f32 %v5398, %v5520
  %v5647 = vmul.f32 %v5399, %v5521
  %v5648 = vmul.f32 %v5400, %v5522
  %v5649 = vmul.f32 %v5401, %v5523
  %v5650 = vmul.f32 %v5402, %v5524
  %v5651 = vmul.f32 %v5403, %v5525
  %v5652 = vmul.f32 %v5404, %v5474
  %v5653 = vmul.f32 %v5405, %v5526
  %v5654 = vmul.f32 %v5406, %v5527
  %v5655 = vmul.f32 %v5407, %v5528
  %v5656 = vmul.f32 %v5408, %v5529
  %v5657 = vmul.f32 %v5409, %v5530
  %v5658 = vmul.f32 %v5410, %v5531
  %v5659 = vmul.f32 %v5411, %v5532
  %v5660 = vmul.f32 %v5412, %v5475
  %v5661 = vmul.f32 %v5413, %v5533
  %v5662 = vmul.f32 %v5414, %v5534
  %v5663 = vmul.f32 %v5415, %v5535
  %v5664 = vmul.f32 %v5416, %v5536
  %v5665 = vmul.f32 %v5417, %v5537
  %v5666 = vmul.f32 %v5418, %v5538
  %v5667 = vmul.f32 %v5419, %v5539
  %v5668 = vld [vmem:[%s11] sm:$0xf]
  %v5669 = vld [vmem:[%s11 + $0x4] sm:$0xf]
  %v5670 = vld [vmem:[%s11 + $0x8] sm:$0xf]
  %v5671 = vld [vmem:[%s11 + $0xc] sm:$0xf]
  %v5672 = vld [vmem:[%s11 + $0x10] sm:$0xf]
  %v5673 = vld [vmem:[%s11 + $0x14] sm:$0xf]
  %v5674 = vld [vmem:[%s11 + $0x18] sm:$0xf]
  %v5675 = vld [vmem:[%s11 + $0x1c] sm:$0xf]
  %v5676 = vld [vmem:[%s11 + $0x20] sm:$0xf]
  %v5677 = vld [vmem:[%s11 + $0x24] sm:$0xf]
  %v5678 = vld [vmem:[%s11 + $0x28] sm:$0xf]
  %v5679 = vld [vmem:[%s11 + $0x2c] sm:$0xf]
  %v5680 = vld [vmem:[%s11 + $0x30] sm:$0xf]
  %v5681 = vld [vmem:[%s11 + $0x34] sm:$0xf]
  %v5682 = vld [vmem:[%s11 + $0x38] sm:$0xf]
  %v5683 = vld [vmem:[%s11 + $0x3c] sm:$0xf]
  %v5684 = vpack.c.bf16 %v5604, %v5604
  %v5685 = vpack.c.bf16 %v5605, %v5605
  %v5686 = vpack.c.bf16 %v5606, %v5606
  %v5687 = vpack.c.bf16 %v5607, %v5607
  %v5688 = vpack.c.bf16 %v5608, %v5608
  %v5689 = vpack.c.bf16 %v5609, %v5609
  %v5690 = vpack.c.bf16 %v5610, %v5610
  %v5691 = vpack.c.bf16 %v5611, %v5611
  %v5692 = vpack.c.bf16 %v5612, %v5612
  %v5693 = vpack.c.bf16 %v5613, %v5613
  %v5694 = vpack.c.bf16 %v5614, %v5614
  %v5695 = vpack.c.bf16 %v5615, %v5615
  %v5696 = vpack.c.bf16 %v5616, %v5616
  %v5697 = vpack.c.bf16 %v5617, %v5617
  %v5698 = vpack.c.bf16 %v5618, %v5618
  %v5699 = vpack.c.bf16 %v5619, %v5619
  %v5700 = vpack.c.bf16 %v5620, %v5620
  %v5701 = vpack.c.bf16 %v5621, %v5621
  %v5702 = vpack.c.bf16 %v5622, %v5622
  %v5703 = vpack.c.bf16 %v5623, %v5623
  %v5704 = vpack.c.bf16 %v5624, %v5624
  %v5705 = vpack.c.bf16 %v5625, %v5625
  %v5706 = vpack.c.bf16 %v5626, %v5626
  %v5707 = vpack.c.bf16 %v5627, %v5627
  %v5708 = vpack.c.bf16 %v5628, %v5628
  %v5709 = vpack.c.bf16 %v5629, %v5629
  %v5710 = vpack.c.bf16 %v5630, %v5630
  %v5711 = vpack.c.bf16 %v5631, %v5631
  %v5712 = vpack.c.bf16 %v5632, %v5632
  %v5713 = vpack.c.bf16 %v5633, %v5633
  %v5714 = vpack.c.bf16 %v5634, %v5634
  %v5715 = vpack.c.bf16 %v5635, %v5635
  %v5716 = vpack.c.bf16 %v5636, %v5636
  %v5717 = vpack.c.bf16 %v5637, %v5637
  %v5718 = vpack.c.bf16 %v5638, %v5638
  %v5719 = vpack.c.bf16 %v5639, %v5639
  %v5720 = vpack.c.bf16 %v5640, %v5640
  %v5721 = vpack.c.bf16 %v5641, %v5641
  %v5722 = vpack.c.bf16 %v5642, %v5642
  %v5723 = vpack.c.bf16 %v5643, %v5643
  %v5724 = vpack.c.bf16 %v5644, %v5644
  %v5725 = vpack.c.bf16 %v5645, %v5645
  %v5726 = vpack.c.bf16 %v5646, %v5646
  %v5727 = vpack.c.bf16 %v5647, %v5647
  %v5728 = vpack.c.bf16 %v5648, %v5648
  %v5729 = vpack.c.bf16 %v5649, %v5649
  %v5730 = vpack.c.bf16 %v5650, %v5650
  %v5731 = vpack.c.bf16 %v5651, %v5651
  %v5732 = vpack.c.bf16 %v5652, %v5652
  %v5733 = vpack.c.bf16 %v5653, %v5653
  %v5734 = vpack.c.bf16 %v5654, %v5654
  %v5735 = vpack.c.bf16 %v5655, %v5655
  %v5736 = vpack.c.bf16 %v5656, %v5656
  %v5737 = vpack.c.bf16 %v5657, %v5657
  %v5738 = vpack.c.bf16 %v5658, %v5658
  %v5739 = vpack.c.bf16 %v5659, %v5659
  %v5740 = vpack.c.bf16 %v5660, %v5660
  %v5741 = vpack.c.bf16 %v5661, %v5661
  %v5742 = vpack.c.bf16 %v5662, %v5662
  %v5743 = vpack.c.bf16 %v5663, %v5663
  %v5744 = vpack.c.bf16 %v5664, %v5664
  %v5745 = vpack.c.bf16 %v5665, %v5665
  %v5746 = vpack.c.bf16 %v5666, %v5666
  %v5747 = vpack.c.bf16 %v5667, %v5667
  %v5812 = vunpack.c.l.b16 %v5684
  %v5813 = vunpack.c.l.b16 %v5685
  %v5814 = vunpack.c.l.b16 %v5686
  %v5815 = vunpack.c.l.b16 %v5687
  %v5816 = vunpack.c.l.b16 %v5688
  %v5817 = vunpack.c.l.b16 %v5689
  %v5818 = vunpack.c.l.b16 %v5690
  %v5819 = vunpack.c.l.b16 %v5691
  %v5820 = vunpack.c.l.b16 %v5692
  %v5821 = vunpack.c.l.b16 %v5693
  %v5822 = vunpack.c.l.b16 %v5694
  %v5823 = vunpack.c.l.b16 %v5695
  %v5824 = vunpack.c.l.b16 %v5696
  %v5825 = vunpack.c.l.b16 %v5697
  %v5826 = vunpack.c.l.b16 %v5698
  %v5827 = vunpack.c.l.b16 %v5699
  %v5828 = vunpack.c.l.b16 %v5700
  %v5829 = vunpack.c.l.b16 %v5701
  %v5830 = vunpack.c.l.b16 %v5702
  %v5831 = vunpack.c.l.b16 %v5703
  %v5832 = vunpack.c.l.b16 %v5704
  %v5833 = vunpack.c.l.b16 %v5705
  %v5834 = vunpack.c.l.b16 %v5706
  %v5835 = vunpack.c.l.b16 %v5707
  %v5836 = vunpack.c.l.b16 %v5708
  %v5837 = vunpack.c.l.b16 %v5709
  %v5838 = vunpack.c.l.b16 %v5710
  %v5839 = vunpack.c.l.b16 %v5711
  %v5840 = vunpack.c.l.b16 %v5712
  %v5841 = vunpack.c.l.b16 %v5713
  %v5842 = vunpack.c.l.b16 %v5714
  %v5843 = vunpack.c.l.b16 %v5715
  %v5844 = vunpack.c.l.b16 %v5716
  %v5845 = vunpack.c.l.b16 %v5717
  %v5846 = vunpack.c.l.b16 %v5718
  %v5847 = vunpack.c.l.b16 %v5719
  %v5848 = vunpack.c.l.b16 %v5720
  %v5849 = vunpack.c.l.b16 %v5721
  %v5850 = vunpack.c.l.b16 %v5722
  %v5851 = vunpack.c.l.b16 %v5723
  %v5852 = vunpack.c.l.b16 %v5724
  %v5853 = vunpack.c.l.b16 %v5725
  %v5854 = vunpack.c.l.b16 %v5726
  %v5855 = vunpack.c.l.b16 %v5727
  %v5856 = vunpack.c.l.b16 %v5728
  %v5857 = vunpack.c.l.b16 %v5729
  %v5858 = vunpack.c.l.b16 %v5730
  %v5859 = vunpack.c.l.b16 %v5731
  %v5860 = vunpack.c.l.b16 %v5732
  %v5861 = vunpack.c.l.b16 %v5733
  %v5862 = vunpack.c.l.b16 %v5734
  %v5863 = vunpack.c.l.b16 %v5735
  %v5864 = vunpack.c.l.b16 %v5736
  %v5865 = vunpack.c.l.b16 %v5737
  %v5866 = vunpack.c.l.b16 %v5738
  %v5867 = vunpack.c.l.b16 %v5739
  %v5868 = vunpack.c.l.b16 %v5740
  %v5869 = vunpack.c.l.b16 %v5741
  %v5870 = vunpack.c.l.b16 %v5742
  %v5871 = vunpack.c.l.b16 %v5743
  %v5872 = vunpack.c.l.b16 %v5744
  %v5873 = vunpack.c.l.b16 %v5745
  %v5874 = vunpack.c.l.b16 %v5746
  %v5875 = vunpack.c.l.b16 %v5747
  %v5876 = vrot.slane %v5813, 7
  %vm5877 = vcmask 1041409
  %v5878 = vsel %vm5877, %v5876, %v5812
  %v5879 = vrot.slane %v5814, 6
  %vm5880 = vcmask 1042434
  %v5881 = vsel %vm5880, %v5879, %v5878
  %v5882 = vrot.slane %v5815, 5
  %vm5883 = vcmask 1043459
  %v5884 = vsel %vm5883, %v5882, %v5881
  %v5885 = vrot.slane %v5816, 4
  %vm5886 = vcmask 1044484
  %v5887 = vsel %vm5886, %v5885, %v5884
  %v5888 = vrot.slane %v5817, 3
  %vm5889 = vcmask 1045509
  %v5890 = vsel %vm5889, %v5888, %v5887
  %v5891 = vrot.slane %v5818, 2
  %vm5892 = vcmask 1046534
  %v5893 = vsel %vm5892, %v5891, %v5890
  %v5894 = vrot.slane %v5819, 1
  %vm5895 = vcmask 1047559
  %v5896 = vsel %vm5895, %v5894, %v5893
  %v5897 = vrot.slane %v5821, 7
  %v5898 = vsel %vm5877, %v5897, %v5820
  %v5899 = vrot.slane %v5822, 6
  %v5900 = vsel %vm5880, %v5899, %v5898
  %v5901 = vrot.slane %v5823, 5
  %v5902 = vsel %vm5883, %v5901, %v5900
  %v5903 = vrot.slane %v5824, 4
  %v5904 = vsel %vm5886, %v5903, %v5902
  %v5905 = vrot.slane %v5825, 3
  %v5906 = vsel %vm5889, %v5905, %v5904
  %v5907 = vrot.slane %v5826, 2
  %v5908 = vsel %vm5892, %v5907, %v5906
  %v5909 = vrot.slane %v5827, 1
  %v5910 = vsel %vm5895, %v5909, %v5908
  %v5911 = vrot.slane %v5829, 7
  %v5912 = vsel %vm5877, %v5911, %v5828
  %v5913 = vrot.slane %v5830, 6
  %v5914 = vsel %vm5880, %v5913, %v5912
  %v5915 = vrot.slane %v5831, 5
  %v5916 = vsel %vm5883, %v5915, %v5914
  %v5917 = vrot.slane %v5832, 4
  %v5918 = vsel %vm5886, %v5917, %v5916
  %v5919 = vrot.slane %v5833, 3
  %v5920 = vsel %vm5889, %v5919, %v5918
  %v5921 = vrot.slane %v5834, 2
  %v5922 = vsel %vm5892, %v5921, %v5920
  %v5923 = vrot.slane %v5835, 1
  %v5924 = vsel %vm5895, %v5923, %v5922
  %v5925 = vrot.slane %v5837, 7
  %v5926 = vsel %vm5877, %v5925, %v5836
  %v5927 = vrot.slane %v5838, 6
  %v5928 = vsel %vm5880, %v5927, %v5926
  %v5929 = vrot.slane %v5839, 5
  %v5930 = vsel %vm5883, %v5929, %v5928
  %v5931 = vrot.slane %v5840, 4
  %v5932 = vsel %vm5886, %v5931, %v5930
  %v5933 = vrot.slane %v5841, 3
  %v5934 = vsel %vm5889, %v5933, %v5932
  %v5935 = vrot.slane %v5842, 2
  %v5936 = vsel %vm5892, %v5935, %v5934
  %v5937 = vrot.slane %v5843, 1
  %v5938 = vsel %vm5895, %v5937, %v5936
  %v5939 = vrot.slane %v5845, 7
  %v5940 = vsel %vm5877, %v5939, %v5844
  %v5941 = vrot.slane %v5846, 6
  %v5942 = vsel %vm5880, %v5941, %v5940
  %v5943 = vrot.slane %v5847, 5
  %v5944 = vsel %vm5883, %v5943, %v5942
  %v5945 = vrot.slane %v5848, 4
  %v5946 = vsel %vm5886, %v5945, %v5944
  %v5947 = vrot.slane %v5849, 3
  %v5948 = vsel %vm5889, %v5947, %v5946
  %v5949 = vrot.slane %v5850, 2
  %v5950 = vsel %vm5892, %v5949, %v5948
  %v5951 = vrot.slane %v5851, 1
  %v5952 = vsel %vm5895, %v5951, %v5950
  %v5953 = vrot.slane %v5853, 7
  %v5954 = vsel %vm5877, %v5953, %v5852
  %v5955 = vrot.slane %v5854, 6
  %v5956 = vsel %vm5880, %v5955, %v5954
  %v5957 = vrot.slane %v5855, 5
  %v5958 = vsel %vm5883, %v5957, %v5956
  %v5959 = vrot.slane %v5856, 4
  %v5960 = vsel %vm5886, %v5959, %v5958
  %v5961 = vrot.slane %v5857, 3
  %v5962 = vsel %vm5889, %v5961, %v5960
  %v5963 = vrot.slane %v5858, 2
  %v5964 = vsel %vm5892, %v5963, %v5962
  %v5965 = vrot.slane %v5859, 1
  %v5966 = vsel %vm5895, %v5965, %v5964
  %v5967 = vrot.slane %v5861, 7
  %v5968 = vsel %vm5877, %v5967, %v5860
  %v5969 = vrot.slane %v5862, 6
  %v5970 = vsel %vm5880, %v5969, %v5968
  %v5971 = vrot.slane %v5863, 5
  %v5972 = vsel %vm5883, %v5971, %v5970
  %v5973 = vrot.slane %v5864, 4
  %v5974 = vsel %vm5886, %v5973, %v5972
  %v5975 = vrot.slane %v5865, 3
  %v5976 = vsel %vm5889, %v5975, %v5974
  %v5977 = vrot.slane %v5866, 2
  %v5978 = vsel %vm5892, %v5977, %v5976
  %v5979 = vrot.slane %v5867, 1
  %v5980 = vsel %vm5895, %v5979, %v5978
  %v5981 = vrot.slane %v5869, 7
  %v5982 = vsel %vm5877, %v5981, %v5868
  %v5983 = vrot.slane %v5870, 6
  %v5984 = vsel %vm5880, %v5983, %v5982
  %v5985 = vrot.slane %v5871, 5
  %v5986 = vsel %vm5883, %v5985, %v5984
  %v5987 = vrot.slane %v5872, 4
  %v5988 = vsel %vm5886, %v5987, %v5986
  %v5989 = vrot.slane %v5873, 3
  %v5990 = vsel %vm5889, %v5989, %v5988
  %v5991 = vrot.slane %v5874, 2
  %v5992 = vsel %vm5892, %v5991, %v5990
  %v5993 = vrot.slane %v5875, 1
  %v5994 = vsel %vm5895, %v5993, %v5992
  %v5995 = vpack.c.b16 %v5910, %v5896
  %v5996 = vpack.c.b16 %v5938, %v5924
  %v5997 = vpack.c.b16 %v5966, %v5952
  %v5998 = vpack.c.b16 %v5994, %v5980
  %v6019 = vunpack.c.l.b16 %v5668
  %v6020 = vunpack.c.l.b16 %v5669
  %v6021 = vunpack.c.l.b16 %v5670
  %v6022 = vunpack.c.l.b16 %v5671
  %v6023 = vunpack.c.l.b16 %v5672
  %v6024 = vunpack.c.l.b16 %v5673
  %v6025 = vunpack.c.l.b16 %v5674
  %v6026 = vunpack.c.l.b16 %v5675
  %v6027 = vunpack.c.l.b16 %v5676
  %v6028 = vunpack.c.l.b16 %v5677
  %v6029 = vunpack.c.l.b16 %v5678
  %v6030 = vunpack.c.l.b16 %v5679
  %v6031 = vunpack.c.l.b16 %v5680
  %v6032 = vunpack.c.l.b16 %v5681
  %v6033 = vunpack.c.l.b16 %v5682
  %v6034 = vunpack.c.l.b16 %v5683
  %v6035 = vpack.c.b16 %v6020, %v6019
  %v6036 = vpack.c.b16 %v6022, %v6021
  %v6037 = vpack.c.b16 %v6024, %v6023
  %v6038 = vpack.c.b16 %v6026, %v6025
  %v6039 = vpack.c.b16 %v6028, %v6027
  %v6040 = vpack.c.b16 %v6030, %v6029
  %v6041 = vpack.c.b16 %v6032, %v6031
  %v6042 = vpack.c.b16 %v6034, %v6033
  %6051 = vmatprep.subr.bf16.mxu0 0
  %6052 = vmatpush1.bf16.msra.mxu0 %v6035
  %6053 = vmatprep.subr.bf16.mxu0 0
  %6054 = vmatpush1.bf16.msra.mxu0 %v6036
  %6055 = vmatprep.subr.bf16.mxu0 0
  %6056 = vmatpush1.bf16.msra.mxu0 %v6037
  %6057 = vmatprep.subr.bf16.mxu0 0
  %6058 = vmatpush1.bf16.msra.mxu0 %v6038
  %6059 = vmatprep.subr.bf16.mxu0 0
  %6060 = vmatpush1.bf16.msra.mxu0 %v6039
  %6061 = vmatprep.subr.bf16.mxu0 0
  %6062 = vmatpush1.bf16.msra.mxu0 %v6040
  %6063 = vmatprep.subr.bf16.mxu0 0
  %6064 = vmatpush1.bf16.msra.mxu0 %v6041
  %6065 = vmatprep.subr.bf16.mxu0 0
  %6066 = vmatpush1.bf16.msra.mxu0 %v6042
  %6067 = vmatprep.subr.bf16.mxu0 0
  %6068 = vmatpush1.bf16.msra.mxu0 0
  %6069 = vmatprep.subr.bf16.mxu0 0
  %6070 = vmatpush1.bf16.msra.mxu0 0
  %6071 = vmatprep.subr.bf16.mxu0 0
  %6072 = vmatpush1.bf16.msra.mxu0 0
  %6073 = vmatprep.subr.bf16.mxu0 0
  %6074 = vmatpush1.bf16.msra.mxu0 0
  %6075 = vmatprep.subr.bf16.mxu0 0
  %6076 = vmatpush1.bf16.msra.mxu0 0
  %6077 = vmatprep.subr.bf16.mxu0 0
  %6078 = vmatpush1.bf16.msra.mxu0 0
  %6079 = vmatprep.subr.bf16.mxu0 0
  %6080 = vmatpush1.bf16.msra.mxu0 0
  %6081 = vmatprep.subr.bf16.mxu0 0
  %6082 = vmatpush1.bf16.msra.mxu0 0
  %6083 = vmatprep.mubr.bf16.mxu0 0
  %6084 = vmatmul.mubr.bf16.gmra.mrb[0].mxu0 %v5995
  %v6085 = vpop.f32.mrb[0].mxu0
  %v6086 = vadd.f32 0.0, %v6085
  %v6087 = vpop.f32.mrb[0].mxu0
  %v6088 = vpop.f32.mrb[0].mxu0
  %v6089 = vpop.f32.mrb[0].mxu0
  %6090 = vmatprep.mubr.bf16.mxu0 0
  %6091 = vmatmul.mubr.bf16.gmra.mrb[0].mxu0 %v5996
  %v6092 = vpop.f32.mrb[0].mxu0
  %v6093 = vadd.f32 0.0, %v6092
  %v6094 = vpop.f32.mrb[0].mxu0
  %v6095 = vpop.f32.mrb[0].mxu0
  %v6096 = vpop.f32.mrb[0].mxu0
  %6097 = vmatprep.mubr.bf16.mxu0 0
  %6098 = vmatmul.mubr.bf16.gmra.mrb[0].mxu0 %v5997
  %v6099 = vpop.f32.mrb[0].mxu0
  %v6100 = vadd.f32 0.0, %v6099
  %v6101 = vpop.f32.mrb[0].mxu0
  %v6102 = vpop.f32.mrb[0].mxu0
  %v6103 = vpop.f32.mrb[0].mxu0
  %6104 = vmatprep.mubr.bf16.mxu0 0
  %6105 = vmatmul.mubr.bf16.gmra.mrb[0].mxu0 %v5998
  %v6106 = vpop.f32.mrb[0].mxu0
  %v6107 = vadd.f32 0.0, %v6106
  %v6108 = vpop.f32.mrb[0].mxu0
  %v6109 = vpop.f32.mrb[0].mxu0
  %v6110 = vpop.f32.mrb[0].mxu0
  %6111 = vdwg.mxu0
  %v6112 = vld [vmem:[%s12] sm:$0xf]
  %v6113 = vld [vmem:[%s12 + $0x4] sm:$0xf]
  %v6114 = vld [vmem:[%s12 + $0x8] sm:$0xf]
  %v6115 = vld [vmem:[%s12 + $0xc] sm:$0xf]
  %v6116 = vld [vmem:[%s12 + $0x10] sm:$0xf]
  %v6117 = vld [vmem:[%s12 + $0x14] sm:$0xf]
  %v6118 = vld [vmem:[%s12 + $0x18] sm:$0xf]
  %v6119 = vld [vmem:[%s12 + $0x1c] sm:$0xf]
  %v6120 = vld [vmem:[%s12 + $0x20] sm:$0xf]
  %v6121 = vld [vmem:[%s12 + $0x24] sm:$0xf]
  %v6122 = vld [vmem:[%s12 + $0x28] sm:$0xf]
  %v6123 = vld [vmem:[%s12 + $0x2c] sm:$0xf]
  %v6124 = vld [vmem:[%s12 + $0x30] sm:$0xf]
  %v6125 = vld [vmem:[%s12 + $0x34] sm:$0xf]
  %v6126 = vld [vmem:[%s12 + $0x38] sm:$0xf]
  %v6127 = vld [vmem:[%s12 + $0x3c] sm:$0xf]
  %v6144 = vunpack.c.l.b16 %v6112
  %v6145 = vunpack.c.l.b16 %v6113
  %v6146 = vunpack.c.l.b16 %v6114
  %v6147 = vunpack.c.l.b16 %v6115
  %v6148 = vunpack.c.l.b16 %v6116
  %v6149 = vunpack.c.l.b16 %v6117
  %v6150 = vunpack.c.l.b16 %v6118
  %v6151 = vunpack.c.l.b16 %v6119
  %v6152 = vunpack.c.l.b16 %v6120
  %v6153 = vunpack.c.l.b16 %v6121
  %v6154 = vunpack.c.l.b16 %v6122
  %v6155 = vunpack.c.l.b16 %v6123
  %v6156 = vunpack.c.l.b16 %v6124
  %v6157 = vunpack.c.l.b16 %v6125
  %v6158 = vunpack.c.l.b16 %v6126
  %v6159 = vunpack.c.l.b16 %v6127
  %v6160 = vpack.c.b16 %v6145, %v6144
  %v6161 = vpack.c.b16 %v6147, %v6146
  %v6162 = vpack.c.b16 %v6149, %v6148
  %v6163 = vpack.c.b16 %v6151, %v6150
  %v6164 = vpack.c.b16 %v6153, %v6152
  %v6165 = vpack.c.b16 %v6155, %v6154
  %v6166 = vpack.c.b16 %v6157, %v6156
  %v6167 = vpack.c.b16 %v6159, %v6158
  %6176 = vmatprep.subr.bf16.mxu0 0
  %6177 = vmatpush1.bf16.msra.mxu0 %v6160
  %6178 = vmatprep.subr.bf16.mxu0 0
  %6179 = vmatpush1.bf16.msra.mxu0 %v6161
  %6180 = vmatprep.subr.bf16.mxu0 0
  %6181 = vmatpush1.bf16.msra.mxu0 %v6162
  %6182 = vmatprep.subr.bf16.mxu0 0
  %6183 = vmatpush1.bf16.msra.mxu0 %v6163
  %6184 = vmatprep.subr.bf16.mxu0 0
  %6185 = vmatpush1.bf16.msra.mxu0 %v6164
  %6186 = vmatprep.subr.bf16.mxu0 0
  %6187 = vmatpush1.bf16.msra.mxu0 %v6165
  %6188 = vmatprep.subr.bf16.mxu0 0
  %6189 = vmatpush1.bf16.msra.mxu0 %v6166
  %6190 = vmatprep.subr.bf16.mxu0 0
  %6191 = vmatpush1.bf16.msra.mxu0 %v6167
  %6192 = vmatprep.subr.bf16.mxu0 0
  %6193 = vmatpush1.bf16.msra.mxu0 0
  %6194 = vmatprep.subr.bf16.mxu0 0
  %6195 = vmatpush1.bf16.msra.mxu0 0
  %6196 = vmatprep.subr.bf16.mxu0 0
  %6197 = vmatpush1.bf16.msra.mxu0 0
  %6198 = vmatprep.subr.bf16.mxu0 0
  %6199 = vmatpush1.bf16.msra.mxu0 0
  %6200 = vmatprep.subr.bf16.mxu0 0
  %6201 = vmatpush1.bf16.msra.mxu0 0
  %6202 = vmatprep.subr.bf16.mxu0 0
  %6203 = vmatpush1.bf16.msra.mxu0 0
  %6204 = vmatprep.subr.bf16.mxu0 0
  %6205 = vmatpush1.bf16.msra.mxu0 0
  %6206 = vmatprep.subr.bf16.mxu0 0
  %6207 = vmatpush1.bf16.msra.mxu0 0
  %6208 = vmatprep.mubr.bf16.mxu0 0
  %6209 = vmatmul.mubr.bf16.gmra.mrb[0].mxu0 %v5995
  %v6210 = vpop.f32.mrb[0].mxu0
  %v6211 = vpop.f32.mrb[0].mxu0
  %v6212 = vpop.f32.mrb[0].mxu0
  %v6213 = vadd.f32 0.0, %v6212
  %v6214 = vpop.f32.mrb[0].mxu0
  %6215 = vmatprep.mubr.bf16.mxu0 0
  %6216 = vmatmul.mubr.bf16.gmra.mrb[0].mxu0 %v5996
  %v6217 = vpop.f32.mrb[0].mxu0
  %v6218 = vpop.f32.mrb[0].mxu0
  %v6219 = vpop.f32.mrb[0].mxu0
  %v6220 = vadd.f32 0.0, %v6219
  %v6221 = vpop.f32.mrb[0].mxu0
  %6222 = vmatprep.mubr.bf16.mxu0 0
  %6223 = vmatmul.mubr.bf16.gmra.mrb[0].mxu0 %v5997
  %v6224 = vpop.f32.mrb[0].mxu0
  %v6225 = vpop.f32.mrb[0].mxu0
  %v6226 = vpop.f32.mrb[0].mxu0
  %v6227 = vadd.f32 0.0, %v6226
  %v6228 = vpop.f32.mrb[0].mxu0
  %6229 = vmatprep.mubr.bf16.mxu0 0
  %6230 = vmatmul.mubr.bf16.gmra.mrb[0].mxu0 %v5998
  %v6231 = vpop.f32.mrb[0].mxu0
  %v6232 = vpop.f32.mrb[0].mxu0
  %v6233 = vpop.f32.mrb[0].mxu0
  %v6234 = vadd.f32 0.0, %v6233
  %v6235 = vpop.f32.mrb[0].mxu0
  %6236 = vdwg.mxu0
  %v6237 = vmul.f32 %v6086, %v6213
  %v6238 = vmul.f32 %v6093, %v6220
  %v6239 = vmul.f32 %v6100, %v6227
  %v6240 = vmul.f32 %v6107, %v6234
  %v6241 = vmul.f32 %v6237, %v6237
  %v6242 = vmul.f32 %v6238, %v6238
  %v6243 = vmul.f32 %v6239, %v6239
  %v6244 = vmul.f32 %v6240, %v6240
  %v6245 = vsel %vm64, %v6241, 0.0
  %6246 = vadd.xlane.f32.xlu0 %v6245
  %v6247 = vpop.xlane.xlu0 %6246
  %v6248 = vsel %vm64, %v6242, 0.0
  %6249 = vadd.xlane.f32.xlu0 %v6248
  %v6250 = vpop.xlane.xlu0 %6249
  %v6251 = vsel %vm64, %v6243, 0.0
  %6252 = vadd.xlane.f32.xlu0 %v6251
  %v6253 = vpop.xlane.xlu0 %6252
  %v6254 = vsel %vm64, %v6244, 0.0
  %6255 = vadd.xlane.f32.xlu0 %v6254
  %v6256 = vpop.xlane.xlu0 %6255
  %v6257 = vmul.f32 %v6247, %v89
  %v6258 = vmul.f32 %v6250, %v89
  %v6259 = vmul.f32 %v6253, %v89
  %v6260 = vmul.f32 %v6256, %v89
  %v6261 = vadd.f32 %v6257, 1e-05
  %v6262 = vadd.f32 %v6258, 1e-05
  %v6263 = vadd.f32 %v6259, 1e-05
  %v6264 = vadd.f32 %v6260, 1e-05
  %v6265 = vrsqrt.pop %v6261
  %v6266 = vrsqrt.pop %v6262
  %v6267 = vrsqrt.pop %v6263
  %v6268 = vrsqrt.pop %v6264
  %v6269 = vmul.f32 %v6237, %v6265
  %v6270 = vmul.f32 %v6238, %v6266
  %v6271 = vmul.f32 %v6239, %v6267
  %v6272 = vmul.f32 %v6240, %v6268
  %v6273 = vld [vmem:[%s2] sm:$0x1]
  %v6275 = vlaneseq
  %v6276 = vshrl.u32 %v6275, 7
  %v6277 = vsub.s32 0, %v6276
  %v6278 = vrot.slane %v6273, %v6277
  %v6280 = vmul.f32 %v6269, %v6278
  %v6281 = vmul.f32 %v6270, %v6278
  %v6282 = vmul.f32 %v6271, %v6278
  %v6283 = vmul.f32 %v6272, %v6278
  %v6284 = vadd.f32 %v6280, %v48
  %v6285 = vadd.f32 %v6281, %v50
  %v6286 = vadd.f32 %v6282, %v52
  %v6287 = vadd.f32 %v6283, %v54
  %v6288 = vld [vmem:[%s13] sm:$0xff]
  %v6289 = vld [vmem:[%s13 + $0x8] sm:$0xff]
  %v6290 = vld [vmem:[%s13 + $0x10] sm:$0xff]
  %v6291 = vld [vmem:[%s13 + $0x18] sm:$0xff]
  %v6292 = vld [vmem:[%s13 + $0x20] sm:$0xff]
  %v6293 = vld [vmem:[%s13 + $0x28] sm:$0xff]
  %v6294 = vld [vmem:[%s13 + $0x30] sm:$0xff]
  %v6295 = vld [vmem:[%s13 + $0x38] sm:$0xff]
  %v6296 = vld [vmem:[%s13 + $0x40] sm:$0xff]
  %v6297 = vld [vmem:[%s13 + $0x48] sm:$0xff]
  %v6298 = vld [vmem:[%s13 + $0x50] sm:$0xff]
  %v6299 = vld [vmem:[%s13 + $0x58] sm:$0xff]
  %v6300 = vld [vmem:[%s13 + $0x60] sm:$0xff]
  %v6301 = vld [vmem:[%s13 + $0x68] sm:$0xff]
  %v6302 = vld [vmem:[%s13 + $0x70] sm:$0xff]
  %v6303 = vld [vmem:[%s13 + $0x78] sm:$0xff]
  %v6304 = vld [vmem:[%s13 + $0x80] sm:$0xff]
  %v6305 = vld [vmem:[%s13 + $0x88] sm:$0xff]
  %v6306 = vld [vmem:[%s13 + $0x90] sm:$0xff]
  %v6307 = vld [vmem:[%s13 + $0x98] sm:$0xff]
  %v6308 = vld [vmem:[%s13 + $0xa0] sm:$0xff]
  %v6309 = vld [vmem:[%s13 + $0xa8] sm:$0xff]
  %v6310 = vld [vmem:[%s13 + $0xb0] sm:$0xff]
  %v6311 = vld [vmem:[%s13 + $0xb8] sm:$0xff]
  %v6312 = vld [vmem:[%s13 + $0xc0] sm:$0xff]
  %v6313 = vld [vmem:[%s13 + $0xc8] sm:$0xff]
  %v6314 = vld [vmem:[%s13 + $0xd0] sm:$0xff]
  %v6315 = vld [vmem:[%s13 + $0xd8] sm:$0xff]
  %v6316 = vld [vmem:[%s13 + $0xe0] sm:$0xff]
  %v6317 = vld [vmem:[%s13 + $0xe8] sm:$0xff]
  %v6318 = vld [vmem:[%s13 + $0xf0] sm:$0xff]
  %v6319 = vld [vmem:[%s13 + $0xf8] sm:$0xff]
  %v6320 = vld [vmem:[%s13 + $0x100] sm:$0xff]
  %v6321 = vld [vmem:[%s13 + $0x108] sm:$0xff]
  %v6322 = vld [vmem:[%s13 + $0x110] sm:$0xff]
  %v6323 = vld [vmem:[%s13 + $0x118] sm:$0xff]
  %v6324 = vld [vmem:[%s13 + $0x120] sm:$0xff]
  %v6325 = vld [vmem:[%s13 + $0x128] sm:$0xff]
  %v6326 = vld [vmem:[%s13 + $0x130] sm:$0xff]
  %v6327 = vld [vmem:[%s13 + $0x138] sm:$0xff]
  %v6328 = vld [vmem:[%s13 + $0x140] sm:$0xff]
  %v6329 = vld [vmem:[%s13 + $0x148] sm:$0xff]
  %v6330 = vld [vmem:[%s13 + $0x150] sm:$0xff]
  %v6331 = vld [vmem:[%s13 + $0x158] sm:$0xff]
  %v6332 = vld [vmem:[%s13 + $0x160] sm:$0xff]
  %v6333 = vld [vmem:[%s13 + $0x168] sm:$0xff]
  %v6334 = vld [vmem:[%s13 + $0x170] sm:$0xff]
  %v6335 = vld [vmem:[%s13 + $0x178] sm:$0xff]
  %v6336 = vld [vmem:[%s13 + $0x180] sm:$0xff]
  %v6337 = vld [vmem:[%s13 + $0x188] sm:$0xff]
  %v6338 = vld [vmem:[%s13 + $0x190] sm:$0xff]
  %v6339 = vld [vmem:[%s13 + $0x198] sm:$0xff]
  %v6340 = vld [vmem:[%s13 + $0x1a0] sm:$0xff]
  %v6341 = vld [vmem:[%s13 + $0x1a8] sm:$0xff]
  %v6342 = vld [vmem:[%s13 + $0x1b0] sm:$0xff]
  %v6343 = vld [vmem:[%s13 + $0x1b8] sm:$0xff]
  %v6344 = vld [vmem:[%s13 + $0x1c0] sm:$0xff]
  %v6345 = vld [vmem:[%s13 + $0x1c8] sm:$0xff]
  %v6346 = vld [vmem:[%s13 + $0x1d0] sm:$0xff]
  %v6347 = vld [vmem:[%s13 + $0x1d8] sm:$0xff]
  %v6348 = vld [vmem:[%s13 + $0x1e0] sm:$0xff]
  %v6349 = vld [vmem:[%s13 + $0x1e8] sm:$0xff]
  %v6350 = vld [vmem:[%s13 + $0x1f0] sm:$0xff]
  %v6351 = vld [vmem:[%s13 + $0x1f8] sm:$0xff]
  %v6352 = vld [vmem:[%s13 + $0x200] sm:$0xff]
  %v6353 = vld [vmem:[%s13 + $0x208] sm:$0xff]
  %v6354 = vld [vmem:[%s13 + $0x210] sm:$0xff]
  %v6355 = vld [vmem:[%s13 + $0x218] sm:$0xff]
  %v6356 = vld [vmem:[%s13 + $0x220] sm:$0xff]
  %v6357 = vld [vmem:[%s13 + $0x228] sm:$0xff]
  %v6358 = vld [vmem:[%s13 + $0x230] sm:$0xff]
  %v6359 = vld [vmem:[%s13 + $0x238] sm:$0xff]
  %v6360 = vld [vmem:[%s13 + $0x240] sm:$0xff]
  %v6361 = vld [vmem:[%s13 + $0x248] sm:$0xff]
  %v6362 = vld [vmem:[%s13 + $0x250] sm:$0xff]
  %v6363 = vld [vmem:[%s13 + $0x258] sm:$0xff]
  %v6364 = vld [vmem:[%s13 + $0x260] sm:$0xff]
  %v6365 = vld [vmem:[%s13 + $0x268] sm:$0xff]
  %v6366 = vld [vmem:[%s13 + $0x270] sm:$0xff]
  %v6367 = vld [vmem:[%s13 + $0x278] sm:$0xff]
  %v6368 = vld [vmem:[%s13 + $0x280] sm:$0xff]
  %v6369 = vld [vmem:[%s13 + $0x288] sm:$0xff]
  %v6370 = vld [vmem:[%s13 + $0x290] sm:$0xff]
  %v6371 = vld [vmem:[%s13 + $0x298] sm:$0xff]
  %v6372 = vld [vmem:[%s13 + $0x2a0] sm:$0xff]
  %v6373 = vld [vmem:[%s13 + $0x2a8] sm:$0xff]
  %v6374 = vld [vmem:[%s13 + $0x2b0] sm:$0xff]
  %v6375 = vld [vmem:[%s13 + $0x2b8] sm:$0xff]
  %v6376 = vld [vmem:[%s13 + $0x2c0] sm:$0xff]
  %v6377 = vld [vmem:[%s13 + $0x2c8] sm:$0xff]
  %v6378 = vld [vmem:[%s13 + $0x2d0] sm:$0xff]
  %v6379 = vld [vmem:[%s13 + $0x2d8] sm:$0xff]
  %v6380 = vld [vmem:[%s13 + $0x2e0] sm:$0xff]
  %v6381 = vld [vmem:[%s13 + $0x2e8] sm:$0xff]
  %v6382 = vld [vmem:[%s13 + $0x2f0] sm:$0xff]
  %v6383 = vld [vmem:[%s13 + $0x2f8] sm:$0xff]
  %v6384 = vld [vmem:[%s13 + $0x300] sm:$0xff]
  %v6385 = vld [vmem:[%s13 + $0x308] sm:$0xff]
  %v6386 = vld [vmem:[%s13 + $0x310] sm:$0xff]
  %v6387 = vld [vmem:[%s13 + $0x318] sm:$0xff]
  %v6388 = vld [vmem:[%s13 + $0x320] sm:$0xff]
  %v6389 = vld [vmem:[%s13 + $0x328] sm:$0xff]
  %v6390 = vld [vmem:[%s13 + $0x330] sm:$0xff]
  %v6391 = vld [vmem:[%s13 + $0x338] sm:$0xff]
  %v6392 = vld [vmem:[%s13 + $0x340] sm:$0xff]
  %v6393 = vld [vmem:[%s13 + $0x348] sm:$0xff]
  %v6394 = vld [vmem:[%s13 + $0x350] sm:$0xff]
  %v6395 = vld [vmem:[%s13 + $0x358] sm:$0xff]
  %v6396 = vld [vmem:[%s13 + $0x360] sm:$0xff]
  %v6397 = vld [vmem:[%s13 + $0x368] sm:$0xff]
  %v6398 = vld [vmem:[%s13 + $0x370] sm:$0xff]
  %v6399 = vld [vmem:[%s13 + $0x378] sm:$0xff]
  %v6400 = vld [vmem:[%s13 + $0x380] sm:$0xff]
  %v6401 = vld [vmem:[%s13 + $0x388] sm:$0xff]
  %v6402 = vld [vmem:[%s13 + $0x390] sm:$0xff]
  %v6403 = vld [vmem:[%s13 + $0x398] sm:$0xff]
  %v6404 = vld [vmem:[%s13 + $0x3a0] sm:$0xff]
  %v6405 = vld [vmem:[%s13 + $0x3a8] sm:$0xff]
  %v6406 = vld [vmem:[%s13 + $0x3b0] sm:$0xff]
  %v6407 = vld [vmem:[%s13 + $0x3b8] sm:$0xff]
  %v6408 = vld [vmem:[%s13 + $0x3c0] sm:$0xff]
  %v6409 = vld [vmem:[%s13 + $0x3c8] sm:$0xff]
  %v6410 = vld [vmem:[%s13 + $0x3d0] sm:$0xff]
  %v6411 = vld [vmem:[%s13 + $0x3d8] sm:$0xff]
  %v6412 = vld [vmem:[%s13 + $0x3e0] sm:$0xff]
  %v6413 = vld [vmem:[%s13 + $0x3e8] sm:$0xff]
  %v6414 = vld [vmem:[%s13 + $0x3f0] sm:$0xff]
  %v6415 = vld [vmem:[%s13 + $0x3f8] sm:$0xff]
  %v6416 = vpack.c.bf16 %v6285, %v6284
  %v6417 = vpack.c.bf16 %v6287, %v6286
  %v6546 = vunpack.c.l.b16 %v6288
  %v6547 = vunpack.c.h.b16 %v6288
  %v6548 = vunpack.c.l.b16 %v6289
  %v6549 = vunpack.c.h.b16 %v6289
  %v6550 = vunpack.c.l.b16 %v6290
  %v6551 = vunpack.c.h.b16 %v6290
  %v6552 = vunpack.c.l.b16 %v6291
  %v6553 = vunpack.c.h.b16 %v6291
  %v6554 = vunpack.c.l.b16 %v6292
  %v6555 = vunpack.c.h.b16 %v6292
  %v6556 = vunpack.c.l.b16 %v6293
  %v6557 = vunpack.c.h.b16 %v6293
  %v6558 = vunpack.c.l.b16 %v6294
  %v6559 = vunpack.c.h.b16 %v6294
  %v6560 = vunpack.c.l.b16 %v6295
  %v6561 = vunpack.c.h.b16 %v6295
  %v6562 = vunpack.c.l.b16 %v6296
  %v6563 = vunpack.c.h.b16 %v6296
  %v6564 = vunpack.c.l.b16 %v6297
  %v6565 = vunpack.c.h.b16 %v6297
  %v6566 = vunpack.c.l.b16 %v6298
  %v6567 = vunpack.c.h.b16 %v6298
  %v6568 = vunpack.c.l.b16 %v6299
  %v6569 = vunpack.c.h.b16 %v6299
  %v6570 = vunpack.c.l.b16 %v6300
  %v6571 = vunpack.c.h.b16 %v6300
  %v6572 = vunpack.c.l.b16 %v6301
  %v6573 = vunpack.c.h.b16 %v6301
  %v6574 = vunpack.c.l.b16 %v6302
  %v6575 = vunpack.c.h.b16 %v6302
  %v6576 = vunpack.c.l.b16 %v6303
  %v6577 = vunpack.c.h.b16 %v6303
  %v6578 = vunpack.c.l.b16 %v6304
  %v6579 = vunpack.c.h.b16 %v6304
  %v6580 = vunpack.c.l.b16 %v6305
  %v6581 = vunpack.c.h.b16 %v6305
  %v6582 = vunpack.c.l.b16 %v6306
  %v6583 = vunpack.c.h.b16 %v6306
  %v6584 = vunpack.c.l.b16 %v6307
  %v6585 = vunpack.c.h.b16 %v6307
  %v6586 = vunpack.c.l.b16 %v6308
  %v6587 = vunpack.c.h.b16 %v6308
  %v6588 = vunpack.c.l.b16 %v6309
  %v6589 = vunpack.c.h.b16 %v6309
  %v6590 = vunpack.c.l.b16 %v6310
  %v6591 = vunpack.c.h.b16 %v6310
  %v6592 = vunpack.c.l.b16 %v6311
  %v6593 = vunpack.c.h.b16 %v6311
  %v6594 = vunpack.c.l.b16 %v6312
  %v6595 = vunpack.c.h.b16 %v6312
  %v6596 = vunpack.c.l.b16 %v6313
  %v6597 = vunpack.c.h.b16 %v6313
  %v6598 = vunpack.c.l.b16 %v6314
  %v6599 = vunpack.c.h.b16 %v6314
  %v6600 = vunpack.c.l.b16 %v6315
  %v6601 = vunpack.c.h.b16 %v6315
  %v6602 = vunpack.c.l.b16 %v6316
  %v6603 = vunpack.c.h.b16 %v6316
  %v6604 = vunpack.c.l.b16 %v6317
  %v6605 = vunpack.c.h.b16 %v6317
  %v6606 = vunpack.c.l.b16 %v6318
  %v6607 = vunpack.c.h.b16 %v6318
  %v6608 = vunpack.c.l.b16 %v6319
  %v6609 = vunpack.c.h.b16 %v6319
  %v6610 = vunpack.c.l.b16 %v6320
  %v6611 = vunpack.c.h.b16 %v6320
  %v6612 = vunpack.c.l.b16 %v6321
  %v6613 = vunpack.c.h.b16 %v6321
  %v6614 = vunpack.c.l.b16 %v6322
  %v6615 = vunpack.c.h.b16 %v6322
  %v6616 = vunpack.c.l.b16 %v6323
  %v6617 = vunpack.c.h.b16 %v6323
  %v6618 = vunpack.c.l.b16 %v6324
  %v6619 = vunpack.c.h.b16 %v6324
  %v6620 = vunpack.c.l.b16 %v6325
  %v6621 = vunpack.c.h.b16 %v6325
  %v6622 = vunpack.c.l.b16 %v6326
  %v6623 = vunpack.c.h.b16 %v6326
  %v6624 = vunpack.c.l.b16 %v6327
  %v6625 = vunpack.c.h.b16 %v6327
  %v6626 = vunpack.c.l.b16 %v6328
  %v6627 = vunpack.c.h.b16 %v6328
  %v6628 = vunpack.c.l.b16 %v6329
  %v6629 = vunpack.c.h.b16 %v6329
  %v6630 = vunpack.c.l.b16 %v6330
  %v6631 = vunpack.c.h.b16 %v6330
  %v6632 = vunpack.c.l.b16 %v6331
  %v6633 = vunpack.c.h.b16 %v6331
  %v6634 = vunpack.c.l.b16 %v6332
  %v6635 = vunpack.c.h.b16 %v6332
  %v6636 = vunpack.c.l.b16 %v6333
  %v6637 = vunpack.c.h.b16 %v6333
  %v6638 = vunpack.c.l.b16 %v6334
  %v6639 = vunpack.c.h.b16 %v6334
  %v6640 = vunpack.c.l.b16 %v6335
  %v6641 = vunpack.c.h.b16 %v6335
  %v6642 = vunpack.c.l.b16 %v6336
  %v6643 = vunpack.c.h.b16 %v6336
  %v6644 = vunpack.c.l.b16 %v6337
  %v6645 = vunpack.c.h.b16 %v6337
  %v6646 = vunpack.c.l.b16 %v6338
  %v6647 = vunpack.c.h.b16 %v6338
  %v6648 = vunpack.c.l.b16 %v6339
  %v6649 = vunpack.c.h.b16 %v6339
  %v6650 = vunpack.c.l.b16 %v6340
  %v6651 = vunpack.c.h.b16 %v6340
  %v6652 = vunpack.c.l.b16 %v6341
  %v6653 = vunpack.c.h.b16 %v6341
  %v6654 = vunpack.c.l.b16 %v6342
  %v6655 = vunpack.c.h.b16 %v6342
  %v6656 = vunpack.c.l.b16 %v6343
  %v6657 = vunpack.c.h.b16 %v6343
  %v6658 = vunpack.c.l.b16 %v6344
  %v6659 = vunpack.c.h.b16 %v6344
  %v6660 = vunpack.c.l.b16 %v6345
  %v6661 = vunpack.c.h.b16 %v6345
  %v6662 = vunpack.c.l.b16 %v6346
  %v6663 = vunpack.c.h.b16 %v6346
  %v6664 = vunpack.c.l.b16 %v6347
  %v6665 = vunpack.c.h.b16 %v6347
  %v6666 = vunpack.c.l.b16 %v6348
  %v6667 = vunpack.c.h.b16 %v6348
  %v6668 = vunpack.c.l.b16 %v6349
  %v6669 = vunpack.c.h.b16 %v6349
  %v6670 = vunpack.c.l.b16 %v6350
  %v6671 = vunpack.c.h.b16 %v6350
  %v6672 = vunpack.c.l.b16 %v6351
  %v6673 = vunpack.c.h.b16 %v6351
  %v6674 = vunpack.c.l.b16 %v6352
  %v6675 = vunpack.c.h.b16 %v6352
  %v6676 = vunpack.c.l.b16 %v6353
  %v6677 = vunpack.c.h.b16 %v6353
  %v6678 = vunpack.c.l.b16 %v6354
  %v6679 = vunpack.c.h.b16 %v6354
  %v6680 = vunpack.c.l.b16 %v6355
  %v6681 = vunpack.c.h.b16 %v6355
  %v6682 = vunpack.c.l.b16 %v6356
  %v6683 = vunpack.c.h.b16 %v6356
  %v6684 = vunpack.c.l.b16 %v6357
  %v6685 = vunpack.c.h.b16 %v6357
  %v6686 = vunpack.c.l.b16 %v6358
  %v6687 = vunpack.c.h.b16 %v6358
  %v6688 = vunpack.c.l.b16 %v6359
  %v6689 = vunpack.c.h.b16 %v6359
  %v6690 = vunpack.c.l.b16 %v6360
  %v6691 = vunpack.c.h.b16 %v6360
  %v6692 = vunpack.c.l.b16 %v6361
  %v6693 = vunpack.c.h.b16 %v6361
  %v6694 = vunpack.c.l.b16 %v6362
  %v6695 = vunpack.c.h.b16 %v6362
  %v6696 = vunpack.c.l.b16 %v6363
  %v6697 = vunpack.c.h.b16 %v6363
  %v6698 = vunpack.c.l.b16 %v6364
  %v6699 = vunpack.c.h.b16 %v6364
  %v6700 = vunpack.c.l.b16 %v6365
  %v6701 = vunpack.c.h.b16 %v6365
  %v6702 = vunpack.c.l.b16 %v6366
  %v6703 = vunpack.c.h.b16 %v6366
  %v6704 = vunpack.c.l.b16 %v6367
  %v6705 = vunpack.c.h.b16 %v6367
  %v6706 = vunpack.c.l.b16 %v6368
  %v6707 = vunpack.c.h.b16 %v6368
  %v6708 = vunpack.c.l.b16 %v6369
  %v6709 = vunpack.c.h.b16 %v6369
  %v6710 = vunpack.c.l.b16 %v6370
  %v6711 = vunpack.c.h.b16 %v6370
  %v6712 = vunpack.c.l.b16 %v6371
  %v6713 = vunpack.c.h.b16 %v6371
  %v6714 = vunpack.c.l.b16 %v6372
  %v6715 = vunpack.c.h.b16 %v6372
  %v6716 = vunpack.c.l.b16 %v6373
  %v6717 = vunpack.c.h.b16 %v6373
  %v6718 = vunpack.c.l.b16 %v6374
  %v6719 = vunpack.c.h.b16 %v6374
  %v6720 = vunpack.c.l.b16 %v6375
  %v6721 = vunpack.c.h.b16 %v6375
  %v6722 = vunpack.c.l.b16 %v6376
  %v6723 = vunpack.c.h.b16 %v6376
  %v6724 = vunpack.c.l.b16 %v6377
  %v6725 = vunpack.c.h.b16 %v6377
  %v6726 = vunpack.c.l.b16 %v6378
  %v6727 = vunpack.c.h.b16 %v6378
  %v6728 = vunpack.c.l.b16 %v6379
  %v6729 = vunpack.c.h.b16 %v6379
  %v6730 = vunpack.c.l.b16 %v6380
  %v6731 = vunpack.c.h.b16 %v6380
  %v6732 = vunpack.c.l.b16 %v6381
  %v6733 = vunpack.c.h.b16 %v6381
  %v6734 = vunpack.c.l.b16 %v6382
  %v6735 = vunpack.c.h.b16 %v6382
  %v6736 = vunpack.c.l.b16 %v6383
  %v6737 = vunpack.c.h.b16 %v6383
  %v6738 = vunpack.c.l.b16 %v6384
  %v6739 = vunpack.c.h.b16 %v6384
  %v6740 = vunpack.c.l.b16 %v6385
  %v6741 = vunpack.c.h.b16 %v6385
  %v6742 = vunpack.c.l.b16 %v6386
  %v6743 = vunpack.c.h.b16 %v6386
  %v6744 = vunpack.c.l.b16 %v6387
  %v6745 = vunpack.c.h.b16 %v6387
  %v6746 = vunpack.c.l.b16 %v6388
  %v6747 = vunpack.c.h.b16 %v6388
  %v6748 = vunpack.c.l.b16 %v6389
  %v6749 = vunpack.c.h.b16 %v6389
  %v6750 = vunpack.c.l.b16 %v6390
  %v6751 = vunpack.c.h.b16 %v6390
  %v6752 = vunpack.c.l.b16 %v6391
  %v6753 = vunpack.c.h.b16 %v6391
  %v6754 = vunpack.c.l.b16 %v6392
  %v6755 = vunpack.c.h.b16 %v6392
  %v6756 = vunpack.c.l.b16 %v6393
  %v6757 = vunpack.c.h.b16 %v6393
  %v6758 = vunpack.c.l.b16 %v6394
  %v6759 = vunpack.c.h.b16 %v6394
  %v6760 = vunpack.c.l.b16 %v6395
  %v6761 = vunpack.c.h.b16 %v6395
  %v6762 = vunpack.c.l.b16 %v6396
  %v6763 = vunpack.c.h.b16 %v6396
  %v6764 = vunpack.c.l.b16 %v6397
  %v6765 = vunpack.c.h.b16 %v6397
  %v6766 = vunpack.c.l.b16 %v6398
  %v6767 = vunpack.c.h.b16 %v6398
  %v6768 = vunpack.c.l.b16 %v6399
  %v6769 = vunpack.c.h.b16 %v6399
  %v6770 = vunpack.c.l.b16 %v6400
  %v6771 = vunpack.c.h.b16 %v6400
  %v6772 = vunpack.c.l.b16 %v6401
  %v6773 = vunpack.c.h.b16 %v6401
  %v6774 = vunpack.c.l.b16 %v6402
  %v6775 = vunpack.c.h.b16 %v6402
  %v6776 = vunpack.c.l.b16 %v6403
  %v6777 = vunpack.c.h.b16 %v6403
  %v6778 = vunpack.c.l.b16 %v6404
  %v6779 = vunpack.c.h.b16 %v6404
  %v6780 = vunpack.c.l.b16 %v6405
  %v6781 = vunpack.c.h.b16 %v6405
  %v6782 = vunpack.c.l.b16 %v6406
  %v6783 = vunpack.c.h.b16 %v6406
  %v6784 = vunpack.c.l.b16 %v6407
  %v6785 = vunpack.c.h.b16 %v6407
  %v6786 = vunpack.c.l.b16 %v6408
  %v6787 = vunpack.c.h.b16 %v6408
  %v6788 = vunpack.c.l.b16 %v6409
  %v6789 = vunpack.c.h.b16 %v6409
  %v6790 = vunpack.c.l.b16 %v6410
  %v6791 = vunpack.c.h.b16 %v6410
  %v6792 = vunpack.c.l.b16 %v6411
  %v6793 = vunpack.c.h.b16 %v6411
  %v6794 = vunpack.c.l.b16 %v6412
  %v6795 = vunpack.c.h.b16 %v6412
  %v6796 = vunpack.c.l.b16 %v6413
  %v6797 = vunpack.c.h.b16 %v6413
  %v6798 = vunpack.c.l.b16 %v6414
  %v6799 = vunpack.c.h.b16 %v6414
  %v6800 = vunpack.c.l.b16 %v6415
  %v6801 = vunpack.c.h.b16 %v6415
  %v6802 = vpack.c.b16 %v6578, %v6546
  %v6803 = vpack.c.b16 %v6579, %v6547
  %v6804 = vpack.c.b16 %v6580, %v6548
  %v6805 = vpack.c.b16 %v6581, %v6549
  %v6806 = vpack.c.b16 %v6582, %v6550
  %v6807 = vpack.c.b16 %v6583, %v6551
  %v6808 = vpack.c.b16 %v6584, %v6552
  %v6809 = vpack.c.b16 %v6585, %v6553
  %v6810 = vpack.c.b16 %v6586, %v6554
  %v6811 = vpack.c.b16 %v6587, %v6555
  %v6812 = vpack.c.b16 %v6588, %v6556
  %v6813 = vpack.c.b16 %v6589, %v6557
  %v6814 = vpack.c.b16 %v6590, %v6558
  %v6815 = vpack.c.b16 %v6591, %v6559
  %v6816 = vpack.c.b16 %v6592, %v6560
  %v6817 = vpack.c.b16 %v6593, %v6561
  %v6818 = vpack.c.b16 %v6594, %v6562
  %v6819 = vpack.c.b16 %v6595, %v6563
  %v6820 = vpack.c.b16 %v6596, %v6564
  %v6821 = vpack.c.b16 %v6597, %v6565
  %v6822 = vpack.c.b16 %v6598, %v6566
  %v6823 = vpack.c.b16 %v6599, %v6567
  %v6824 = vpack.c.b16 %v6600, %v6568
  %v6825 = vpack.c.b16 %v6601, %v6569
  %v6826 = vpack.c.b16 %v6602, %v6570
  %v6827 = vpack.c.b16 %v6603, %v6571
  %v6828 = vpack.c.b16 %v6604, %v6572
  %v6829 = vpack.c.b16 %v6605, %v6573
  %v6830 = vpack.c.b16 %v6606, %v6574
  %v6831 = vpack.c.b16 %v6607, %v6575
  %v6832 = vpack.c.b16 %v6608, %v6576
  %v6833 = vpack.c.b16 %v6609, %v6577
  %v6834 = vpack.c.b16 %v6642, %v6610
  %v6835 = vpack.c.b16 %v6643, %v6611
  %v6836 = vpack.c.b16 %v6644, %v6612
  %v6837 = vpack.c.b16 %v6645, %v6613
  %v6838 = vpack.c.b16 %v6646, %v6614
  %v6839 = vpack.c.b16 %v6647, %v6615
  %v6840 = vpack.c.b16 %v6648, %v6616
  %v6841 = vpack.c.b16 %v6649, %v6617
  %v6842 = vpack.c.b16 %v6650, %v6618
  %v6843 = vpack.c.b16 %v6651, %v6619
  %v6844 = vpack.c.b16 %v6652, %v6620
  %v6845 = vpack.c.b16 %v6653, %v6621
  %v6846 = vpack.c.b16 %v6654, %v6622
  %v6847 = vpack.c.b16 %v6655, %v6623
  %v6848 = vpack.c.b16 %v6656, %v6624
  %v6849 = vpack.c.b16 %v6657, %v6625
  %v6850 = vpack.c.b16 %v6658, %v6626
  %v6851 = vpack.c.b16 %v6659, %v6627
  %v6852 = vpack.c.b16 %v6660, %v6628
  %v6853 = vpack.c.b16 %v6661, %v6629
  %v6854 = vpack.c.b16 %v6662, %v6630
  %v6855 = vpack.c.b16 %v6663, %v6631
  %v6856 = vpack.c.b16 %v6664, %v6632
  %v6857 = vpack.c.b16 %v6665, %v6633
  %v6858 = vpack.c.b16 %v6666, %v6634
  %v6859 = vpack.c.b16 %v6667, %v6635
  %v6860 = vpack.c.b16 %v6668, %v6636
  %v6861 = vpack.c.b16 %v6669, %v6637
  %v6862 = vpack.c.b16 %v6670, %v6638
  %v6863 = vpack.c.b16 %v6671, %v6639
  %v6864 = vpack.c.b16 %v6672, %v6640
  %v6865 = vpack.c.b16 %v6673, %v6641
  %v6866 = vpack.c.b16 %v6706, %v6674
  %v6867 = vpack.c.b16 %v6707, %v6675
  %v6868 = vpack.c.b16 %v6708, %v6676
  %v6869 = vpack.c.b16 %v6709, %v6677
  %v6870 = vpack.c.b16 %v6710, %v6678
  %v6871 = vpack.c.b16 %v6711, %v6679
  %v6872 = vpack.c.b16 %v6712, %v6680
  %v6873 = vpack.c.b16 %v6713, %v6681
  %v6874 = vpack.c.b16 %v6714, %v6682
  %v6875 = vpack.c.b16 %v6715, %v6683
  %v6876 = vpack.c.b16 %v6716, %v6684
  %v6877 = vpack.c.b16 %v6717, %v6685
  %v6878 = vpack.c.b16 %v6718, %v6686
  %v6879 = vpack.c.b16 %v6719, %v6687
  %v6880 = vpack.c.b16 %v6720, %v6688
  %v6881 = vpack.c.b16 %v6721, %v6689
  %v6882 = vpack.c.b16 %v6722, %v6690
  %v6883 = vpack.c.b16 %v6723, %v6691
  %v6884 = vpack.c.b16 %v6724, %v6692
  %v6885 = vpack.c.b16 %v6725, %v6693
  %v6886 = vpack.c.b16 %v6726, %v6694
  %v6887 = vpack.c.b16 %v6727, %v6695
  %v6888 = vpack.c.b16 %v6728, %v6696
  %v6889 = vpack.c.b16 %v6729, %v6697
  %v6890 = vpack.c.b16 %v6730, %v6698
  %v6891 = vpack.c.b16 %v6731, %v6699
  %v6892 = vpack.c.b16 %v6732, %v6700
  %v6893 = vpack.c.b16 %v6733, %v6701
  %v6894 = vpack.c.b16 %v6734, %v6702
  %v6895 = vpack.c.b16 %v6735, %v6703
  %v6896 = vpack.c.b16 %v6736, %v6704
  %v6897 = vpack.c.b16 %v6737, %v6705
  %v6898 = vpack.c.b16 %v6770, %v6738
  %v6899 = vpack.c.b16 %v6771, %v6739
  %v6900 = vpack.c.b16 %v6772, %v6740
  %v6901 = vpack.c.b16 %v6773, %v6741
  %v6902 = vpack.c.b16 %v6774, %v6742
  %v6903 = vpack.c.b16 %v6775, %v6743
  %v6904 = vpack.c.b16 %v6776, %v6744
  %v6905 = vpack.c.b16 %v6777, %v6745
  %v6906 = vpack.c.b16 %v6778, %v6746
  %v6907 = vpack.c.b16 %v6779, %v6747
  %v6908 = vpack.c.b16 %v6780, %v6748
  %v6909 = vpack.c.b16 %v6781, %v6749
  %v6910 = vpack.c.b16 %v6782, %v6750
  %v6911 = vpack.c.b16 %v6783, %v6751
  %v6912 = vpack.c.b16 %v6784, %v6752
  %v6913 = vpack.c.b16 %v6785, %v6753
  %v6914 = vpack.c.b16 %v6786, %v6754
  %v6915 = vpack.c.b16 %v6787, %v6755
  %v6916 = vpack.c.b16 %v6788, %v6756
  %v6917 = vpack.c.b16 %v6789, %v6757
  %v6918 = vpack.c.b16 %v6790, %v6758
  %v6919 = vpack.c.b16 %v6791, %v6759
  %v6920 = vpack.c.b16 %v6792, %v6760
  %v6921 = vpack.c.b16 %v6793, %v6761
  %v6922 = vpack.c.b16 %v6794, %v6762
  %v6923 = vpack.c.b16 %v6795, %v6763
  %v6924 = vpack.c.b16 %v6796, %v6764
  %v6925 = vpack.c.b16 %v6797, %v6765
  %v6926 = vpack.c.b16 %v6798, %v6766
  %v6927 = vpack.c.b16 %v6799, %v6767
  %v6928 = vpack.c.b16 %v6800, %v6768
  %v6929 = vpack.c.b16 %v6801, %v6769
  %v7059 = vsel %vm64, %v6416, 0
  %v7062 = vsel %vm64, %v6417, 0
  %7064 = vmatprep.subr.bf16.mxu0 %v6803
  %7065 = vmatpush1.bf16.msra.mxu0 %v6802
  %7066 = vmatprep.subr.bf16.mxu0 %v6835
  %7067 = vmatpush1.bf16.msra.mxu0 %v6834
  %7068 = vmatprep.subr.bf16.mxu0 %v6867
  %7069 = vmatpush1.bf16.msra.mxu0 %v6866
  %7070 = vmatprep.subr.bf16.mxu0 %v6899
  %7071 = vmatpush1.bf16.msra.mxu0 %v6898
  %7072 = vmatprep.subr.bf16.mxu0 0
  %7073 = vmatpush1.bf16.msra.mxu0 0
  %7074 = vmatprep.subr.bf16.mxu0 0
  %7075 = vmatpush1.bf16.msra.mxu0 0
  %7076 = vmatprep.subr.bf16.mxu0 0
  %7077 = vmatpush1.bf16.msra.mxu0 0
  %7078 = vmatprep.subr.bf16.mxu0 0
  %7079 = vmatpush1.bf16.msra.mxu0 0
  %7080 = vmatprep.subr.bf16.mxu0 0
  %7081 = vmatpush1.bf16.msra.mxu0 0
  %7082 = vmatprep.subr.bf16.mxu0 0
  %7083 = vmatpush1.bf16.msra.mxu0 0
  %7084 = vmatprep.subr.bf16.mxu0 0
  %7085 = vmatpush1.bf16.msra.mxu0 0
  %7086 = vmatprep.subr.bf16.mxu0 0
  %7087 = vmatpush1.bf16.msra.mxu0 0
  %7088 = vmatprep.subr.bf16.mxu0 0
  %7089 = vmatpush1.bf16.msra.mxu0 0
  %7090 = vmatprep.subr.bf16.mxu0 0
  %7091 = vmatpush1.bf16.msra.mxu0 0
  %7092 = vmatprep.subr.bf16.mxu0 0
  %7093 = vmatpush1.bf16.msra.mxu0 0
  %7094 = vmatprep.subr.bf16.mxu0 0
  %7095 = vmatpush1.bf16.msra.mxu0 0
  %7096 = vmatprep.mubr.bf16.mxu0 0
  %7097 = vmatmul.mubr.bf16.gmra.mrb[0].mxu0 %v7059
  %v7098 = vpop.f32.mrb[0].mxu0
  %v7099 = vadd.f32 0.0, %v7098
  %v7100 = vpop.f32.mrb[0].mxu0
  %v7101 = vadd.f32 0.0, %v7100
  %v7102 = vpop.f32.mrb[0].mxu0
  %v7103 = vadd.f32 0.0, %v7102
  %v7104 = vpop.f32.mrb[0].mxu0
  %v7105 = vadd.f32 0.0, %v7104
  %7106 = vmatprep.mubr.bf16.mxu0 0
  %7107 = vmatmul.mubr.bf16.gmra.mrb[0].mxu0 %v7062
  %v7108 = vpop.f32.mrb[0].mxu0
  %v7109 = vadd.f32 0.0, %v7108
  %v7110 = vpop.f32.mrb[0].mxu0
  %v7111 = vadd.f32 0.0, %v7110
  %v7112 = vpop.f32.mrb[0].mxu0
  %v7113 = vadd.f32 0.0, %v7112
  %v7114 = vpop.f32.mrb[0].mxu0
  %v7115 = vadd.f32 0.0, %v7114
  %7116 = vdwg.mxu0
  %7117 = vmatprep.subr.bf16.mxu0 %v6805
  %7118 = vmatpush1.bf16.msra.mxu0 %v6804
  %7119 = vmatprep.subr.bf16.mxu0 %v6837
  %7120 = vmatpush1.bf16.msra.mxu0 %v6836
  %7121 = vmatprep.subr.bf16.mxu0 %v6869
  %7122 = vmatpush1.bf16.msra.mxu0 %v6868
  %7123 = vmatprep.subr.bf16.mxu0 %v6901
  %7124 = vmatpush1.bf16.msra.mxu0 %v6900
  %7125 = vmatprep.subr.bf16.mxu0 0
  %7126 = vmatpush1.bf16.msra.mxu0 0
  %7127 = vmatprep.subr.bf16.mxu0 0
  %7128 = vmatpush1.bf16.msra.mxu0 0
  %7129 = vmatprep.subr.bf16.mxu0 0
  %7130 = vmatpush1.bf16.msra.mxu0 0
  %7131 = vmatprep.subr.bf16.mxu0 0
  %7132 = vmatpush1.bf16.msra.mxu0 0
  %7133 = vmatprep.subr.bf16.mxu0 0
  %7134 = vmatpush1.bf16.msra.mxu0 0
  %7135 = vmatprep.subr.bf16.mxu0 0
  %7136 = vmatpush1.bf16.msra.mxu0 0
  %7137 = vmatprep.subr.bf16.mxu0 0
  %7138 = vmatpush1.bf16.msra.mxu0 0
  %7139 = vmatprep.subr.bf16.mxu0 0
  %7140 = vmatpush1.bf16.msra.mxu0 0
  %7141 = vmatprep.subr.bf16.mxu0 0
  %7142 = vmatpush1.bf16.msra.mxu0 0
  %7143 = vmatprep.subr.bf16.mxu0 0
  %7144 = vmatpush1.bf16.msra.mxu0 0
  %7145 = vmatprep.subr.bf16.mxu0 0
  %7146 = vmatpush1.bf16.msra.mxu0 0
  %7147 = vmatprep.subr.bf16.mxu0 0
  %7148 = vmatpush1.bf16.msra.mxu0 0
  %7149 = vmatprep.mubr.bf16.mxu0 0
  %7150 = vmatmul.mubr.bf16.gmra.mrb[0].mxu0 %v7059
  %v7151 = vpop.f32.mrb[0].mxu0
  %v7152 = vadd.f32 0.0, %v7151
  %v7153 = vpop.f32.mrb[0].mxu0
  %v7154 = vadd.f32 0.0, %v7153
  %v7155 = vpop.f32.mrb[0].mxu0
  %v7156 = vadd.f32 0.0, %v7155
  %v7157 = vpop.f32.mrb[0].mxu0
  %v7158 = vadd.f32 0.0, %v7157
  %7159 = vmatprep.mubr.bf16.mxu0 0
  %7160 = vmatmul.mubr.bf16.gmra.mrb[0].mxu0 %v7062
  %v7161 = vpop.f32.mrb[0].mxu0
  %v7162 = vadd.f32 0.0, %v7161
  %v7163 = vpop.f32.mrb[0].mxu0
  %v7164 = vadd.f32 0.0, %v7163
  %v7165 = vpop.f32.mrb[0].mxu0
  %v7166 = vadd.f32 0.0, %v7165
  %v7167 = vpop.f32.mrb[0].mxu0
  %v7168 = vadd.f32 0.0, %v7167
  %7169 = vdwg.mxu0
  %7170 = vmatprep.subr.bf16.mxu0 %v6807
  %7171 = vmatpush1.bf16.msra.mxu0 %v6806
  %7172 = vmatprep.subr.bf16.mxu0 %v6839
  %7173 = vmatpush1.bf16.msra.mxu0 %v6838
  %7174 = vmatprep.subr.bf16.mxu0 %v6871
  %7175 = vmatpush1.bf16.msra.mxu0 %v6870
  %7176 = vmatprep.subr.bf16.mxu0 %v6903
  %7177 = vmatpush1.bf16.msra.mxu0 %v6902
  %7178 = vmatprep.subr.bf16.mxu0 0
  %7179 = vmatpush1.bf16.msra.mxu0 0
  %7180 = vmatprep.subr.bf16.mxu0 0
  %7181 = vmatpush1.bf16.msra.mxu0 0
  %7182 = vmatprep.subr.bf16.mxu0 0
  %7183 = vmatpush1.bf16.msra.mxu0 0
  %7184 = vmatprep.subr.bf16.mxu0 0
  %7185 = vmatpush1.bf16.msra.mxu0 0
  %7186 = vmatprep.subr.bf16.mxu0 0
  %7187 = vmatpush1.bf16.msra.mxu0 0
  %7188 = vmatprep.subr.bf16.mxu0 0
  %7189 = vmatpush1.bf16.msra.mxu0 0
  %7190 = vmatprep.subr.bf16.mxu0 0
  %7191 = vmatpush1.bf16.msra.mxu0 0
  %7192 = vmatprep.subr.bf16.mxu0 0
  %7193 = vmatpush1.bf16.msra.mxu0 0
  %7194 = vmatprep.subr.bf16.mxu0 0
  %7195 = vmatpush1.bf16.msra.mxu0 0
  %7196 = vmatprep.subr.bf16.mxu0 0
  %7197 = vmatpush1.bf16.msra.mxu0 0
  %7198 = vmatprep.subr.bf16.mxu0 0
  %7199 = vmatpush1.bf16.msra.mxu0 0
  %7200 = vmatprep.subr.bf16.mxu0 0
  %7201 = vmatpush1.bf16.msra.mxu0 0
  %7202 = vmatprep.mubr.bf16.mxu0 0
  %7203 = vmatmul.mubr.bf16.gmra.mrb[0].mxu0 %v7059
  %v7204 = vpop.f32.mrb[0].mxu0
  %v7205 = vadd.f32 0.0, %v7204
  %v7206 = vpop.f32.mrb[0].mxu0
  %v7207 = vadd.f32 0.0, %v7206
  %v7208 = vpop.f32.mrb[0].mxu0
  %v7209 = vadd.f32 0.0, %v7208
  %v7210 = vpop.f32.mrb[0].mxu0
  %v7211 = vadd.f32 0.0, %v7210
  %7212 = vmatprep.mubr.bf16.mxu0 0
  %7213 = vmatmul.mubr.bf16.gmra.mrb[0].mxu0 %v7062
  %v7214 = vpop.f32.mrb[0].mxu0
  %v7215 = vadd.f32 0.0, %v7214
  %v7216 = vpop.f32.mrb[0].mxu0
  %v7217 = vadd.f32 0.0, %v7216
  %v7218 = vpop.f32.mrb[0].mxu0
  %v7219 = vadd.f32 0.0, %v7218
  %v7220 = vpop.f32.mrb[0].mxu0
  %v7221 = vadd.f32 0.0, %v7220
  %7222 = vdwg.mxu0
  %7223 = vmatprep.subr.bf16.mxu0 %v6809
  %7224 = vmatpush1.bf16.msra.mxu0 %v6808
  %7225 = vmatprep.subr.bf16.mxu0 %v6841
  %7226 = vmatpush1.bf16.msra.mxu0 %v6840
  %7227 = vmatprep.subr.bf16.mxu0 %v6873
  %7228 = vmatpush1.bf16.msra.mxu0 %v6872
  %7229 = vmatprep.subr.bf16.mxu0 %v6905
  %7230 = vmatpush1.bf16.msra.mxu0 %v6904
  %7231 = vmatprep.subr.bf16.mxu0 0
  %7232 = vmatpush1.bf16.msra.mxu0 0
  %7233 = vmatprep.subr.bf16.mxu0 0
  %7234 = vmatpush1.bf16.msra.mxu0 0
  %7235 = vmatprep.subr.bf16.mxu0 0
  %7236 = vmatpush1.bf16.msra.mxu0 0
  %7237 = vmatprep.subr.bf16.mxu0 0
  %7238 = vmatpush1.bf16.msra.mxu0 0
  %7239 = vmatprep.subr.bf16.mxu0 0
  %7240 = vmatpush1.bf16.msra.mxu0 0
  %7241 = vmatprep.subr.bf16.mxu0 0
  %7242 = vmatpush1.bf16.msra.mxu0 0
  %7243 = vmatprep.subr.bf16.mxu0 0
  %7244 = vmatpush1.bf16.msra.mxu0 0
  %7245 = vmatprep.subr.bf16.mxu0 0
  %7246 = vmatpush1.bf16.msra.mxu0 0
  %7247 = vmatprep.subr.bf16.mxu0 0
  %7248 = vmatpush1.bf16.msra.mxu0 0
  %7249 = vmatprep.subr.bf16.mxu0 0
  %7250 = vmatpush1.bf16.msra.mxu0 0
  %7251 = vmatprep.subr.bf16.mxu0 0
  %7252 = vmatpush1.bf16.msra.mxu0 0
  %7253 = vmatprep.subr.bf16.mxu0 0
  %7254 = vmatpush1.bf16.msra.mxu0 0
  %7255 = vmatprep.mubr.bf16.mxu0 0
  %7256 = vmatmul.mubr.bf16.gmra.mrb[0].mxu0 %v7059
  %v7257 = vpop.f32.mrb[0].mxu0
  %v7258 = vadd.f32 0.0, %v7257
  %v7259 = vpop.f32.mrb[0].mxu0
  %v7260 = vadd.f32 0.0, %v7259
  %v7261 = vpop.f32.mrb[0].mxu0
  %v7262 = vadd.f32 0.0, %v7261
  %v7263 = vpop.f32.mrb[0].mxu0
  %v7264 = vadd.f32 0.0, %v7263
  %7265 = vmatprep.mubr.bf16.mxu0 0
  %7266 = vmatmul.mubr.bf16.gmra.mrb[0].mxu0 %v7062
  %v7267 = vpop.f32.mrb[0].mxu0
  %v7268 = vadd.f32 0.0, %v7267
  %v7269 = vpop.f32.mrb[0].mxu0
  %v7270 = vadd.f32 0.0, %v7269
  %v7271 = vpop.f32.mrb[0].mxu0
  %v7272 = vadd.f32 0.0, %v7271
  %v7273 = vpop.f32.mrb[0].mxu0
  %v7274 = vadd.f32 0.0, %v7273
  %7275 = vdwg.mxu0
  %7276 = vmatprep.subr.bf16.mxu0 %v6811
  %7277 = vmatpush1.bf16.msra.mxu0 %v6810
  %7278 = vmatprep.subr.bf16.mxu0 %v6843
  %7279 = vmatpush1.bf16.msra.mxu0 %v6842
  %7280 = vmatprep.subr.bf16.mxu0 %v6875
  %7281 = vmatpush1.bf16.msra.mxu0 %v6874
  %7282 = vmatprep.subr.bf16.mxu0 %v6907
  %7283 = vmatpush1.bf16.msra.mxu0 %v6906
  %7284 = vmatprep.subr.bf16.mxu0 0
  %7285 = vmatpush1.bf16.msra.mxu0 0
  %7286 = vmatprep.subr.bf16.mxu0 0
  %7287 = vmatpush1.bf16.msra.mxu0 0
  %7288 = vmatprep.subr.bf16.mxu0 0
  %7289 = vmatpush1.bf16.msra.mxu0 0
  %7290 = vmatprep.subr.bf16.mxu0 0
  %7291 = vmatpush1.bf16.msra.mxu0 0
  %7292 = vmatprep.subr.bf16.mxu0 0
  %7293 = vmatpush1.bf16.msra.mxu0 0
  %7294 = vmatprep.subr.bf16.mxu0 0
  %7295 = vmatpush1.bf16.msra.mxu0 0
  %7296 = vmatprep.subr.bf16.mxu0 0
  %7297 = vmatpush1.bf16.msra.mxu0 0
  %7298 = vmatprep.subr.bf16.mxu0 0
  %7299 = vmatpush1.bf16.msra.mxu0 0
  %7300 = vmatprep.subr.bf16.mxu0 0
  %7301 = vmatpush1.bf16.msra.mxu0 0
  %7302 = vmatprep.subr.bf16.mxu0 0
  %7303 = vmatpush1.bf16.msra.mxu0 0
  %7304 = vmatprep.subr.bf16.mxu0 0
  %7305 = vmatpush1.bf16.msra.mxu0 0
  %7306 = vmatprep.subr.bf16.mxu0 0
  %7307 = vmatpush1.bf16.msra.mxu0 0
  %7308 = vmatprep.mubr.bf16.mxu0 0
  %7309 = vmatmul.mubr.bf16.gmra.mrb[0].mxu0 %v7059
  %v7310 = vpop.f32.mrb[0].mxu0
  %v7311 = vadd.f32 0.0, %v7310
  %v7312 = vpop.f32.mrb[0].mxu0
  %v7313 = vadd.f32 0.0, %v7312
  %v7314 = vpop.f32.mrb[0].mxu0
  %v7315 = vadd.f32 0.0, %v7314
  %v7316 = vpop.f32.mrb[0].mxu0
  %v7317 = vadd.f32 0.0, %v7316
  %7318 = vmatprep.mubr.bf16.mxu0 0
  %7319 = vmatmul.mubr.bf16.gmra.mrb[0].mxu0 %v7062
  %v7320 = vpop.f32.mrb[0].mxu0
  %v7321 = vadd.f32 0.0, %v7320
  %v7322 = vpop.f32.mrb[0].mxu0
  %v7323 = vadd.f32 0.0, %v7322
  %v7324 = vpop.f32.mrb[0].mxu0
  %v7325 = vadd.f32 0.0, %v7324
  %v7326 = vpop.f32.mrb[0].mxu0
  %v7327 = vadd.f32 0.0, %v7326
  %7328 = vdwg.mxu0
  %7329 = vmatprep.subr.bf16.mxu0 %v6813
  %7330 = vmatpush1.bf16.msra.mxu0 %v6812
  %7331 = vmatprep.subr.bf16.mxu0 %v6845
  %7332 = vmatpush1.bf16.msra.mxu0 %v6844
  %7333 = vmatprep.subr.bf16.mxu0 %v6877
  %7334 = vmatpush1.bf16.msra.mxu0 %v6876
  %7335 = vmatprep.subr.bf16.mxu0 %v6909
  %7336 = vmatpush1.bf16.msra.mxu0 %v6908
  %7337 = vmatprep.subr.bf16.mxu0 0
  %7338 = vmatpush1.bf16.msra.mxu0 0
  %7339 = vmatprep.subr.bf16.mxu0 0
  %7340 = vmatpush1.bf16.msra.mxu0 0
  %7341 = vmatprep.subr.bf16.mxu0 0
  %7342 = vmatpush1.bf16.msra.mxu0 0
  %7343 = vmatprep.subr.bf16.mxu0 0
  %7344 = vmatpush1.bf16.msra.mxu0 0
  %7345 = vmatprep.subr.bf16.mxu0 0
  %7346 = vmatpush1.bf16.msra.mxu0 0
  %7347 = vmatprep.subr.bf16.mxu0 0
  %7348 = vmatpush1.bf16.msra.mxu0 0
  %7349 = vmatprep.subr.bf16.mxu0 0
  %7350 = vmatpush1.bf16.msra.mxu0 0
  %7351 = vmatprep.subr.bf16.mxu0 0
  %7352 = vmatpush1.bf16.msra.mxu0 0
  %7353 = vmatprep.subr.bf16.mxu0 0
  %7354 = vmatpush1.bf16.msra.mxu0 0
  %7355 = vmatprep.subr.bf16.mxu0 0
  %7356 = vmatpush1.bf16.msra.mxu0 0
  %7357 = vmatprep.subr.bf16.mxu0 0
  %7358 = vmatpush1.bf16.msra.mxu0 0
  %7359 = vmatprep.subr.bf16.mxu0 0
  %7360 = vmatpush1.bf16.msra.mxu0 0
  %7361 = vmatprep.mubr.bf16.mxu0 0
  %7362 = vmatmul.mubr.bf16.gmra.mrb[0].mxu0 %v7059
  %v7363 = vpop.f32.mrb[0].mxu0
  %v7364 = vadd.f32 0.0, %v7363
  %v7365 = vpop.f32.mrb[0].mxu0
  %v7366 = vadd.f32 0.0, %v7365
  %v7367 = vpop.f32.mrb[0].mxu0
  %v7368 = vadd.f32 0.0, %v7367
  %v7369 = vpop.f32.mrb[0].mxu0
  %v7370 = vadd.f32 0.0, %v7369
  %7371 = vmatprep.mubr.bf16.mxu0 0
  %7372 = vmatmul.mubr.bf16.gmra.mrb[0].mxu0 %v7062
  %v7373 = vpop.f32.mrb[0].mxu0
  %v7374 = vadd.f32 0.0, %v7373
  %v7375 = vpop.f32.mrb[0].mxu0
  %v7376 = vadd.f32 0.0, %v7375
  %v7377 = vpop.f32.mrb[0].mxu0
  %v7378 = vadd.f32 0.0, %v7377
  %v7379 = vpop.f32.mrb[0].mxu0
  %v7380 = vadd.f32 0.0, %v7379
  %7381 = vdwg.mxu0
  %7382 = vmatprep.subr.bf16.mxu0 %v6815
  %7383 = vmatpush1.bf16.msra.mxu0 %v6814
  %7384 = vmatprep.subr.bf16.mxu0 %v6847
  %7385 = vmatpush1.bf16.msra.mxu0 %v6846
  %7386 = vmatprep.subr.bf16.mxu0 %v6879
  %7387 = vmatpush1.bf16.msra.mxu0 %v6878
  %7388 = vmatprep.subr.bf16.mxu0 %v6911
  %7389 = vmatpush1.bf16.msra.mxu0 %v6910
  %7390 = vmatprep.subr.bf16.mxu0 0
  %7391 = vmatpush1.bf16.msra.mxu0 0
  %7392 = vmatprep.subr.bf16.mxu0 0
  %7393 = vmatpush1.bf16.msra.mxu0 0
  %7394 = vmatprep.subr.bf16.mxu0 0
  %7395 = vmatpush1.bf16.msra.mxu0 0
  %7396 = vmatprep.subr.bf16.mxu0 0
  %7397 = vmatpush1.bf16.msra.mxu0 0
  %7398 = vmatprep.subr.bf16.mxu0 0
  %7399 = vmatpush1.bf16.msra.mxu0 0
  %7400 = vmatprep.subr.bf16.mxu0 0
  %7401 = vmatpush1.bf16.msra.mxu0 0
  %7402 = vmatprep.subr.bf16.mxu0 0
  %7403 = vmatpush1.bf16.msra.mxu0 0
  %7404 = vmatprep.subr.bf16.mxu0 0
  %7405 = vmatpush1.bf16.msra.mxu0 0
  %7406 = vmatprep.subr.bf16.mxu0 0
  %7407 = vmatpush1.bf16.msra.mxu0 0
  %7408 = vmatprep.subr.bf16.mxu0 0
  %7409 = vmatpush1.bf16.msra.mxu0 0
  %7410 = vmatprep.subr.bf16.mxu0 0
  %7411 = vmatpush1.bf16.msra.mxu0 0
  %7412 = vmatprep.subr.bf16.mxu0 0
  %7413 = vmatpush1.bf16.msra.mxu0 0
  %7414 = vmatprep.mubr.bf16.mxu0 0
  %7415 = vmatmul.mubr.bf16.gmra.mrb[0].mxu0 %v7059
  %v7416 = vpop.f32.mrb[0].mxu0
  %v7417 = vadd.f32 0.0, %v7416
  %v7418 = vpop.f32.mrb[0].mxu0
  %v7419 = vadd.f32 0.0, %v7418
  %v7420 = vpop.f32.mrb[0].mxu0
  %v7421 = vadd.f32 0.0, %v7420
  %v7422 = vpop.f32.mrb[0].mxu0
  %v7423 = vadd.f32 0.0, %v7422
  %7424 = vmatprep.mubr.bf16.mxu0 0
  %7425 = vmatmul.mubr.bf16.gmra.mrb[0].mxu0 %v7062
  %v7426 = vpop.f32.mrb[0].mxu0
  %v7427 = vadd.f32 0.0, %v7426
  %v7428 = vpop.f32.mrb[0].mxu0
  %v7429 = vadd.f32 0.0, %v7428
  %v7430 = vpop.f32.mrb[0].mxu0
  %v7431 = vadd.f32 0.0, %v7430
  %v7432 = vpop.f32.mrb[0].mxu0
  %v7433 = vadd.f32 0.0, %v7432
  %7434 = vdwg.mxu0
  %7435 = vmatprep.subr.bf16.mxu0 %v6817
  %7436 = vmatpush1.bf16.msra.mxu0 %v6816
  %7437 = vmatprep.subr.bf16.mxu0 %v6849
  %7438 = vmatpush1.bf16.msra.mxu0 %v6848
  %7439 = vmatprep.subr.bf16.mxu0 %v6881
  %7440 = vmatpush1.bf16.msra.mxu0 %v6880
  %7441 = vmatprep.subr.bf16.mxu0 %v6913
  %7442 = vmatpush1.bf16.msra.mxu0 %v6912
  %7443 = vmatprep.subr.bf16.mxu0 0
  %7444 = vmatpush1.bf16.msra.mxu0 0
  %7445 = vmatprep.subr.bf16.mxu0 0
  %7446 = vmatpush1.bf16.msra.mxu0 0
  %7447 = vmatprep.subr.bf16.mxu0 0
  %7448 = vmatpush1.bf16.msra.mxu0 0
  %7449 = vmatprep.subr.bf16.mxu0 0
  %7450 = vmatpush1.bf16.msra.mxu0 0
  %7451 = vmatprep.subr.bf16.mxu0 0
  %7452 = vmatpush1.bf16.msra.mxu0 0
  %7453 = vmatprep.subr.bf16.mxu0 0
  %7454 = vmatpush1.bf16.msra.mxu0 0
  %7455 = vmatprep.subr.bf16.mxu0 0
  %7456 = vmatpush1.bf16.msra.mxu0 0
  %7457 = vmatprep.subr.bf16.mxu0 0
  %7458 = vmatpush1.bf16.msra.mxu0 0
  %7459 = vmatprep.subr.bf16.mxu0 0
  %7460 = vmatpush1.bf16.msra.mxu0 0
  %7461 = vmatprep.subr.bf16.mxu0 0
  %7462 = vmatpush1.bf16.msra.mxu0 0
  %7463 = vmatprep.subr.bf16.mxu0 0
  %7464 = vmatpush1.bf16.msra.mxu0 0
  %7465 = vmatprep.subr.bf16.mxu0 0
  %7466 = vmatpush1.bf16.msra.mxu0 0
  %7467 = vmatprep.mubr.bf16.mxu0 0
  %7468 = vmatmul.mubr.bf16.gmra.mrb[0].mxu0 %v7059
  %v7469 = vpop.f32.mrb[0].mxu0
  %v7470 = vadd.f32 0.0, %v7469
  %v7471 = vpop.f32.mrb[0].mxu0
  %v7472 = vadd.f32 0.0, %v7471
  %v7473 = vpop.f32.mrb[0].mxu0
  %v7474 = vadd.f32 0.0, %v7473
  %v7475 = vpop.f32.mrb[0].mxu0
  %v7476 = vadd.f32 0.0, %v7475
  %7477 = vmatprep.mubr.bf16.mxu0 0
  %7478 = vmatmul.mubr.bf16.gmra.mrb[0].mxu0 %v7062
  %v7479 = vpop.f32.mrb[0].mxu0
  %v7480 = vadd.f32 0.0, %v7479
  %v7481 = vpop.f32.mrb[0].mxu0
  %v7482 = vadd.f32 0.0, %v7481
  %v7483 = vpop.f32.mrb[0].mxu0
  %v7484 = vadd.f32 0.0, %v7483
  %v7485 = vpop.f32.mrb[0].mxu0
  %v7486 = vadd.f32 0.0, %v7485
  %7487 = vdwg.mxu0
  %7488 = vmatprep.subr.bf16.mxu0 %v6819
  %7489 = vmatpush1.bf16.msra.mxu0 %v6818
  %7490 = vmatprep.subr.bf16.mxu0 %v6851
  %7491 = vmatpush1.bf16.msra.mxu0 %v6850
  %7492 = vmatprep.subr.bf16.mxu0 %v6883
  %7493 = vmatpush1.bf16.msra.mxu0 %v6882
  %7494 = vmatprep.subr.bf16.mxu0 %v6915
  %7495 = vmatpush1.bf16.msra.mxu0 %v6914
  %7496 = vmatprep.subr.bf16.mxu0 0
  %7497 = vmatpush1.bf16.msra.mxu0 0
  %7498 = vmatprep.subr.bf16.mxu0 0
  %7499 = vmatpush1.bf16.msra.mxu0 0
  %7500 = vmatprep.subr.bf16.mxu0 0
  %7501 = vmatpush1.bf16.msra.mxu0 0
  %7502 = vmatprep.subr.bf16.mxu0 0
  %7503 = vmatpush1.bf16.msra.mxu0 0
  %7504 = vmatprep.subr.bf16.mxu0 0
  %7505 = vmatpush1.bf16.msra.mxu0 0
  %7506 = vmatprep.subr.bf16.mxu0 0
  %7507 = vmatpush1.bf16.msra.mxu0 0
  %7508 = vmatprep.subr.bf16.mxu0 0
  %7509 = vmatpush1.bf16.msra.mxu0 0
  %7510 = vmatprep.subr.bf16.mxu0 0
  %7511 = vmatpush1.bf16.msra.mxu0 0
  %7512 = vmatprep.subr.bf16.mxu0 0
  %7513 = vmatpush1.bf16.msra.mxu0 0
  %7514 = vmatprep.subr.bf16.mxu0 0
  %7515 = vmatpush1.bf16.msra.mxu0 0
  %7516 = vmatprep.subr.bf16.mxu0 0
  %7517 = vmatpush1.bf16.msra.mxu0 0
  %7518 = vmatprep.subr.bf16.mxu0 0
  %7519 = vmatpush1.bf16.msra.mxu0 0
  %7520 = vmatprep.mubr.bf16.mxu0 0
  %7521 = vmatmul.mubr.bf16.gmra.mrb[0].mxu0 %v7059
  %v7522 = vpop.f32.mrb[0].mxu0
  %v7523 = vadd.f32 0.0, %v7522
  %v7524 = vpop.f32.mrb[0].mxu0
  %v7525 = vadd.f32 0.0, %v7524
  %v7526 = vpop.f32.mrb[0].mxu0
  %v7527 = vadd.f32 0.0, %v7526
  %v7528 = vpop.f32.mrb[0].mxu0
  %v7529 = vadd.f32 0.0, %v7528
  %7530 = vmatprep.mubr.bf16.mxu0 0
  %7531 = vmatmul.mubr.bf16.gmra.mrb[0].mxu0 %v7062
  %v7532 = vpop.f32.mrb[0].mxu0
  %v7533 = vadd.f32 0.0, %v7532
  %v7534 = vpop.f32.mrb[0].mxu0
  %v7535 = vadd.f32 0.0, %v7534
  %v7536 = vpop.f32.mrb[0].mxu0
  %v7537 = vadd.f32 0.0, %v7536
  %v7538 = vpop.f32.mrb[0].mxu0
  %v7539 = vadd.f32 0.0, %v7538
  %7540 = vdwg.mxu0
  %7541 = vmatprep.subr.bf16.mxu0 %v6821
  %7542 = vmatpush1.bf16.msra.mxu0 %v6820
  %7543 = vmatprep.subr.bf16.mxu0 %v6853
  %7544 = vmatpush1.bf16.msra.mxu0 %v6852
  %7545 = vmatprep.subr.bf16.mxu0 %v6885
  %7546 = vmatpush1.bf16.msra.mxu0 %v6884
  %7547 = vmatprep.subr.bf16.mxu0 %v6917
  %7548 = vmatpush1.bf16.msra.mxu0 %v6916
  %7549 = vmatprep.subr.bf16.mxu0 0
  %7550 = vmatpush1.bf16.msra.mxu0 0
  %7551 = vmatprep.subr.bf16.mxu0 0
  %7552 = vmatpush1.bf16.msra.mxu0 0
  %7553 = vmatprep.subr.bf16.mxu0 0
  %7554 = vmatpush1.bf16.msra.mxu0 0
  %7555 = vmatprep.subr.bf16.mxu0 0
  %7556 = vmatpush1.bf16.msra.mxu0 0
  %7557 = vmatprep.subr.bf16.mxu0 0
  %7558 = vmatpush1.bf16.msra.mxu0 0
  %7559 = vmatprep.subr.bf16.mxu0 0
  %7560 = vmatpush1.bf16.msra.mxu0 0
  %7561 = vmatprep.subr.bf16.mxu0 0
  %7562 = vmatpush1.bf16.msra.mxu0 0
  %7563 = vmatprep.subr.bf16.mxu0 0
  %7564 = vmatpush1.bf16.msra.mxu0 0
  %7565 = vmatprep.subr.bf16.mxu0 0
  %7566 = vmatpush1.bf16.msra.mxu0 0
  %7567 = vmatprep.subr.bf16.mxu0 0
  %7568 = vmatpush1.bf16.msra.mxu0 0
  %7569 = vmatprep.subr.bf16.mxu0 0
  %7570 = vmatpush1.bf16.msra.mxu0 0
  %7571 = vmatprep.subr.bf16.mxu0 0
  %7572 = vmatpush1.bf16.msra.mxu0 0
  %7573 = vmatprep.mubr.bf16.mxu0 0
  %7574 = vmatmul.mubr.bf16.gmra.mrb[0].mxu0 %v7059
  %v7575 = vpop.f32.mrb[0].mxu0
  %v7576 = vadd.f32 0.0, %v7575
  %v7577 = vpop.f32.mrb[0].mxu0
  %v7578 = vadd.f32 0.0, %v7577
  %v7579 = vpop.f32.mrb[0].mxu0
  %v7580 = vadd.f32 0.0, %v7579
  %v7581 = vpop.f32.mrb[0].mxu0
  %v7582 = vadd.f32 0.0, %v7581
  %7583 = vmatprep.mubr.bf16.mxu0 0
  %7584 = vmatmul.mubr.bf16.gmra.mrb[0].mxu0 %v7062
  %v7585 = vpop.f32.mrb[0].mxu0
  %v7586 = vadd.f32 0.0, %v7585
  %v7587 = vpop.f32.mrb[0].mxu0
  %v7588 = vadd.f32 0.0, %v7587
  %v7589 = vpop.f32.mrb[0].mxu0
  %v7590 = vadd.f32 0.0, %v7589
  %v7591 = vpop.f32.mrb[0].mxu0
  %v7592 = vadd.f32 0.0, %v7591
  %7593 = vdwg.mxu0
  %7594 = vmatprep.subr.bf16.mxu0 %v6823
  %7595 = vmatpush1.bf16.msra.mxu0 %v6822
  %7596 = vmatprep.subr.bf16.mxu0 %v6855
  %7597 = vmatpush1.bf16.msra.mxu0 %v6854
  %7598 = vmatprep.subr.bf16.mxu0 %v6887
  %7599 = vmatpush1.bf16.msra.mxu0 %v6886
  %7600 = vmatprep.subr.bf16.mxu0 %v6919
  %7601 = vmatpush1.bf16.msra.mxu0 %v6918
  %7602 = vmatprep.subr.bf16.mxu0 0
  %7603 = vmatpush1.bf16.msra.mxu0 0
  %7604 = vmatprep.subr.bf16.mxu0 0
  %7605 = vmatpush1.bf16.msra.mxu0 0
  %7606 = vmatprep.subr.bf16.mxu0 0
  %7607 = vmatpush1.bf16.msra.mxu0 0
  %7608 = vmatprep.subr.bf16.mxu0 0
  %7609 = vmatpush1.bf16.msra.mxu0 0
  %7610 = vmatprep.subr.bf16.mxu0 0
  %7611 = vmatpush1.bf16.msra.mxu0 0
  %7612 = vmatprep.subr.bf16.mxu0 0
  %7613 = vmatpush1.bf16.msra.mxu0 0
  %7614 = vmatprep.subr.bf16.mxu0 0
  %7615 = vmatpush1.bf16.msra.mxu0 0
  %7616 = vmatprep.subr.bf16.mxu0 0
  %7617 = vmatpush1.bf16.msra.mxu0 0
  %7618 = vmatprep.subr.bf16.mxu0 0
  %7619 = vmatpush1.bf16.msra.mxu0 0
  %7620 = vmatprep.subr.bf16.mxu0 0
  %7621 = vmatpush1.bf16.msra.mxu0 0
  %7622 = vmatprep.subr.bf16.mxu0 0
  %7623 = vmatpush1.bf16.msra.mxu0 0
  %7624 = vmatprep.subr.bf16.mxu0 0
  %7625 = vmatpush1.bf16.msra.mxu0 0
  %7626 = vmatprep.mubr.bf16.mxu0 0
  %7627 = vmatmul.mubr.bf16.gmra.mrb[0].mxu0 %v7059
  %v7628 = vpop.f32.mrb[0].mxu0
  %v7629 = vadd.f32 0.0, %v7628
  %v7630 = vpop.f32.mrb[0].mxu0
  %v7631 = vadd.f32 0.0, %v7630
  %v7632 = vpop.f32.mrb[0].mxu0
  %v7633 = vadd.f32 0.0, %v7632
  %v7634 = vpop.f32.mrb[0].mxu0
  %v7635 = vadd.f32 0.0, %v7634
  %7636 = vmatprep.mubr.bf16.mxu0 0
  %7637 = vmatmul.mubr.bf16.gmra.mrb[0].mxu0 %v7062
  %v7638 = vpop.f32.mrb[0].mxu0
  %v7639 = vadd.f32 0.0, %v7638
  %v7640 = vpop.f32.mrb[0].mxu0
  %v7641 = vadd.f32 0.0, %v7640
  %v7642 = vpop.f32.mrb[0].mxu0
  %v7643 = vadd.f32 0.0, %v7642
  %v7644 = vpop.f32.mrb[0].mxu0
  %v7645 = vadd.f32 0.0, %v7644
  %7646 = vdwg.mxu0
  %7647 = vmatprep.subr.bf16.mxu0 %v6825
  %7648 = vmatpush1.bf16.msra.mxu0 %v6824
  %7649 = vmatprep.subr.bf16.mxu0 %v6857
  %7650 = vmatpush1.bf16.msra.mxu0 %v6856
  %7651 = vmatprep.subr.bf16.mxu0 %v6889
  %7652 = vmatpush1.bf16.msra.mxu0 %v6888
  %7653 = vmatprep.subr.bf16.mxu0 %v6921
  %7654 = vmatpush1.bf16.msra.mxu0 %v6920
  %7655 = vmatprep.subr.bf16.mxu0 0
  %7656 = vmatpush1.bf16.msra.mxu0 0
  %7657 = vmatprep.subr.bf16.mxu0 0
  %7658 = vmatpush1.bf16.msra.mxu0 0
  %7659 = vmatprep.subr.bf16.mxu0 0
  %7660 = vmatpush1.bf16.msra.mxu0 0
  %7661 = vmatprep.subr.bf16.mxu0 0
  %7662 = vmatpush1.bf16.msra.mxu0 0
  %7663 = vmatprep.subr.bf16.mxu0 0
  %7664 = vmatpush1.bf16.msra.mxu0 0
  %7665 = vmatprep.subr.bf16.mxu0 0
  %7666 = vmatpush1.bf16.msra.mxu0 0
  %7667 = vmatprep.subr.bf16.mxu0 0
  %7668 = vmatpush1.bf16.msra.mxu0 0
  %7669 = vmatprep.subr.bf16.mxu0 0
  %7670 = vmatpush1.bf16.msra.mxu0 0
  %7671 = vmatprep.subr.bf16.mxu0 0
  %7672 = vmatpush1.bf16.msra.mxu0 0
  %7673 = vmatprep.subr.bf16.mxu0 0
  %7674 = vmatpush1.bf16.msra.mxu0 0
  %7675 = vmatprep.subr.bf16.mxu0 0
  %7676 = vmatpush1.bf16.msra.mxu0 0
  %7677 = vmatprep.subr.bf16.mxu0 0
  %7678 = vmatpush1.bf16.msra.mxu0 0
  %7679 = vmatprep.mubr.bf16.mxu0 0
  %7680 = vmatmul.mubr.bf16.gmra.mrb[0].mxu0 %v7059
  %v7681 = vpop.f32.mrb[0].mxu0
  %v7682 = vadd.f32 0.0, %v7681
  %v7683 = vpop.f32.mrb[0].mxu0
  %v7684 = vadd.f32 0.0, %v7683
  %v7685 = vpop.f32.mrb[0].mxu0
  %v7686 = vadd.f32 0.0, %v7685
  %v7687 = vpop.f32.mrb[0].mxu0
  %v7688 = vadd.f32 0.0, %v7687
  %7689 = vmatprep.mubr.bf16.mxu0 0
  %7690 = vmatmul.mubr.bf16.gmra.mrb[0].mxu0 %v7062
  %v7691 = vpop.f32.mrb[0].mxu0
  %v7692 = vadd.f32 0.0, %v7691
  %v7693 = vpop.f32.mrb[0].mxu0
  %v7694 = vadd.f32 0.0, %v7693
  %v7695 = vpop.f32.mrb[0].mxu0
  %v7696 = vadd.f32 0.0, %v7695
  %v7697 = vpop.f32.mrb[0].mxu0
  %v7698 = vadd.f32 0.0, %v7697
  %7699 = vdwg.mxu0
  %7700 = vmatprep.subr.bf16.mxu0 %v6827
  %7701 = vmatpush1.bf16.msra.mxu0 %v6826
  %7702 = vmatprep.subr.bf16.mxu0 %v6859
  %7703 = vmatpush1.bf16.msra.mxu0 %v6858
  %7704 = vmatprep.subr.bf16.mxu0 %v6891
  %7705 = vmatpush1.bf16.msra.mxu0 %v6890
  %7706 = vmatprep.subr.bf16.mxu0 %v6923
  %7707 = vmatpush1.bf16.msra.mxu0 %v6922
  %7708 = vmatprep.subr.bf16.mxu0 0
  %7709 = vmatpush1.bf16.msra.mxu0 0
  %7710 = vmatprep.subr.bf16.mxu0 0
  %7711 = vmatpush1.bf16.msra.mxu0 0
  %7712 = vmatprep.subr.bf16.mxu0 0
  %7713 = vmatpush1.bf16.msra.mxu0 0
  %7714 = vmatprep.subr.bf16.mxu0 0
  %7715 = vmatpush1.bf16.msra.mxu0 0
  %7716 = vmatprep.subr.bf16.mxu0 0
  %7717 = vmatpush1.bf16.msra.mxu0 0
  %7718 = vmatprep.subr.bf16.mxu0 0
  %7719 = vmatpush1.bf16.msra.mxu0 0
  %7720 = vmatprep.subr.bf16.mxu0 0
  %7721 = vmatpush1.bf16.msra.mxu0 0
  %7722 = vmatprep.subr.bf16.mxu0 0
  %7723 = vmatpush1.bf16.msra.mxu0 0
  %7724 = vmatprep.subr.bf16.mxu0 0
  %7725 = vmatpush1.bf16.msra.mxu0 0
  %7726 = vmatprep.subr.bf16.mxu0 0
  %7727 = vmatpush1.bf16.msra.mxu0 0
  %7728 = vmatprep.subr.bf16.mxu0 0
  %7729 = vmatpush1.bf16.msra.mxu0 0
  %7730 = vmatprep.subr.bf16.mxu0 0
  %7731 = vmatpush1.bf16.msra.mxu0 0
  %7732 = vmatprep.mubr.bf16.mxu0 0
  %7733 = vmatmul.mubr.bf16.gmra.mrb[0].mxu0 %v7059
  %v7734 = vpop.f32.mrb[0].mxu0
  %v7735 = vadd.f32 0.0, %v7734
  %v7736 = vpop.f32.mrb[0].mxu0
  %v7737 = vadd.f32 0.0, %v7736
  %v7738 = vpop.f32.mrb[0].mxu0
  %v7739 = vadd.f32 0.0, %v7738
  %v7740 = vpop.f32.mrb[0].mxu0
  %v7741 = vadd.f32 0.0, %v7740
  %7742 = vmatprep.mubr.bf16.mxu0 0
  %7743 = vmatmul.mubr.bf16.gmra.mrb[0].mxu0 %v7062
  %v7744 = vpop.f32.mrb[0].mxu0
  %v7745 = vadd.f32 0.0, %v7744
  %v7746 = vpop.f32.mrb[0].mxu0
  %v7747 = vadd.f32 0.0, %v7746
  %v7748 = vpop.f32.mrb[0].mxu0
  %v7749 = vadd.f32 0.0, %v7748
  %v7750 = vpop.f32.mrb[0].mxu0
  %v7751 = vadd.f32 0.0, %v7750
  %7752 = vdwg.mxu0
  %7753 = vmatprep.subr.bf16.mxu0 %v6829
  %7754 = vmatpush1.bf16.msra.mxu0 %v6828
  %7755 = vmatprep.subr.bf16.mxu0 %v6861
  %7756 = vmatpush1.bf16.msra.mxu0 %v6860
  %7757 = vmatprep.subr.bf16.mxu0 %v6893
  %7758 = vmatpush1.bf16.msra.mxu0 %v6892
  %7759 = vmatprep.subr.bf16.mxu0 %v6925
  %7760 = vmatpush1.bf16.msra.mxu0 %v6924
  %7761 = vmatprep.subr.bf16.mxu0 0
  %7762 = vmatpush1.bf16.msra.mxu0 0
  %7763 = vmatprep.subr.bf16.mxu0 0
  %7764 = vmatpush1.bf16.msra.mxu0 0
  %7765 = vmatprep.subr.bf16.mxu0 0
  %7766 = vmatpush1.bf16.msra.mxu0 0
  %7767 = vmatprep.subr.bf16.mxu0 0
  %7768 = vmatpush1.bf16.msra.mxu0 0
  %7769 = vmatprep.subr.bf16.mxu0 0
  %7770 = vmatpush1.bf16.msra.mxu0 0
  %7771 = vmatprep.subr.bf16.mxu0 0
  %7772 = vmatpush1.bf16.msra.mxu0 0
  %7773 = vmatprep.subr.bf16.mxu0 0
  %7774 = vmatpush1.bf16.msra.mxu0 0
  %7775 = vmatprep.subr.bf16.mxu0 0
  %7776 = vmatpush1.bf16.msra.mxu0 0
  %7777 = vmatprep.subr.bf16.mxu0 0
  %7778 = vmatpush1.bf16.msra.mxu0 0
  %7779 = vmatprep.subr.bf16.mxu0 0
  %7780 = vmatpush1.bf16.msra.mxu0 0
  %7781 = vmatprep.subr.bf16.mxu0 0
  %7782 = vmatpush1.bf16.msra.mxu0 0
  %7783 = vmatprep.subr.bf16.mxu0 0
  %7784 = vmatpush1.bf16.msra.mxu0 0
  %7785 = vmatprep.mubr.bf16.mxu0 0
  %7786 = vmatmul.mubr.bf16.gmra.mrb[0].mxu0 %v7059
  %v7787 = vpop.f32.mrb[0].mxu0
  %v7788 = vadd.f32 0.0, %v7787
  %v7789 = vpop.f32.mrb[0].mxu0
  %v7790 = vadd.f32 0.0, %v7789
  %v7791 = vpop.f32.mrb[0].mxu0
  %v7792 = vadd.f32 0.0, %v7791
  %v7793 = vpop.f32.mrb[0].mxu0
  %v7794 = vadd.f32 0.0, %v7793
  %7795 = vmatprep.mubr.bf16.mxu0 0
  %7796 = vmatmul.mubr.bf16.gmra.mrb[0].mxu0 %v7062
  %v7797 = vpop.f32.mrb[0].mxu0
  %v7798 = vadd.f32 0.0, %v7797
  %v7799 = vpop.f32.mrb[0].mxu0
  %v7800 = vadd.f32 0.0, %v7799
  %v7801 = vpop.f32.mrb[0].mxu0
  %v7802 = vadd.f32 0.0, %v7801
  %v7803 = vpop.f32.mrb[0].mxu0
  %v7804 = vadd.f32 0.0, %v7803
  %7805 = vdwg.mxu0
  %7806 = vmatprep.subr.bf16.mxu0 %v6831
  %7807 = vmatpush1.bf16.msra.mxu0 %v6830
  %7808 = vmatprep.subr.bf16.mxu0 %v6863
  %7809 = vmatpush1.bf16.msra.mxu0 %v6862
  %7810 = vmatprep.subr.bf16.mxu0 %v6895
  %7811 = vmatpush1.bf16.msra.mxu0 %v6894
  %7812 = vmatprep.subr.bf16.mxu0 %v6927
  %7813 = vmatpush1.bf16.msra.mxu0 %v6926
  %7814 = vmatprep.subr.bf16.mxu0 0
  %7815 = vmatpush1.bf16.msra.mxu0 0
  %7816 = vmatprep.subr.bf16.mxu0 0
  %7817 = vmatpush1.bf16.msra.mxu0 0
  %7818 = vmatprep.subr.bf16.mxu0 0
  %7819 = vmatpush1.bf16.msra.mxu0 0
  %7820 = vmatprep.subr.bf16.mxu0 0
  %7821 = vmatpush1.bf16.msra.mxu0 0
  %7822 = vmatprep.subr.bf16.mxu0 0
  %7823 = vmatpush1.bf16.msra.mxu0 0
  %7824 = vmatprep.subr.bf16.mxu0 0
  %7825 = vmatpush1.bf16.msra.mxu0 0
  %7826 = vmatprep.subr.bf16.mxu0 0
  %7827 = vmatpush1.bf16.msra.mxu0 0
  %7828 = vmatprep.subr.bf16.mxu0 0
  %7829 = vmatpush1.bf16.msra.mxu0 0
  %7830 = vmatprep.subr.bf16.mxu0 0
  %7831 = vmatpush1.bf16.msra.mxu0 0
  %7832 = vmatprep.subr.bf16.mxu0 0
  %7833 = vmatpush1.bf16.msra.mxu0 0
  %7834 = vmatprep.subr.bf16.mxu0 0
  %7835 = vmatpush1.bf16.msra.mxu0 0
  %7836 = vmatprep.subr.bf16.mxu0 0
  %7837 = vmatpush1.bf16.msra.mxu0 0
  %7838 = vmatprep.mubr.bf16.mxu0 0
  %7839 = vmatmul.mubr.bf16.gmra.mrb[0].mxu0 %v7059
  %v7840 = vpop.f32.mrb[0].mxu0
  %v7841 = vadd.f32 0.0, %v7840
  %v7842 = vpop.f32.mrb[0].mxu0
  %v7843 = vadd.f32 0.0, %v7842
  %v7844 = vpop.f32.mrb[0].mxu0
  %v7845 = vadd.f32 0.0, %v7844
  %v7846 = vpop.f32.mrb[0].mxu0
  %v7847 = vadd.f32 0.0, %v7846
  %7848 = vmatprep.mubr.bf16.mxu0 0
  %7849 = vmatmul.mubr.bf16.gmra.mrb[0].mxu0 %v7062
  %v7850 = vpop.f32.mrb[0].mxu0
  %v7851 = vadd.f32 0.0, %v7850
  %v7852 = vpop.f32.mrb[0].mxu0
  %v7853 = vadd.f32 0.0, %v7852
  %v7854 = vpop.f32.mrb[0].mxu0
  %v7855 = vadd.f32 0.0, %v7854
  %v7856 = vpop.f32.mrb[0].mxu0
  %v7857 = vadd.f32 0.0, %v7856
  %7858 = vdwg.mxu0
  %7859 = vmatprep.subr.bf16.mxu0 %v6833
  %7860 = vmatpush1.bf16.msra.mxu0 %v6832
  %7861 = vmatprep.subr.bf16.mxu0 %v6865
  %7862 = vmatpush1.bf16.msra.mxu0 %v6864
  %7863 = vmatprep.subr.bf16.mxu0 %v6897
  %7864 = vmatpush1.bf16.msra.mxu0 %v6896
  %7865 = vmatprep.subr.bf16.mxu0 %v6929
  %7866 = vmatpush1.bf16.msra.mxu0 %v6928
  %7867 = vmatprep.subr.bf16.mxu0 0
  %7868 = vmatpush1.bf16.msra.mxu0 0
  %7869 = vmatprep.subr.bf16.mxu0 0
  %7870 = vmatpush1.bf16.msra.mxu0 0
  %7871 = vmatprep.subr.bf16.mxu0 0
  %7872 = vmatpush1.bf16.msra.mxu0 0
  %7873 = vmatprep.subr.bf16.mxu0 0
  %7874 = vmatpush1.bf16.msra.mxu0 0
  %7875 = vmatprep.subr.bf16.mxu0 0
  %7876 = vmatpush1.bf16.msra.mxu0 0
  %7877 = vmatprep.subr.bf16.mxu0 0
  %7878 = vmatpush1.bf16.msra.mxu0 0
  %7879 = vmatprep.subr.bf16.mxu0 0
  %7880 = vmatpush1.bf16.msra.mxu0 0
  %7881 = vmatprep.subr.bf16.mxu0 0
  %7882 = vmatpush1.bf16.msra.mxu0 0
  %7883 = vmatprep.subr.bf16.mxu0 0
  %7884 = vmatpush1.bf16.msra.mxu0 0
  %7885 = vmatprep.subr.bf16.mxu0 0
  %7886 = vmatpush1.bf16.msra.mxu0 0
  %7887 = vmatprep.subr.bf16.mxu0 0
  %7888 = vmatpush1.bf16.msra.mxu0 0
  %7889 = vmatprep.subr.bf16.mxu0 0
  %7890 = vmatpush1.bf16.msra.mxu0 0
  %7891 = vmatprep.mubr.bf16.mxu0 0
  %7892 = vmatmul.mubr.bf16.gmra.mrb[0].mxu0 %v7059
  %v7893 = vpop.f32.mrb[0].mxu0
  %v7894 = vadd.f32 0.0, %v7893
  %v7895 = vpop.f32.mrb[0].mxu0
  %v7896 = vadd.f32 0.0, %v7895
  %v7897 = vpop.f32.mrb[0].mxu0
  %v7898 = vadd.f32 0.0, %v7897
  %v7899 = vpop.f32.mrb[0].mxu0
  %v7900 = vadd.f32 0.0, %v7899
  %7901 = vmatprep.mubr.bf16.mxu0 0
  %7902 = vmatmul.mubr.bf16.gmra.mrb[0].mxu0 %v7062
  %v7903 = vpop.f32.mrb[0].mxu0
  %v7904 = vadd.f32 0.0, %v7903
  %v7905 = vpop.f32.mrb[0].mxu0
  %v7906 = vadd.f32 0.0, %v7905
  %v7907 = vpop.f32.mrb[0].mxu0
  %v7908 = vadd.f32 0.0, %v7907
  %v7909 = vpop.f32.mrb[0].mxu0
  %v7910 = vadd.f32 0.0, %v7909
  %7911 = vdwg.mxu0
  %7912 = vst [vmem:[%s14] sm:$0xff] %v7099
  %7913 = vst [vmem:[%s14 + $0x8] sm:$0xff] %v7101
  %7914 = vst [vmem:[%s14 + $0x10] sm:$0xff] %v7152
  %7915 = vst [vmem:[%s14 + $0x18] sm:$0xff] %v7154
  %7916 = vst [vmem:[%s14 + $0x20] sm:$0xff] %v7205
  %7917 = vst [vmem:[%s14 + $0x28] sm:$0xff] %v7207
  %7918 = vst [vmem:[%s14 + $0x30] sm:$0xff] %v7258
  %7919 = vst [vmem:[%s14 + $0x38] sm:$0xff] %v7260
  %7920 = vst [vmem:[%s14 + $0x40] sm:$0xff] %v7311
  %7921 = vst [vmem:[%s14 + $0x48] sm:$0xff] %v7313
  %7922 = vst [vmem:[%s14 + $0x50] sm:$0xff] %v7364
  %7923 = vst [vmem:[%s14 + $0x58] sm:$0xff] %v7366
  %7924 = vst [vmem:[%s14 + $0x60] sm:$0xff] %v7417
  %7925 = vst [vmem:[%s14 + $0x68] sm:$0xff] %v7419
  %7926 = vst [vmem:[%s14 + $0x70] sm:$0xff] %v7470
  %7927 = vst [vmem:[%s14 + $0x78] sm:$0xff] %v7472
  %7928 = vst [vmem:[%s14 + $0x80] sm:$0xff] %v7523
  %7929 = vst [vmem:[%s14 + $0x88] sm:$0xff] %v7525
  %7930 = vst [vmem:[%s14 + $0x90] sm:$0xff] %v7576
  %7931 = vst [vmem:[%s14 + $0x98] sm:$0xff] %v7578
  %7932 = vst [vmem:[%s14 + $0xa0] sm:$0xff] %v7629
  %7933 = vst [vmem:[%s14 + $0xa8] sm:$0xff] %v7631
  %7934 = vst [vmem:[%s14 + $0xb0] sm:$0xff] %v7682
  %7935 = vst [vmem:[%s14 + $0xb8] sm:$0xff] %v7684
  %7936 = vst [vmem:[%s14 + $0xc0] sm:$0xff] %v7735
  %7937 = vst [vmem:[%s14 + $0xc8] sm:$0xff] %v7737
  %7938 = vst [vmem:[%s14 + $0xd0] sm:$0xff] %v7788
  %7939 = vst [vmem:[%s14 + $0xd8] sm:$0xff] %v7790
  %7940 = vst [vmem:[%s14 + $0xe0] sm:$0xff] %v7841
  %7941 = vst [vmem:[%s14 + $0xe8] sm:$0xff] %v7843
  %7942 = vst [vmem:[%s14 + $0xf0] sm:$0xff] %v7894
  %7943 = vst [vmem:[%s14 + $0xf8] sm:$0xff] %v7896
  %7944 = vst [vmem:[%s14 + $0x100] sm:$0xff] %v7103
  %7945 = vst [vmem:[%s14 + $0x108] sm:$0xff] %v7105
  %7946 = vst [vmem:[%s14 + $0x110] sm:$0xff] %v7156
  %7947 = vst [vmem:[%s14 + $0x118] sm:$0xff] %v7158
  %7948 = vst [vmem:[%s14 + $0x120] sm:$0xff] %v7209
  %7949 = vst [vmem:[%s14 + $0x128] sm:$0xff] %v7211
  %7950 = vst [vmem:[%s14 + $0x130] sm:$0xff] %v7262
  %7951 = vst [vmem:[%s14 + $0x138] sm:$0xff] %v7264
  %7952 = vst [vmem:[%s14 + $0x140] sm:$0xff] %v7315
  %7953 = vst [vmem:[%s14 + $0x148] sm:$0xff] %v7317
  %7954 = vst [vmem:[%s14 + $0x150] sm:$0xff] %v7368
  %7955 = vst [vmem:[%s14 + $0x158] sm:$0xff] %v7370
  %7956 = vst [vmem:[%s14 + $0x160] sm:$0xff] %v7421
  %7957 = vst [vmem:[%s14 + $0x168] sm:$0xff] %v7423
  %7958 = vst [vmem:[%s14 + $0x170] sm:$0xff] %v7474
  %7959 = vst [vmem:[%s14 + $0x178] sm:$0xff] %v7476
  %7960 = vst [vmem:[%s14 + $0x180] sm:$0xff] %v7527
  %7961 = vst [vmem:[%s14 + $0x188] sm:$0xff] %v7529
  %7962 = vst [vmem:[%s14 + $0x190] sm:$0xff] %v7580
  %7963 = vst [vmem:[%s14 + $0x198] sm:$0xff] %v7582
  %7964 = vst [vmem:[%s14 + $0x1a0] sm:$0xff] %v7633
  %7965 = vst [vmem:[%s14 + $0x1a8] sm:$0xff] %v7635
  %7966 = vst [vmem:[%s14 + $0x1b0] sm:$0xff] %v7686
  %7967 = vst [vmem:[%s14 + $0x1b8] sm:$0xff] %v7688
  %7968 = vst [vmem:[%s14 + $0x1c0] sm:$0xff] %v7739
  %7969 = vst [vmem:[%s14 + $0x1c8] sm:$0xff] %v7741
  %7970 = vst [vmem:[%s14 + $0x1d0] sm:$0xff] %v7792
  %7971 = vst [vmem:[%s14 + $0x1d8] sm:$0xff] %v7794
  %7972 = vst [vmem:[%s14 + $0x1e0] sm:$0xff] %v7845
  %7973 = vst [vmem:[%s14 + $0x1e8] sm:$0xff] %v7847
  %7974 = vst [vmem:[%s14 + $0x1f0] sm:$0xff] %v7898
  %7975 = vst [vmem:[%s14 + $0x1f8] sm:$0xff] %v7900
  %7976 = vst [vmem:[%s14 + $0x200] sm:$0xff] %v7109
  %7977 = vst [vmem:[%s14 + $0x208] sm:$0xff] %v7111
  %7978 = vst [vmem:[%s14 + $0x210] sm:$0xff] %v7162
  %7979 = vst [vmem:[%s14 + $0x218] sm:$0xff] %v7164
  %7980 = vst [vmem:[%s14 + $0x220] sm:$0xff] %v7215
  %7981 = vst [vmem:[%s14 + $0x228] sm:$0xff] %v7217
  %7982 = vst [vmem:[%s14 + $0x230] sm:$0xff] %v7268
  %7983 = vst [vmem:[%s14 + $0x238] sm:$0xff] %v7270
  %7984 = vst [vmem:[%s14 + $0x240] sm:$0xff] %v7321
  %7985 = vst [vmem:[%s14 + $0x248] sm:$0xff] %v7323
  %7986 = vst [vmem:[%s14 + $0x250] sm:$0xff] %v7374
  %7987 = vst [vmem:[%s14 + $0x258] sm:$0xff] %v7376
  %7988 = vst [vmem:[%s14 + $0x260] sm:$0xff] %v7427
  %7989 = vst [vmem:[%s14 + $0x268] sm:$0xff] %v7429
  %7990 = vst [vmem:[%s14 + $0x270] sm:$0xff] %v7480
  %7991 = vst [vmem:[%s14 + $0x278] sm:$0xff] %v7482
  %7992 = vst [vmem:[%s14 + $0x280] sm:$0xff] %v7533
  %7993 = vst [vmem:[%s14 + $0x288] sm:$0xff] %v7535
  %7994 = vst [vmem:[%s14 + $0x290] sm:$0xff] %v7586
  %7995 = vst [vmem:[%s14 + $0x298] sm:$0xff] %v7588
  %7996 = vst [vmem:[%s14 + $0x2a0] sm:$0xff] %v7639
  %7997 = vst [vmem:[%s14 + $0x2a8] sm:$0xff] %v7641
  %7998 = vst [vmem:[%s14 + $0x2b0] sm:$0xff] %v7692
  %7999 = vst [vmem:[%s14 + $0x2b8] sm:$0xff] %v7694
  %8000 = vst [vmem:[%s14 + $0x2c0] sm:$0xff] %v7745
  %8001 = vst [vmem:[%s14 + $0x2c8] sm:$0xff] %v7747
  %8002 = vst [vmem:[%s14 + $0x2d0] sm:$0xff] %v7798
  %8003 = vst [vmem:[%s14 + $0x2d8] sm:$0xff] %v7800
  %8004 = vst [vmem:[%s14 + $0x2e0] sm:$0xff] %v7851
  %8005 = vst [vmem:[%s14 + $0x2e8] sm:$0xff] %v7853
  %8006 = vst [vmem:[%s14 + $0x2f0] sm:$0xff] %v7904
  %8007 = vst [vmem:[%s14 + $0x2f8] sm:$0xff] %v7906
  %8008 = vst [vmem:[%s14 + $0x300] sm:$0xff] %v7113
  %8009 = vst [vmem:[%s14 + $0x308] sm:$0xff] %v7115
  %8010 = vst [vmem:[%s14 + $0x310] sm:$0xff] %v7166
  %8011 = vst [vmem:[%s14 + $0x318] sm:$0xff] %v7168
  %8012 = vst [vmem:[%s14 + $0x320] sm:$0xff] %v7219
  %8013 = vst [vmem:[%s14 + $0x328] sm:$0xff] %v7221
  %8014 = vst [vmem:[%s14 + $0x330] sm:$0xff] %v7272
  %8015 = vst [vmem:[%s14 + $0x338] sm:$0xff] %v7274
  %8016 = vst [vmem:[%s14 + $0x340] sm:$0xff] %v7325
  %8017 = vst [vmem:[%s14 + $0x348] sm:$0xff] %v7327
  %8018 = vst [vmem:[%s14 + $0x350] sm:$0xff] %v7378
  %8019 = vst [vmem:[%s14 + $0x358] sm:$0xff] %v7380
  %8020 = vst [vmem:[%s14 + $0x360] sm:$0xff] %v7431
  %8021 = vst [vmem:[%s14 + $0x368] sm:$0xff] %v7433
  %8022 = vst [vmem:[%s14 + $0x370] sm:$0xff] %v7484
  %8023 = vst [vmem:[%s14 + $0x378] sm:$0xff] %v7486
  %8024 = vst [vmem:[%s14 + $0x380] sm:$0xff] %v7537
  %8025 = vst [vmem:[%s14 + $0x388] sm:$0xff] %v7539
  %8026 = vst [vmem:[%s14 + $0x390] sm:$0xff] %v7590
  %8027 = vst [vmem:[%s14 + $0x398] sm:$0xff] %v7592
  %8028 = vst [vmem:[%s14 + $0x3a0] sm:$0xff] %v7643
  %8029 = vst [vmem:[%s14 + $0x3a8] sm:$0xff] %v7645
  %8030 = vst [vmem:[%s14 + $0x3b0] sm:$0xff] %v7696
  %8031 = vst [vmem:[%s14 + $0x3b8] sm:$0xff] %v7698
  %8032 = vst [vmem:[%s14 + $0x3c0] sm:$0xff] %v7749
  %8033 = vst [vmem:[%s14 + $0x3c8] sm:$0xff] %v7751
  %8034 = vst [vmem:[%s14 + $0x3d0] sm:$0xff] %v7802
  %8035 = vst [vmem:[%s14 + $0x3d8] sm:$0xff] %v7804
  %8036 = vst [vmem:[%s14 + $0x3e0] sm:$0xff] %v7855
  %8037 = vst [vmem:[%s14 + $0x3e8] sm:$0xff] %v7857
  %8038 = vst [vmem:[%s14 + $0x3f0] sm:$0xff] %v7908
  %8039 = vst [vmem:[%s14 + $0x3f8] sm:$0xff] %v7910
  // Predicated region
  $region65: #{_lambda_.1} parent=0 // pred_check
    _
  $region66: #{_lambda_.1} parent=0 // pred_check_branch
    %8041 = sbr.rel (0) target = $region68
  $region67: #{_lambda_.1} parent=0 // pred_region
    _
  $region68: #{_lambda_.1} parent=0 // pred_fallthru
    _
  // Predicated region
  $region69: #{_lambda_.1} parent=0 // pred_check
    _
  $region70: #{_lambda_.1} parent=0 // pred_check_branch
    %8043 = sbr.rel (0) target = $region72
  $region71: #{_lambda_.1} parent=0 // pred_region
    _
  $region72: #{_lambda_.1} parent=0 // pred_fallthru
    _

</llo_original>
